<compile_context>
chip_gen: v7x
topology: tpu7x:2x2x1
jax: 0.10.0
libtpu: 0.0.40
codegen_flags: <defaults>
</compile_context>

<pallas_src>
import jax
import jax.numpy as jnp
from jax.experimental import pallas as pl
from jax.experimental.pallas import tpu as pltpu

# Logical dims (match the PyTorch module)
N_FEATURE = 14
H1, H2, OUT = 500, 300, 2
# Lane-aligned (multiple-of-128) padded dims used inside the kernel
H1_P, H2_P, OUT_P = 512, 384, 128


def _round_up(n, m):
    return ((n + m - 1) // m) * m


def _pad2(a, rows, cols):
    return jnp.pad(a, ((0, rows - a.shape[0]), (0, cols - a.shape[1])))


def mlp_kernel(x_ref, w1_ref, b1_ref, w2_ref, b2_ref, w3_ref, b3_ref, o_ref):
    dt = w1_ref.dtype  # matmul operand dtype (bf16 or f32), fixed at trace time
    prec = jax.lax.Precision.HIGHEST if dt == jnp.float32 else None

    # fc1 + ReLU (K=14: low MXU K-utilization but negligible FLOPs vs fc2).
    x = x_ref[...]  # already in matmul dtype (cast once in the wrapper)
    h1 = jnp.dot(x, w1_ref[...], preferred_element_type=jnp.float32,
                 precision=prec)
    # Fused bias + ReLU + cast: only the `dt` copy of the activation is kept.
    h1 = jnp.maximum(h1 + b1_ref[...], 0.0).astype(dt)

    # fc2 + ReLU
    h2 = jnp.dot(h1, w2_ref[...], preferred_element_type=jnp.float32,
                 precision=prec)
    h2 = jnp.maximum(h2 + b2_ref[...], 0.0).astype(dt)

    # fc3 (no activation) -> lane-dense [bt, 128] store in o_ref.dtype
    h3 = jnp.dot(h2, w3_ref[...], preferred_element_type=jnp.float32,
                 precision=prec) + b3_ref[...]
    o_ref[...] = h3.astype(o_ref.dtype)


def net_forward(x, params, *, block_rows=1024, matmul_dtype=jnp.bfloat16):
    """3-layer MLP forward pass in a single batch-tiled Pallas TPU kernel."""
    w1, b1, w2, b2, w3, b3 = params  # (F,500),(1,500),(500,300),(1,300),(300,2),(1,2)
    B, F = x.shape

    # Zero-pad weights/biases to lane-aligned shapes (results unchanged:
    # padded bias lanes are 0, ReLU(0)=0, padded weight rows/cols are 0).
    w1p = _pad2(w1, F, H1_P).astype(matmul_dtype)
    b1p = _pad2(b1, 1, H1_P)                       # biases stay f32
    w2p = _pad2(w2, H1_P, H2_P).astype(matmul_dtype)
    b2p = _pad2(b2, 1, H2_P)
    w3p = _pad2(w3, H2_P, OUT_P).astype(matmul_dtype)
    b3p = _pad2(b3, 1, OUT_P)

    # Batch tile: multiple of 8 sublanes, capped at block_rows, and chosen so
    # the grid has >=2 steps whenever B > 8 (keeps both v7x TCs busy). Batch
    # rows are zero-padded so every grid step sees a full tile.
    bt = min(block_rows, max(_round_up(pl.cdiv(B, 2), 8), 8))
    B_pad = _round_up(B, bt)
    xp = jnp.pad(x, ((0, B_pad - B), (0, 0))).astype(matmul_dtype)

    # Output store dtype: bf16 on the perf path halves the dominant HBM
    # writeback (padded 128-wide slab); f32 path keeps exact stores.
    out_dtype = jnp.float32 if matmul_dtype == jnp.float32 else jnp.bfloat16

    const = lambda i: (0, 0)  # weights stay VMEM-resident across grid steps

    out_padded = pl.pallas_call(
        mlp_kernel,
        out_shape=jax.ShapeDtypeStruct((B_pad, OUT_P), out_dtype),
        grid=(B_pad // bt,),
        in_specs=[
            pl.BlockSpec((bt, F), lambda i: (i, 0)),   # x: tiled over batch
            pl.BlockSpec((F, H1_P), const),            # w1
            pl.BlockSpec((1, H1_P), const),            # b1
            pl.BlockSpec((H1_P, H2_P), const),         # w2
            pl.BlockSpec((1, H2_P), const),            # b2
            pl.BlockSpec((H2_P, OUT_P), const),        # w3
            pl.BlockSpec((1, OUT_P), const),           # b3
        ],
        out_specs=pl.BlockSpec((bt, OUT_P), lambda i: (i, 0)),
        compiler_params=pltpu.CompilerParams(
            dimension_semantics=("parallel",),
            vmem_limit_bytes=48 * 1024 * 1024,  # covers bt<=2048 incl. v5e's 16 MiB default
        ),
    )(xp, w1p, b1p, w2p, b2p, w3p, b3p)

    # Slice away batch padding + lane padding of the 2-wide output; return f32
    # logits to match the reference module's output dtype.
    return out_padded[:B, :OUT].astype(jnp.float32)


def init_params(key, n_feature):
    """Deterministic init mirroring nn.Linear default (uniform +/- 1/sqrt(fan_in))."""
    dims = [(n_feature, H1), (H1, H2), (H2, OUT)]
    params = []
    for (fan_in, fan_out) in dims:
        key, kw, kb = jax.random.split(key, 3)
        bound = 1.0 / jnp.sqrt(jnp.float32(fan_in))
        w = jax.random.uniform(kw, (fan_in, fan_out), jnp.float32, -bound, bound)
        b = jax.random.uniform(kb, (1, fan_out), jnp.float32, -bound, bound)
        params += [w, b]
    return tuple(params)


def reference_forward(x, params):
    w1, b1, w2, b2, w3, b3 = params
    h1 = jnp.maximum(x @ w1 + b1, 0.0)
    h2 = jnp.maximum(h1 @ w2 + b2, 0.0)
    return h2 @ w3 + b3


if __name__ == "__main__":
    key = jax.random.PRNGKey(0)
    n_feature = N_FEATURE

    key, kx = jax.random.split(key)
    x_small = jax.random.normal(kx, (4, n_feature), jnp.float32)
    params = init_params(key, n_feature)
    ref_small = reference_forward(x_small, params)

    # f32 matmul path — exact semantics (Precision.HIGHEST), tight tolerance.
    out_f32 = jax.block_until_ready(
        net_forward(x_small, params, matmul_dtype=jnp.float32))
    assert out_f32.shape == (4, 2)
    assert jnp.allclose(out_f32, ref_small, atol=1e-4, rtol=1e-4)

    # bf16 matmul path (perf configuration) — looser tolerance.
    out_bf16 = jax.block_until_ready(
        net_forward(x_small, params, matmul_dtype=jnp.bfloat16))
    assert out_bf16.shape == (4, 2)
    assert jnp.allclose(out_bf16, ref_small, atol=5e-2, rtol=5e-2)

    # Larger batch exercising the multi-step batch grid + zero-row padding
    # (B % tile != 0, >=2 grid steps).
    key, kb = jax.random.split(key)
    x_big = jax.random.normal(kb, (1000, n_feature), jnp.float32)
    out_big = jax.block_until_ready(
        net_forward(x_big, params, block_rows=1024, matmul_dtype=jnp.float32))
    ref_big = reference_forward(x_big, params)
    assert out_big.shape == (1000, 2)
    assert jnp.allclose(out_big, ref_big, atol=1e-4, rtol=1e-4)

    print("KERNEL_OK")
</pallas_src>

<mosaic_0001>
module attributes {stable_mosaic.version = 11 : i64} {
  func.func @mlp_kernel(%arg0: i32, %arg1: memref<8x14xf32, #tpu.memory_space<vmem>>, %arg2: memref<14x512xf32, #tpu.memory_space<vmem>>, %arg3: memref<1x512xf32, #tpu.memory_space<vmem>>, %arg4: memref<512x384xf32, #tpu.memory_space<vmem>>, %arg5: memref<1x384xf32, #tpu.memory_space<vmem>>, %arg6: memref<384x128xf32, #tpu.memory_space<vmem>>, %arg7: memref<1x128xf32, #tpu.memory_space<vmem>>, %arg8: memref<8x128xf32, #tpu.memory_space<vmem>>) attributes {dimension_semantics = [#tpu.dimension_semantics<parallel>], iteration_bounds = array<i64: 1>, scalar_prefetch = 0 : i64, scratch_operands = 0 : i64, tpu.core_type = #tpu.core_type<tc>, window_params = [{transform_indices = @transform_0, window_bounds = array<i64: 8, 14>}, {pipeline_mode = #tpu.pipeline_mode<synchronous>, transform_indices = @transform_1, window_bounds = array<i64: 14, 512>}, {pipeline_mode = #tpu.pipeline_mode<synchronous>, transform_indices = @transform_2, window_bounds = array<i64: 1, 512>}, {pipeline_mode = #tpu.pipeline_mode<synchronous>, transform_indices = @transform_3, window_bounds = array<i64: 512, 384>}, {pipeline_mode = #tpu.pipeline_mode<synchronous>, transform_indices = @transform_4, window_bounds = array<i64: 1, 384>}, {pipeline_mode = #tpu.pipeline_mode<synchronous>, transform_indices = @transform_5, window_bounds = array<i64: 384, 128>}, {pipeline_mode = #tpu.pipeline_mode<synchronous>, transform_indices = @transform_6, window_bounds = array<i64: 1, 128>}, {transform_indices = @transform_7, window_bounds = array<i64: 8, 128>}]} {
    %c0 = arith.constant 0 : index
    %c0_0 = arith.constant 0 : index
    %0 = vector.load %arg1[%c0, %c0_0] : memref<8x14xf32, #tpu.memory_space<vmem>>, vector<8x14xf32>
    %c0_1 = arith.constant 0 : index
    %c0_2 = arith.constant 0 : index
    %1 = vector.load %arg2[%c0_1, %c0_2] : memref<14x512xf32, #tpu.memory_space<vmem>>, vector<14x512xf32>
    %cst = arith.constant dense<0.000000e+00> : vector<8x512xf32>
    %2 = tpu.matmul %0, %1, %cst {dimension_numbers = #tpu.dot_dimension_numbers<[1], [0], [0], [1], [0, 0, 1, 1], [], []>, precision = #tpu.contract_precision<fp32>} : vector<8x14xf32>, vector<14x512xf32>, vector<8x512xf32> -> vector<8x512xf32>
    %c0_3 = arith.constant 0 : index
    %c0_4 = arith.constant 0 : index
    %3 = vector.load %arg3[%c0_3, %c0_4] : memref<1x512xf32, #tpu.memory_space<vmem>>, vector<1x512xf32>
    %4 = vector.broadcast %3 : vector<1x512xf32> to vector<8x512xf32>
    %5 = arith.addf %2, %4 : vector<8x512xf32>
    %cst_5 = arith.constant 0.000000e+00 : f32
    %6 = vector.broadcast %cst_5 : f32 to vector<8x512xf32>
    %7 = arith.maximumf %5, %6 : vector<8x512xf32>
    %c0_6 = arith.constant 0 : index
    %c0_7 = arith.constant 0 : index
    %8 = vector.load %arg4[%c0_6, %c0_7] : memref<512x384xf32, #tpu.memory_space<vmem>>, vector<512x384xf32>
    %cst_8 = arith.constant dense<0.000000e+00> : vector<8x384xf32>
    %9 = tpu.matmul %7, %8, %cst_8 {dimension_numbers = #tpu.dot_dimension_numbers<[1], [0], [0], [1], [0, 0, 1, 1], [], []>, precision = #tpu.contract_precision<fp32>} : vector<8x512xf32>, vector<512x384xf32>, vector<8x384xf32> -> vector<8x384xf32>
    %c0_9 = arith.constant 0 : index
    %c0_10 = arith.constant 0 : index
    %10 = vector.load %arg5[%c0_9, %c0_10] : memref<1x384xf32, #tpu.memory_space<vmem>>, vector<1x384xf32>
    %11 = vector.broadcast %10 : vector<1x384xf32> to vector<8x384xf32>
    %12 = arith.addf %9, %11 : vector<8x384xf32>
    %cst_11 = arith.constant 0.000000e+00 : f32
    %13 = vector.broadcast %cst_11 : f32 to vector<8x384xf32>
    %14 = arith.maximumf %12, %13 : vector<8x384xf32>
    %c0_12 = arith.constant 0 : index
    %c0_13 = arith.constant 0 : index
    %15 = vector.load %arg6[%c0_12, %c0_13] : memref<384x128xf32, #tpu.memory_space<vmem>>, vector<384x128xf32>
    %cst_14 = arith.constant dense<0.000000e+00> : vector<8x128xf32>
    %16 = tpu.matmul %14, %15, %cst_14 {dimension_numbers = #tpu.dot_dimension_numbers<[1], [0], [0], [1], [0, 0, 1, 1], [], []>, precision = #tpu.contract_precision<fp32>} : vector<8x384xf32>, vector<384x128xf32>, vector<8x128xf32> -> vector<8x128xf32>
    %c0_15 = arith.constant 0 : index
    %c0_16 = arith.constant 0 : index
    %17 = vector.load %arg7[%c0_15, %c0_16] : memref<1x128xf32, #tpu.memory_space<vmem>>, vector<1x128xf32>
    %18 = vector.broadcast %17 : vector<1x128xf32> to vector<8x128xf32>
    %19 = arith.addf %16, %18 : vector<8x128xf32>
    %c0_17 = arith.constant 0 : index
    %c0_18 = arith.constant 0 : index
    %20 = vector.load %arg8[%c0_17, %c0_18] : memref<8x128xf32, #tpu.memory_space<vmem>>, vector<8x128xf32>
    tpu.vector_store %arg8[%c0_17, %c0_18], %19 {strides = array<i32>} : memref<8x128xf32, #tpu.memory_space<vmem>>, vector<8x128xf32>,
    return
  }
  func.func @transform_0(%arg0: i32) -> (i32, i32) {
    %c0_i32 = arith.constant 0 : i32
    %c0_i32_0 = arith.constant 0 : i32
    return %arg0, %c0_i32 : i32, i32
  }
  func.func @transform_1(%arg0: i32) -> (i32, i32) {
    %c0_i32 = arith.constant 0 : i32
    %c0_i32_0 = arith.constant 0 : i32
    %c0_i32_1 = arith.constant 0 : i32
    return %c0_i32, %c0_i32_0 : i32, i32
  }
  func.func @transform_2(%arg0: i32) -> (i32, i32) {
    %c0_i32 = arith.constant 0 : i32
    %c0_i32_0 = arith.constant 0 : i32
    %c0_i32_1 = arith.constant 0 : i32
    return %c0_i32, %c0_i32_0 : i32, i32
  }
  func.func @transform_3(%arg0: i32) -> (i32, i32) {
    %c0_i32 = arith.constant 0 : i32
    %c0_i32_0 = arith.constant 0 : i32
    %c0_i32_1 = arith.constant 0 : i32
    return %c0_i32, %c0_i32_0 : i32, i32
  }
  func.func @transform_4(%arg0: i32) -> (i32, i32) {
    %c0_i32 = arith.constant 0 : i32
    %c0_i32_0 = arith.constant 0 : i32
    %c0_i32_1 = arith.constant 0 : i32
    return %c0_i32, %c0_i32_0 : i32, i32
  }
  func.func @transform_5(%arg0: i32) -> (i32, i32) {
    %c0_i32 = arith.constant 0 : i32
    %c0_i32_0 = arith.constant 0 : i32
    %c0_i32_1 = arith.constant 0 : i32
    return %c0_i32, %c0_i32_0 : i32, i32
  }
  func.func @transform_6(%arg0: i32) -> (i32, i32) {
    %c0_i32 = arith.constant 0 : i32
    %c0_i32_0 = arith.constant 0 : i32
    %c0_i32_1 = arith.constant 0 : i32
    return %c0_i32, %c0_i32_0 : i32, i32
  }
  func.func @transform_7(%arg0: i32) -> (i32, i32) {
    %c0_i32 = arith.constant 0 : i32
    %c0_i32_0 = arith.constant 0 : i32
    return %arg0, %c0_i32 : i32, i32
  }
}

</mosaic_0001>

<llo_original>
// kernel: tpu_custom_call.1
$region0: #{tpu_custom_call.1}
  #allocation0 [shape = 'u32[]', space=smem, size = 0x4, offset = 0x4, fixed_abs, tag = 'smem constant byte address 0x4 - core index']
  #allocation1 [shape = 'u32[144,128]{1,0:T(1,128)}', space=vmem, size = 0x12000, scoped, tag = 'internal scratch']
  %s0 = inlined_call_operand.hbm [shape: f32[8,14], index: 0, kind: input, shape index: {}]
  %s1 = inlined_call_operand.hbm [shape: f32[14,512], index: 1, kind: input, shape index: {}]
  %s2 = inlined_call_operand.vmem [shape: f32[1,512], index: 2, kind: input, shape index: {}]
  %s3 = inlined_call_operand.hbm [shape: f32[512,384], index: 3, kind: input, shape index: {}]
  %s4 = inlined_call_operand.vmem [shape: f32[1,384], index: 4, kind: input, shape index: {}]
  %s5 = inlined_call_operand.hbm [shape: f32[384,128], index: 5, kind: input, shape index: {}]
  %s6 = inlined_call_operand.vmem [shape: f32[1,128], index: 6, kind: input, shape index: {}]
  %s7 = inlined_call_operand.hbm [shape: f32[8,128], index: 7, kind: output, shape index: {}]
  %s8 = sld [smem:[#allocation0]]
  $region54: #{tpu_custom_call.1} parent=0
    _
  %s10 = ssub.s32 1, %s8
  %s11 = scalar_select 0, %s10, %s8
  $region1: #{tpu_custom_call.1} parent=0
    #allocation2 [shape = 'u8[4096]{0}', space=vmem, size = 0x1000, scoped, tag = 'input window, operand 0, single buffered']
    #allocation3 [shape = 's32[1]{0}', space=sflag, size = 0x4, scoped, tag = 'scoped memory for tpu_custom_call.1']
    #allocation4 [shape = 's32[1]{0}', space=sflag, size = 0x4, scoped, tag = 'scoped memory for tpu_custom_call.1']
    #allocation5 [shape = 'u8[32768]{0}', space=vmem, size = 0x8000, scoped, tag = 'input window, operand 1, single buffered']
    #allocation6 [shape = 's32[1]{0}', space=sflag, size = 0x4, scoped, tag = 'scoped memory for tpu_custom_call.1']
    #allocation7 [shape = 'u8[786432]{0}', space=vmem, size = 0xc0000, scoped, tag = 'input window, operand 3, single buffered']
    #allocation8 [shape = 'u8[196608]{0}', space=vmem, size = 0x30000, scoped, tag = 'input window, operand 5, single buffered']
    #allocation9 [shape = 's32[1]{0}', space=sflag, size = 0x4, scoped, tag = 'scoped memory for tpu_custom_call.1']
    #allocation10 [shape = 'u8[4096]{0}', space=vmem, size = 0x1000, scoped, tag = 'output window, operand 0, single buffered']
    %12 = vsyncpa [#allocation3], 0
    %13 = vsyncpa [#allocation6], 0
    %14 = vsyncpa [#allocation9], 0
    %15 = vsyncpa [#allocation4], 0
    // Predicated region
    $region2: #{tpu_custom_call.1} parent=1 // pred_check
      _
    $region3: #{tpu_custom_call.1} parent=1 // pred_check_branch
      %17 = sbr.rel (0) target = $region5
    $region4: #{tpu_custom_call.1} parent=1 // pred_region
      %s19 = ssub.s32 128, 128
      %20 = vsyncadd [#allocation3], %s19
      %s22 = sshll.u32 [#allocation2], 4
      %s23 = int_to_ptr.vmem [resolvable:$true] %s22
      %25 = dma.hbm_to_vmem [thread:$0]  %s0, 128, %s23, [#allocation3]
    $region5: #{tpu_custom_call.1} parent=1 // pred_fallthru
      _
    // Predicated region
    $region6: #{tpu_custom_call.1} parent=1 // pred_check
      _
    $region7: #{tpu_custom_call.1} parent=1 // pred_check_branch
      %27 = sbr.rel (0) target = $region9
    $region8: #{tpu_custom_call.1} parent=1 // pred_region
      %s29 = ssub.s32 1024, 1024
      %30 = vsyncadd [#allocation6], %s29
      %s31 = sshll.u32 [#allocation5], 4
      %s32 = int_to_ptr.vmem [resolvable:$true] %s31
      %37 = dma.hbm_to_vmem [thread:$0]  %s1, 1024, %s32, [#allocation6], 512, 512, 32
    $region9: #{tpu_custom_call.1} parent=1 // pred_fallthru
      _
    // Predicated region
    $region10: #{tpu_custom_call.1} parent=1 // pred_check
      _
    $region11: #{tpu_custom_call.1} parent=1 // pred_check_branch
      %39 = sbr.rel (0) target = $region13
    $region12: #{tpu_custom_call.1} parent=1 // pred_region
      _
    $region13: #{tpu_custom_call.1} parent=1 // pred_fallthru
      _
    // Predicated region
    $region14: #{tpu_custom_call.1} parent=1 // pred_check
      _
    $region15: #{tpu_custom_call.1} parent=1 // pred_check_branch
      %41 = sbr.rel (0) target = $region17
    $region16: #{tpu_custom_call.1} parent=1 // pred_region
      %s43 = ssub.s32 24576, 24576
      %44 = vsyncadd [#allocation6], %s43
      %s45 = sshll.u32 [#allocation7], 4
      %s46 = int_to_ptr.vmem [resolvable:$true] %s45
      %51 = dma.hbm_to_vmem [thread:$0]  %s3, 24576, %s46, [#allocation6], 384, 384, 24
    $region17: #{tpu_custom_call.1} parent=1 // pred_fallthru
      _
    // Predicated region
    $region18: #{tpu_custom_call.1} parent=1 // pred_check
      _
    $region19: #{tpu_custom_call.1} parent=1 // pred_check_branch
      %53 = sbr.rel (0) target = $region21
    $region20: #{tpu_custom_call.1} parent=1 // pred_region
      _
    $region21: #{tpu_custom_call.1} parent=1 // pred_fallthru
      _
    // Predicated region
    $region22: #{tpu_custom_call.1} parent=1 // pred_check
      _
    $region23: #{tpu_custom_call.1} parent=1 // pred_check_branch
      %55 = sbr.rel (0) target = $region25
    $region24: #{tpu_custom_call.1} parent=1 // pred_region
      %s57 = ssub.s32 6144, 6144
      %58 = vsyncadd [#allocation9], %s57
      %s59 = sshll.u32 [#allocation8], 4
      %s60 = int_to_ptr.vmem [resolvable:$true] %s59
      %65 = dma.hbm_to_vmem [thread:$0]  %s5, 6144, %s60, [#allocation9], 128, 128, 8
    $region25: #{tpu_custom_call.1} parent=1 // pred_fallthru
      _
    // Predicated region
    $region26: #{tpu_custom_call.1} parent=1 // pred_check
      _
    $region27: #{tpu_custom_call.1} parent=1 // pred_check_branch
      %67 = sbr.rel (0) target = $region29
    $region28: #{tpu_custom_call.1} parent=1 // pred_region
      _
    $region29: #{tpu_custom_call.1} parent=1 // pred_fallthru
      _
    // Predicated region
    $region30: #{tpu_custom_call.1} parent=1 // pred_check
      _
    $region31: #{tpu_custom_call.1} parent=1 // pred_check_branch
      %69 = sbr.rel (0) target = $region33
    $region32: #{tpu_custom_call.1} parent=1 // pred_region
      %70 = dma.done [#allocation3], 128
    $region33: #{tpu_custom_call.1} parent=1 // pred_fallthru
      _
    // Predicated region
    $region34: #{tpu_custom_call.1} parent=1 // pred_check
      _
    $region35: #{tpu_custom_call.1} parent=1 // pred_check_branch
      %72 = sbr.rel (0) target = $region37
    $region36: #{tpu_custom_call.1} parent=1 // pred_region
      %73 = dma.done [#allocation6], 1024
    $region37: #{tpu_custom_call.1} parent=1 // pred_fallthru
      _
    // Predicated region
    $region38: #{tpu_custom_call.1} parent=1 // pred_check
      _
    $region39: #{tpu_custom_call.1} parent=1 // pred_check_branch
      %75 = sbr.rel (0) target = $region41
    $region40: #{tpu_custom_call.1} parent=1 // pred_region
      %76 = dma.done [#allocation6], 24576
    $region41: #{tpu_custom_call.1} parent=1 // pred_fallthru
      _
    // Predicated region
    $region42: #{tpu_custom_call.1} parent=1 // pred_check
      _
    $region43: #{tpu_custom_call.1} parent=1 // pred_check_branch
      %78 = sbr.rel (0) target = $region45
    $region44: #{tpu_custom_call.1} parent=1 // pred_region
      %79 = dma.done [#allocation9], 6144
    $region45: #{tpu_custom_call.1} parent=1 // pred_fallthru
      _
    %v80 = vld [vmem:[#allocation2] sm:$0xff]
    %v81 = vld [vmem:[#allocation5] sm:$0xff]
    %v82 = vld [vmem:[#allocation5 + $0x8] sm:$0xff]
    %v83 = vld [vmem:[#allocation5 + $0x10] sm:$0xff]
    %v84 = vld [vmem:[#allocation5 + $0x18] sm:$0xff]
    %v85 = vld [vmem:[#allocation5 + $0x20] sm:$0x3f]
    %v86 = vld [vmem:[#allocation5 + $0x28] sm:$0x3f]
    %v87 = vld [vmem:[#allocation5 + $0x30] sm:$0x3f]
    %v88 = vld [vmem:[#allocation5 + $0x38] sm:$0x3f]
    %v89 = vld [vmem:[%s2] sm:$0xf]
    %v91 = vlaneseq
    %v92 = vshrl.u32 %v91, 7
    %v93 = vsub.s32 0, %v92
    %v94 = vrot.slane %v89, %v93
    %v95 = vlaneseq
    %v96 = vshrl.u32 %v95, 7
    %v97 = vsub.s32 1, %v96
    %v98 = vrot.slane %v89, %v97
    %v99 = vlaneseq
    %v100 = vshrl.u32 %v99, 7
    %v101 = vsub.s32 2, %v100
    %v102 = vrot.slane %v89, %v101
    %v103 = vlaneseq
    %v104 = vshrl.u32 %v103, 7
    %v105 = vsub.s32 3, %v104
    %v106 = vrot.slane %v89, %v105
    %vm111 = vcmask 113664
    %v113 = vsel %vm111, %v80, 0
    %vm115 = vcmask 1045504
    %v117 = vsel %vm115, %v85, 0
    %v120 = vsel %vm115, %v86, 0
    %v123 = vsel %vm115, %v87, 0
    %v126 = vsel %vm115, %v88, 0
    %v128 = vand.u32 %v82, 4294901760
    %129 = vmatprep.subr.mxu0 %v128
    %v130 = vand.u32 %v81, 4294901760
    %131 = vmatpush1.msra.mxu0 %v130
    %v132 = vand.u32 %v120, 4294901760
    %133 = vmatprep.subr.mxu0 %v132
    %v134 = vand.u32 %v117, 4294901760
    %135 = vmatpush1.msra.mxu0 %v134
    %136 = vmatprep.subr.mxu0 0.0
    %137 = vmatpush1.msra.mxu0 0.0
    %138 = vmatprep.subr.mxu0 0.0
    %139 = vmatpush1.msra.mxu0 0.0
    %140 = vmatprep.subr.mxu0 0.0
    %141 = vmatpush1.msra.mxu0 0.0
    %142 = vmatprep.subr.mxu0 0.0
    %143 = vmatpush1.msra.mxu0 0.0
    %144 = vmatprep.subr.mxu0 0.0
    %145 = vmatpush1.msra.mxu0 0.0
    %146 = vmatprep.subr.mxu0 0.0
    %147 = vmatpush1.msra.mxu0 0.0
    %148 = vmatprep.subr.mxu0 0.0
    %149 = vmatpush1.msra.mxu0 0.0
    %150 = vmatprep.subr.mxu0 0.0
    %151 = vmatpush1.msra.mxu0 0.0
    %152 = vmatprep.subr.mxu0 0.0
    %153 = vmatpush1.msra.mxu0 0.0
    %154 = vmatprep.subr.mxu0 0.0
    %155 = vmatpush1.msra.mxu0 0.0
    %156 = vmatprep.subr.mxu0 0.0
    %157 = vmatpush1.msra.mxu0 0.0
    %158 = vmatprep.subr.mxu0 0.0
    %159 = vmatpush1.msra.mxu0 0.0
    %160 = vmatprep.subr.mxu0 0.0
    %161 = vmatpush1.msra.mxu0 0.0
    %162 = vmatprep.subr.mxu0 0.0
    %163 = vmatpush1.msra.mxu0 0.0
    %164 = vmatprep.subr.mxu0 0.0
    %165 = vmatpush1.msra.mxu0 0.0
    %166 = vmatprep.subr.mxu0 0.0
    %167 = vmatpush1.msra.mxu0 0.0
    %168 = vmatprep.subr.mxu0 0.0
    %169 = vmatpush1.msra.mxu0 0.0
    %170 = vmatprep.subr.mxu0 0.0
    %171 = vmatpush1.msra.mxu0 0.0
    %172 = vmatprep.subr.mxu0 0.0
    %173 = vmatpush1.msra.mxu0 0.0
    %174 = vmatprep.subr.mxu0 0.0
    %175 = vmatpush1.msra.mxu0 0.0
    %176 = vmatprep.subr.mxu0 0.0
    %177 = vmatpush1.msra.mxu0 0.0
    %178 = vmatprep.subr.mxu0 0.0
    %179 = vmatpush1.msra.mxu0 0.0
    %180 = vmatprep.subr.mxu0 0.0
    %181 = vmatpush1.msra.mxu0 0.0
    %182 = vmatprep.subr.mxu0 0.0
    %183 = vmatpush1.msra.mxu0 0.0
    %184 = vmatprep.subr.mxu0 0.0
    %185 = vmatpush1.msra.mxu0 0.0
    %186 = vmatprep.subr.mxu0 0.0
    %187 = vmatpush1.msra.mxu0 0.0
    %188 = vmatprep.subr.mxu0 0.0
    %189 = vmatpush1.msra.mxu0 0.0
    %190 = vmatprep.subr.mxu0 0.0
    %191 = vmatpush1.msra.mxu0 0.0
    %192 = vmatprep.subr.mxu0 0.0
    %193 = vmatpush1.msra.mxu0 0.0
    %194 = vmatprep.subr.mxu0 0.0
    %195 = vmatpush1.msra.mxu0 0.0
    %196 = vmatprep.mubr.f32.mxu0 0.0
    %v197 = vand.u32 %v113, 4294901760
    %v198 = vsub.f32 %v113, %v197
    %v199 = vand.u32 %v198, 4294901760
    %v200 = vsub.f32 %v198, %v199
    %v201 = vand.u32 %v200, 4294901760
    %202 = vmatmul.mubr.f32.gmra.mrb[0].mxu0 %v201
    %v203 = vpop.f32.mrb[0].mxu0
    %v204 = vadd.f32 %v94, %v203
    %v205 = vpop.f32.mrb[0].mxu0
    %v206 = vadd.f32 %v98, %v205
    %207 = vdwg.mxu0
    %v208 = vand.u32 %v82, 4294901760
    %v209 = vsub.f32 %v82, %v208
    %v210 = vand.u32 %v209, 4294901760
    %v211 = vsub.f32 %v209, %v210
    %v212 = vand.u32 %v211, 4294901760
    %213 = vmatprep.subr.mxu0 %v212
    %v214 = vand.u32 %v81, 4294901760
    %v215 = vsub.f32 %v81, %v214
    %v216 = vand.u32 %v215, 4294901760
    %v217 = vsub.f32 %v215, %v216
    %v218 = vand.u32 %v217, 4294901760
    %219 = vmatpush1.msra.mxu0 %v218
    %v220 = vand.u32 %v120, 4294901760
    %v221 = vsub.f32 %v120, %v220
    %v222 = vand.u32 %v221, 4294901760
    %v223 = vsub.f32 %v221, %v222
    %v224 = vand.u32 %v223, 4294901760
    %225 = vmatprep.subr.mxu0 %v224
    %v226 = vand.u32 %v117, 4294901760
    %v227 = vsub.f32 %v117, %v226
    %v228 = vand.u32 %v227, 4294901760
    %v229 = vsub.f32 %v227, %v228
    %v230 = vand.u32 %v229, 4294901760
    %231 = vmatpush1.msra.mxu0 %v230
    %232 = vmatprep.subr.mxu0 0.0
    %233 = vmatpush1.msra.mxu0 0.0
    %234 = vmatprep.subr.mxu0 0.0
    %235 = vmatpush1.msra.mxu0 0.0
    %236 = vmatprep.subr.mxu0 0.0
    %237 = vmatpush1.msra.mxu0 0.0
    %238 = vmatprep.subr.mxu0 0.0
    %239 = vmatpush1.msra.mxu0 0.0
    %240 = vmatprep.subr.mxu0 0.0
    %241 = vmatpush1.msra.mxu0 0.0
    %242 = vmatprep.subr.mxu0 0.0
    %243 = vmatpush1.msra.mxu0 0.0
    %244 = vmatprep.subr.mxu0 0.0
    %245 = vmatpush1.msra.mxu0 0.0
    %246 = vmatprep.subr.mxu0 0.0
    %247 = vmatpush1.msra.mxu0 0.0
    %248 = vmatprep.subr.mxu0 0.0
    %249 = vmatpush1.msra.mxu0 0.0
    %250 = vmatprep.subr.mxu0 0.0
    %251 = vmatpush1.msra.mxu0 0.0
    %252 = vmatprep.subr.mxu0 0.0
    %253 = vmatpush1.msra.mxu0 0.0
    %254 = vmatprep.subr.mxu0 0.0
    %255 = vmatpush1.msra.mxu0 0.0
    %256 = vmatprep.subr.mxu0 0.0
    %257 = vmatpush1.msra.mxu0 0.0
    %258 = vmatprep.subr.mxu0 0.0
    %259 = vmatpush1.msra.mxu0 0.0
    %260 = vmatprep.subr.mxu0 0.0
    %261 = vmatpush1.msra.mxu0 0.0
    %262 = vmatprep.subr.mxu0 0.0
    %263 = vmatpush1.msra.mxu0 0.0
    %264 = vmatprep.subr.mxu0 0.0
    %265 = vmatpush1.msra.mxu0 0.0
    %266 = vmatprep.subr.mxu0 0.0
    %267 = vmatpush1.msra.mxu0 0.0
    %268 = vmatprep.subr.mxu0 0.0
    %269 = vmatpush1.msra.mxu0 0.0
    %270 = vmatprep.subr.mxu0 0.0
    %271 = vmatpush1.msra.mxu0 0.0
    %272 = vmatprep.subr.mxu0 0.0
    %273 = vmatpush1.msra.mxu0 0.0
    %274 = vmatprep.subr.mxu0 0.0
    %275 = vmatpush1.msra.mxu0 0.0
    %276 = vmatprep.subr.mxu0 0.0
    %277 = vmatpush1.msra.mxu0 0.0
    %278 = vmatprep.subr.mxu0 0.0
    %279 = vmatpush1.msra.mxu0 0.0
    %280 = vmatprep.subr.mxu0 0.0
    %281 = vmatpush1.msra.mxu0 0.0
    %282 = vmatprep.subr.mxu0 0.0
    %283 = vmatpush1.msra.mxu0 0.0
    %284 = vmatprep.subr.mxu0 0.0
    %285 = vmatpush1.msra.mxu0 0.0
    %286 = vmatprep.subr.mxu0 0.0
    %287 = vmatpush1.msra.mxu0 0.0
    %288 = vmatprep.subr.mxu0 0.0
    %289 = vmatpush1.msra.mxu0 0.0
    %290 = vmatprep.subr.mxu0 0.0
    %291 = vmatpush1.msra.mxu0 0.0
    %292 = vmatprep.mubr.f32.mxu0 0.0
    %v293 = vand.u32 %v113, 4294901760
    %294 = vmatmul.mubr.f32.gmra.mrb[0].mxu0 %v293
    %v295 = vpop.f32.mrb[0].mxu0
    %v296 = vadd.f32 %v204, %v295
    %v297 = vpop.f32.mrb[0].mxu0
    %v298 = vadd.f32 %v206, %v297
    %299 = vdwg.mxu0
    %v300 = vand.u32 %v82, 4294901760
    %v301 = vsub.f32 %v82, %v300
    %302 = vmatprep.subr.mxu0 %v301
    %v303 = vand.u32 %v81, 4294901760
    %v304 = vsub.f32 %v81, %v303
    %305 = vmatpush1.msra.mxu0 %v304
    %v306 = vand.u32 %v120, 4294901760
    %v307 = vsub.f32 %v120, %v306
    %308 = vmatprep.subr.mxu0 %v307
    %v309 = vand.u32 %v117, 4294901760
    %v310 = vsub.f32 %v117, %v309
    %311 = vmatpush1.msra.mxu0 %v310
    %312 = vmatprep.subr.mxu0 0.0
    %313 = vmatpush1.msra.mxu0 0.0
    %314 = vmatprep.subr.mxu0 0.0
    %315 = vmatpush1.msra.mxu0 0.0
    %316 = vmatprep.subr.mxu0 0.0
    %317 = vmatpush1.msra.mxu0 0.0
    %318 = vmatprep.subr.mxu0 0.0
    %319 = vmatpush1.msra.mxu0 0.0
    %320 = vmatprep.subr.mxu0 0.0
    %321 = vmatpush1.msra.mxu0 0.0
    %322 = vmatprep.subr.mxu0 0.0
    %323 = vmatpush1.msra.mxu0 0.0
    %324 = vmatprep.subr.mxu0 0.0
    %325 = vmatpush1.msra.mxu0 0.0
    %326 = vmatprep.subr.mxu0 0.0
    %327 = vmatpush1.msra.mxu0 0.0
    %328 = vmatprep.subr.mxu0 0.0
    %329 = vmatpush1.msra.mxu0 0.0
    %330 = vmatprep.subr.mxu0 0.0
    %331 = vmatpush1.msra.mxu0 0.0
    %332 = vmatprep.subr.mxu0 0.0
    %333 = vmatpush1.msra.mxu0 0.0
    %334 = vmatprep.subr.mxu0 0.0
    %335 = vmatpush1.msra.mxu0 0.0
    %336 = vmatprep.subr.mxu0 0.0
    %337 = vmatpush1.msra.mxu0 0.0
    %338 = vmatprep.subr.mxu0 0.0
    %339 = vmatpush1.msra.mxu0 0.0
    %340 = vmatprep.subr.mxu0 0.0
    %341 = vmatpush1.msra.mxu0 0.0
    %342 = vmatprep.subr.mxu0 0.0
    %343 = vmatpush1.msra.mxu0 0.0
    %344 = vmatprep.subr.mxu0 0.0
    %345 = vmatpush1.msra.mxu0 0.0
    %346 = vmatprep.subr.mxu0 0.0
    %347 = vmatpush1.msra.mxu0 0.0
    %348 = vmatprep.subr.mxu0 0.0
    %349 = vmatpush1.msra.mxu0 0.0
    %350 = vmatprep.subr.mxu0 0.0
    %351 = vmatpush1.msra.mxu0 0.0
    %352 = vmatprep.subr.mxu0 0.0
    %353 = vmatpush1.msra.mxu0 0.0
    %354 = vmatprep.subr.mxu0 0.0
    %355 = vmatpush1.msra.mxu0 0.0
    %356 = vmatprep.subr.mxu0 0.0
    %357 = vmatpush1.msra.mxu0 0.0
    %358 = vmatprep.subr.mxu0 0.0
    %359 = vmatpush1.msra.mxu0 0.0
    %360 = vmatprep.subr.mxu0 0.0
    %361 = vmatpush1.msra.mxu0 0.0
    %362 = vmatprep.subr.mxu0 0.0
    %363 = vmatpush1.msra.mxu0 0.0
    %364 = vmatprep.subr.mxu0 0.0
    %365 = vmatpush1.msra.mxu0 0.0
    %366 = vmatprep.subr.mxu0 0.0
    %367 = vmatpush1.msra.mxu0 0.0
    %368 = vmatprep.subr.mxu0 0.0
    %369 = vmatpush1.msra.mxu0 0.0
    %370 = vmatprep.subr.mxu0 0.0
    %371 = vmatpush1.msra.mxu0 0.0
    %372 = vmatprep.mubr.f32.mxu0 0.0
    %v373 = vand.u32 %v113, 4294901760
    %v374 = vsub.f32 %v113, %v373
    %375 = vmatmul.mubr.f32.gmra.mrb[0].mxu0 %v374
    %v376 = vpop.f32.mrb[0].mxu0
    %v377 = vadd.f32 %v296, %v376
    %v378 = vpop.f32.mrb[0].mxu0
    %v379 = vadd.f32 %v298, %v378
    %380 = vdwg.mxu0
    %v381 = vand.u32 %v82, 4294901760
    %382 = vmatprep.subr.mxu0 %v381
    %v383 = vand.u32 %v81, 4294901760
    %384 = vmatpush1.msra.mxu0 %v383
    %v385 = vand.u32 %v120, 4294901760
    %386 = vmatprep.subr.mxu0 %v385
    %v387 = vand.u32 %v117, 4294901760
    %388 = vmatpush1.msra.mxu0 %v387
    %389 = vmatprep.subr.mxu0 0.0
    %390 = vmatpush1.msra.mxu0 0.0
    %391 = vmatprep.subr.mxu0 0.0
    %392 = vmatpush1.msra.mxu0 0.0
    %393 = vmatprep.subr.mxu0 0.0
    %394 = vmatpush1.msra.mxu0 0.0
    %395 = vmatprep.subr.mxu0 0.0
    %396 = vmatpush1.msra.mxu0 0.0
    %397 = vmatprep.subr.mxu0 0.0
    %398 = vmatpush1.msra.mxu0 0.0
    %399 = vmatprep.subr.mxu0 0.0
    %400 = vmatpush1.msra.mxu0 0.0
    %401 = vmatprep.subr.mxu0 0.0
    %402 = vmatpush1.msra.mxu0 0.0
    %403 = vmatprep.subr.mxu0 0.0
    %404 = vmatpush1.msra.mxu0 0.0
    %405 = vmatprep.subr.mxu0 0.0
    %406 = vmatpush1.msra.mxu0 0.0
    %407 = vmatprep.subr.mxu0 0.0
    %408 = vmatpush1.msra.mxu0 0.0
    %409 = vmatprep.subr.mxu0 0.0
    %410 = vmatpush1.msra.mxu0 0.0
    %411 = vmatprep.subr.mxu0 0.0
    %412 = vmatpush1.msra.mxu0 0.0
    %413 = vmatprep.subr.mxu0 0.0
    %414 = vmatpush1.msra.mxu0 0.0
    %415 = vmatprep.subr.mxu0 0.0
    %416 = vmatpush1.msra.mxu0 0.0
    %417 = vmatprep.subr.mxu0 0.0
    %418 = vmatpush1.msra.mxu0 0.0
    %419 = vmatprep.subr.mxu0 0.0
    %420 = vmatpush1.msra.mxu0 0.0
    %421 = vmatprep.subr.mxu0 0.0
    %422 = vmatpush1.msra.mxu0 0.0
    %423 = vmatprep.subr.mxu0 0.0
    %424 = vmatpush1.msra.mxu0 0.0
    %425 = vmatprep.subr.mxu0 0.0
    %426 = vmatpush1.msra.mxu0 0.0
    %427 = vmatprep.subr.mxu0 0.0
    %428 = vmatpush1.msra.mxu0 0.0
    %429 = vmatprep.subr.mxu0 0.0
    %430 = vmatpush1.msra.mxu0 0.0
    %431 = vmatprep.subr.mxu0 0.0
    %432 = vmatpush1.msra.mxu0 0.0
    %433 = vmatprep.subr.mxu0 0.0
    %434 = vmatpush1.msra.mxu0 0.0
    %435 = vmatprep.subr.mxu0 0.0
    %436 = vmatpush1.msra.mxu0 0.0
    %437 = vmatprep.subr.mxu0 0.0
    %438 = vmatpush1.msra.mxu0 0.0
    %439 = vmatprep.subr.mxu0 0.0
    %440 = vmatpush1.msra.mxu0 0.0
    %441 = vmatprep.subr.mxu0 0.0
    %442 = vmatpush1.msra.mxu0 0.0
    %443 = vmatprep.subr.mxu0 0.0
    %444 = vmatpush1.msra.mxu0 0.0
    %445 = vmatprep.subr.mxu0 0.0
    %446 = vmatpush1.msra.mxu0 0.0
    %447 = vmatprep.subr.mxu0 0.0
    %448 = vmatpush1.msra.mxu0 0.0
    %449 = vmatprep.mubr.f32.mxu0 0.0
    %v450 = vand.u32 %v113, 4294901760
    %v451 = vsub.f32 %v113, %v450
    %v452 = vand.u32 %v451, 4294901760
    %453 = vmatmul.mubr.f32.gmra.mrb[0].mxu0 %v452
    %v454 = vpop.f32.mrb[0].mxu0
    %v455 = vadd.f32 %v377, %v454
    %v456 = vpop.f32.mrb[0].mxu0
    %v457 = vadd.f32 %v379, %v456
    %458 = vdwg.mxu0
    %v459 = vand.u32 %v82, 4294901760
    %v460 = vsub.f32 %v82, %v459
    %v461 = vand.u32 %v460, 4294901760
    %462 = vmatprep.subr.mxu0 %v461
    %v463 = vand.u32 %v81, 4294901760
    %v464 = vsub.f32 %v81, %v463
    %v465 = vand.u32 %v464, 4294901760
    %466 = vmatpush1.msra.mxu0 %v465
    %v467 = vand.u32 %v120, 4294901760
    %v468 = vsub.f32 %v120, %v467
    %v469 = vand.u32 %v468, 4294901760
    %470 = vmatprep.subr.mxu0 %v469
    %v471 = vand.u32 %v117, 4294901760
    %v472 = vsub.f32 %v117, %v471
    %v473 = vand.u32 %v472, 4294901760
    %474 = vmatpush1.msra.mxu0 %v473
    %475 = vmatprep.subr.mxu0 0.0
    %476 = vmatpush1.msra.mxu0 0.0
    %477 = vmatprep.subr.mxu0 0.0
    %478 = vmatpush1.msra.mxu0 0.0
    %479 = vmatprep.subr.mxu0 0.0
    %480 = vmatpush1.msra.mxu0 0.0
    %481 = vmatprep.subr.mxu0 0.0
    %482 = vmatpush1.msra.mxu0 0.0
    %483 = vmatprep.subr.mxu0 0.0
    %484 = vmatpush1.msra.mxu0 0.0
    %485 = vmatprep.subr.mxu0 0.0
    %486 = vmatpush1.msra.mxu0 0.0
    %487 = vmatprep.subr.mxu0 0.0
    %488 = vmatpush1.msra.mxu0 0.0
    %489 = vmatprep.subr.mxu0 0.0
    %490 = vmatpush1.msra.mxu0 0.0
    %491 = vmatprep.subr.mxu0 0.0
    %492 = vmatpush1.msra.mxu0 0.0
    %493 = vmatprep.subr.mxu0 0.0
    %494 = vmatpush1.msra.mxu0 0.0
    %495 = vmatprep.subr.mxu0 0.0
    %496 = vmatpush1.msra.mxu0 0.0
    %497 = vmatprep.subr.mxu0 0.0
    %498 = vmatpush1.msra.mxu0 0.0
    %499 = vmatprep.subr.mxu0 0.0
    %500 = vmatpush1.msra.mxu0 0.0
    %501 = vmatprep.subr.mxu0 0.0
    %502 = vmatpush1.msra.mxu0 0.0
    %503 = vmatprep.subr.mxu0 0.0
    %504 = vmatpush1.msra.mxu0 0.0
    %505 = vmatprep.subr.mxu0 0.0
    %506 = vmatpush1.msra.mxu0 0.0
    %507 = vmatprep.subr.mxu0 0.0
    %508 = vmatpush1.msra.mxu0 0.0
    %509 = vmatprep.subr.mxu0 0.0
    %510 = vmatpush1.msra.mxu0 0.0
    %511 = vmatprep.subr.mxu0 0.0
    %512 = vmatpush1.msra.mxu0 0.0
    %513 = vmatprep.subr.mxu0 0.0
    %514 = vmatpush1.msra.mxu0 0.0
    %515 = vmatprep.subr.mxu0 0.0
    %516 = vmatpush1.msra.mxu0 0.0
    %517 = vmatprep.subr.mxu0 0.0
    %518 = vmatpush1.msra.mxu0 0.0
    %519 = vmatprep.subr.mxu0 0.0
    %520 = vmatpush1.msra.mxu0 0.0
    %521 = vmatprep.subr.mxu0 0.0
    %522 = vmatpush1.msra.mxu0 0.0
    %523 = vmatprep.subr.mxu0 0.0
    %524 = vmatpush1.msra.mxu0 0.0
    %525 = vmatprep.subr.mxu0 0.0
    %526 = vmatpush1.msra.mxu0 0.0
    %527 = vmatprep.subr.mxu0 0.0
    %528 = vmatpush1.msra.mxu0 0.0
    %529 = vmatprep.subr.mxu0 0.0
    %530 = vmatpush1.msra.mxu0 0.0
    %531 = vmatprep.subr.mxu0 0.0
    %532 = vmatpush1.msra.mxu0 0.0
    %533 = vmatprep.subr.mxu0 0.0
    %534 = vmatpush1.msra.mxu0 0.0
    %535 = vmatprep.mubr.f32.mxu0 0.0
    %v536 = vand.u32 %v113, 4294901760
    %537 = vmatmul.mubr.f32.gmra.mrb[0].mxu0 %v536
    %v538 = vpop.f32.mrb[0].mxu0
    %v539 = vadd.f32 %v455, %v538
    %v540 = vpop.f32.mrb[0].mxu0
    %v541 = vadd.f32 %v457, %v540
    %542 = vdwg.mxu0
    %v543 = vand.u32 %v82, 4294901760
    %544 = vmatprep.subr.mxu0 %v543
    %v545 = vand.u32 %v81, 4294901760
    %546 = vmatpush1.msra.mxu0 %v545
    %v547 = vand.u32 %v120, 4294901760
    %548 = vmatprep.subr.mxu0 %v547
    %v549 = vand.u32 %v117, 4294901760
    %550 = vmatpush1.msra.mxu0 %v549
    %551 = vmatprep.subr.mxu0 0.0
    %552 = vmatpush1.msra.mxu0 0.0
    %553 = vmatprep.subr.mxu0 0.0
    %554 = vmatpush1.msra.mxu0 0.0
    %555 = vmatprep.subr.mxu0 0.0
    %556 = vmatpush1.msra.mxu0 0.0
    %557 = vmatprep.subr.mxu0 0.0
    %558 = vmatpush1.msra.mxu0 0.0
    %559 = vmatprep.subr.mxu0 0.0
    %560 = vmatpush1.msra.mxu0 0.0
    %561 = vmatprep.subr.mxu0 0.0
    %562 = vmatpush1.msra.mxu0 0.0
    %563 = vmatprep.subr.mxu0 0.0
    %564 = vmatpush1.msra.mxu0 0.0
    %565 = vmatprep.subr.mxu0 0.0
    %566 = vmatpush1.msra.mxu0 0.0
    %567 = vmatprep.subr.mxu0 0.0
    %568 = vmatpush1.msra.mxu0 0.0
    %569 = vmatprep.subr.mxu0 0.0
    %570 = vmatpush1.msra.mxu0 0.0
    %571 = vmatprep.subr.mxu0 0.0
    %572 = vmatpush1.msra.mxu0 0.0
    %573 = vmatprep.subr.mxu0 0.0
    %574 = vmatpush1.msra.mxu0 0.0
    %575 = vmatprep.subr.mxu0 0.0
    %576 = vmatpush1.msra.mxu0 0.0
    %577 = vmatprep.subr.mxu0 0.0
    %578 = vmatpush1.msra.mxu0 0.0
    %579 = vmatprep.subr.mxu0 0.0
    %580 = vmatpush1.msra.mxu0 0.0
    %581 = vmatprep.subr.mxu0 0.0
    %582 = vmatpush1.msra.mxu0 0.0
    %583 = vmatprep.subr.mxu0 0.0
    %584 = vmatpush1.msra.mxu0 0.0
    %585 = vmatprep.subr.mxu0 0.0
    %586 = vmatpush1.msra.mxu0 0.0
    %587 = vmatprep.subr.mxu0 0.0
    %588 = vmatpush1.msra.mxu0 0.0
    %589 = vmatprep.subr.mxu0 0.0
    %590 = vmatpush1.msra.mxu0 0.0
    %591 = vmatprep.subr.mxu0 0.0
    %592 = vmatpush1.msra.mxu0 0.0
    %593 = vmatprep.subr.mxu0 0.0
    %594 = vmatpush1.msra.mxu0 0.0
    %595 = vmatprep.subr.mxu0 0.0
    %596 = vmatpush1.msra.mxu0 0.0
    %597 = vmatprep.subr.mxu0 0.0
    %598 = vmatpush1.msra.mxu0 0.0
    %599 = vmatprep.subr.mxu0 0.0
    %600 = vmatpush1.msra.mxu0 0.0
    %601 = vmatprep.subr.mxu0 0.0
    %602 = vmatpush1.msra.mxu0 0.0
    %603 = vmatprep.subr.mxu0 0.0
    %604 = vmatpush1.msra.mxu0 0.0
    %605 = vmatprep.subr.mxu0 0.0
    %606 = vmatpush1.msra.mxu0 0.0
    %607 = vmatprep.subr.mxu0 0.0
    %608 = vmatpush1.msra.mxu0 0.0
    %609 = vmatprep.subr.mxu0 0.0
    %610 = vmatpush1.msra.mxu0 0.0
    %611 = vmatprep.mubr.f32.mxu0 0.0
    %v612 = vand.u32 %v113, 4294901760
    %613 = vmatmul.mubr.f32.gmra.mrb[0].mxu0 %v612
    %v614 = vpop.f32.mrb[0].mxu0
    %v615 = vadd.f32 %v539, %v614
    %v616 = vpop.f32.mrb[0].mxu0
    %v617 = vadd.f32 %v541, %v616
    %618 = vdwg.mxu0
    %v619 = vand.u32 %v84, 4294901760
    %620 = vmatprep.subr.mxu0 %v619
    %v621 = vand.u32 %v83, 4294901760
    %622 = vmatpush1.msra.mxu0 %v621
    %v623 = vand.u32 %v126, 4294901760
    %624 = vmatprep.subr.mxu0 %v623
    %v625 = vand.u32 %v123, 4294901760
    %626 = vmatpush1.msra.mxu0 %v625
    %627 = vmatprep.subr.mxu0 0.0
    %628 = vmatpush1.msra.mxu0 0.0
    %629 = vmatprep.subr.mxu0 0.0
    %630 = vmatpush1.msra.mxu0 0.0
    %631 = vmatprep.subr.mxu0 0.0
    %632 = vmatpush1.msra.mxu0 0.0
    %633 = vmatprep.subr.mxu0 0.0
    %634 = vmatpush1.msra.mxu0 0.0
    %635 = vmatprep.subr.mxu0 0.0
    %636 = vmatpush1.msra.mxu0 0.0
    %637 = vmatprep.subr.mxu0 0.0
    %638 = vmatpush1.msra.mxu0 0.0
    %639 = vmatprep.subr.mxu0 0.0
    %640 = vmatpush1.msra.mxu0 0.0
    %641 = vmatprep.subr.mxu0 0.0
    %642 = vmatpush1.msra.mxu0 0.0
    %643 = vmatprep.subr.mxu0 0.0
    %644 = vmatpush1.msra.mxu0 0.0
    %645 = vmatprep.subr.mxu0 0.0
    %646 = vmatpush1.msra.mxu0 0.0
    %647 = vmatprep.subr.mxu0 0.0
    %648 = vmatpush1.msra.mxu0 0.0
    %649 = vmatprep.subr.mxu0 0.0
    %650 = vmatpush1.msra.mxu0 0.0
    %651 = vmatprep.subr.mxu0 0.0
    %652 = vmatpush1.msra.mxu0 0.0
    %653 = vmatprep.subr.mxu0 0.0
    %654 = vmatpush1.msra.mxu0 0.0
    %655 = vmatprep.subr.mxu0 0.0
    %656 = vmatpush1.msra.mxu0 0.0
    %657 = vmatprep.subr.mxu0 0.0
    %658 = vmatpush1.msra.mxu0 0.0
    %659 = vmatprep.subr.mxu0 0.0
    %660 = vmatpush1.msra.mxu0 0.0
    %661 = vmatprep.subr.mxu0 0.0
    %662 = vmatpush1.msra.mxu0 0.0
    %663 = vmatprep.subr.mxu0 0.0
    %664 = vmatpush1.msra.mxu0 0.0
    %665 = vmatprep.subr.mxu0 0.0
    %666 = vmatpush1.msra.mxu0 0.0
    %667 = vmatprep.subr.mxu0 0.0
    %668 = vmatpush1.msra.mxu0 0.0
    %669 = vmatprep.subr.mxu0 0.0
    %670 = vmatpush1.msra.mxu0 0.0
    %671 = vmatprep.subr.mxu0 0.0
    %672 = vmatpush1.msra.mxu0 0.0
    %673 = vmatprep.subr.mxu0 0.0
    %674 = vmatpush1.msra.mxu0 0.0
    %675 = vmatprep.subr.mxu0 0.0
    %676 = vmatpush1.msra.mxu0 0.0
    %677 = vmatprep.subr.mxu0 0.0
    %678 = vmatpush1.msra.mxu0 0.0
    %679 = vmatprep.subr.mxu0 0.0
    %680 = vmatpush1.msra.mxu0 0.0
    %681 = vmatprep.subr.mxu0 0.0
    %682 = vmatpush1.msra.mxu0 0.0
    %683 = vmatprep.subr.mxu0 0.0
    %684 = vmatpush1.msra.mxu0 0.0
    %685 = vmatprep.subr.mxu0 0.0
    %686 = vmatpush1.msra.mxu0 0.0
    %687 = vmatprep.mubr.f32.mxu0 0.0
    %v688 = vand.u32 %v113, 4294901760
    %v689 = vsub.f32 %v113, %v688
    %v690 = vand.u32 %v689, 4294901760
    %v691 = vsub.f32 %v689, %v690
    %v692 = vand.u32 %v691, 4294901760
    %693 = vmatmul.mubr.f32.gmra.mrb[0].mxu0 %v692
    %v694 = vpop.f32.mrb[0].mxu0
    %v695 = vadd.f32 %v102, %v694
    %v696 = vpop.f32.mrb[0].mxu0
    %v697 = vadd.f32 %v106, %v696
    %698 = vdwg.mxu0
    %v699 = vand.u32 %v84, 4294901760
    %v700 = vsub.f32 %v84, %v699
    %v701 = vand.u32 %v700, 4294901760
    %v702 = vsub.f32 %v700, %v701
    %v703 = vand.u32 %v702, 4294901760
    %704 = vmatprep.subr.mxu0 %v703
    %v705 = vand.u32 %v83, 4294901760
    %v706 = vsub.f32 %v83, %v705
    %v707 = vand.u32 %v706, 4294901760
    %v708 = vsub.f32 %v706, %v707
    %v709 = vand.u32 %v708, 4294901760
    %710 = vmatpush1.msra.mxu0 %v709
    %v711 = vand.u32 %v126, 4294901760
    %v712 = vsub.f32 %v126, %v711
    %v713 = vand.u32 %v712, 4294901760
    %v714 = vsub.f32 %v712, %v713
    %v715 = vand.u32 %v714, 4294901760
    %716 = vmatprep.subr.mxu0 %v715
    %v717 = vand.u32 %v123, 4294901760
    %v718 = vsub.f32 %v123, %v717
    %v719 = vand.u32 %v718, 4294901760
    %v720 = vsub.f32 %v718, %v719
    %v721 = vand.u32 %v720, 4294901760
    %722 = vmatpush1.msra.mxu0 %v721
    %723 = vmatprep.subr.mxu0 0.0
    %724 = vmatpush1.msra.mxu0 0.0
    %725 = vmatprep.subr.mxu0 0.0
    %726 = vmatpush1.msra.mxu0 0.0
    %727 = vmatprep.subr.mxu0 0.0
    %728 = vmatpush1.msra.mxu0 0.0
    %729 = vmatprep.subr.mxu0 0.0
    %730 = vmatpush1.msra.mxu0 0.0
    %731 = vmatprep.subr.mxu0 0.0
    %732 = vmatpush1.msra.mxu0 0.0
    %733 = vmatprep.subr.mxu0 0.0
    %734 = vmatpush1.msra.mxu0 0.0
    %735 = vmatprep.subr.mxu0 0.0
    %736 = vmatpush1.msra.mxu0 0.0
    %737 = vmatprep.subr.mxu0 0.0
    %738 = vmatpush1.msra.mxu0 0.0
    %739 = vmatprep.subr.mxu0 0.0
    %740 = vmatpush1.msra.mxu0 0.0
    %741 = vmatprep.subr.mxu0 0.0
    %742 = vmatpush1.msra.mxu0 0.0
    %743 = vmatprep.subr.mxu0 0.0
    %744 = vmatpush1.msra.mxu0 0.0
    %745 = vmatprep.subr.mxu0 0.0
    %746 = vmatpush1.msra.mxu0 0.0
    %747 = vmatprep.subr.mxu0 0.0
    %748 = vmatpush1.msra.mxu0 0.0
    %749 = vmatprep.subr.mxu0 0.0
    %750 = vmatpush1.msra.mxu0 0.0
    %751 = vmatprep.subr.mxu0 0.0
    %752 = vmatpush1.msra.mxu0 0.0
    %753 = vmatprep.subr.mxu0 0.0
    %754 = vmatpush1.msra.mxu0 0.0
    %755 = vmatprep.subr.mxu0 0.0
    %756 = vmatpush1.msra.mxu0 0.0
    %757 = vmatprep.subr.mxu0 0.0
    %758 = vmatpush1.msra.mxu0 0.0
    %759 = vmatprep.subr.mxu0 0.0
    %760 = vmatpush1.msra.mxu0 0.0
    %761 = vmatprep.subr.mxu0 0.0
    %762 = vmatpush1.msra.mxu0 0.0
    %763 = vmatprep.subr.mxu0 0.0
    %764 = vmatpush1.msra.mxu0 0.0
    %765 = vmatprep.subr.mxu0 0.0
    %766 = vmatpush1.msra.mxu0 0.0
    %767 = vmatprep.subr.mxu0 0.0
    %768 = vmatpush1.msra.mxu0 0.0
    %769 = vmatprep.subr.mxu0 0.0
    %770 = vmatpush1.msra.mxu0 0.0
    %771 = vmatprep.subr.mxu0 0.0
    %772 = vmatpush1.msra.mxu0 0.0
    %773 = vmatprep.subr.mxu0 0.0
    %774 = vmatpush1.msra.mxu0 0.0
    %775 = vmatprep.subr.mxu0 0.0
    %776 = vmatpush1.msra.mxu0 0.0
    %777 = vmatprep.subr.mxu0 0.0
    %778 = vmatpush1.msra.mxu0 0.0
    %779 = vmatprep.subr.mxu0 0.0
    %780 = vmatpush1.msra.mxu0 0.0
    %781 = vmatprep.subr.mxu0 0.0
    %782 = vmatpush1.msra.mxu0 0.0
    %783 = vmatprep.mubr.f32.mxu0 0.0
    %v784 = vand.u32 %v113, 4294901760
    %785 = vmatmul.mubr.f32.gmra.mrb[0].mxu0 %v784
    %v786 = vpop.f32.mrb[0].mxu0
    %v787 = vadd.f32 %v695, %v786
    %v788 = vpop.f32.mrb[0].mxu0
    %v789 = vadd.f32 %v697, %v788
    %790 = vdwg.mxu0
    %v791 = vand.u32 %v84, 4294901760
    %v792 = vsub.f32 %v84, %v791
    %793 = vmatprep.subr.mxu0 %v792
    %v794 = vand.u32 %v83, 4294901760
    %v795 = vsub.f32 %v83, %v794
    %796 = vmatpush1.msra.mxu0 %v795
    %v797 = vand.u32 %v126, 4294901760
    %v798 = vsub.f32 %v126, %v797
    %799 = vmatprep.subr.mxu0 %v798
    %v800 = vand.u32 %v123, 4294901760
    %v801 = vsub.f32 %v123, %v800
    %802 = vmatpush1.msra.mxu0 %v801
    %803 = vmatprep.subr.mxu0 0.0
    %804 = vmatpush1.msra.mxu0 0.0
    %805 = vmatprep.subr.mxu0 0.0
    %806 = vmatpush1.msra.mxu0 0.0
    %807 = vmatprep.subr.mxu0 0.0
    %808 = vmatpush1.msra.mxu0 0.0
    %809 = vmatprep.subr.mxu0 0.0
    %810 = vmatpush1.msra.mxu0 0.0
    %811 = vmatprep.subr.mxu0 0.0
    %812 = vmatpush1.msra.mxu0 0.0
    %813 = vmatprep.subr.mxu0 0.0
    %814 = vmatpush1.msra.mxu0 0.0
    %815 = vmatprep.subr.mxu0 0.0
    %816 = vmatpush1.msra.mxu0 0.0
    %817 = vmatprep.subr.mxu0 0.0
    %818 = vmatpush1.msra.mxu0 0.0
    %819 = vmatprep.subr.mxu0 0.0
    %820 = vmatpush1.msra.mxu0 0.0
    %821 = vmatprep.subr.mxu0 0.0
    %822 = vmatpush1.msra.mxu0 0.0
    %823 = vmatprep.subr.mxu0 0.0
    %824 = vmatpush1.msra.mxu0 0.0
    %825 = vmatprep.subr.mxu0 0.0
    %826 = vmatpush1.msra.mxu0 0.0
    %827 = vmatprep.subr.mxu0 0.0
    %828 = vmatpush1.msra.mxu0 0.0
    %829 = vmatprep.subr.mxu0 0.0
    %830 = vmatpush1.msra.mxu0 0.0
    %831 = vmatprep.subr.mxu0 0.0
    %832 = vmatpush1.msra.mxu0 0.0
    %833 = vmatprep.subr.mxu0 0.0
    %834 = vmatpush1.msra.mxu0 0.0
    %835 = vmatprep.subr.mxu0 0.0
    %836 = vmatpush1.msra.mxu0 0.0
    %837 = vmatprep.subr.mxu0 0.0
    %838 = vmatpush1.msra.mxu0 0.0
    %839 = vmatprep.subr.mxu0 0.0
    %840 = vmatpush1.msra.mxu0 0.0
    %841 = vmatprep.subr.mxu0 0.0
    %842 = vmatpush1.msra.mxu0 0.0
    %843 = vmatprep.subr.mxu0 0.0
    %844 = vmatpush1.msra.mxu0 0.0
    %845 = vmatprep.subr.mxu0 0.0
    %846 = vmatpush1.msra.mxu0 0.0
    %847 = vmatprep.subr.mxu0 0.0
    %848 = vmatpush1.msra.mxu0 0.0
    %849 = vmatprep.subr.mxu0 0.0
    %850 = vmatpush1.msra.mxu0 0.0
    %851 = vmatprep.subr.mxu0 0.0
    %852 = vmatpush1.msra.mxu0 0.0
    %853 = vmatprep.subr.mxu0 0.0
    %854 = vmatpush1.msra.mxu0 0.0
    %855 = vmatprep.subr.mxu0 0.0
    %856 = vmatpush1.msra.mxu0 0.0
    %857 = vmatprep.subr.mxu0 0.0
    %858 = vmatpush1.msra.mxu0 0.0
    %859 = vmatprep.subr.mxu0 0.0
    %860 = vmatpush1.msra.mxu0 0.0
    %861 = vmatprep.subr.mxu0 0.0
    %862 = vmatpush1.msra.mxu0 0.0
    %863 = vmatprep.mubr.f32.mxu0 0.0
    %v864 = vand.u32 %v113, 4294901760
    %v865 = vsub.f32 %v113, %v864
    %866 = vmatmul.mubr.f32.gmra.mrb[0].mxu0 %v865
    %v867 = vpop.f32.mrb[0].mxu0
    %v868 = vadd.f32 %v787, %v867
    %v869 = vpop.f32.mrb[0].mxu0
    %v870 = vadd.f32 %v789, %v869
    %871 = vdwg.mxu0
    %v872 = vand.u32 %v84, 4294901760
    %873 = vmatprep.subr.mxu0 %v872
    %v874 = vand.u32 %v83, 4294901760
    %875 = vmatpush1.msra.mxu0 %v874
    %v876 = vand.u32 %v126, 4294901760
    %877 = vmatprep.subr.mxu0 %v876
    %v878 = vand.u32 %v123, 4294901760
    %879 = vmatpush1.msra.mxu0 %v878
    %880 = vmatprep.subr.mxu0 0.0
    %881 = vmatpush1.msra.mxu0 0.0
    %882 = vmatprep.subr.mxu0 0.0
    %883 = vmatpush1.msra.mxu0 0.0
    %884 = vmatprep.subr.mxu0 0.0
    %885 = vmatpush1.msra.mxu0 0.0
    %886 = vmatprep.subr.mxu0 0.0
    %887 = vmatpush1.msra.mxu0 0.0
    %888 = vmatprep.subr.mxu0 0.0
    %889 = vmatpush1.msra.mxu0 0.0
    %890 = vmatprep.subr.mxu0 0.0
    %891 = vmatpush1.msra.mxu0 0.0
    %892 = vmatprep.subr.mxu0 0.0
    %893 = vmatpush1.msra.mxu0 0.0
    %894 = vmatprep.subr.mxu0 0.0
    %895 = vmatpush1.msra.mxu0 0.0
    %896 = vmatprep.subr.mxu0 0.0
    %897 = vmatpush1.msra.mxu0 0.0
    %898 = vmatprep.subr.mxu0 0.0
    %899 = vmatpush1.msra.mxu0 0.0
    %900 = vmatprep.subr.mxu0 0.0
    %901 = vmatpush1.msra.mxu0 0.0
    %902 = vmatprep.subr.mxu0 0.0
    %903 = vmatpush1.msra.mxu0 0.0
    %904 = vmatprep.subr.mxu0 0.0
    %905 = vmatpush1.msra.mxu0 0.0
    %906 = vmatprep.subr.mxu0 0.0
    %907 = vmatpush1.msra.mxu0 0.0
    %908 = vmatprep.subr.mxu0 0.0
    %909 = vmatpush1.msra.mxu0 0.0
    %910 = vmatprep.subr.mxu0 0.0
    %911 = vmatpush1.msra.mxu0 0.0
    %912 = vmatprep.subr.mxu0 0.0
    %913 = vmatpush1.msra.mxu0 0.0
    %914 = vmatprep.subr.mxu0 0.0
    %915 = vmatpush1.msra.mxu0 0.0
    %916 = vmatprep.subr.mxu0 0.0
    %917 = vmatpush1.msra.mxu0 0.0
    %918 = vmatprep.subr.mxu0 0.0
    %919 = vmatpush1.msra.mxu0 0.0
    %920 = vmatprep.subr.mxu0 0.0
    %921 = vmatpush1.msra.mxu0 0.0
    %922 = vmatprep.subr.mxu0 0.0
    %923 = vmatpush1.msra.mxu0 0.0
    %924 = vmatprep.subr.mxu0 0.0
    %925 = vmatpush1.msra.mxu0 0.0
    %926 = vmatprep.subr.mxu0 0.0
    %927 = vmatpush1.msra.mxu0 0.0
    %928 = vmatprep.subr.mxu0 0.0
    %929 = vmatpush1.msra.mxu0 0.0
    %930 = vmatprep.subr.mxu0 0.0
    %931 = vmatpush1.msra.mxu0 0.0
    %932 = vmatprep.subr.mxu0 0.0
    %933 = vmatpush1.msra.mxu0 0.0
    %934 = vmatprep.subr.mxu0 0.0
    %935 = vmatpush1.msra.mxu0 0.0
    %936 = vmatprep.subr.mxu0 0.0
    %937 = vmatpush1.msra.mxu0 0.0
    %938 = vmatprep.subr.mxu0 0.0
    %939 = vmatpush1.msra.mxu0 0.0
    %940 = vmatprep.mubr.f32.mxu0 0.0
    %v941 = vand.u32 %v113, 4294901760
    %v942 = vsub.f32 %v113, %v941
    %v943 = vand.u32 %v942, 4294901760
    %944 = vmatmul.mubr.f32.gmra.mrb[0].mxu0 %v943
    %v945 = vpop.f32.mrb[0].mxu0
    %v946 = vadd.f32 %v868, %v945
    %v947 = vpop.f32.mrb[0].mxu0
    %v948 = vadd.f32 %v870, %v947
    %949 = vdwg.mxu0
    %v950 = vand.u32 %v84, 4294901760
    %v951 = vsub.f32 %v84, %v950
    %v952 = vand.u32 %v951, 4294901760
    %953 = vmatprep.subr.mxu0 %v952
    %v954 = vand.u32 %v83, 4294901760
    %v955 = vsub.f32 %v83, %v954
    %v956 = vand.u32 %v955, 4294901760
    %957 = vmatpush1.msra.mxu0 %v956
    %v958 = vand.u32 %v126, 4294901760
    %v959 = vsub.f32 %v126, %v958
    %v960 = vand.u32 %v959, 4294901760
    %961 = vmatprep.subr.mxu0 %v960
    %v962 = vand.u32 %v123, 4294901760
    %v963 = vsub.f32 %v123, %v962
    %v964 = vand.u32 %v963, 4294901760
    %965 = vmatpush1.msra.mxu0 %v964
    %966 = vmatprep.subr.mxu0 0.0
    %967 = vmatpush1.msra.mxu0 0.0
    %968 = vmatprep.subr.mxu0 0.0
    %969 = vmatpush1.msra.mxu0 0.0
    %970 = vmatprep.subr.mxu0 0.0
    %971 = vmatpush1.msra.mxu0 0.0
    %972 = vmatprep.subr.mxu0 0.0
    %973 = vmatpush1.msra.mxu0 0.0
    %974 = vmatprep.subr.mxu0 0.0
    %975 = vmatpush1.msra.mxu0 0.0
    %976 = vmatprep.subr.mxu0 0.0
    %977 = vmatpush1.msra.mxu0 0.0
    %978 = vmatprep.subr.mxu0 0.0
    %979 = vmatpush1.msra.mxu0 0.0
    %980 = vmatprep.subr.mxu0 0.0
    %981 = vmatpush1.msra.mxu0 0.0
    %982 = vmatprep.subr.mxu0 0.0
    %983 = vmatpush1.msra.mxu0 0.0
    %984 = vmatprep.subr.mxu0 0.0
    %985 = vmatpush1.msra.mxu0 0.0
    %986 = vmatprep.subr.mxu0 0.0
    %987 = vmatpush1.msra.mxu0 0.0
    %988 = vmatprep.subr.mxu0 0.0
    %989 = vmatpush1.msra.mxu0 0.0
    %990 = vmatprep.subr.mxu0 0.0
    %991 = vmatpush1.msra.mxu0 0.0
    %992 = vmatprep.subr.mxu0 0.0
    %993 = vmatpush1.msra.mxu0 0.0
    %994 = vmatprep.subr.mxu0 0.0
    %995 = vmatpush1.msra.mxu0 0.0
    %996 = vmatprep.subr.mxu0 0.0
    %997 = vmatpush1.msra.mxu0 0.0
    %998 = vmatprep.subr.mxu0 0.0
    %999 = vmatpush1.msra.mxu0 0.0
    %1000 = vmatprep.subr.mxu0 0.0
    %1001 = vmatpush1.msra.mxu0 0.0
    %1002 = vmatprep.subr.mxu0 0.0
    %1003 = vmatpush1.msra.mxu0 0.0
    %1004 = vmatprep.subr.mxu0 0.0
    %1005 = vmatpush1.msra.mxu0 0.0
    %1006 = vmatprep.subr.mxu0 0.0
    %1007 = vmatpush1.msra.mxu0 0.0
    %1008 = vmatprep.subr.mxu0 0.0
    %1009 = vmatpush1.msra.mxu0 0.0
    %1010 = vmatprep.subr.mxu0 0.0
    %1011 = vmatpush1.msra.mxu0 0.0
    %1012 = vmatprep.subr.mxu0 0.0
    %1013 = vmatpush1.msra.mxu0 0.0
    %1014 = vmatprep.subr.mxu0 0.0
    %1015 = vmatpush1.msra.mxu0 0.0
    %1016 = vmatprep.subr.mxu0 0.0
    %1017 = vmatpush1.msra.mxu0 0.0
    %1018 = vmatprep.subr.mxu0 0.0
    %1019 = vmatpush1.msra.mxu0 0.0
    %1020 = vmatprep.subr.mxu0 0.0
    %1021 = vmatpush1.msra.mxu0 0.0
    %1022 = vmatprep.subr.mxu0 0.0
    %1023 = vmatpush1.msra.mxu0 0.0
    %1024 = vmatprep.subr.mxu0 0.0
    %1025 = vmatpush1.msra.mxu0 0.0
    %1026 = vmatprep.mubr.f32.mxu0 0.0
    %v1027 = vand.u32 %v113, 4294901760
    %1028 = vmatmul.mubr.f32.gmra.mrb[0].mxu0 %v1027
    %v1029 = vpop.f32.mrb[0].mxu0
    %v1030 = vadd.f32 %v946, %v1029
    %v1031 = vpop.f32.mrb[0].mxu0
    %v1032 = vadd.f32 %v948, %v1031
    %1033 = vdwg.mxu0
    %v1034 = vand.u32 %v84, 4294901760
    %1035 = vmatprep.subr.mxu0 %v1034
    %v1036 = vand.u32 %v83, 4294901760
    %1037 = vmatpush1.msra.mxu0 %v1036
    %v1038 = vand.u32 %v126, 4294901760
    %1039 = vmatprep.subr.mxu0 %v1038
    %v1040 = vand.u32 %v123, 4294901760
    %1041 = vmatpush1.msra.mxu0 %v1040
    %1042 = vmatprep.subr.mxu0 0.0
    %1043 = vmatpush1.msra.mxu0 0.0
    %1044 = vmatprep.subr.mxu0 0.0
    %1045 = vmatpush1.msra.mxu0 0.0
    %1046 = vmatprep.subr.mxu0 0.0
    %1047 = vmatpush1.msra.mxu0 0.0
    %1048 = vmatprep.subr.mxu0 0.0
    %1049 = vmatpush1.msra.mxu0 0.0
    %1050 = vmatprep.subr.mxu0 0.0
    %1051 = vmatpush1.msra.mxu0 0.0
    %1052 = vmatprep.subr.mxu0 0.0
    %1053 = vmatpush1.msra.mxu0 0.0
    %1054 = vmatprep.subr.mxu0 0.0
    %1055 = vmatpush1.msra.mxu0 0.0
    %1056 = vmatprep.subr.mxu0 0.0
    %1057 = vmatpush1.msra.mxu0 0.0
    %1058 = vmatprep.subr.mxu0 0.0
    %1059 = vmatpush1.msra.mxu0 0.0
    %1060 = vmatprep.subr.mxu0 0.0
    %1061 = vmatpush1.msra.mxu0 0.0
    %1062 = vmatprep.subr.mxu0 0.0
    %1063 = vmatpush1.msra.mxu0 0.0
    %1064 = vmatprep.subr.mxu0 0.0
    %1065 = vmatpush1.msra.mxu0 0.0
    %1066 = vmatprep.subr.mxu0 0.0
    %1067 = vmatpush1.msra.mxu0 0.0
    %1068 = vmatprep.subr.mxu0 0.0
    %1069 = vmatpush1.msra.mxu0 0.0
    %1070 = vmatprep.subr.mxu0 0.0
    %1071 = vmatpush1.msra.mxu0 0.0
    %1072 = vmatprep.subr.mxu0 0.0
    %1073 = vmatpush1.msra.mxu0 0.0
    %1074 = vmatprep.subr.mxu0 0.0
    %1075 = vmatpush1.msra.mxu0 0.0
    %1076 = vmatprep.subr.mxu0 0.0
    %1077 = vmatpush1.msra.mxu0 0.0
    %1078 = vmatprep.subr.mxu0 0.0
    %1079 = vmatpush1.msra.mxu0 0.0
    %1080 = vmatprep.subr.mxu0 0.0
    %1081 = vmatpush1.msra.mxu0 0.0
    %1082 = vmatprep.subr.mxu0 0.0
    %1083 = vmatpush1.msra.mxu0 0.0
    %1084 = vmatprep.subr.mxu0 0.0
    %1085 = vmatpush1.msra.mxu0 0.0
    %1086 = vmatprep.subr.mxu0 0.0
    %1087 = vmatpush1.msra.mxu0 0.0
    %1088 = vmatprep.subr.mxu0 0.0
    %1089 = vmatpush1.msra.mxu0 0.0
    %1090 = vmatprep.subr.mxu0 0.0
    %1091 = vmatpush1.msra.mxu0 0.0
    %1092 = vmatprep.subr.mxu0 0.0
    %1093 = vmatpush1.msra.mxu0 0.0
    %1094 = vmatprep.subr.mxu0 0.0
    %1095 = vmatpush1.msra.mxu0 0.0
    %1096 = vmatprep.subr.mxu0 0.0
    %1097 = vmatpush1.msra.mxu0 0.0
    %1098 = vmatprep.subr.mxu0 0.0
    %1099 = vmatpush1.msra.mxu0 0.0
    %1100 = vmatprep.subr.mxu0 0.0
    %1101 = vmatpush1.msra.mxu0 0.0
    %1102 = vmatprep.mubr.f32.mxu0 0.0
    %v1103 = vand.u32 %v113, 4294901760
    %1104 = vmatmul.mubr.f32.gmra.mrb[0].mxu0 %v1103
    %v1105 = vpop.f32.mrb[0].mxu0
    %v1106 = vadd.f32 %v1030, %v1105
    %v1107 = vpop.f32.mrb[0].mxu0
    %v1108 = vadd.f32 %v1032, %v1107
    %1109 = vdwg.mxu0
    %v1110 = vmax.f32 %v615, 0.0
    %v1111 = vmax.f32 %v617, 0.0
    %v1112 = vmax.f32 %v1106, 0.0
    %v1113 = vmax.f32 %v1108, 0.0
    %v1114 = vld [vmem:[#allocation7] sm:$0xff]
    %v1115 = vld [vmem:[#allocation7 + $0x8] sm:$0xff]
    %v1116 = vld [vmem:[#allocation7 + $0x10] sm:$0xff]
    %v1117 = vld [vmem:[#allocation7 + $0x18] sm:$0xff]
    %v1118 = vld [vmem:[#allocation7 + $0x20] sm:$0xff]
    %v1119 = vld [vmem:[#allocation7 + $0x28] sm:$0xff]
    %v1120 = vld [vmem:[#allocation7 + $0x30] sm:$0xff]
    %v1121 = vld [vmem:[#allocation7 + $0x38] sm:$0xff]
    %v1122 = vld [vmem:[#allocation7 + $0x40] sm:$0xff]
    %v1123 = vld [vmem:[#allocation7 + $0x48] sm:$0xff]
    %v1124 = vld [vmem:[#allocation7 + $0x50] sm:$0xff]
    %v1125 = vld [vmem:[#allocation7 + $0x58] sm:$0xff]
    %v1126 = vld [vmem:[#allocation7 + $0x60] sm:$0xff]
    %v1127 = vld [vmem:[#allocation7 + $0x68] sm:$0xff]
    %v1128 = vld [vmem:[#allocation7 + $0x70] sm:$0xff]
    %v1129 = vld [vmem:[#allocation7 + $0x78] sm:$0xff]
    %v1130 = vld [vmem:[#allocation7 + $0x80] sm:$0xff]
    %v1131 = vld [vmem:[#allocation7 + $0x88] sm:$0xff]
    %v1132 = vld [vmem:[#allocation7 + $0x90] sm:$0xff]
    %v1133 = vld [vmem:[#allocation7 + $0x98] sm:$0xff]
    %v1134 = vld [vmem:[#allocation7 + $0xa0] sm:$0xff]
    %v1135 = vld [vmem:[#allocation7 + $0xa8] sm:$0xff]
    %v1136 = vld [vmem:[#allocation7 + $0xb0] sm:$0xff]
    %v1137 = vld [vmem:[#allocation7 + $0xb8] sm:$0xff]
    %v1138 = vld [vmem:[#allocation7 + $0xc0] sm:$0xff]
    %v1139 = vld [vmem:[#allocation7 + $0xc8] sm:$0xff]
    %v1140 = vld [vmem:[#allocation7 + $0xd0] sm:$0xff]
    %v1141 = vld [vmem:[#allocation7 + $0xd8] sm:$0xff]
    %v1142 = vld [vmem:[#allocation7 + $0xe0] sm:$0xff]
    %v1143 = vld [vmem:[#allocation7 + $0xe8] sm:$0xff]
    %v1144 = vld [vmem:[#allocation7 + $0xf0] sm:$0xff]
    %v1145 = vld [vmem:[#allocation7 + $0xf8] sm:$0xff]
    %v1146 = vld [vmem:[#allocation7 + $0x100] sm:$0xff]
    %v1147 = vld [vmem:[#allocation7 + $0x108] sm:$0xff]
    %v1148 = vld [vmem:[#allocation7 + $0x110] sm:$0xff]
    %v1149 = vld [vmem:[#allocation7 + $0x118] sm:$0xff]
    %v1150 = vld [vmem:[#allocation7 + $0x120] sm:$0xff]
    %v1151 = vld [vmem:[#allocation7 + $0x128] sm:$0xff]
    %v1152 = vld [vmem:[#allocation7 + $0x130] sm:$0xff]
    %v1153 = vld [vmem:[#allocation7 + $0x138] sm:$0xff]
    %v1154 = vld [vmem:[#allocation7 + $0x140] sm:$0xff]
    %v1155 = vld [vmem:[#allocation7 + $0x148] sm:$0xff]
    %v1156 = vld [vmem:[#allocation7 + $0x150] sm:$0xff]
    %v1157 = vld [vmem:[#allocation7 + $0x158] sm:$0xff]
    %v1158 = vld [vmem:[#allocation7 + $0x160] sm:$0xff]
    %v1159 = vld [vmem:[#allocation7 + $0x168] sm:$0xff]
    %v1160 = vld [vmem:[#allocation7 + $0x170] sm:$0xff]
    %v1161 = vld [vmem:[#allocation7 + $0x178] sm:$0xff]
    %v1162 = vld [vmem:[#allocation7 + $0x180] sm:$0xff]
    %v1163 = vld [vmem:[#allocation7 + $0x188] sm:$0xff]
    %v1164 = vld [vmem:[#allocation7 + $0x190] sm:$0xff]
    %v1165 = vld [vmem:[#allocation7 + $0x198] sm:$0xff]
    %v1166 = vld [vmem:[#allocation7 + $0x1a0] sm:$0xff]
    %v1167 = vld [vmem:[#allocation7 + $0x1a8] sm:$0xff]
    %v1168 = vld [vmem:[#allocation7 + $0x1b0] sm:$0xff]
    %v1169 = vld [vmem:[#allocation7 + $0x1b8] sm:$0xff]
    %v1170 = vld [vmem:[#allocation7 + $0x1c0] sm:$0xff]
    %v1171 = vld [vmem:[#allocation7 + $0x1c8] sm:$0xff]
    %v1172 = vld [vmem:[#allocation7 + $0x1d0] sm:$0xff]
    %v1173 = vld [vmem:[#allocation7 + $0x1d8] sm:$0xff]
    %v1174 = vld [vmem:[#allocation7 + $0x1e0] sm:$0xff]
    %v1175 = vld [vmem:[#allocation7 + $0x1e8] sm:$0xff]
    %v1176 = vld [vmem:[#allocation7 + $0x1f0] sm:$0xff]
    %v1177 = vld [vmem:[#allocation7 + $0x1f8] sm:$0xff]
    %v1178 = vld [vmem:[#allocation7 + $0x200] sm:$0xff]
    %v1179 = vld [vmem:[#allocation7 + $0x208] sm:$0xff]
    %v1180 = vld [vmem:[#allocation7 + $0x210] sm:$0xff]
    %v1181 = vld [vmem:[#allocation7 + $0x218] sm:$0xff]
    %v1182 = vld [vmem:[#allocation7 + $0x220] sm:$0xff]
    %v1183 = vld [vmem:[#allocation7 + $0x228] sm:$0xff]
    %v1184 = vld [vmem:[#allocation7 + $0x230] sm:$0xff]
    %v1185 = vld [vmem:[#allocation7 + $0x238] sm:$0xff]
    %v1186 = vld [vmem:[#allocation7 + $0x240] sm:$0xff]
    %v1187 = vld [vmem:[#allocation7 + $0x248] sm:$0xff]
    %v1188 = vld [vmem:[#allocation7 + $0x250] sm:$0xff]
    %v1189 = vld [vmem:[#allocation7 + $0x258] sm:$0xff]
    %v1190 = vld [vmem:[#allocation7 + $0x260] sm:$0xff]
    %v1191 = vld [vmem:[#allocation7 + $0x268] sm:$0xff]
    %v1192 = vld [vmem:[#allocation7 + $0x270] sm:$0xff]
    %v1193 = vld [vmem:[#allocation7 + $0x278] sm:$0xff]
    %v1194 = vld [vmem:[#allocation7 + $0x280] sm:$0xff]
    %v1195 = vld [vmem:[#allocation7 + $0x288] sm:$0xff]
    %v1196 = vld [vmem:[#allocation7 + $0x290] sm:$0xff]
    %v1197 = vld [vmem:[#allocation7 + $0x298] sm:$0xff]
    %v1198 = vld [vmem:[#allocation7 + $0x2a0] sm:$0xff]
    %v1199 = vld [vmem:[#allocation7 + $0x2a8] sm:$0xff]
    %v1200 = vld [vmem:[#allocation7 + $0x2b0] sm:$0xff]
    %v1201 = vld [vmem:[#allocation7 + $0x2b8] sm:$0xff]
    %v1202 = vld [vmem:[#allocation7 + $0x2c0] sm:$0xff]
    %v1203 = vld [vmem:[#allocation7 + $0x2c8] sm:$0xff]
    %v1204 = vld [vmem:[#allocation7 + $0x2d0] sm:$0xff]
    %v1205 = vld [vmem:[#allocation7 + $0x2d8] sm:$0xff]
    %v1206 = vld [vmem:[#allocation7 + $0x2e0] sm:$0xff]
    %v1207 = vld [vmem:[#allocation7 + $0x2e8] sm:$0xff]
    %v1208 = vld [vmem:[#allocation7 + $0x2f0] sm:$0xff]
    %v1209 = vld [vmem:[#allocation7 + $0x2f8] sm:$0xff]
    %v1210 = vld [vmem:[#allocation7 + $0x300] sm:$0xff]
    %v1211 = vld [vmem:[#allocation7 + $0x308] sm:$0xff]
    %v1212 = vld [vmem:[#allocation7 + $0x310] sm:$0xff]
    %v1213 = vld [vmem:[#allocation7 + $0x318] sm:$0xff]
    %v1214 = vld [vmem:[#allocation7 + $0x320] sm:$0xff]
    %v1215 = vld [vmem:[#allocation7 + $0x328] sm:$0xff]
    %v1216 = vld [vmem:[#allocation7 + $0x330] sm:$0xff]
    %v1217 = vld [vmem:[#allocation7 + $0x338] sm:$0xff]
    %v1218 = vld [vmem:[#allocation7 + $0x340] sm:$0xff]
    %v1219 = vld [vmem:[#allocation7 + $0x348] sm:$0xff]
    %v1220 = vld [vmem:[#allocation7 + $0x350] sm:$0xff]
    %v1221 = vld [vmem:[#allocation7 + $0x358] sm:$0xff]
    %v1222 = vld [vmem:[#allocation7 + $0x360] sm:$0xff]
    %v1223 = vld [vmem:[#allocation7 + $0x368] sm:$0xff]
    %v1224 = vld [vmem:[#allocation7 + $0x370] sm:$0xff]
    %v1225 = vld [vmem:[#allocation7 + $0x378] sm:$0xff]
    %v1226 = vld [vmem:[#allocation7 + $0x380] sm:$0xff]
    %v1227 = vld [vmem:[#allocation7 + $0x388] sm:$0xff]
    %v1228 = vld [vmem:[#allocation7 + $0x390] sm:$0xff]
    %v1229 = vld [vmem:[#allocation7 + $0x398] sm:$0xff]
    %v1230 = vld [vmem:[#allocation7 + $0x3a0] sm:$0xff]
    %v1231 = vld [vmem:[#allocation7 + $0x3a8] sm:$0xff]
    %v1232 = vld [vmem:[#allocation7 + $0x3b0] sm:$0xff]
    %v1233 = vld [vmem:[#allocation7 + $0x3b8] sm:$0xff]
    %v1234 = vld [vmem:[#allocation7 + $0x3c0] sm:$0xff]
    %v1235 = vld [vmem:[#allocation7 + $0x3c8] sm:$0xff]
    %v1236 = vld [vmem:[#allocation7 + $0x3d0] sm:$0xff]
    %v1237 = vld [vmem:[#allocation7 + $0x3d8] sm:$0xff]
    %v1238 = vld [vmem:[#allocation7 + $0x3e0] sm:$0xff]
    %v1239 = vld [vmem:[#allocation7 + $0x3e8] sm:$0xff]
    %v1240 = vld [vmem:[#allocation7 + $0x3f0] sm:$0xff]
    %v1241 = vld [vmem:[#allocation7 + $0x3f8] sm:$0xff]
    %v1242 = vld [vmem:[#allocation7 + $0x400] sm:$0xff]
    %v1243 = vld [vmem:[#allocation7 + $0x408] sm:$0xff]
    %v1244 = vld [vmem:[#allocation7 + $0x410] sm:$0xff]
    %v1245 = vld [vmem:[#allocation7 + $0x418] sm:$0xff]
    %v1246 = vld [vmem:[#allocation7 + $0x420] sm:$0xff]
    %v1247 = vld [vmem:[#allocation7 + $0x428] sm:$0xff]
    %v1248 = vld [vmem:[#allocation7 + $0x430] sm:$0xff]
    %v1249 = vld [vmem:[#allocation7 + $0x438] sm:$0xff]
    %v1250 = vld [vmem:[#allocation7 + $0x440] sm:$0xff]
    %v1251 = vld [vmem:[#allocation7 + $0x448] sm:$0xff]
    %v1252 = vld [vmem:[#allocation7 + $0x450] sm:$0xff]
    %v1253 = vld [vmem:[#allocation7 + $0x458] sm:$0xff]
    %v1254 = vld [vmem:[#allocation7 + $0x460] sm:$0xff]
    %v1255 = vld [vmem:[#allocation7 + $0x468] sm:$0xff]
    %v1256 = vld [vmem:[#allocation7 + $0x470] sm:$0xff]
    %v1257 = vld [vmem:[#allocation7 + $0x478] sm:$0xff]
    %v1258 = vld [vmem:[#allocation7 + $0x480] sm:$0xff]
    %v1259 = vld [vmem:[#allocation7 + $0x488] sm:$0xff]
    %v1260 = vld [vmem:[#allocation7 + $0x490] sm:$0xff]
    %v1261 = vld [vmem:[#allocation7 + $0x498] sm:$0xff]
    %v1262 = vld [vmem:[#allocation7 + $0x4a0] sm:$0xff]
    %v1263 = vld [vmem:[#allocation7 + $0x4a8] sm:$0xff]
    %v1264 = vld [vmem:[#allocation7 + $0x4b0] sm:$0xff]
    %v1265 = vld [vmem:[#allocation7 + $0x4b8] sm:$0xff]
    %v1266 = vld [vmem:[#allocation7 + $0x4c0] sm:$0xff]
    %v1267 = vld [vmem:[#allocation7 + $0x4c8] sm:$0xff]
    %v1268 = vld [vmem:[#allocation7 + $0x4d0] sm:$0xff]
    %v1269 = vld [vmem:[#allocation7 + $0x4d8] sm:$0xff]
    %v1270 = vld [vmem:[#allocation7 + $0x4e0] sm:$0xff]
    %v1271 = vld [vmem:[#allocation7 + $0x4e8] sm:$0xff]
    %v1272 = vld [vmem:[#allocation7 + $0x4f0] sm:$0xff]
    %v1273 = vld [vmem:[#allocation7 + $0x4f8] sm:$0xff]
    %v1274 = vld [vmem:[#allocation7 + $0x500] sm:$0xff]
    %v1275 = vld [vmem:[#allocation7 + $0x508] sm:$0xff]
    %v1276 = vld [vmem:[#allocation7 + $0x510] sm:$0xff]
    %v1277 = vld [vmem:[#allocation7 + $0x518] sm:$0xff]
    %v1278 = vld [vmem:[#allocation7 + $0x520] sm:$0xff]
    %v1279 = vld [vmem:[#allocation7 + $0x528] sm:$0xff]
    %v1280 = vld [vmem:[#allocation7 + $0x530] sm:$0xff]
    %v1281 = vld [vmem:[#allocation7 + $0x538] sm:$0xff]
    %v1282 = vld [vmem:[#allocation7 + $0x540] sm:$0xff]
    %v1283 = vld [vmem:[#allocation7 + $0x548] sm:$0xff]
    %v1284 = vld [vmem:[#allocation7 + $0x550] sm:$0xff]
    %v1285 = vld [vmem:[#allocation7 + $0x558] sm:$0xff]
    %v1286 = vld [vmem:[#allocation7 + $0x560] sm:$0xff]
    %v1287 = vld [vmem:[#allocation7 + $0x568] sm:$0xff]
    %v1288 = vld [vmem:[#allocation7 + $0x570] sm:$0xff]
    %v1289 = vld [vmem:[#allocation7 + $0x578] sm:$0xff]
    %v1290 = vld [vmem:[#allocation7 + $0x580] sm:$0xff]
    %v1291 = vld [vmem:[#allocation7 + $0x588] sm:$0xff]
    %v1292 = vld [vmem:[#allocation7 + $0x590] sm:$0xff]
    %v1293 = vld [vmem:[#allocation7 + $0x598] sm:$0xff]
    %v1294 = vld [vmem:[#allocation7 + $0x5a0] sm:$0xff]
    %v1295 = vld [vmem:[#allocation7 + $0x5a8] sm:$0xff]
    %v1296 = vld [vmem:[#allocation7 + $0x5b0] sm:$0xff]
    %v1297 = vld [vmem:[#allocation7 + $0x5b8] sm:$0xff]
    %v1298 = vld [vmem:[#allocation7 + $0x5c0] sm:$0xff]
    %v1299 = vld [vmem:[#allocation7 + $0x5c8] sm:$0xff]
    %v1300 = vld [vmem:[#allocation7 + $0x5d0] sm:$0xff]
    %v1301 = vld [vmem:[#allocation7 + $0x5d8] sm:$0xff]
    %v1302 = vld [vmem:[#allocation7 + $0x5e0] sm:$0xff]
    %v1303 = vld [vmem:[#allocation7 + $0x5e8] sm:$0xff]
    %v1304 = vld [vmem:[#allocation7 + $0x5f0] sm:$0xff]
    %v1305 = vld [vmem:[#allocation7 + $0x5f8] sm:$0xff]
    %v1306 = vld [vmem:[%s4] sm:$0x7]
    %v1308 = vlaneseq
    %v1309 = vshrl.u32 %v1308, 7
    %v1310 = vsub.s32 0, %v1309
    %v1311 = vrot.slane %v1306, %v1310
    %v1312 = vlaneseq
    %v1313 = vshrl.u32 %v1312, 7
    %v1314 = vsub.s32 1, %v1313
    %v1315 = vrot.slane %v1306, %v1314
    %v1316 = vlaneseq
    %v1317 = vshrl.u32 %v1316, 7
    %v1318 = vsub.s32 2, %v1317
    %v1319 = vrot.slane %v1306, %v1318
    %v1323 = vand.u32 %v1115, 4294901760
    %1324 = vmatprep.subr.mxu0 %v1323
    %v1325 = vand.u32 %v1114, 4294901760
    %1326 = vmatpush1.msra.mxu0 %v1325
    %v1327 = vand.u32 %v1118, 4294901760
    %1328 = vmatprep.subr.mxu0 %v1327
    %v1329 = vand.u32 %v1117, 4294901760
    %1330 = vmatpush1.msra.mxu0 %v1329
    %v1331 = vand.u32 %v1121, 4294901760
    %1332 = vmatprep.subr.mxu0 %v1331
    %v1333 = vand.u32 %v1120, 4294901760
    %1334 = vmatpush1.msra.mxu0 %v1333
    %v1335 = vand.u32 %v1124, 4294901760
    %1336 = vmatprep.subr.mxu0 %v1335
    %v1337 = vand.u32 %v1123, 4294901760
    %1338 = vmatpush1.msra.mxu0 %v1337
    %v1339 = vand.u32 %v1127, 4294901760
    %1340 = vmatprep.subr.mxu0 %v1339
    %v1341 = vand.u32 %v1126, 4294901760
    %1342 = vmatpush1.msra.mxu0 %v1341
    %v1343 = vand.u32 %v1130, 4294901760
    %1344 = vmatprep.subr.mxu0 %v1343
    %v1345 = vand.u32 %v1129, 4294901760
    %1346 = vmatpush1.msra.mxu0 %v1345
    %v1347 = vand.u32 %v1133, 4294901760
    %1348 = vmatprep.subr.mxu0 %v1347
    %v1349 = vand.u32 %v1132, 4294901760
    %1350 = vmatpush1.msra.mxu0 %v1349
    %v1351 = vand.u32 %v1136, 4294901760
    %1352 = vmatprep.subr.mxu0 %v1351
    %v1353 = vand.u32 %v1135, 4294901760
    %1354 = vmatpush1.msra.mxu0 %v1353
    %v1355 = vand.u32 %v1139, 4294901760
    %1356 = vmatprep.subr.mxu0 %v1355
    %v1357 = vand.u32 %v1138, 4294901760
    %1358 = vmatpush1.msra.mxu0 %v1357
    %v1359 = vand.u32 %v1142, 4294901760
    %1360 = vmatprep.subr.mxu0 %v1359
    %v1361 = vand.u32 %v1141, 4294901760
    %1362 = vmatpush1.msra.mxu0 %v1361
    %v1363 = vand.u32 %v1145, 4294901760
    %1364 = vmatprep.subr.mxu0 %v1363
    %v1365 = vand.u32 %v1144, 4294901760
    %1366 = vmatpush1.msra.mxu0 %v1365
    %v1367 = vand.u32 %v1148, 4294901760
    %1368 = vmatprep.subr.mxu0 %v1367
    %v1369 = vand.u32 %v1147, 4294901760
    %1370 = vmatpush1.msra.mxu0 %v1369
    %v1371 = vand.u32 %v1151, 4294901760
    %1372 = vmatprep.subr.mxu0 %v1371
    %v1373 = vand.u32 %v1150, 4294901760
    %1374 = vmatpush1.msra.mxu0 %v1373
    %v1375 = vand.u32 %v1154, 4294901760
    %1376 = vmatprep.subr.mxu0 %v1375
    %v1377 = vand.u32 %v1153, 4294901760
    %1378 = vmatpush1.msra.mxu0 %v1377
    %v1379 = vand.u32 %v1157, 4294901760
    %1380 = vmatprep.subr.mxu0 %v1379
    %v1381 = vand.u32 %v1156, 4294901760
    %1382 = vmatpush1.msra.mxu0 %v1381
    %v1383 = vand.u32 %v1160, 4294901760
    %1384 = vmatprep.subr.mxu0 %v1383
    %v1385 = vand.u32 %v1159, 4294901760
    %1386 = vmatpush1.msra.mxu0 %v1385
    %v1387 = vand.u32 %v1163, 4294901760
    %1388 = vmatprep.subr.mxu0 %v1387
    %v1389 = vand.u32 %v1162, 4294901760
    %1390 = vmatpush1.msra.mxu0 %v1389
    %v1391 = vand.u32 %v1166, 4294901760
    %1392 = vmatprep.subr.mxu0 %v1391
    %v1393 = vand.u32 %v1165, 4294901760
    %1394 = vmatpush1.msra.mxu0 %v1393
    %v1395 = vand.u32 %v1169, 4294901760
    %1396 = vmatprep.subr.mxu0 %v1395
    %v1397 = vand.u32 %v1168, 4294901760
    %1398 = vmatpush1.msra.mxu0 %v1397
    %v1399 = vand.u32 %v1172, 4294901760
    %1400 = vmatprep.subr.mxu0 %v1399
    %v1401 = vand.u32 %v1171, 4294901760
    %1402 = vmatpush1.msra.mxu0 %v1401
    %v1403 = vand.u32 %v1175, 4294901760
    %1404 = vmatprep.subr.mxu0 %v1403
    %v1405 = vand.u32 %v1174, 4294901760
    %1406 = vmatpush1.msra.mxu0 %v1405
    %v1407 = vand.u32 %v1178, 4294901760
    %1408 = vmatprep.subr.mxu0 %v1407
    %v1409 = vand.u32 %v1177, 4294901760
    %1410 = vmatpush1.msra.mxu0 %v1409
    %v1411 = vand.u32 %v1181, 4294901760
    %1412 = vmatprep.subr.mxu0 %v1411
    %v1413 = vand.u32 %v1180, 4294901760
    %1414 = vmatpush1.msra.mxu0 %v1413
    %v1415 = vand.u32 %v1184, 4294901760
    %1416 = vmatprep.subr.mxu0 %v1415
    %v1417 = vand.u32 %v1183, 4294901760
    %1418 = vmatpush1.msra.mxu0 %v1417
    %v1419 = vand.u32 %v1187, 4294901760
    %1420 = vmatprep.subr.mxu0 %v1419
    %v1421 = vand.u32 %v1186, 4294901760
    %1422 = vmatpush1.msra.mxu0 %v1421
    %v1423 = vand.u32 %v1190, 4294901760
    %1424 = vmatprep.subr.mxu0 %v1423
    %v1425 = vand.u32 %v1189, 4294901760
    %1426 = vmatpush1.msra.mxu0 %v1425
    %v1427 = vand.u32 %v1193, 4294901760
    %1428 = vmatprep.subr.mxu0 %v1427
    %v1429 = vand.u32 %v1192, 4294901760
    %1430 = vmatpush1.msra.mxu0 %v1429
    %v1431 = vand.u32 %v1196, 4294901760
    %1432 = vmatprep.subr.mxu0 %v1431
    %v1433 = vand.u32 %v1195, 4294901760
    %1434 = vmatpush1.msra.mxu0 %v1433
    %v1435 = vand.u32 %v1199, 4294901760
    %1436 = vmatprep.subr.mxu0 %v1435
    %v1437 = vand.u32 %v1198, 4294901760
    %1438 = vmatpush1.msra.mxu0 %v1437
    %v1439 = vand.u32 %v1202, 4294901760
    %1440 = vmatprep.subr.mxu0 %v1439
    %v1441 = vand.u32 %v1201, 4294901760
    %1442 = vmatpush1.msra.mxu0 %v1441
    %v1443 = vand.u32 %v1205, 4294901760
    %1444 = vmatprep.subr.mxu0 %v1443
    %v1445 = vand.u32 %v1204, 4294901760
    %1446 = vmatpush1.msra.mxu0 %v1445
    %v1447 = vand.u32 %v1208, 4294901760
    %1448 = vmatprep.subr.mxu0 %v1447
    %v1449 = vand.u32 %v1207, 4294901760
    %1450 = vmatpush1.msra.mxu0 %v1449
    %v1451 = vand.u32 %v1111, 4294901760
    %v1452 = vsub.f32 %v1111, %v1451
    %v1453 = vand.u32 %v1452, 4294901760
    %v1454 = vsub.f32 %v1452, %v1453
    %v1455 = vand.u32 %v1454, 4294901760
    %1456 = vmatprep.mubr.f32.mxu0 %v1455
    %v1457 = vand.u32 %v1110, 4294901760
    %v1458 = vsub.f32 %v1110, %v1457
    %v1459 = vand.u32 %v1458, 4294901760
    %v1460 = vsub.f32 %v1458, %v1459
    %v1461 = vand.u32 %v1460, 4294901760
    %1462 = vmatmul.mubr.f32.gmra.mrb[0].mxu0 %v1461
    %v1463 = vpop.f32.mrb[0].mxu0
    %v1464 = vadd.f32 %v1311, %v1463
    %v1465 = vpop.f32.mrb[0].mxu0
    %v1466 = vadd.f32 %v1315, %v1465
    %1467 = vdwg.mxu0
    %v1468 = vand.u32 %v1115, 4294901760
    %v1469 = vsub.f32 %v1115, %v1468
    %v1470 = vand.u32 %v1469, 4294901760
    %v1471 = vsub.f32 %v1469, %v1470
    %v1472 = vand.u32 %v1471, 4294901760
    %1473 = vmatprep.subr.mxu0 %v1472
    %v1474 = vand.u32 %v1114, 4294901760
    %v1475 = vsub.f32 %v1114, %v1474
    %v1476 = vand.u32 %v1475, 4294901760
    %v1477 = vsub.f32 %v1475, %v1476
    %v1478 = vand.u32 %v1477, 4294901760
    %1479 = vmatpush1.msra.mxu0 %v1478
    %v1480 = vand.u32 %v1118, 4294901760
    %v1481 = vsub.f32 %v1118, %v1480
    %v1482 = vand.u32 %v1481, 4294901760
    %v1483 = vsub.f32 %v1481, %v1482
    %v1484 = vand.u32 %v1483, 4294901760
    %1485 = vmatprep.subr.mxu0 %v1484
    %v1486 = vand.u32 %v1117, 4294901760
    %v1487 = vsub.f32 %v1117, %v1486
    %v1488 = vand.u32 %v1487, 4294901760
    %v1489 = vsub.f32 %v1487, %v1488
    %v1490 = vand.u32 %v1489, 4294901760
    %1491 = vmatpush1.msra.mxu0 %v1490
    %v1492 = vand.u32 %v1121, 4294901760
    %v1493 = vsub.f32 %v1121, %v1492
    %v1494 = vand.u32 %v1493, 4294901760
    %v1495 = vsub.f32 %v1493, %v1494
    %v1496 = vand.u32 %v1495, 4294901760
    %1497 = vmatprep.subr.mxu0 %v1496
    %v1498 = vand.u32 %v1120, 4294901760
    %v1499 = vsub.f32 %v1120, %v1498
    %v1500 = vand.u32 %v1499, 4294901760
    %v1501 = vsub.f32 %v1499, %v1500
    %v1502 = vand.u32 %v1501, 4294901760
    %1503 = vmatpush1.msra.mxu0 %v1502
    %v1504 = vand.u32 %v1124, 4294901760
    %v1505 = vsub.f32 %v1124, %v1504
    %v1506 = vand.u32 %v1505, 4294901760
    %v1507 = vsub.f32 %v1505, %v1506
    %v1508 = vand.u32 %v1507, 4294901760
    %1509 = vmatprep.subr.mxu0 %v1508
    %v1510 = vand.u32 %v1123, 4294901760
    %v1511 = vsub.f32 %v1123, %v1510
    %v1512 = vand.u32 %v1511, 4294901760
    %v1513 = vsub.f32 %v1511, %v1512
    %v1514 = vand.u32 %v1513, 4294901760
    %1515 = vmatpush1.msra.mxu0 %v1514
    %v1516 = vand.u32 %v1127, 4294901760
    %v1517 = vsub.f32 %v1127, %v1516
    %v1518 = vand.u32 %v1517, 4294901760
    %v1519 = vsub.f32 %v1517, %v1518
    %v1520 = vand.u32 %v1519, 4294901760
    %1521 = vmatprep.subr.mxu0 %v1520
    %v1522 = vand.u32 %v1126, 4294901760
    %v1523 = vsub.f32 %v1126, %v1522
    %v1524 = vand.u32 %v1523, 4294901760
    %v1525 = vsub.f32 %v1523, %v1524
    %v1526 = vand.u32 %v1525, 4294901760
    %1527 = vmatpush1.msra.mxu0 %v1526
    %v1528 = vand.u32 %v1130, 4294901760
    %v1529 = vsub.f32 %v1130, %v1528
    %v1530 = vand.u32 %v1529, 4294901760
    %v1531 = vsub.f32 %v1529, %v1530
    %v1532 = vand.u32 %v1531, 4294901760
    %1533 = vmatprep.subr.mxu0 %v1532
    %v1534 = vand.u32 %v1129, 4294901760
    %v1535 = vsub.f32 %v1129, %v1534
    %v1536 = vand.u32 %v1535, 4294901760
    %v1537 = vsub.f32 %v1535, %v1536
    %v1538 = vand.u32 %v1537, 4294901760
    %1539 = vmatpush1.msra.mxu0 %v1538
    %v1540 = vand.u32 %v1133, 4294901760
    %v1541 = vsub.f32 %v1133, %v1540
    %v1542 = vand.u32 %v1541, 4294901760
    %v1543 = vsub.f32 %v1541, %v1542
    %v1544 = vand.u32 %v1543, 4294901760
    %1545 = vmatprep.subr.mxu0 %v1544
    %v1546 = vand.u32 %v1132, 4294901760
    %v1547 = vsub.f32 %v1132, %v1546
    %v1548 = vand.u32 %v1547, 4294901760
    %v1549 = vsub.f32 %v1547, %v1548
    %v1550 = vand.u32 %v1549, 4294901760
    %1551 = vmatpush1.msra.mxu0 %v1550
    %v1552 = vand.u32 %v1136, 4294901760
    %v1553 = vsub.f32 %v1136, %v1552
    %v1554 = vand.u32 %v1553, 4294901760
    %v1555 = vsub.f32 %v1553, %v1554
    %v1556 = vand.u32 %v1555, 4294901760
    %1557 = vmatprep.subr.mxu0 %v1556
    %v1558 = vand.u32 %v1135, 4294901760
    %v1559 = vsub.f32 %v1135, %v1558
    %v1560 = vand.u32 %v1559, 4294901760
    %v1561 = vsub.f32 %v1559, %v1560
    %v1562 = vand.u32 %v1561, 4294901760
    %1563 = vmatpush1.msra.mxu0 %v1562
    %v1564 = vand.u32 %v1139, 4294901760
    %v1565 = vsub.f32 %v1139, %v1564
    %v1566 = vand.u32 %v1565, 4294901760
    %v1567 = vsub.f32 %v1565, %v1566
    %v1568 = vand.u32 %v1567, 4294901760
    %1569 = vmatprep.subr.mxu0 %v1568
    %v1570 = vand.u32 %v1138, 4294901760
    %v1571 = vsub.f32 %v1138, %v1570
    %v1572 = vand.u32 %v1571, 4294901760
    %v1573 = vsub.f32 %v1571, %v1572
    %v1574 = vand.u32 %v1573, 4294901760
    %1575 = vmatpush1.msra.mxu0 %v1574
    %v1576 = vand.u32 %v1142, 4294901760
    %v1577 = vsub.f32 %v1142, %v1576
    %v1578 = vand.u32 %v1577, 4294901760
    %v1579 = vsub.f32 %v1577, %v1578
    %v1580 = vand.u32 %v1579, 4294901760
    %1581 = vmatprep.subr.mxu0 %v1580
    %v1582 = vand.u32 %v1141, 4294901760
    %v1583 = vsub.f32 %v1141, %v1582
    %v1584 = vand.u32 %v1583, 4294901760
    %v1585 = vsub.f32 %v1583, %v1584
    %v1586 = vand.u32 %v1585, 4294901760
    %1587 = vmatpush1.msra.mxu0 %v1586
    %v1588 = vand.u32 %v1145, 4294901760
    %v1589 = vsub.f32 %v1145, %v1588
    %v1590 = vand.u32 %v1589, 4294901760
    %v1591 = vsub.f32 %v1589, %v1590
    %v1592 = vand.u32 %v1591, 4294901760
    %1593 = vmatprep.subr.mxu0 %v1592
    %v1594 = vand.u32 %v1144, 4294901760
    %v1595 = vsub.f32 %v1144, %v1594
    %v1596 = vand.u32 %v1595, 4294901760
    %v1597 = vsub.f32 %v1595, %v1596
    %v1598 = vand.u32 %v1597, 4294901760
    %1599 = vmatpush1.msra.mxu0 %v1598
    %v1600 = vand.u32 %v1148, 4294901760
    %v1601 = vsub.f32 %v1148, %v1600
    %v1602 = vand.u32 %v1601, 4294901760
    %v1603 = vsub.f32 %v1601, %v1602
    %v1604 = vand.u32 %v1603, 4294901760
    %1605 = vmatprep.subr.mxu0 %v1604
    %v1606 = vand.u32 %v1147, 4294901760
    %v1607 = vsub.f32 %v1147, %v1606
    %v1608 = vand.u32 %v1607, 4294901760
    %v1609 = vsub.f32 %v1607, %v1608
    %v1610 = vand.u32 %v1609, 4294901760
    %1611 = vmatpush1.msra.mxu0 %v1610
    %v1612 = vand.u32 %v1151, 4294901760
    %v1613 = vsub.f32 %v1151, %v1612
    %v1614 = vand.u32 %v1613, 4294901760
    %v1615 = vsub.f32 %v1613, %v1614
    %v1616 = vand.u32 %v1615, 4294901760
    %1617 = vmatprep.subr.mxu0 %v1616
    %v1618 = vand.u32 %v1150, 4294901760
    %v1619 = vsub.f32 %v1150, %v1618
    %v1620 = vand.u32 %v1619, 4294901760
    %v1621 = vsub.f32 %v1619, %v1620
    %v1622 = vand.u32 %v1621, 4294901760
    %1623 = vmatpush1.msra.mxu0 %v1622
    %v1624 = vand.u32 %v1154, 4294901760
    %v1625 = vsub.f32 %v1154, %v1624
    %v1626 = vand.u32 %v1625, 4294901760
    %v1627 = vsub.f32 %v1625, %v1626
    %v1628 = vand.u32 %v1627, 4294901760
    %1629 = vmatprep.subr.mxu0 %v1628
    %v1630 = vand.u32 %v1153, 4294901760
    %v1631 = vsub.f32 %v1153, %v1630
    %v1632 = vand.u32 %v1631, 4294901760
    %v1633 = vsub.f32 %v1631, %v1632
    %v1634 = vand.u32 %v1633, 4294901760
    %1635 = vmatpush1.msra.mxu0 %v1634
    %v1636 = vand.u32 %v1157, 4294901760
    %v1637 = vsub.f32 %v1157, %v1636
    %v1638 = vand.u32 %v1637, 4294901760
    %v1639 = vsub.f32 %v1637, %v1638
    %v1640 = vand.u32 %v1639, 4294901760
    %1641 = vmatprep.subr.mxu0 %v1640
    %v1642 = vand.u32 %v1156, 4294901760
    %v1643 = vsub.f32 %v1156, %v1642
    %v1644 = vand.u32 %v1643, 4294901760
    %v1645 = vsub.f32 %v1643, %v1644
    %v1646 = vand.u32 %v1645, 4294901760
    %1647 = vmatpush1.msra.mxu0 %v1646
    %v1648 = vand.u32 %v1160, 4294901760
    %v1649 = vsub.f32 %v1160, %v1648
    %v1650 = vand.u32 %v1649, 4294901760
    %v1651 = vsub.f32 %v1649, %v1650
    %v1652 = vand.u32 %v1651, 4294901760
    %1653 = vmatprep.subr.mxu0 %v1652
    %v1654 = vand.u32 %v1159, 4294901760
    %v1655 = vsub.f32 %v1159, %v1654
    %v1656 = vand.u32 %v1655, 4294901760
    %v1657 = vsub.f32 %v1655, %v1656
    %v1658 = vand.u32 %v1657, 4294901760
    %1659 = vmatpush1.msra.mxu0 %v1658
    %v1660 = vand.u32 %v1163, 4294901760
    %v1661 = vsub.f32 %v1163, %v1660
    %v1662 = vand.u32 %v1661, 4294901760
    %v1663 = vsub.f32 %v1661, %v1662
    %v1664 = vand.u32 %v1663, 4294901760
    %1665 = vmatprep.subr.mxu0 %v1664
    %v1666 = vand.u32 %v1162, 4294901760
    %v1667 = vsub.f32 %v1162, %v1666
    %v1668 = vand.u32 %v1667, 4294901760
    %v1669 = vsub.f32 %v1667, %v1668
    %v1670 = vand.u32 %v1669, 4294901760
    %1671 = vmatpush1.msra.mxu0 %v1670
    %v1672 = vand.u32 %v1166, 4294901760
    %v1673 = vsub.f32 %v1166, %v1672
    %v1674 = vand.u32 %v1673, 4294901760
    %v1675 = vsub.f32 %v1673, %v1674
    %v1676 = vand.u32 %v1675, 4294901760
    %1677 = vmatprep.subr.mxu0 %v1676
    %v1678 = vand.u32 %v1165, 4294901760
    %v1679 = vsub.f32 %v1165, %v1678
    %v1680 = vand.u32 %v1679, 4294901760
    %v1681 = vsub.f32 %v1679, %v1680
    %v1682 = vand.u32 %v1681, 4294901760
    %1683 = vmatpush1.msra.mxu0 %v1682
    %v1684 = vand.u32 %v1169, 4294901760
    %v1685 = vsub.f32 %v1169, %v1684
    %v1686 = vand.u32 %v1685, 4294901760
    %v1687 = vsub.f32 %v1685, %v1686
    %v1688 = vand.u32 %v1687, 4294901760
    %1689 = vmatprep.subr.mxu0 %v1688
    %v1690 = vand.u32 %v1168, 4294901760
    %v1691 = vsub.f32 %v1168, %v1690
    %v1692 = vand.u32 %v1691, 4294901760
    %v1693 = vsub.f32 %v1691, %v1692
    %v1694 = vand.u32 %v1693, 4294901760
    %1695 = vmatpush1.msra.mxu0 %v1694
    %v1696 = vand.u32 %v1172, 4294901760
    %v1697 = vsub.f32 %v1172, %v1696
    %v1698 = vand.u32 %v1697, 4294901760
    %v1699 = vsub.f32 %v1697, %v1698
    %v1700 = vand.u32 %v1699, 4294901760
    %1701 = vmatprep.subr.mxu0 %v1700
    %v1702 = vand.u32 %v1171, 4294901760
    %v1703 = vsub.f32 %v1171, %v1702
    %v1704 = vand.u32 %v1703, 4294901760
    %v1705 = vsub.f32 %v1703, %v1704
    %v1706 = vand.u32 %v1705, 4294901760
    %1707 = vmatpush1.msra.mxu0 %v1706
    %v1708 = vand.u32 %v1175, 4294901760
    %v1709 = vsub.f32 %v1175, %v1708
    %v1710 = vand.u32 %v1709, 4294901760
    %v1711 = vsub.f32 %v1709, %v1710
    %v1712 = vand.u32 %v1711, 4294901760
    %1713 = vmatprep.subr.mxu0 %v1712
    %v1714 = vand.u32 %v1174, 4294901760
    %v1715 = vsub.f32 %v1174, %v1714
    %v1716 = vand.u32 %v1715, 4294901760
    %v1717 = vsub.f32 %v1715, %v1716
    %v1718 = vand.u32 %v1717, 4294901760
    %1719 = vmatpush1.msra.mxu0 %v1718
    %v1720 = vand.u32 %v1178, 4294901760
    %v1721 = vsub.f32 %v1178, %v1720
    %v1722 = vand.u32 %v1721, 4294901760
    %v1723 = vsub.f32 %v1721, %v1722
    %v1724 = vand.u32 %v1723, 4294901760
    %1725 = vmatprep.subr.mxu0 %v1724
    %v1726 = vand.u32 %v1177, 4294901760
    %v1727 = vsub.f32 %v1177, %v1726
    %v1728 = vand.u32 %v1727, 4294901760
    %v1729 = vsub.f32 %v1727, %v1728
    %v1730 = vand.u32 %v1729, 4294901760
    %1731 = vmatpush1.msra.mxu0 %v1730
    %v1732 = vand.u32 %v1181, 4294901760
    %v1733 = vsub.f32 %v1181, %v1732
    %v1734 = vand.u32 %v1733, 4294901760
    %v1735 = vsub.f32 %v1733, %v1734
    %v1736 = vand.u32 %v1735, 4294901760
    %1737 = vmatprep.subr.mxu0 %v1736
    %v1738 = vand.u32 %v1180, 4294901760
    %v1739 = vsub.f32 %v1180, %v1738
    %v1740 = vand.u32 %v1739, 4294901760
    %v1741 = vsub.f32 %v1739, %v1740
    %v1742 = vand.u32 %v1741, 4294901760
    %1743 = vmatpush1.msra.mxu0 %v1742
    %v1744 = vand.u32 %v1184, 4294901760
    %v1745 = vsub.f32 %v1184, %v1744
    %v1746 = vand.u32 %v1745, 4294901760
    %v1747 = vsub.f32 %v1745, %v1746
    %v1748 = vand.u32 %v1747, 4294901760
    %1749 = vmatprep.subr.mxu0 %v1748
    %v1750 = vand.u32 %v1183, 4294901760
    %v1751 = vsub.f32 %v1183, %v1750
    %v1752 = vand.u32 %v1751, 4294901760
    %v1753 = vsub.f32 %v1751, %v1752
    %v1754 = vand.u32 %v1753, 4294901760
    %1755 = vmatpush1.msra.mxu0 %v1754
    %v1756 = vand.u32 %v1187, 4294901760
    %v1757 = vsub.f32 %v1187, %v1756
    %v1758 = vand.u32 %v1757, 4294901760
    %v1759 = vsub.f32 %v1757, %v1758
    %v1760 = vand.u32 %v1759, 4294901760
    %1761 = vmatprep.subr.mxu0 %v1760
    %v1762 = vand.u32 %v1186, 4294901760
    %v1763 = vsub.f32 %v1186, %v1762
    %v1764 = vand.u32 %v1763, 4294901760
    %v1765 = vsub.f32 %v1763, %v1764
    %v1766 = vand.u32 %v1765, 4294901760
    %1767 = vmatpush1.msra.mxu0 %v1766
    %v1768 = vand.u32 %v1190, 4294901760
    %v1769 = vsub.f32 %v1190, %v1768
    %v1770 = vand.u32 %v1769, 4294901760
    %v1771 = vsub.f32 %v1769, %v1770
    %v1772 = vand.u32 %v1771, 4294901760
    %1773 = vmatprep.subr.mxu0 %v1772
    %v1774 = vand.u32 %v1189, 4294901760
    %v1775 = vsub.f32 %v1189, %v1774
    %v1776 = vand.u32 %v1775, 4294901760
    %v1777 = vsub.f32 %v1775, %v1776
    %v1778 = vand.u32 %v1777, 4294901760
    %1779 = vmatpush1.msra.mxu0 %v1778
    %v1780 = vand.u32 %v1193, 4294901760
    %v1781 = vsub.f32 %v1193, %v1780
    %v1782 = vand.u32 %v1781, 4294901760
    %v1783 = vsub.f32 %v1781, %v1782
    %v1784 = vand.u32 %v1783, 4294901760
    %1785 = vmatprep.subr.mxu0 %v1784
    %v1786 = vand.u32 %v1192, 4294901760
    %v1787 = vsub.f32 %v1192, %v1786
    %v1788 = vand.u32 %v1787, 4294901760
    %v1789 = vsub.f32 %v1787, %v1788
    %v1790 = vand.u32 %v1789, 4294901760
    %1791 = vmatpush1.msra.mxu0 %v1790
    %v1792 = vand.u32 %v1196, 4294901760
    %v1793 = vsub.f32 %v1196, %v1792
    %v1794 = vand.u32 %v1793, 4294901760
    %v1795 = vsub.f32 %v1793, %v1794
    %v1796 = vand.u32 %v1795, 4294901760
    %1797 = vmatprep.subr.mxu0 %v1796
    %v1798 = vand.u32 %v1195, 4294901760
    %v1799 = vsub.f32 %v1195, %v1798
    %v1800 = vand.u32 %v1799, 4294901760
    %v1801 = vsub.f32 %v1799, %v1800
    %v1802 = vand.u32 %v1801, 4294901760
    %1803 = vmatpush1.msra.mxu0 %v1802
    %v1804 = vand.u32 %v1199, 4294901760
    %v1805 = vsub.f32 %v1199, %v1804
    %v1806 = vand.u32 %v1805, 4294901760
    %v1807 = vsub.f32 %v1805, %v1806
    %v1808 = vand.u32 %v1807, 4294901760
    %1809 = vmatprep.subr.mxu0 %v1808
    %v1810 = vand.u32 %v1198, 4294901760
    %v1811 = vsub.f32 %v1198, %v1810
    %v1812 = vand.u32 %v1811, 4294901760
    %v1813 = vsub.f32 %v1811, %v1812
    %v1814 = vand.u32 %v1813, 4294901760
    %1815 = vmatpush1.msra.mxu0 %v1814
    %v1816 = vand.u32 %v1202, 4294901760
    %v1817 = vsub.f32 %v1202, %v1816
    %v1818 = vand.u32 %v1817, 4294901760
    %v1819 = vsub.f32 %v1817, %v1818
    %v1820 = vand.u32 %v1819, 4294901760
    %1821 = vmatprep.subr.mxu0 %v1820
    %v1822 = vand.u32 %v1201, 4294901760
    %v1823 = vsub.f32 %v1201, %v1822
    %v1824 = vand.u32 %v1823, 4294901760
    %v1825 = vsub.f32 %v1823, %v1824
    %v1826 = vand.u32 %v1825, 4294901760
    %1827 = vmatpush1.msra.mxu0 %v1826
    %v1828 = vand.u32 %v1205, 4294901760
    %v1829 = vsub.f32 %v1205, %v1828
    %v1830 = vand.u32 %v1829, 4294901760
    %v1831 = vsub.f32 %v1829, %v1830
    %v1832 = vand.u32 %v1831, 4294901760
    %1833 = vmatprep.subr.mxu0 %v1832
    %v1834 = vand.u32 %v1204, 4294901760
    %v1835 = vsub.f32 %v1204, %v1834
    %v1836 = vand.u32 %v1835, 4294901760
    %v1837 = vsub.f32 %v1835, %v1836
    %v1838 = vand.u32 %v1837, 4294901760
    %1839 = vmatpush1.msra.mxu0 %v1838
    %v1840 = vand.u32 %v1208, 4294901760
    %v1841 = vsub.f32 %v1208, %v1840
    %v1842 = vand.u32 %v1841, 4294901760
    %v1843 = vsub.f32 %v1841, %v1842
    %v1844 = vand.u32 %v1843, 4294901760
    %1845 = vmatprep.subr.mxu0 %v1844
    %v1846 = vand.u32 %v1207, 4294901760
    %v1847 = vsub.f32 %v1207, %v1846
    %v1848 = vand.u32 %v1847, 4294901760
    %v1849 = vsub.f32 %v1847, %v1848
    %v1850 = vand.u32 %v1849, 4294901760
    %1851 = vmatpush1.msra.mxu0 %v1850
    %v1852 = vand.u32 %v1111, 4294901760
    %1853 = vmatprep.mubr.f32.mxu0 %v1852
    %v1854 = vand.u32 %v1110, 4294901760
    %1855 = vmatmul.mubr.f32.gmra.mrb[0].mxu0 %v1854
    %v1856 = vpop.f32.mrb[0].mxu0
    %v1857 = vadd.f32 %v1464, %v1856
    %v1858 = vpop.f32.mrb[0].mxu0
    %v1859 = vadd.f32 %v1466, %v1858
    %1860 = vdwg.mxu0
    %v1861 = vand.u32 %v1115, 4294901760
    %v1862 = vsub.f32 %v1115, %v1861
    %1863 = vmatprep.subr.mxu0 %v1862
    %v1864 = vand.u32 %v1114, 4294901760
    %v1865 = vsub.f32 %v1114, %v1864
    %1866 = vmatpush1.msra.mxu0 %v1865
    %v1867 = vand.u32 %v1118, 4294901760
    %v1868 = vsub.f32 %v1118, %v1867
    %1869 = vmatprep.subr.mxu0 %v1868
    %v1870 = vand.u32 %v1117, 4294901760
    %v1871 = vsub.f32 %v1117, %v1870
    %1872 = vmatpush1.msra.mxu0 %v1871
    %v1873 = vand.u32 %v1121, 4294901760
    %v1874 = vsub.f32 %v1121, %v1873
    %1875 = vmatprep.subr.mxu0 %v1874
    %v1876 = vand.u32 %v1120, 4294901760
    %v1877 = vsub.f32 %v1120, %v1876
    %1878 = vmatpush1.msra.mxu0 %v1877
    %v1879 = vand.u32 %v1124, 4294901760
    %v1880 = vsub.f32 %v1124, %v1879
    %1881 = vmatprep.subr.mxu0 %v1880
    %v1882 = vand.u32 %v1123, 4294901760
    %v1883 = vsub.f32 %v1123, %v1882
    %1884 = vmatpush1.msra.mxu0 %v1883
    %v1885 = vand.u32 %v1127, 4294901760
    %v1886 = vsub.f32 %v1127, %v1885
    %1887 = vmatprep.subr.mxu0 %v1886
    %v1888 = vand.u32 %v1126, 4294901760
    %v1889 = vsub.f32 %v1126, %v1888
    %1890 = vmatpush1.msra.mxu0 %v1889
    %v1891 = vand.u32 %v1130, 4294901760
    %v1892 = vsub.f32 %v1130, %v1891
    %1893 = vmatprep.subr.mxu0 %v1892
    %v1894 = vand.u32 %v1129, 4294901760
    %v1895 = vsub.f32 %v1129, %v1894
    %1896 = vmatpush1.msra.mxu0 %v1895
    %v1897 = vand.u32 %v1133, 4294901760
    %v1898 = vsub.f32 %v1133, %v1897
    %1899 = vmatprep.subr.mxu0 %v1898
    %v1900 = vand.u32 %v1132, 4294901760
    %v1901 = vsub.f32 %v1132, %v1900
    %1902 = vmatpush1.msra.mxu0 %v1901
    %v1903 = vand.u32 %v1136, 4294901760
    %v1904 = vsub.f32 %v1136, %v1903
    %1905 = vmatprep.subr.mxu0 %v1904
    %v1906 = vand.u32 %v1135, 4294901760
    %v1907 = vsub.f32 %v1135, %v1906
    %1908 = vmatpush1.msra.mxu0 %v1907
    %v1909 = vand.u32 %v1139, 4294901760
    %v1910 = vsub.f32 %v1139, %v1909
    %1911 = vmatprep.subr.mxu0 %v1910
    %v1912 = vand.u32 %v1138, 4294901760
    %v1913 = vsub.f32 %v1138, %v1912
    %1914 = vmatpush1.msra.mxu0 %v1913
    %v1915 = vand.u32 %v1142, 4294901760
    %v1916 = vsub.f32 %v1142, %v1915
    %1917 = vmatprep.subr.mxu0 %v1916
    %v1918 = vand.u32 %v1141, 4294901760
    %v1919 = vsub.f32 %v1141, %v1918
    %1920 = vmatpush1.msra.mxu0 %v1919
    %v1921 = vand.u32 %v1145, 4294901760
    %v1922 = vsub.f32 %v1145, %v1921
    %1923 = vmatprep.subr.mxu0 %v1922
    %v1924 = vand.u32 %v1144, 4294901760
    %v1925 = vsub.f32 %v1144, %v1924
    %1926 = vmatpush1.msra.mxu0 %v1925
    %v1927 = vand.u32 %v1148, 4294901760
    %v1928 = vsub.f32 %v1148, %v1927
    %1929 = vmatprep.subr.mxu0 %v1928
    %v1930 = vand.u32 %v1147, 4294901760
    %v1931 = vsub.f32 %v1147, %v1930
    %1932 = vmatpush1.msra.mxu0 %v1931
    %v1933 = vand.u32 %v1151, 4294901760
    %v1934 = vsub.f32 %v1151, %v1933
    %1935 = vmatprep.subr.mxu0 %v1934
    %v1936 = vand.u32 %v1150, 4294901760
    %v1937 = vsub.f32 %v1150, %v1936
    %1938 = vmatpush1.msra.mxu0 %v1937
    %v1939 = vand.u32 %v1154, 4294901760
    %v1940 = vsub.f32 %v1154, %v1939
    %1941 = vmatprep.subr.mxu0 %v1940
    %v1942 = vand.u32 %v1153, 4294901760
    %v1943 = vsub.f32 %v1153, %v1942
    %1944 = vmatpush1.msra.mxu0 %v1943
    %v1945 = vand.u32 %v1157, 4294901760
    %v1946 = vsub.f32 %v1157, %v1945
    %1947 = vmatprep.subr.mxu0 %v1946
    %v1948 = vand.u32 %v1156, 4294901760
    %v1949 = vsub.f32 %v1156, %v1948
    %1950 = vmatpush1.msra.mxu0 %v1949
    %v1951 = vand.u32 %v1160, 4294901760
    %v1952 = vsub.f32 %v1160, %v1951
    %1953 = vmatprep.subr.mxu0 %v1952
    %v1954 = vand.u32 %v1159, 4294901760
    %v1955 = vsub.f32 %v1159, %v1954
    %1956 = vmatpush1.msra.mxu0 %v1955
    %v1957 = vand.u32 %v1163, 4294901760
    %v1958 = vsub.f32 %v1163, %v1957
    %1959 = vmatprep.subr.mxu0 %v1958
    %v1960 = vand.u32 %v1162, 4294901760
    %v1961 = vsub.f32 %v1162, %v1960
    %1962 = vmatpush1.msra.mxu0 %v1961
    %v1963 = vand.u32 %v1166, 4294901760
    %v1964 = vsub.f32 %v1166, %v1963
    %1965 = vmatprep.subr.mxu0 %v1964
    %v1966 = vand.u32 %v1165, 4294901760
    %v1967 = vsub.f32 %v1165, %v1966
    %1968 = vmatpush1.msra.mxu0 %v1967
    %v1969 = vand.u32 %v1169, 4294901760
    %v1970 = vsub.f32 %v1169, %v1969
    %1971 = vmatprep.subr.mxu0 %v1970
    %v1972 = vand.u32 %v1168, 4294901760
    %v1973 = vsub.f32 %v1168, %v1972
    %1974 = vmatpush1.msra.mxu0 %v1973
    %v1975 = vand.u32 %v1172, 4294901760
    %v1976 = vsub.f32 %v1172, %v1975
    %1977 = vmatprep.subr.mxu0 %v1976
    %v1978 = vand.u32 %v1171, 4294901760
    %v1979 = vsub.f32 %v1171, %v1978
    %1980 = vmatpush1.msra.mxu0 %v1979
    %v1981 = vand.u32 %v1175, 4294901760
    %v1982 = vsub.f32 %v1175, %v1981
    %1983 = vmatprep.subr.mxu0 %v1982
    %v1984 = vand.u32 %v1174, 4294901760
    %v1985 = vsub.f32 %v1174, %v1984
    %1986 = vmatpush1.msra.mxu0 %v1985
    %v1987 = vand.u32 %v1178, 4294901760
    %v1988 = vsub.f32 %v1178, %v1987
    %1989 = vmatprep.subr.mxu0 %v1988
    %v1990 = vand.u32 %v1177, 4294901760
    %v1991 = vsub.f32 %v1177, %v1990
    %1992 = vmatpush1.msra.mxu0 %v1991
    %v1993 = vand.u32 %v1181, 4294901760
    %v1994 = vsub.f32 %v1181, %v1993
    %1995 = vmatprep.subr.mxu0 %v1994
    %v1996 = vand.u32 %v1180, 4294901760
    %v1997 = vsub.f32 %v1180, %v1996
    %1998 = vmatpush1.msra.mxu0 %v1997
    %v1999 = vand.u32 %v1184, 4294901760
    %v2000 = vsub.f32 %v1184, %v1999
    %2001 = vmatprep.subr.mxu0 %v2000
    %v2002 = vand.u32 %v1183, 4294901760
    %v2003 = vsub.f32 %v1183, %v2002
    %2004 = vmatpush1.msra.mxu0 %v2003
    %v2005 = vand.u32 %v1187, 4294901760
    %v2006 = vsub.f32 %v1187, %v2005
    %2007 = vmatprep.subr.mxu0 %v2006
    %v2008 = vand.u32 %v1186, 4294901760
    %v2009 = vsub.f32 %v1186, %v2008
    %2010 = vmatpush1.msra.mxu0 %v2009
    %v2011 = vand.u32 %v1190, 4294901760
    %v2012 = vsub.f32 %v1190, %v2011
    %2013 = vmatprep.subr.mxu0 %v2012
    %v2014 = vand.u32 %v1189, 4294901760
    %v2015 = vsub.f32 %v1189, %v2014
    %2016 = vmatpush1.msra.mxu0 %v2015
    %v2017 = vand.u32 %v1193, 4294901760
    %v2018 = vsub.f32 %v1193, %v2017
    %2019 = vmatprep.subr.mxu0 %v2018
    %v2020 = vand.u32 %v1192, 4294901760
    %v2021 = vsub.f32 %v1192, %v2020
    %2022 = vmatpush1.msra.mxu0 %v2021
    %v2023 = vand.u32 %v1196, 4294901760
    %v2024 = vsub.f32 %v1196, %v2023
    %2025 = vmatprep.subr.mxu0 %v2024
    %v2026 = vand.u32 %v1195, 4294901760
    %v2027 = vsub.f32 %v1195, %v2026
    %2028 = vmatpush1.msra.mxu0 %v2027
    %v2029 = vand.u32 %v1199, 4294901760
    %v2030 = vsub.f32 %v1199, %v2029
    %2031 = vmatprep.subr.mxu0 %v2030
    %v2032 = vand.u32 %v1198, 4294901760
    %v2033 = vsub.f32 %v1198, %v2032
    %2034 = vmatpush1.msra.mxu0 %v2033
    %v2035 = vand.u32 %v1202, 4294901760
    %v2036 = vsub.f32 %v1202, %v2035
    %2037 = vmatprep.subr.mxu0 %v2036
    %v2038 = vand.u32 %v1201, 4294901760
    %v2039 = vsub.f32 %v1201, %v2038
    %2040 = vmatpush1.msra.mxu0 %v2039
    %v2041 = vand.u32 %v1205, 4294901760
    %v2042 = vsub.f32 %v1205, %v2041
    %2043 = vmatprep.subr.mxu0 %v2042
    %v2044 = vand.u32 %v1204, 4294901760
    %v2045 = vsub.f32 %v1204, %v2044
    %2046 = vmatpush1.msra.mxu0 %v2045
    %v2047 = vand.u32 %v1208, 4294901760
    %v2048 = vsub.f32 %v1208, %v2047
    %2049 = vmatprep.subr.mxu0 %v2048
    %v2050 = vand.u32 %v1207, 4294901760
    %v2051 = vsub.f32 %v1207, %v2050
    %2052 = vmatpush1.msra.mxu0 %v2051
    %v2053 = vand.u32 %v1111, 4294901760
    %v2054 = vsub.f32 %v1111, %v2053
    %2055 = vmatprep.mubr.f32.mxu0 %v2054
    %v2056 = vand.u32 %v1110, 4294901760
    %v2057 = vsub.f32 %v1110, %v2056
    %2058 = vmatmul.mubr.f32.gmra.mrb[0].mxu0 %v2057
    %v2059 = vpop.f32.mrb[0].mxu0
    %v2060 = vadd.f32 %v1857, %v2059
    %v2061 = vpop.f32.mrb[0].mxu0
    %v2062 = vadd.f32 %v1859, %v2061
    %2063 = vdwg.mxu0
    %v2064 = vand.u32 %v1115, 4294901760
    %2065 = vmatprep.subr.mxu0 %v2064
    %v2066 = vand.u32 %v1114, 4294901760
    %2067 = vmatpush1.msra.mxu0 %v2066
    %v2068 = vand.u32 %v1118, 4294901760
    %2069 = vmatprep.subr.mxu0 %v2068
    %v2070 = vand.u32 %v1117, 4294901760
    %2071 = vmatpush1.msra.mxu0 %v2070
    %v2072 = vand.u32 %v1121, 4294901760
    %2073 = vmatprep.subr.mxu0 %v2072
    %v2074 = vand.u32 %v1120, 4294901760
    %2075 = vmatpush1.msra.mxu0 %v2074
    %v2076 = vand.u32 %v1124, 4294901760
    %2077 = vmatprep.subr.mxu0 %v2076
    %v2078 = vand.u32 %v1123, 4294901760
    %2079 = vmatpush1.msra.mxu0 %v2078
    %v2080 = vand.u32 %v1127, 4294901760
    %2081 = vmatprep.subr.mxu0 %v2080
    %v2082 = vand.u32 %v1126, 4294901760
    %2083 = vmatpush1.msra.mxu0 %v2082
    %v2084 = vand.u32 %v1130, 4294901760
    %2085 = vmatprep.subr.mxu0 %v2084
    %v2086 = vand.u32 %v1129, 4294901760
    %2087 = vmatpush1.msra.mxu0 %v2086
    %v2088 = vand.u32 %v1133, 4294901760
    %2089 = vmatprep.subr.mxu0 %v2088
    %v2090 = vand.u32 %v1132, 4294901760
    %2091 = vmatpush1.msra.mxu0 %v2090
    %v2092 = vand.u32 %v1136, 4294901760
    %2093 = vmatprep.subr.mxu0 %v2092
    %v2094 = vand.u32 %v1135, 4294901760
    %2095 = vmatpush1.msra.mxu0 %v2094
    %v2096 = vand.u32 %v1139, 4294901760
    %2097 = vmatprep.subr.mxu0 %v2096
    %v2098 = vand.u32 %v1138, 4294901760
    %2099 = vmatpush1.msra.mxu0 %v2098
    %v2100 = vand.u32 %v1142, 4294901760
    %2101 = vmatprep.subr.mxu0 %v2100
    %v2102 = vand.u32 %v1141, 4294901760
    %2103 = vmatpush1.msra.mxu0 %v2102
    %v2104 = vand.u32 %v1145, 4294901760
    %2105 = vmatprep.subr.mxu0 %v2104
    %v2106 = vand.u32 %v1144, 4294901760
    %2107 = vmatpush1.msra.mxu0 %v2106
    %v2108 = vand.u32 %v1148, 4294901760
    %2109 = vmatprep.subr.mxu0 %v2108
    %v2110 = vand.u32 %v1147, 4294901760
    %2111 = vmatpush1.msra.mxu0 %v2110
    %v2112 = vand.u32 %v1151, 4294901760
    %2113 = vmatprep.subr.mxu0 %v2112
    %v2114 = vand.u32 %v1150, 4294901760
    %2115 = vmatpush1.msra.mxu0 %v2114
    %v2116 = vand.u32 %v1154, 4294901760
    %2117 = vmatprep.subr.mxu0 %v2116
    %v2118 = vand.u32 %v1153, 4294901760
    %2119 = vmatpush1.msra.mxu0 %v2118
    %v2120 = vand.u32 %v1157, 4294901760
    %2121 = vmatprep.subr.mxu0 %v2120
    %v2122 = vand.u32 %v1156, 4294901760
    %2123 = vmatpush1.msra.mxu0 %v2122
    %v2124 = vand.u32 %v1160, 4294901760
    %2125 = vmatprep.subr.mxu0 %v2124
    %v2126 = vand.u32 %v1159, 4294901760
    %2127 = vmatpush1.msra.mxu0 %v2126
    %v2128 = vand.u32 %v1163, 4294901760
    %2129 = vmatprep.subr.mxu0 %v2128
    %v2130 = vand.u32 %v1162, 4294901760
    %2131 = vmatpush1.msra.mxu0 %v2130
    %v2132 = vand.u32 %v1166, 4294901760
    %2133 = vmatprep.subr.mxu0 %v2132
    %v2134 = vand.u32 %v1165, 4294901760
    %2135 = vmatpush1.msra.mxu0 %v2134
    %v2136 = vand.u32 %v1169, 4294901760
    %2137 = vmatprep.subr.mxu0 %v2136
    %v2138 = vand.u32 %v1168, 4294901760
    %2139 = vmatpush1.msra.mxu0 %v2138
    %v2140 = vand.u32 %v1172, 4294901760
    %2141 = vmatprep.subr.mxu0 %v2140
    %v2142 = vand.u32 %v1171, 4294901760
    %2143 = vmatpush1.msra.mxu0 %v2142
    %v2144 = vand.u32 %v1175, 4294901760
    %2145 = vmatprep.subr.mxu0 %v2144
    %v2146 = vand.u32 %v1174, 4294901760
    %2147 = vmatpush1.msra.mxu0 %v2146
    %v2148 = vand.u32 %v1178, 4294901760
    %2149 = vmatprep.subr.mxu0 %v2148
    %v2150 = vand.u32 %v1177, 4294901760
    %2151 = vmatpush1.msra.mxu0 %v2150
    %v2152 = vand.u32 %v1181, 4294901760
    %2153 = vmatprep.subr.mxu0 %v2152
    %v2154 = vand.u32 %v1180, 4294901760
    %2155 = vmatpush1.msra.mxu0 %v2154
    %v2156 = vand.u32 %v1184, 4294901760
    %2157 = vmatprep.subr.mxu0 %v2156
    %v2158 = vand.u32 %v1183, 4294901760
    %2159 = vmatpush1.msra.mxu0 %v2158
    %v2160 = vand.u32 %v1187, 4294901760
    %2161 = vmatprep.subr.mxu0 %v2160
    %v2162 = vand.u32 %v1186, 4294901760
    %2163 = vmatpush1.msra.mxu0 %v2162
    %v2164 = vand.u32 %v1190, 4294901760
    %2165 = vmatprep.subr.mxu0 %v2164
    %v2166 = vand.u32 %v1189, 4294901760
    %2167 = vmatpush1.msra.mxu0 %v2166
    %v2168 = vand.u32 %v1193, 4294901760
    %2169 = vmatprep.subr.mxu0 %v2168
    %v2170 = vand.u32 %v1192, 4294901760
    %2171 = vmatpush1.msra.mxu0 %v2170
    %v2172 = vand.u32 %v1196, 4294901760
    %2173 = vmatprep.subr.mxu0 %v2172
    %v2174 = vand.u32 %v1195, 4294901760
    %2175 = vmatpush1.msra.mxu0 %v2174
    %v2176 = vand.u32 %v1199, 4294901760
    %2177 = vmatprep.subr.mxu0 %v2176
    %v2178 = vand.u32 %v1198, 4294901760
    %2179 = vmatpush1.msra.mxu0 %v2178
    %v2180 = vand.u32 %v1202, 4294901760
    %2181 = vmatprep.subr.mxu0 %v2180
    %v2182 = vand.u32 %v1201, 4294901760
    %2183 = vmatpush1.msra.mxu0 %v2182
    %v2184 = vand.u32 %v1205, 4294901760
    %2185 = vmatprep.subr.mxu0 %v2184
    %v2186 = vand.u32 %v1204, 4294901760
    %2187 = vmatpush1.msra.mxu0 %v2186
    %v2188 = vand.u32 %v1208, 4294901760
    %2189 = vmatprep.subr.mxu0 %v2188
    %v2190 = vand.u32 %v1207, 4294901760
    %2191 = vmatpush1.msra.mxu0 %v2190
    %v2192 = vand.u32 %v1111, 4294901760
    %v2193 = vsub.f32 %v1111, %v2192
    %v2194 = vand.u32 %v2193, 4294901760
    %2195 = vmatprep.mubr.f32.mxu0 %v2194
    %v2196 = vand.u32 %v1110, 4294901760
    %v2197 = vsub.f32 %v1110, %v2196
    %v2198 = vand.u32 %v2197, 4294901760
    %2199 = vmatmul.mubr.f32.gmra.mrb[0].mxu0 %v2198
    %v2200 = vpop.f32.mrb[0].mxu0
    %v2201 = vadd.f32 %v2060, %v2200
    %v2202 = vpop.f32.mrb[0].mxu0
    %v2203 = vadd.f32 %v2062, %v2202
    %2204 = vdwg.mxu0
    %v2205 = vand.u32 %v1115, 4294901760
    %v2206 = vsub.f32 %v1115, %v2205
    %v2207 = vand.u32 %v2206, 4294901760
    %2208 = vmatprep.subr.mxu0 %v2207
    %v2209 = vand.u32 %v1114, 4294901760
    %v2210 = vsub.f32 %v1114, %v2209
    %v2211 = vand.u32 %v2210, 4294901760
    %2212 = vmatpush1.msra.mxu0 %v2211
    %v2213 = vand.u32 %v1118, 4294901760
    %v2214 = vsub.f32 %v1118, %v2213
    %v2215 = vand.u32 %v2214, 4294901760
    %2216 = vmatprep.subr.mxu0 %v2215
    %v2217 = vand.u32 %v1117, 4294901760
    %v2218 = vsub.f32 %v1117, %v2217
    %v2219 = vand.u32 %v2218, 4294901760
    %2220 = vmatpush1.msra.mxu0 %v2219
    %v2221 = vand.u32 %v1121, 4294901760
    %v2222 = vsub.f32 %v1121, %v2221
    %v2223 = vand.u32 %v2222, 4294901760
    %2224 = vmatprep.subr.mxu0 %v2223
    %v2225 = vand.u32 %v1120, 4294901760
    %v2226 = vsub.f32 %v1120, %v2225
    %v2227 = vand.u32 %v2226, 4294901760
    %2228 = vmatpush1.msra.mxu0 %v2227
    %v2229 = vand.u32 %v1124, 4294901760
    %v2230 = vsub.f32 %v1124, %v2229
    %v2231 = vand.u32 %v2230, 4294901760
    %2232 = vmatprep.subr.mxu0 %v2231
    %v2233 = vand.u32 %v1123, 4294901760
    %v2234 = vsub.f32 %v1123, %v2233
    %v2235 = vand.u32 %v2234, 4294901760
    %2236 = vmatpush1.msra.mxu0 %v2235
    %v2237 = vand.u32 %v1127, 4294901760
    %v2238 = vsub.f32 %v1127, %v2237
    %v2239 = vand.u32 %v2238, 4294901760
    %2240 = vmatprep.subr.mxu0 %v2239
    %v2241 = vand.u32 %v1126, 4294901760
    %v2242 = vsub.f32 %v1126, %v2241
    %v2243 = vand.u32 %v2242, 4294901760
    %2244 = vmatpush1.msra.mxu0 %v2243
    %v2245 = vand.u32 %v1130, 4294901760
    %v2246 = vsub.f32 %v1130, %v2245
    %v2247 = vand.u32 %v2246, 4294901760
    %2248 = vmatprep.subr.mxu0 %v2247
    %v2249 = vand.u32 %v1129, 4294901760
    %v2250 = vsub.f32 %v1129, %v2249
    %v2251 = vand.u32 %v2250, 4294901760
    %2252 = vmatpush1.msra.mxu0 %v2251
    %v2253 = vand.u32 %v1133, 4294901760
    %v2254 = vsub.f32 %v1133, %v2253
    %v2255 = vand.u32 %v2254, 4294901760
    %2256 = vmatprep.subr.mxu0 %v2255
    %v2257 = vand.u32 %v1132, 4294901760
    %v2258 = vsub.f32 %v1132, %v2257
    %v2259 = vand.u32 %v2258, 4294901760
    %2260 = vmatpush1.msra.mxu0 %v2259
    %v2261 = vand.u32 %v1136, 4294901760
    %v2262 = vsub.f32 %v1136, %v2261
    %v2263 = vand.u32 %v2262, 4294901760
    %2264 = vmatprep.subr.mxu0 %v2263
    %v2265 = vand.u32 %v1135, 4294901760
    %v2266 = vsub.f32 %v1135, %v2265
    %v2267 = vand.u32 %v2266, 4294901760
    %2268 = vmatpush1.msra.mxu0 %v2267
    %v2269 = vand.u32 %v1139, 4294901760
    %v2270 = vsub.f32 %v1139, %v2269
    %v2271 = vand.u32 %v2270, 4294901760
    %2272 = vmatprep.subr.mxu0 %v2271
    %v2273 = vand.u32 %v1138, 4294901760
    %v2274 = vsub.f32 %v1138, %v2273
    %v2275 = vand.u32 %v2274, 4294901760
    %2276 = vmatpush1.msra.mxu0 %v2275
    %v2277 = vand.u32 %v1142, 4294901760
    %v2278 = vsub.f32 %v1142, %v2277
    %v2279 = vand.u32 %v2278, 4294901760
    %2280 = vmatprep.subr.mxu0 %v2279
    %v2281 = vand.u32 %v1141, 4294901760
    %v2282 = vsub.f32 %v1141, %v2281
    %v2283 = vand.u32 %v2282, 4294901760
    %2284 = vmatpush1.msra.mxu0 %v2283
    %v2285 = vand.u32 %v1145, 4294901760
    %v2286 = vsub.f32 %v1145, %v2285
    %v2287 = vand.u32 %v2286, 4294901760
    %2288 = vmatprep.subr.mxu0 %v2287
    %v2289 = vand.u32 %v1144, 4294901760
    %v2290 = vsub.f32 %v1144, %v2289
    %v2291 = vand.u32 %v2290, 4294901760
    %2292 = vmatpush1.msra.mxu0 %v2291
    %v2293 = vand.u32 %v1148, 4294901760
    %v2294 = vsub.f32 %v1148, %v2293
    %v2295 = vand.u32 %v2294, 4294901760
    %2296 = vmatprep.subr.mxu0 %v2295
    %v2297 = vand.u32 %v1147, 4294901760
    %v2298 = vsub.f32 %v1147, %v2297
    %v2299 = vand.u32 %v2298, 4294901760
    %2300 = vmatpush1.msra.mxu0 %v2299
    %v2301 = vand.u32 %v1151, 4294901760
    %v2302 = vsub.f32 %v1151, %v2301
    %v2303 = vand.u32 %v2302, 4294901760
    %2304 = vmatprep.subr.mxu0 %v2303
    %v2305 = vand.u32 %v1150, 4294901760
    %v2306 = vsub.f32 %v1150, %v2305
    %v2307 = vand.u32 %v2306, 4294901760
    %2308 = vmatpush1.msra.mxu0 %v2307
    %v2309 = vand.u32 %v1154, 4294901760
    %v2310 = vsub.f32 %v1154, %v2309
    %v2311 = vand.u32 %v2310, 4294901760
    %2312 = vmatprep.subr.mxu0 %v2311
    %v2313 = vand.u32 %v1153, 4294901760
    %v2314 = vsub.f32 %v1153, %v2313
    %v2315 = vand.u32 %v2314, 4294901760
    %2316 = vmatpush1.msra.mxu0 %v2315
    %v2317 = vand.u32 %v1157, 4294901760
    %v2318 = vsub.f32 %v1157, %v2317
    %v2319 = vand.u32 %v2318, 4294901760
    %2320 = vmatprep.subr.mxu0 %v2319
    %v2321 = vand.u32 %v1156, 4294901760
    %v2322 = vsub.f32 %v1156, %v2321
    %v2323 = vand.u32 %v2322, 4294901760
    %2324 = vmatpush1.msra.mxu0 %v2323
    %v2325 = vand.u32 %v1160, 4294901760
    %v2326 = vsub.f32 %v1160, %v2325
    %v2327 = vand.u32 %v2326, 4294901760
    %2328 = vmatprep.subr.mxu0 %v2327
    %v2329 = vand.u32 %v1159, 4294901760
    %v2330 = vsub.f32 %v1159, %v2329
    %v2331 = vand.u32 %v2330, 4294901760
    %2332 = vmatpush1.msra.mxu0 %v2331
    %v2333 = vand.u32 %v1163, 4294901760
    %v2334 = vsub.f32 %v1163, %v2333
    %v2335 = vand.u32 %v2334, 4294901760
    %2336 = vmatprep.subr.mxu0 %v2335
    %v2337 = vand.u32 %v1162, 4294901760
    %v2338 = vsub.f32 %v1162, %v2337
    %v2339 = vand.u32 %v2338, 4294901760
    %2340 = vmatpush1.msra.mxu0 %v2339
    %v2341 = vand.u32 %v1166, 4294901760
    %v2342 = vsub.f32 %v1166, %v2341
    %v2343 = vand.u32 %v2342, 4294901760
    %2344 = vmatprep.subr.mxu0 %v2343
    %v2345 = vand.u32 %v1165, 4294901760
    %v2346 = vsub.f32 %v1165, %v2345
    %v2347 = vand.u32 %v2346, 4294901760
    %2348 = vmatpush1.msra.mxu0 %v2347
    %v2349 = vand.u32 %v1169, 4294901760
    %v2350 = vsub.f32 %v1169, %v2349
    %v2351 = vand.u32 %v2350, 4294901760
    %2352 = vmatprep.subr.mxu0 %v2351
    %v2353 = vand.u32 %v1168, 4294901760
    %v2354 = vsub.f32 %v1168, %v2353
    %v2355 = vand.u32 %v2354, 4294901760
    %2356 = vmatpush1.msra.mxu0 %v2355
    %v2357 = vand.u32 %v1172, 4294901760
    %v2358 = vsub.f32 %v1172, %v2357
    %v2359 = vand.u32 %v2358, 4294901760
    %2360 = vmatprep.subr.mxu0 %v2359
    %v2361 = vand.u32 %v1171, 4294901760
    %v2362 = vsub.f32 %v1171, %v2361
    %v2363 = vand.u32 %v2362, 4294901760
    %2364 = vmatpush1.msra.mxu0 %v2363
    %v2365 = vand.u32 %v1175, 4294901760
    %v2366 = vsub.f32 %v1175, %v2365
    %v2367 = vand.u32 %v2366, 4294901760
    %2368 = vmatprep.subr.mxu0 %v2367
    %v2369 = vand.u32 %v1174, 4294901760
    %v2370 = vsub.f32 %v1174, %v2369
    %v2371 = vand.u32 %v2370, 4294901760
    %2372 = vmatpush1.msra.mxu0 %v2371
    %v2373 = vand.u32 %v1178, 4294901760
    %v2374 = vsub.f32 %v1178, %v2373
    %v2375 = vand.u32 %v2374, 4294901760
    %2376 = vmatprep.subr.mxu0 %v2375
    %v2377 = vand.u32 %v1177, 4294901760
    %v2378 = vsub.f32 %v1177, %v2377
    %v2379 = vand.u32 %v2378, 4294901760
    %2380 = vmatpush1.msra.mxu0 %v2379
    %v2381 = vand.u32 %v1181, 4294901760
    %v2382 = vsub.f32 %v1181, %v2381
    %v2383 = vand.u32 %v2382, 4294901760
    %2384 = vmatprep.subr.mxu0 %v2383
    %v2385 = vand.u32 %v1180, 4294901760
    %v2386 = vsub.f32 %v1180, %v2385
    %v2387 = vand.u32 %v2386, 4294901760
    %2388 = vmatpush1.msra.mxu0 %v2387
    %v2389 = vand.u32 %v1184, 4294901760
    %v2390 = vsub.f32 %v1184, %v2389
    %v2391 = vand.u32 %v2390, 4294901760
    %2392 = vmatprep.subr.mxu0 %v2391
    %v2393 = vand.u32 %v1183, 4294901760
    %v2394 = vsub.f32 %v1183, %v2393
    %v2395 = vand.u32 %v2394, 4294901760
    %2396 = vmatpush1.msra.mxu0 %v2395
    %v2397 = vand.u32 %v1187, 4294901760
    %v2398 = vsub.f32 %v1187, %v2397
    %v2399 = vand.u32 %v2398, 4294901760
    %2400 = vmatprep.subr.mxu0 %v2399
    %v2401 = vand.u32 %v1186, 4294901760
    %v2402 = vsub.f32 %v1186, %v2401
    %v2403 = vand.u32 %v2402, 4294901760
    %2404 = vmatpush1.msra.mxu0 %v2403
    %v2405 = vand.u32 %v1190, 4294901760
    %v2406 = vsub.f32 %v1190, %v2405
    %v2407 = vand.u32 %v2406, 4294901760
    %2408 = vmatprep.subr.mxu0 %v2407
    %v2409 = vand.u32 %v1189, 4294901760
    %v2410 = vsub.f32 %v1189, %v2409
    %v2411 = vand.u32 %v2410, 4294901760
    %2412 = vmatpush1.msra.mxu0 %v2411
    %v2413 = vand.u32 %v1193, 4294901760
    %v2414 = vsub.f32 %v1193, %v2413
    %v2415 = vand.u32 %v2414, 4294901760
    %2416 = vmatprep.subr.mxu0 %v2415
    %v2417 = vand.u32 %v1192, 4294901760
    %v2418 = vsub.f32 %v1192, %v2417
    %v2419 = vand.u32 %v2418, 4294901760
    %2420 = vmatpush1.msra.mxu0 %v2419
    %v2421 = vand.u32 %v1196, 4294901760
    %v2422 = vsub.f32 %v1196, %v2421
    %v2423 = vand.u32 %v2422, 4294901760
    %2424 = vmatprep.subr.mxu0 %v2423
    %v2425 = vand.u32 %v1195, 4294901760
    %v2426 = vsub.f32 %v1195, %v2425
    %v2427 = vand.u32 %v2426, 4294901760
    %2428 = vmatpush1.msra.mxu0 %v2427
    %v2429 = vand.u32 %v1199, 4294901760
    %v2430 = vsub.f32 %v1199, %v2429
    %v2431 = vand.u32 %v2430, 4294901760
    %2432 = vmatprep.subr.mxu0 %v2431
    %v2433 = vand.u32 %v1198, 4294901760
    %v2434 = vsub.f32 %v1198, %v2433
    %v2435 = vand.u32 %v2434, 4294901760
    %2436 = vmatpush1.msra.mxu0 %v2435
    %v2437 = vand.u32 %v1202, 4294901760
    %v2438 = vsub.f32 %v1202, %v2437
    %v2439 = vand.u32 %v2438, 4294901760
    %2440 = vmatprep.subr.mxu0 %v2439
    %v2441 = vand.u32 %v1201, 4294901760
    %v2442 = vsub.f32 %v1201, %v2441
    %v2443 = vand.u32 %v2442, 4294901760
    %2444 = vmatpush1.msra.mxu0 %v2443
    %v2445 = vand.u32 %v1205, 4294901760
    %v2446 = vsub.f32 %v1205, %v2445
    %v2447 = vand.u32 %v2446, 4294901760
    %2448 = vmatprep.subr.mxu0 %v2447
    %v2449 = vand.u32 %v1204, 4294901760
    %v2450 = vsub.f32 %v1204, %v2449
    %v2451 = vand.u32 %v2450, 4294901760
    %2452 = vmatpush1.msra.mxu0 %v2451
    %v2453 = vand.u32 %v1208, 4294901760
    %v2454 = vsub.f32 %v1208, %v2453
    %v2455 = vand.u32 %v2454, 4294901760
    %2456 = vmatprep.subr.mxu0 %v2455
    %v2457 = vand.u32 %v1207, 4294901760
    %v2458 = vsub.f32 %v1207, %v2457
    %v2459 = vand.u32 %v2458, 4294901760
    %2460 = vmatpush1.msra.mxu0 %v2459
    %v2461 = vand.u32 %v1111, 4294901760
    %2462 = vmatprep.mubr.f32.mxu0 %v2461
    %v2463 = vand.u32 %v1110, 4294901760
    %2464 = vmatmul.mubr.f32.gmra.mrb[0].mxu0 %v2463
    %v2465 = vpop.f32.mrb[0].mxu0
    %v2466 = vadd.f32 %v2201, %v2465
    %v2467 = vpop.f32.mrb[0].mxu0
    %v2468 = vadd.f32 %v2203, %v2467
    %2469 = vdwg.mxu0
    %v2470 = vand.u32 %v1115, 4294901760
    %2471 = vmatprep.subr.mxu0 %v2470
    %v2472 = vand.u32 %v1114, 4294901760
    %2473 = vmatpush1.msra.mxu0 %v2472
    %v2474 = vand.u32 %v1118, 4294901760
    %2475 = vmatprep.subr.mxu0 %v2474
    %v2476 = vand.u32 %v1117, 4294901760
    %2477 = vmatpush1.msra.mxu0 %v2476
    %v2478 = vand.u32 %v1121, 4294901760
    %2479 = vmatprep.subr.mxu0 %v2478
    %v2480 = vand.u32 %v1120, 4294901760
    %2481 = vmatpush1.msra.mxu0 %v2480
    %v2482 = vand.u32 %v1124, 4294901760
    %2483 = vmatprep.subr.mxu0 %v2482
    %v2484 = vand.u32 %v1123, 4294901760
    %2485 = vmatpush1.msra.mxu0 %v2484
    %v2486 = vand.u32 %v1127, 4294901760
    %2487 = vmatprep.subr.mxu0 %v2486
    %v2488 = vand.u32 %v1126, 4294901760
    %2489 = vmatpush1.msra.mxu0 %v2488
    %v2490 = vand.u32 %v1130, 4294901760
    %2491 = vmatprep.subr.mxu0 %v2490
    %v2492 = vand.u32 %v1129, 4294901760
    %2493 = vmatpush1.msra.mxu0 %v2492
    %v2494 = vand.u32 %v1133, 4294901760
    %2495 = vmatprep.subr.mxu0 %v2494
    %v2496 = vand.u32 %v1132, 4294901760
    %2497 = vmatpush1.msra.mxu0 %v2496
    %v2498 = vand.u32 %v1136, 4294901760
    %2499 = vmatprep.subr.mxu0 %v2498
    %v2500 = vand.u32 %v1135, 4294901760
    %2501 = vmatpush1.msra.mxu0 %v2500
    %v2502 = vand.u32 %v1139, 4294901760
    %2503 = vmatprep.subr.mxu0 %v2502
    %v2504 = vand.u32 %v1138, 4294901760
    %2505 = vmatpush1.msra.mxu0 %v2504
    %v2506 = vand.u32 %v1142, 4294901760
    %2507 = vmatprep.subr.mxu0 %v2506
    %v2508 = vand.u32 %v1141, 4294901760
    %2509 = vmatpush1.msra.mxu0 %v2508
    %v2510 = vand.u32 %v1145, 4294901760
    %2511 = vmatprep.subr.mxu0 %v2510
    %v2512 = vand.u32 %v1144, 4294901760
    %2513 = vmatpush1.msra.mxu0 %v2512
    %v2514 = vand.u32 %v1148, 4294901760
    %2515 = vmatprep.subr.mxu0 %v2514
    %v2516 = vand.u32 %v1147, 4294901760
    %2517 = vmatpush1.msra.mxu0 %v2516
    %v2518 = vand.u32 %v1151, 4294901760
    %2519 = vmatprep.subr.mxu0 %v2518
    %v2520 = vand.u32 %v1150, 4294901760
    %2521 = vmatpush1.msra.mxu0 %v2520
    %v2522 = vand.u32 %v1154, 4294901760
    %2523 = vmatprep.subr.mxu0 %v2522
    %v2524 = vand.u32 %v1153, 4294901760
    %2525 = vmatpush1.msra.mxu0 %v2524
    %v2526 = vand.u32 %v1157, 4294901760
    %2527 = vmatprep.subr.mxu0 %v2526
    %v2528 = vand.u32 %v1156, 4294901760
    %2529 = vmatpush1.msra.mxu0 %v2528
    %v2530 = vand.u32 %v1160, 4294901760
    %2531 = vmatprep.subr.mxu0 %v2530
    %v2532 = vand.u32 %v1159, 4294901760
    %2533 = vmatpush1.msra.mxu0 %v2532
    %v2534 = vand.u32 %v1163, 4294901760
    %2535 = vmatprep.subr.mxu0 %v2534
    %v2536 = vand.u32 %v1162, 4294901760
    %2537 = vmatpush1.msra.mxu0 %v2536
    %v2538 = vand.u32 %v1166, 4294901760
    %2539 = vmatprep.subr.mxu0 %v2538
    %v2540 = vand.u32 %v1165, 4294901760
    %2541 = vmatpush1.msra.mxu0 %v2540
    %v2542 = vand.u32 %v1169, 4294901760
    %2543 = vmatprep.subr.mxu0 %v2542
    %v2544 = vand.u32 %v1168, 4294901760
    %2545 = vmatpush1.msra.mxu0 %v2544
    %v2546 = vand.u32 %v1172, 4294901760
    %2547 = vmatprep.subr.mxu0 %v2546
    %v2548 = vand.u32 %v1171, 4294901760
    %2549 = vmatpush1.msra.mxu0 %v2548
    %v2550 = vand.u32 %v1175, 4294901760
    %2551 = vmatprep.subr.mxu0 %v2550
    %v2552 = vand.u32 %v1174, 4294901760
    %2553 = vmatpush1.msra.mxu0 %v2552
    %v2554 = vand.u32 %v1178, 4294901760
    %2555 = vmatprep.subr.mxu0 %v2554
    %v2556 = vand.u32 %v1177, 4294901760
    %2557 = vmatpush1.msra.mxu0 %v2556
    %v2558 = vand.u32 %v1181, 4294901760
    %2559 = vmatprep.subr.mxu0 %v2558
    %v2560 = vand.u32 %v1180, 4294901760
    %2561 = vmatpush1.msra.mxu0 %v2560
    %v2562 = vand.u32 %v1184, 4294901760
    %2563 = vmatprep.subr.mxu0 %v2562
    %v2564 = vand.u32 %v1183, 4294901760
    %2565 = vmatpush1.msra.mxu0 %v2564
    %v2566 = vand.u32 %v1187, 4294901760
    %2567 = vmatprep.subr.mxu0 %v2566
    %v2568 = vand.u32 %v1186, 4294901760
    %2569 = vmatpush1.msra.mxu0 %v2568
    %v2570 = vand.u32 %v1190, 4294901760
    %2571 = vmatprep.subr.mxu0 %v2570
    %v2572 = vand.u32 %v1189, 4294901760
    %2573 = vmatpush1.msra.mxu0 %v2572
    %v2574 = vand.u32 %v1193, 4294901760
    %2575 = vmatprep.subr.mxu0 %v2574
    %v2576 = vand.u32 %v1192, 4294901760
    %2577 = vmatpush1.msra.mxu0 %v2576
    %v2578 = vand.u32 %v1196, 4294901760
    %2579 = vmatprep.subr.mxu0 %v2578
    %v2580 = vand.u32 %v1195, 4294901760
    %2581 = vmatpush1.msra.mxu0 %v2580
    %v2582 = vand.u32 %v1199, 4294901760
    %2583 = vmatprep.subr.mxu0 %v2582
    %v2584 = vand.u32 %v1198, 4294901760
    %2585 = vmatpush1.msra.mxu0 %v2584
    %v2586 = vand.u32 %v1202, 4294901760
    %2587 = vmatprep.subr.mxu0 %v2586
    %v2588 = vand.u32 %v1201, 4294901760
    %2589 = vmatpush1.msra.mxu0 %v2588
    %v2590 = vand.u32 %v1205, 4294901760
    %2591 = vmatprep.subr.mxu0 %v2590
    %v2592 = vand.u32 %v1204, 4294901760
    %2593 = vmatpush1.msra.mxu0 %v2592
    %v2594 = vand.u32 %v1208, 4294901760
    %2595 = vmatprep.subr.mxu0 %v2594
    %v2596 = vand.u32 %v1207, 4294901760
    %2597 = vmatpush1.msra.mxu0 %v2596
    %v2598 = vand.u32 %v1111, 4294901760
    %2599 = vmatprep.mubr.f32.mxu0 %v2598
    %v2600 = vand.u32 %v1110, 4294901760
    %2601 = vmatmul.mubr.f32.gmra.mrb[0].mxu0 %v2600
    %v2602 = vpop.f32.mrb[0].mxu0
    %v2603 = vadd.f32 %v2466, %v2602
    %v2604 = vpop.f32.mrb[0].mxu0
    %v2605 = vadd.f32 %v2468, %v2604
    %2606 = vdwg.mxu0
    %v2607 = vand.u32 %v1211, 4294901760
    %2608 = vmatprep.subr.mxu0 %v2607
    %v2609 = vand.u32 %v1210, 4294901760
    %2610 = vmatpush1.msra.mxu0 %v2609
    %v2611 = vand.u32 %v1214, 4294901760
    %2612 = vmatprep.subr.mxu0 %v2611
    %v2613 = vand.u32 %v1213, 4294901760
    %2614 = vmatpush1.msra.mxu0 %v2613
    %v2615 = vand.u32 %v1217, 4294901760
    %2616 = vmatprep.subr.mxu0 %v2615
    %v2617 = vand.u32 %v1216, 4294901760
    %2618 = vmatpush1.msra.mxu0 %v2617
    %v2619 = vand.u32 %v1220, 4294901760
    %2620 = vmatprep.subr.mxu0 %v2619
    %v2621 = vand.u32 %v1219, 4294901760
    %2622 = vmatpush1.msra.mxu0 %v2621
    %v2623 = vand.u32 %v1223, 4294901760
    %2624 = vmatprep.subr.mxu0 %v2623
    %v2625 = vand.u32 %v1222, 4294901760
    %2626 = vmatpush1.msra.mxu0 %v2625
    %v2627 = vand.u32 %v1226, 4294901760
    %2628 = vmatprep.subr.mxu0 %v2627
    %v2629 = vand.u32 %v1225, 4294901760
    %2630 = vmatpush1.msra.mxu0 %v2629
    %v2631 = vand.u32 %v1229, 4294901760
    %2632 = vmatprep.subr.mxu0 %v2631
    %v2633 = vand.u32 %v1228, 4294901760
    %2634 = vmatpush1.msra.mxu0 %v2633
    %v2635 = vand.u32 %v1232, 4294901760
    %2636 = vmatprep.subr.mxu0 %v2635
    %v2637 = vand.u32 %v1231, 4294901760
    %2638 = vmatpush1.msra.mxu0 %v2637
    %v2639 = vand.u32 %v1235, 4294901760
    %2640 = vmatprep.subr.mxu0 %v2639
    %v2641 = vand.u32 %v1234, 4294901760
    %2642 = vmatpush1.msra.mxu0 %v2641
    %v2643 = vand.u32 %v1238, 4294901760
    %2644 = vmatprep.subr.mxu0 %v2643
    %v2645 = vand.u32 %v1237, 4294901760
    %2646 = vmatpush1.msra.mxu0 %v2645
    %v2647 = vand.u32 %v1241, 4294901760
    %2648 = vmatprep.subr.mxu0 %v2647
    %v2649 = vand.u32 %v1240, 4294901760
    %2650 = vmatpush1.msra.mxu0 %v2649
    %v2651 = vand.u32 %v1244, 4294901760
    %2652 = vmatprep.subr.mxu0 %v2651
    %v2653 = vand.u32 %v1243, 4294901760
    %2654 = vmatpush1.msra.mxu0 %v2653
    %v2655 = vand.u32 %v1247, 4294901760
    %2656 = vmatprep.subr.mxu0 %v2655
    %v2657 = vand.u32 %v1246, 4294901760
    %2658 = vmatpush1.msra.mxu0 %v2657
    %v2659 = vand.u32 %v1250, 4294901760
    %2660 = vmatprep.subr.mxu0 %v2659
    %v2661 = vand.u32 %v1249, 4294901760
    %2662 = vmatpush1.msra.mxu0 %v2661
    %v2663 = vand.u32 %v1253, 4294901760
    %2664 = vmatprep.subr.mxu0 %v2663
    %v2665 = vand.u32 %v1252, 4294901760
    %2666 = vmatpush1.msra.mxu0 %v2665
    %v2667 = vand.u32 %v1256, 4294901760
    %2668 = vmatprep.subr.mxu0 %v2667
    %v2669 = vand.u32 %v1255, 4294901760
    %2670 = vmatpush1.msra.mxu0 %v2669
    %v2671 = vand.u32 %v1259, 4294901760
    %2672 = vmatprep.subr.mxu0 %v2671
    %v2673 = vand.u32 %v1258, 4294901760
    %2674 = vmatpush1.msra.mxu0 %v2673
    %v2675 = vand.u32 %v1262, 4294901760
    %2676 = vmatprep.subr.mxu0 %v2675
    %v2677 = vand.u32 %v1261, 4294901760
    %2678 = vmatpush1.msra.mxu0 %v2677
    %v2679 = vand.u32 %v1265, 4294901760
    %2680 = vmatprep.subr.mxu0 %v2679
    %v2681 = vand.u32 %v1264, 4294901760
    %2682 = vmatpush1.msra.mxu0 %v2681
    %v2683 = vand.u32 %v1268, 4294901760
    %2684 = vmatprep.subr.mxu0 %v2683
    %v2685 = vand.u32 %v1267, 4294901760
    %2686 = vmatpush1.msra.mxu0 %v2685
    %v2687 = vand.u32 %v1271, 4294901760
    %2688 = vmatprep.subr.mxu0 %v2687
    %v2689 = vand.u32 %v1270, 4294901760
    %2690 = vmatpush1.msra.mxu0 %v2689
    %v2691 = vand.u32 %v1274, 4294901760
    %2692 = vmatprep.subr.mxu0 %v2691
    %v2693 = vand.u32 %v1273, 4294901760
    %2694 = vmatpush1.msra.mxu0 %v2693
    %v2695 = vand.u32 %v1277, 4294901760
    %2696 = vmatprep.subr.mxu0 %v2695
    %v2697 = vand.u32 %v1276, 4294901760
    %2698 = vmatpush1.msra.mxu0 %v2697
    %v2699 = vand.u32 %v1280, 4294901760
    %2700 = vmatprep.subr.mxu0 %v2699
    %v2701 = vand.u32 %v1279, 4294901760
    %2702 = vmatpush1.msra.mxu0 %v2701
    %v2703 = vand.u32 %v1283, 4294901760
    %2704 = vmatprep.subr.mxu0 %v2703
    %v2705 = vand.u32 %v1282, 4294901760
    %2706 = vmatpush1.msra.mxu0 %v2705
    %v2707 = vand.u32 %v1286, 4294901760
    %2708 = vmatprep.subr.mxu0 %v2707
    %v2709 = vand.u32 %v1285, 4294901760
    %2710 = vmatpush1.msra.mxu0 %v2709
    %v2711 = vand.u32 %v1289, 4294901760
    %2712 = vmatprep.subr.mxu0 %v2711
    %v2713 = vand.u32 %v1288, 4294901760
    %2714 = vmatpush1.msra.mxu0 %v2713
    %v2715 = vand.u32 %v1292, 4294901760
    %2716 = vmatprep.subr.mxu0 %v2715
    %v2717 = vand.u32 %v1291, 4294901760
    %2718 = vmatpush1.msra.mxu0 %v2717
    %v2719 = vand.u32 %v1295, 4294901760
    %2720 = vmatprep.subr.mxu0 %v2719
    %v2721 = vand.u32 %v1294, 4294901760
    %2722 = vmatpush1.msra.mxu0 %v2721
    %v2723 = vand.u32 %v1298, 4294901760
    %2724 = vmatprep.subr.mxu0 %v2723
    %v2725 = vand.u32 %v1297, 4294901760
    %2726 = vmatpush1.msra.mxu0 %v2725
    %v2727 = vand.u32 %v1301, 4294901760
    %2728 = vmatprep.subr.mxu0 %v2727
    %v2729 = vand.u32 %v1300, 4294901760
    %2730 = vmatpush1.msra.mxu0 %v2729
    %v2731 = vand.u32 %v1304, 4294901760
    %2732 = vmatprep.subr.mxu0 %v2731
    %v2733 = vand.u32 %v1303, 4294901760
    %2734 = vmatpush1.msra.mxu0 %v2733
    %v2735 = vand.u32 %v1113, 4294901760
    %v2736 = vsub.f32 %v1113, %v2735
    %v2737 = vand.u32 %v2736, 4294901760
    %v2738 = vsub.f32 %v2736, %v2737
    %v2739 = vand.u32 %v2738, 4294901760
    %2740 = vmatprep.mubr.f32.mxu0 %v2739
    %v2741 = vand.u32 %v1112, 4294901760
    %v2742 = vsub.f32 %v1112, %v2741
    %v2743 = vand.u32 %v2742, 4294901760
    %v2744 = vsub.f32 %v2742, %v2743
    %v2745 = vand.u32 %v2744, 4294901760
    %2746 = vmatmul.mubr.f32.gmra.mrb[0].mxu0 %v2745
    %v2747 = vpop.f32.mrb[0].mxu0
    %v2748 = vadd.f32 %v2603, %v2747
    %v2749 = vpop.f32.mrb[0].mxu0
    %v2750 = vadd.f32 %v2605, %v2749
    %2751 = vdwg.mxu0
    %v2752 = vand.u32 %v1211, 4294901760
    %v2753 = vsub.f32 %v1211, %v2752
    %v2754 = vand.u32 %v2753, 4294901760
    %v2755 = vsub.f32 %v2753, %v2754
    %v2756 = vand.u32 %v2755, 4294901760
    %2757 = vmatprep.subr.mxu0 %v2756
    %v2758 = vand.u32 %v1210, 4294901760
    %v2759 = vsub.f32 %v1210, %v2758
    %v2760 = vand.u32 %v2759, 4294901760
    %v2761 = vsub.f32 %v2759, %v2760
    %v2762 = vand.u32 %v2761, 4294901760
    %2763 = vmatpush1.msra.mxu0 %v2762
    %v2764 = vand.u32 %v1214, 4294901760
    %v2765 = vsub.f32 %v1214, %v2764
    %v2766 = vand.u32 %v2765, 4294901760
    %v2767 = vsub.f32 %v2765, %v2766
    %v2768 = vand.u32 %v2767, 4294901760
    %2769 = vmatprep.subr.mxu0 %v2768
    %v2770 = vand.u32 %v1213, 4294901760
    %v2771 = vsub.f32 %v1213, %v2770
    %v2772 = vand.u32 %v2771, 4294901760
    %v2773 = vsub.f32 %v2771, %v2772
    %v2774 = vand.u32 %v2773, 4294901760
    %2775 = vmatpush1.msra.mxu0 %v2774
    %v2776 = vand.u32 %v1217, 4294901760
    %v2777 = vsub.f32 %v1217, %v2776
    %v2778 = vand.u32 %v2777, 4294901760
    %v2779 = vsub.f32 %v2777, %v2778
    %v2780 = vand.u32 %v2779, 4294901760
    %2781 = vmatprep.subr.mxu0 %v2780
    %v2782 = vand.u32 %v1216, 4294901760
    %v2783 = vsub.f32 %v1216, %v2782
    %v2784 = vand.u32 %v2783, 4294901760
    %v2785 = vsub.f32 %v2783, %v2784
    %v2786 = vand.u32 %v2785, 4294901760
    %2787 = vmatpush1.msra.mxu0 %v2786
    %v2788 = vand.u32 %v1220, 4294901760
    %v2789 = vsub.f32 %v1220, %v2788
    %v2790 = vand.u32 %v2789, 4294901760
    %v2791 = vsub.f32 %v2789, %v2790
    %v2792 = vand.u32 %v2791, 4294901760
    %2793 = vmatprep.subr.mxu0 %v2792
    %v2794 = vand.u32 %v1219, 4294901760
    %v2795 = vsub.f32 %v1219, %v2794
    %v2796 = vand.u32 %v2795, 4294901760
    %v2797 = vsub.f32 %v2795, %v2796
    %v2798 = vand.u32 %v2797, 4294901760
    %2799 = vmatpush1.msra.mxu0 %v2798
    %v2800 = vand.u32 %v1223, 4294901760
    %v2801 = vsub.f32 %v1223, %v2800
    %v2802 = vand.u32 %v2801, 4294901760
    %v2803 = vsub.f32 %v2801, %v2802
    %v2804 = vand.u32 %v2803, 4294901760
    %2805 = vmatprep.subr.mxu0 %v2804
    %v2806 = vand.u32 %v1222, 4294901760
    %v2807 = vsub.f32 %v1222, %v2806
    %v2808 = vand.u32 %v2807, 4294901760
    %v2809 = vsub.f32 %v2807, %v2808
    %v2810 = vand.u32 %v2809, 4294901760
    %2811 = vmatpush1.msra.mxu0 %v2810
    %v2812 = vand.u32 %v1226, 4294901760
    %v2813 = vsub.f32 %v1226, %v2812
    %v2814 = vand.u32 %v2813, 4294901760
    %v2815 = vsub.f32 %v2813, %v2814
    %v2816 = vand.u32 %v2815, 4294901760
    %2817 = vmatprep.subr.mxu0 %v2816
    %v2818 = vand.u32 %v1225, 4294901760
    %v2819 = vsub.f32 %v1225, %v2818
    %v2820 = vand.u32 %v2819, 4294901760
    %v2821 = vsub.f32 %v2819, %v2820
    %v2822 = vand.u32 %v2821, 4294901760
    %2823 = vmatpush1.msra.mxu0 %v2822
    %v2824 = vand.u32 %v1229, 4294901760
    %v2825 = vsub.f32 %v1229, %v2824
    %v2826 = vand.u32 %v2825, 4294901760
    %v2827 = vsub.f32 %v2825, %v2826
    %v2828 = vand.u32 %v2827, 4294901760
    %2829 = vmatprep.subr.mxu0 %v2828
    %v2830 = vand.u32 %v1228, 4294901760
    %v2831 = vsub.f32 %v1228, %v2830
    %v2832 = vand.u32 %v2831, 4294901760
    %v2833 = vsub.f32 %v2831, %v2832
    %v2834 = vand.u32 %v2833, 4294901760
    %2835 = vmatpush1.msra.mxu0 %v2834
    %v2836 = vand.u32 %v1232, 4294901760
    %v2837 = vsub.f32 %v1232, %v2836
    %v2838 = vand.u32 %v2837, 4294901760
    %v2839 = vsub.f32 %v2837, %v2838
    %v2840 = vand.u32 %v2839, 4294901760
    %2841 = vmatprep.subr.mxu0 %v2840
    %v2842 = vand.u32 %v1231, 4294901760
    %v2843 = vsub.f32 %v1231, %v2842
    %v2844 = vand.u32 %v2843, 4294901760
    %v2845 = vsub.f32 %v2843, %v2844
    %v2846 = vand.u32 %v2845, 4294901760
    %2847 = vmatpush1.msra.mxu0 %v2846
    %v2848 = vand.u32 %v1235, 4294901760
    %v2849 = vsub.f32 %v1235, %v2848
    %v2850 = vand.u32 %v2849, 4294901760
    %v2851 = vsub.f32 %v2849, %v2850
    %v2852 = vand.u32 %v2851, 4294901760
    %2853 = vmatprep.subr.mxu0 %v2852
    %v2854 = vand.u32 %v1234, 4294901760
    %v2855 = vsub.f32 %v1234, %v2854
    %v2856 = vand.u32 %v2855, 4294901760
    %v2857 = vsub.f32 %v2855, %v2856
    %v2858 = vand.u32 %v2857, 4294901760
    %2859 = vmatpush1.msra.mxu0 %v2858
    %v2860 = vand.u32 %v1238, 4294901760
    %v2861 = vsub.f32 %v1238, %v2860
    %v2862 = vand.u32 %v2861, 4294901760
    %v2863 = vsub.f32 %v2861, %v2862
    %v2864 = vand.u32 %v2863, 4294901760
    %2865 = vmatprep.subr.mxu0 %v2864
    %v2866 = vand.u32 %v1237, 4294901760
    %v2867 = vsub.f32 %v1237, %v2866
    %v2868 = vand.u32 %v2867, 4294901760
    %v2869 = vsub.f32 %v2867, %v2868
    %v2870 = vand.u32 %v2869, 4294901760
    %2871 = vmatpush1.msra.mxu0 %v2870
    %v2872 = vand.u32 %v1241, 4294901760
    %v2873 = vsub.f32 %v1241, %v2872
    %v2874 = vand.u32 %v2873, 4294901760
    %v2875 = vsub.f32 %v2873, %v2874
    %v2876 = vand.u32 %v2875, 4294901760
    %2877 = vmatprep.subr.mxu0 %v2876
    %v2878 = vand.u32 %v1240, 4294901760
    %v2879 = vsub.f32 %v1240, %v2878
    %v2880 = vand.u32 %v2879, 4294901760
    %v2881 = vsub.f32 %v2879, %v2880
    %v2882 = vand.u32 %v2881, 4294901760
    %2883 = vmatpush1.msra.mxu0 %v2882
    %v2884 = vand.u32 %v1244, 4294901760
    %v2885 = vsub.f32 %v1244, %v2884
    %v2886 = vand.u32 %v2885, 4294901760
    %v2887 = vsub.f32 %v2885, %v2886
    %v2888 = vand.u32 %v2887, 4294901760
    %2889 = vmatprep.subr.mxu0 %v2888
    %v2890 = vand.u32 %v1243, 4294901760
    %v2891 = vsub.f32 %v1243, %v2890
    %v2892 = vand.u32 %v2891, 4294901760
    %v2893 = vsub.f32 %v2891, %v2892
    %v2894 = vand.u32 %v2893, 4294901760
    %2895 = vmatpush1.msra.mxu0 %v2894
    %v2896 = vand.u32 %v1247, 4294901760
    %v2897 = vsub.f32 %v1247, %v2896
    %v2898 = vand.u32 %v2897, 4294901760
    %v2899 = vsub.f32 %v2897, %v2898
    %v2900 = vand.u32 %v2899, 4294901760
    %2901 = vmatprep.subr.mxu0 %v2900
    %v2902 = vand.u32 %v1246, 4294901760
    %v2903 = vsub.f32 %v1246, %v2902
    %v2904 = vand.u32 %v2903, 4294901760
    %v2905 = vsub.f32 %v2903, %v2904
    %v2906 = vand.u32 %v2905, 4294901760
    %2907 = vmatpush1.msra.mxu0 %v2906
    %v2908 = vand.u32 %v1250, 4294901760
    %v2909 = vsub.f32 %v1250, %v2908
    %v2910 = vand.u32 %v2909, 4294901760
    %v2911 = vsub.f32 %v2909, %v2910
    %v2912 = vand.u32 %v2911, 4294901760
    %2913 = vmatprep.subr.mxu0 %v2912
    %v2914 = vand.u32 %v1249, 4294901760
    %v2915 = vsub.f32 %v1249, %v2914
    %v2916 = vand.u32 %v2915, 4294901760
    %v2917 = vsub.f32 %v2915, %v2916
    %v2918 = vand.u32 %v2917, 4294901760
    %2919 = vmatpush1.msra.mxu0 %v2918
    %v2920 = vand.u32 %v1253, 4294901760
    %v2921 = vsub.f32 %v1253, %v2920
    %v2922 = vand.u32 %v2921, 4294901760
    %v2923 = vsub.f32 %v2921, %v2922
    %v2924 = vand.u32 %v2923, 4294901760
    %2925 = vmatprep.subr.mxu0 %v2924
    %v2926 = vand.u32 %v1252, 4294901760
    %v2927 = vsub.f32 %v1252, %v2926
    %v2928 = vand.u32 %v2927, 4294901760
    %v2929 = vsub.f32 %v2927, %v2928
    %v2930 = vand.u32 %v2929, 4294901760
    %2931 = vmatpush1.msra.mxu0 %v2930
    %v2932 = vand.u32 %v1256, 4294901760
    %v2933 = vsub.f32 %v1256, %v2932
    %v2934 = vand.u32 %v2933, 4294901760
    %v2935 = vsub.f32 %v2933, %v2934
    %v2936 = vand.u32 %v2935, 4294901760
    %2937 = vmatprep.subr.mxu0 %v2936
    %v2938 = vand.u32 %v1255, 4294901760
    %v2939 = vsub.f32 %v1255, %v2938
    %v2940 = vand.u32 %v2939, 4294901760
    %v2941 = vsub.f32 %v2939, %v2940
    %v2942 = vand.u32 %v2941, 4294901760
    %2943 = vmatpush1.msra.mxu0 %v2942
    %v2944 = vand.u32 %v1259, 4294901760
    %v2945 = vsub.f32 %v1259, %v2944
    %v2946 = vand.u32 %v2945, 4294901760
    %v2947 = vsub.f32 %v2945, %v2946
    %v2948 = vand.u32 %v2947, 4294901760
    %2949 = vmatprep.subr.mxu0 %v2948
    %v2950 = vand.u32 %v1258, 4294901760
    %v2951 = vsub.f32 %v1258, %v2950
    %v2952 = vand.u32 %v2951, 4294901760
    %v2953 = vsub.f32 %v2951, %v2952
    %v2954 = vand.u32 %v2953, 4294901760
    %2955 = vmatpush1.msra.mxu0 %v2954
    %v2956 = vand.u32 %v1262, 4294901760
    %v2957 = vsub.f32 %v1262, %v2956
    %v2958 = vand.u32 %v2957, 4294901760
    %v2959 = vsub.f32 %v2957, %v2958
    %v2960 = vand.u32 %v2959, 4294901760
    %2961 = vmatprep.subr.mxu0 %v2960
    %v2962 = vand.u32 %v1261, 4294901760
    %v2963 = vsub.f32 %v1261, %v2962
    %v2964 = vand.u32 %v2963, 4294901760
    %v2965 = vsub.f32 %v2963, %v2964
    %v2966 = vand.u32 %v2965, 4294901760
    %2967 = vmatpush1.msra.mxu0 %v2966
    %v2968 = vand.u32 %v1265, 4294901760
    %v2969 = vsub.f32 %v1265, %v2968
    %v2970 = vand.u32 %v2969, 4294901760
    %v2971 = vsub.f32 %v2969, %v2970
    %v2972 = vand.u32 %v2971, 4294901760
    %2973 = vmatprep.subr.mxu0 %v2972
    %v2974 = vand.u32 %v1264, 4294901760
    %v2975 = vsub.f32 %v1264, %v2974
    %v2976 = vand.u32 %v2975, 4294901760
    %v2977 = vsub.f32 %v2975, %v2976
    %v2978 = vand.u32 %v2977, 4294901760
    %2979 = vmatpush1.msra.mxu0 %v2978
    %v2980 = vand.u32 %v1268, 4294901760
    %v2981 = vsub.f32 %v1268, %v2980
    %v2982 = vand.u32 %v2981, 4294901760
    %v2983 = vsub.f32 %v2981, %v2982
    %v2984 = vand.u32 %v2983, 4294901760
    %2985 = vmatprep.subr.mxu0 %v2984
    %v2986 = vand.u32 %v1267, 4294901760
    %v2987 = vsub.f32 %v1267, %v2986
    %v2988 = vand.u32 %v2987, 4294901760
    %v2989 = vsub.f32 %v2987, %v2988
    %v2990 = vand.u32 %v2989, 4294901760
    %2991 = vmatpush1.msra.mxu0 %v2990
    %v2992 = vand.u32 %v1271, 4294901760
    %v2993 = vsub.f32 %v1271, %v2992
    %v2994 = vand.u32 %v2993, 4294901760
    %v2995 = vsub.f32 %v2993, %v2994
    %v2996 = vand.u32 %v2995, 4294901760
    %2997 = vmatprep.subr.mxu0 %v2996
    %v2998 = vand.u32 %v1270, 4294901760
    %v2999 = vsub.f32 %v1270, %v2998
    %v3000 = vand.u32 %v2999, 4294901760
    %v3001 = vsub.f32 %v2999, %v3000
    %v3002 = vand.u32 %v3001, 4294901760
    %3003 = vmatpush1.msra.mxu0 %v3002
    %v3004 = vand.u32 %v1274, 4294901760
    %v3005 = vsub.f32 %v1274, %v3004
    %v3006 = vand.u32 %v3005, 4294901760
    %v3007 = vsub.f32 %v3005, %v3006
    %v3008 = vand.u32 %v3007, 4294901760
    %3009 = vmatprep.subr.mxu0 %v3008
    %v3010 = vand.u32 %v1273, 4294901760
    %v3011 = vsub.f32 %v1273, %v3010
    %v3012 = vand.u32 %v3011, 4294901760
    %v3013 = vsub.f32 %v3011, %v3012
    %v3014 = vand.u32 %v3013, 4294901760
    %3015 = vmatpush1.msra.mxu0 %v3014
    %v3016 = vand.u32 %v1277, 4294901760
    %v3017 = vsub.f32 %v1277, %v3016
    %v3018 = vand.u32 %v3017, 4294901760
    %v3019 = vsub.f32 %v3017, %v3018
    %v3020 = vand.u32 %v3019, 4294901760
    %3021 = vmatprep.subr.mxu0 %v3020
    %v3022 = vand.u32 %v1276, 4294901760
    %v3023 = vsub.f32 %v1276, %v3022
    %v3024 = vand.u32 %v3023, 4294901760
    %v3025 = vsub.f32 %v3023, %v3024
    %v3026 = vand.u32 %v3025, 4294901760
    %3027 = vmatpush1.msra.mxu0 %v3026
    %v3028 = vand.u32 %v1280, 4294901760
    %v3029 = vsub.f32 %v1280, %v3028
    %v3030 = vand.u32 %v3029, 4294901760
    %v3031 = vsub.f32 %v3029, %v3030
    %v3032 = vand.u32 %v3031, 4294901760
    %3033 = vmatprep.subr.mxu0 %v3032
    %v3034 = vand.u32 %v1279, 4294901760
    %v3035 = vsub.f32 %v1279, %v3034
    %v3036 = vand.u32 %v3035, 4294901760
    %v3037 = vsub.f32 %v3035, %v3036
    %v3038 = vand.u32 %v3037, 4294901760
    %3039 = vmatpush1.msra.mxu0 %v3038
    %v3040 = vand.u32 %v1283, 4294901760
    %v3041 = vsub.f32 %v1283, %v3040
    %v3042 = vand.u32 %v3041, 4294901760
    %v3043 = vsub.f32 %v3041, %v3042
    %v3044 = vand.u32 %v3043, 4294901760
    %3045 = vmatprep.subr.mxu0 %v3044
    %v3046 = vand.u32 %v1282, 4294901760
    %v3047 = vsub.f32 %v1282, %v3046
    %v3048 = vand.u32 %v3047, 4294901760
    %v3049 = vsub.f32 %v3047, %v3048
    %v3050 = vand.u32 %v3049, 4294901760
    %3051 = vmatpush1.msra.mxu0 %v3050
    %v3052 = vand.u32 %v1286, 4294901760
    %v3053 = vsub.f32 %v1286, %v3052
    %v3054 = vand.u32 %v3053, 4294901760
    %v3055 = vsub.f32 %v3053, %v3054
    %v3056 = vand.u32 %v3055, 4294901760
    %3057 = vmatprep.subr.mxu0 %v3056
    %v3058 = vand.u32 %v1285, 4294901760
    %v3059 = vsub.f32 %v1285, %v3058
    %v3060 = vand.u32 %v3059, 4294901760
    %v3061 = vsub.f32 %v3059, %v3060
    %v3062 = vand.u32 %v3061, 4294901760
    %3063 = vmatpush1.msra.mxu0 %v3062
    %v3064 = vand.u32 %v1289, 4294901760
    %v3065 = vsub.f32 %v1289, %v3064
    %v3066 = vand.u32 %v3065, 4294901760
    %v3067 = vsub.f32 %v3065, %v3066
    %v3068 = vand.u32 %v3067, 4294901760
    %3069 = vmatprep.subr.mxu0 %v3068
    %v3070 = vand.u32 %v1288, 4294901760
    %v3071 = vsub.f32 %v1288, %v3070
    %v3072 = vand.u32 %v3071, 4294901760
    %v3073 = vsub.f32 %v3071, %v3072
    %v3074 = vand.u32 %v3073, 4294901760
    %3075 = vmatpush1.msra.mxu0 %v3074
    %v3076 = vand.u32 %v1292, 4294901760
    %v3077 = vsub.f32 %v1292, %v3076
    %v3078 = vand.u32 %v3077, 4294901760
    %v3079 = vsub.f32 %v3077, %v3078
    %v3080 = vand.u32 %v3079, 4294901760
    %3081 = vmatprep.subr.mxu0 %v3080
    %v3082 = vand.u32 %v1291, 4294901760
    %v3083 = vsub.f32 %v1291, %v3082
    %v3084 = vand.u32 %v3083, 4294901760
    %v3085 = vsub.f32 %v3083, %v3084
    %v3086 = vand.u32 %v3085, 4294901760
    %3087 = vmatpush1.msra.mxu0 %v3086
    %v3088 = vand.u32 %v1295, 4294901760
    %v3089 = vsub.f32 %v1295, %v3088
    %v3090 = vand.u32 %v3089, 4294901760
    %v3091 = vsub.f32 %v3089, %v3090
    %v3092 = vand.u32 %v3091, 4294901760
    %3093 = vmatprep.subr.mxu0 %v3092
    %v3094 = vand.u32 %v1294, 4294901760
    %v3095 = vsub.f32 %v1294, %v3094
    %v3096 = vand.u32 %v3095, 4294901760
    %v3097 = vsub.f32 %v3095, %v3096
    %v3098 = vand.u32 %v3097, 4294901760
    %3099 = vmatpush1.msra.mxu0 %v3098
    %v3100 = vand.u32 %v1298, 4294901760
    %v3101 = vsub.f32 %v1298, %v3100
    %v3102 = vand.u32 %v3101, 4294901760
    %v3103 = vsub.f32 %v3101, %v3102
    %v3104 = vand.u32 %v3103, 4294901760
    %3105 = vmatprep.subr.mxu0 %v3104
    %v3106 = vand.u32 %v1297, 4294901760
    %v3107 = vsub.f32 %v1297, %v3106
    %v3108 = vand.u32 %v3107, 4294901760
    %v3109 = vsub.f32 %v3107, %v3108
    %v3110 = vand.u32 %v3109, 4294901760
    %3111 = vmatpush1.msra.mxu0 %v3110
    %v3112 = vand.u32 %v1301, 4294901760
    %v3113 = vsub.f32 %v1301, %v3112
    %v3114 = vand.u32 %v3113, 4294901760
    %v3115 = vsub.f32 %v3113, %v3114
    %v3116 = vand.u32 %v3115, 4294901760
    %3117 = vmatprep.subr.mxu0 %v3116
    %v3118 = vand.u32 %v1300, 4294901760
    %v3119 = vsub.f32 %v1300, %v3118
    %v3120 = vand.u32 %v3119, 4294901760
    %v3121 = vsub.f32 %v3119, %v3120
    %v3122 = vand.u32 %v3121, 4294901760
    %3123 = vmatpush1.msra.mxu0 %v3122
    %v3124 = vand.u32 %v1304, 4294901760
    %v3125 = vsub.f32 %v1304, %v3124
    %v3126 = vand.u32 %v3125, 4294901760
    %v3127 = vsub.f32 %v3125, %v3126
    %v3128 = vand.u32 %v3127, 4294901760
    %3129 = vmatprep.subr.mxu0 %v3128
    %v3130 = vand.u32 %v1303, 4294901760
    %v3131 = vsub.f32 %v1303, %v3130
    %v3132 = vand.u32 %v3131, 4294901760
    %v3133 = vsub.f32 %v3131, %v3132
    %v3134 = vand.u32 %v3133, 4294901760
    %3135 = vmatpush1.msra.mxu0 %v3134
    %v3136 = vand.u32 %v1113, 4294901760
    %3137 = vmatprep.mubr.f32.mxu0 %v3136
    %v3138 = vand.u32 %v1112, 4294901760
    %3139 = vmatmul.mubr.f32.gmra.mrb[0].mxu0 %v3138
    %v3140 = vpop.f32.mrb[0].mxu0
    %v3141 = vadd.f32 %v2748, %v3140
    %v3142 = vpop.f32.mrb[0].mxu0
    %v3143 = vadd.f32 %v2750, %v3142
    %3144 = vdwg.mxu0
    %v3145 = vand.u32 %v1211, 4294901760
    %v3146 = vsub.f32 %v1211, %v3145
    %3147 = vmatprep.subr.mxu0 %v3146
    %v3148 = vand.u32 %v1210, 4294901760
    %v3149 = vsub.f32 %v1210, %v3148
    %3150 = vmatpush1.msra.mxu0 %v3149
    %v3151 = vand.u32 %v1214, 4294901760
    %v3152 = vsub.f32 %v1214, %v3151
    %3153 = vmatprep.subr.mxu0 %v3152
    %v3154 = vand.u32 %v1213, 4294901760
    %v3155 = vsub.f32 %v1213, %v3154
    %3156 = vmatpush1.msra.mxu0 %v3155
    %v3157 = vand.u32 %v1217, 4294901760
    %v3158 = vsub.f32 %v1217, %v3157
    %3159 = vmatprep.subr.mxu0 %v3158
    %v3160 = vand.u32 %v1216, 4294901760
    %v3161 = vsub.f32 %v1216, %v3160
    %3162 = vmatpush1.msra.mxu0 %v3161
    %v3163 = vand.u32 %v1220, 4294901760
    %v3164 = vsub.f32 %v1220, %v3163
    %3165 = vmatprep.subr.mxu0 %v3164
    %v3166 = vand.u32 %v1219, 4294901760
    %v3167 = vsub.f32 %v1219, %v3166
    %3168 = vmatpush1.msra.mxu0 %v3167
    %v3169 = vand.u32 %v1223, 4294901760
    %v3170 = vsub.f32 %v1223, %v3169
    %3171 = vmatprep.subr.mxu0 %v3170
    %v3172 = vand.u32 %v1222, 4294901760
    %v3173 = vsub.f32 %v1222, %v3172
    %3174 = vmatpush1.msra.mxu0 %v3173
    %v3175 = vand.u32 %v1226, 4294901760
    %v3176 = vsub.f32 %v1226, %v3175
    %3177 = vmatprep.subr.mxu0 %v3176
    %v3178 = vand.u32 %v1225, 4294901760
    %v3179 = vsub.f32 %v1225, %v3178
    %3180 = vmatpush1.msra.mxu0 %v3179
    %v3181 = vand.u32 %v1229, 4294901760
    %v3182 = vsub.f32 %v1229, %v3181
    %3183 = vmatprep.subr.mxu0 %v3182
    %v3184 = vand.u32 %v1228, 4294901760
    %v3185 = vsub.f32 %v1228, %v3184
    %3186 = vmatpush1.msra.mxu0 %v3185
    %v3187 = vand.u32 %v1232, 4294901760
    %v3188 = vsub.f32 %v1232, %v3187
    %3189 = vmatprep.subr.mxu0 %v3188
    %v3190 = vand.u32 %v1231, 4294901760
    %v3191 = vsub.f32 %v1231, %v3190
    %3192 = vmatpush1.msra.mxu0 %v3191
    %v3193 = vand.u32 %v1235, 4294901760
    %v3194 = vsub.f32 %v1235, %v3193
    %3195 = vmatprep.subr.mxu0 %v3194
    %v3196 = vand.u32 %v1234, 4294901760
    %v3197 = vsub.f32 %v1234, %v3196
    %3198 = vmatpush1.msra.mxu0 %v3197
    %v3199 = vand.u32 %v1238, 4294901760
    %v3200 = vsub.f32 %v1238, %v3199
    %3201 = vmatprep.subr.mxu0 %v3200
    %v3202 = vand.u32 %v1237, 4294901760
    %v3203 = vsub.f32 %v1237, %v3202
    %3204 = vmatpush1.msra.mxu0 %v3203
    %v3205 = vand.u32 %v1241, 4294901760
    %v3206 = vsub.f32 %v1241, %v3205
    %3207 = vmatprep.subr.mxu0 %v3206
    %v3208 = vand.u32 %v1240, 4294901760
    %v3209 = vsub.f32 %v1240, %v3208
    %3210 = vmatpush1.msra.mxu0 %v3209
    %v3211 = vand.u32 %v1244, 4294901760
    %v3212 = vsub.f32 %v1244, %v3211
    %3213 = vmatprep.subr.mxu0 %v3212
    %v3214 = vand.u32 %v1243, 4294901760
    %v3215 = vsub.f32 %v1243, %v3214
    %3216 = vmatpush1.msra.mxu0 %v3215
    %v3217 = vand.u32 %v1247, 4294901760
    %v3218 = vsub.f32 %v1247, %v3217
    %3219 = vmatprep.subr.mxu0 %v3218
    %v3220 = vand.u32 %v1246, 4294901760
    %v3221 = vsub.f32 %v1246, %v3220
    %3222 = vmatpush1.msra.mxu0 %v3221
    %v3223 = vand.u32 %v1250, 4294901760
    %v3224 = vsub.f32 %v1250, %v3223
    %3225 = vmatprep.subr.mxu0 %v3224
    %v3226 = vand.u32 %v1249, 4294901760
    %v3227 = vsub.f32 %v1249, %v3226
    %3228 = vmatpush1.msra.mxu0 %v3227
    %v3229 = vand.u32 %v1253, 4294901760
    %v3230 = vsub.f32 %v1253, %v3229
    %3231 = vmatprep.subr.mxu0 %v3230
    %v3232 = vand.u32 %v1252, 4294901760
    %v3233 = vsub.f32 %v1252, %v3232
    %3234 = vmatpush1.msra.mxu0 %v3233
    %v3235 = vand.u32 %v1256, 4294901760
    %v3236 = vsub.f32 %v1256, %v3235
    %3237 = vmatprep.subr.mxu0 %v3236
    %v3238 = vand.u32 %v1255, 4294901760
    %v3239 = vsub.f32 %v1255, %v3238
    %3240 = vmatpush1.msra.mxu0 %v3239
    %v3241 = vand.u32 %v1259, 4294901760
    %v3242 = vsub.f32 %v1259, %v3241
    %3243 = vmatprep.subr.mxu0 %v3242
    %v3244 = vand.u32 %v1258, 4294901760
    %v3245 = vsub.f32 %v1258, %v3244
    %3246 = vmatpush1.msra.mxu0 %v3245
    %v3247 = vand.u32 %v1262, 4294901760
    %v3248 = vsub.f32 %v1262, %v3247
    %3249 = vmatprep.subr.mxu0 %v3248
    %v3250 = vand.u32 %v1261, 4294901760
    %v3251 = vsub.f32 %v1261, %v3250
    %3252 = vmatpush1.msra.mxu0 %v3251
    %v3253 = vand.u32 %v1265, 4294901760
    %v3254 = vsub.f32 %v1265, %v3253
    %3255 = vmatprep.subr.mxu0 %v3254
    %v3256 = vand.u32 %v1264, 4294901760
    %v3257 = vsub.f32 %v1264, %v3256
    %3258 = vmatpush1.msra.mxu0 %v3257
    %v3259 = vand.u32 %v1268, 4294901760
    %v3260 = vsub.f32 %v1268, %v3259
    %3261 = vmatprep.subr.mxu0 %v3260
    %v3262 = vand.u32 %v1267, 4294901760
    %v3263 = vsub.f32 %v1267, %v3262
    %3264 = vmatpush1.msra.mxu0 %v3263
    %v3265 = vand.u32 %v1271, 4294901760
    %v3266 = vsub.f32 %v1271, %v3265
    %3267 = vmatprep.subr.mxu0 %v3266
    %v3268 = vand.u32 %v1270, 4294901760
    %v3269 = vsub.f32 %v1270, %v3268
    %3270 = vmatpush1.msra.mxu0 %v3269
    %v3271 = vand.u32 %v1274, 4294901760
    %v3272 = vsub.f32 %v1274, %v3271
    %3273 = vmatprep.subr.mxu0 %v3272
    %v3274 = vand.u32 %v1273, 4294901760
    %v3275 = vsub.f32 %v1273, %v3274
    %3276 = vmatpush1.msra.mxu0 %v3275
    %v3277 = vand.u32 %v1277, 4294901760
    %v3278 = vsub.f32 %v1277, %v3277
    %3279 = vmatprep.subr.mxu0 %v3278
    %v3280 = vand.u32 %v1276, 4294901760
    %v3281 = vsub.f32 %v1276, %v3280
    %3282 = vmatpush1.msra.mxu0 %v3281
    %v3283 = vand.u32 %v1280, 4294901760
    %v3284 = vsub.f32 %v1280, %v3283
    %3285 = vmatprep.subr.mxu0 %v3284
    %v3286 = vand.u32 %v1279, 4294901760
    %v3287 = vsub.f32 %v1279, %v3286
    %3288 = vmatpush1.msra.mxu0 %v3287
    %v3289 = vand.u32 %v1283, 4294901760
    %v3290 = vsub.f32 %v1283, %v3289
    %3291 = vmatprep.subr.mxu0 %v3290
    %v3292 = vand.u32 %v1282, 4294901760
    %v3293 = vsub.f32 %v1282, %v3292
    %3294 = vmatpush1.msra.mxu0 %v3293
    %v3295 = vand.u32 %v1286, 4294901760
    %v3296 = vsub.f32 %v1286, %v3295
    %3297 = vmatprep.subr.mxu0 %v3296
    %v3298 = vand.u32 %v1285, 4294901760
    %v3299 = vsub.f32 %v1285, %v3298
    %3300 = vmatpush1.msra.mxu0 %v3299
    %v3301 = vand.u32 %v1289, 4294901760
    %v3302 = vsub.f32 %v1289, %v3301
    %3303 = vmatprep.subr.mxu0 %v3302
    %v3304 = vand.u32 %v1288, 4294901760
    %v3305 = vsub.f32 %v1288, %v3304
    %3306 = vmatpush1.msra.mxu0 %v3305
    %v3307 = vand.u32 %v1292, 4294901760
    %v3308 = vsub.f32 %v1292, %v3307
    %3309 = vmatprep.subr.mxu0 %v3308
    %v3310 = vand.u32 %v1291, 4294901760
    %v3311 = vsub.f32 %v1291, %v3310
    %3312 = vmatpush1.msra.mxu0 %v3311
    %v3313 = vand.u32 %v1295, 4294901760
    %v3314 = vsub.f32 %v1295, %v3313
    %3315 = vmatprep.subr.mxu0 %v3314
    %v3316 = vand.u32 %v1294, 4294901760
    %v3317 = vsub.f32 %v1294, %v3316
    %3318 = vmatpush1.msra.mxu0 %v3317
    %v3319 = vand.u32 %v1298, 4294901760
    %v3320 = vsub.f32 %v1298, %v3319
    %3321 = vmatprep.subr.mxu0 %v3320
    %v3322 = vand.u32 %v1297, 4294901760
    %v3323 = vsub.f32 %v1297, %v3322
    %3324 = vmatpush1.msra.mxu0 %v3323
    %v3325 = vand.u32 %v1301, 4294901760
    %v3326 = vsub.f32 %v1301, %v3325
    %3327 = vmatprep.subr.mxu0 %v3326
    %v3328 = vand.u32 %v1300, 4294901760
    %v3329 = vsub.f32 %v1300, %v3328
    %3330 = vmatpush1.msra.mxu0 %v3329
    %v3331 = vand.u32 %v1304, 4294901760
    %v3332 = vsub.f32 %v1304, %v3331
    %3333 = vmatprep.subr.mxu0 %v3332
    %v3334 = vand.u32 %v1303, 4294901760
    %v3335 = vsub.f32 %v1303, %v3334
    %3336 = vmatpush1.msra.mxu0 %v3335
    %v3337 = vand.u32 %v1113, 4294901760
    %v3338 = vsub.f32 %v1113, %v3337
    %3339 = vmatprep.mubr.f32.mxu0 %v3338
    %v3340 = vand.u32 %v1112, 4294901760
    %v3341 = vsub.f32 %v1112, %v3340
    %3342 = vmatmul.mubr.f32.gmra.mrb[0].mxu0 %v3341
    %v3343 = vpop.f32.mrb[0].mxu0
    %v3344 = vadd.f32 %v3141, %v3343
    %v3345 = vpop.f32.mrb[0].mxu0
    %v3346 = vadd.f32 %v3143, %v3345
    %3347 = vdwg.mxu0
    %v3348 = vand.u32 %v1211, 4294901760
    %3349 = vmatprep.subr.mxu0 %v3348
    %v3350 = vand.u32 %v1210, 4294901760
    %3351 = vmatpush1.msra.mxu0 %v3350
    %v3352 = vand.u32 %v1214, 4294901760
    %3353 = vmatprep.subr.mxu0 %v3352
    %v3354 = vand.u32 %v1213, 4294901760
    %3355 = vmatpush1.msra.mxu0 %v3354
    %v3356 = vand.u32 %v1217, 4294901760
    %3357 = vmatprep.subr.mxu0 %v3356
    %v3358 = vand.u32 %v1216, 4294901760
    %3359 = vmatpush1.msra.mxu0 %v3358
    %v3360 = vand.u32 %v1220, 4294901760
    %3361 = vmatprep.subr.mxu0 %v3360
    %v3362 = vand.u32 %v1219, 4294901760
    %3363 = vmatpush1.msra.mxu0 %v3362
    %v3364 = vand.u32 %v1223, 4294901760
    %3365 = vmatprep.subr.mxu0 %v3364
    %v3366 = vand.u32 %v1222, 4294901760
    %3367 = vmatpush1.msra.mxu0 %v3366
    %v3368 = vand.u32 %v1226, 4294901760
    %3369 = vmatprep.subr.mxu0 %v3368
    %v3370 = vand.u32 %v1225, 4294901760
    %3371 = vmatpush1.msra.mxu0 %v3370
    %v3372 = vand.u32 %v1229, 4294901760
    %3373 = vmatprep.subr.mxu0 %v3372
    %v3374 = vand.u32 %v1228, 4294901760
    %3375 = vmatpush1.msra.mxu0 %v3374
    %v3376 = vand.u32 %v1232, 4294901760
    %3377 = vmatprep.subr.mxu0 %v3376
    %v3378 = vand.u32 %v1231, 4294901760
    %3379 = vmatpush1.msra.mxu0 %v3378
    %v3380 = vand.u32 %v1235, 4294901760
    %3381 = vmatprep.subr.mxu0 %v3380
    %v3382 = vand.u32 %v1234, 4294901760
    %3383 = vmatpush1.msra.mxu0 %v3382
    %v3384 = vand.u32 %v1238, 4294901760
    %3385 = vmatprep.subr.mxu0 %v3384
    %v3386 = vand.u32 %v1237, 4294901760
    %3387 = vmatpush1.msra.mxu0 %v3386
    %v3388 = vand.u32 %v1241, 4294901760
    %3389 = vmatprep.subr.mxu0 %v3388
    %v3390 = vand.u32 %v1240, 4294901760
    %3391 = vmatpush1.msra.mxu0 %v3390
    %v3392 = vand.u32 %v1244, 4294901760
    %3393 = vmatprep.subr.mxu0 %v3392
    %v3394 = vand.u32 %v1243, 4294901760
    %3395 = vmatpush1.msra.mxu0 %v3394
    %v3396 = vand.u32 %v1247, 4294901760
    %3397 = vmatprep.subr.mxu0 %v3396
    %v3398 = vand.u32 %v1246, 4294901760
    %3399 = vmatpush1.msra.mxu0 %v3398
    %v3400 = vand.u32 %v1250, 4294901760
    %3401 = vmatprep.subr.mxu0 %v3400
    %v3402 = vand.u32 %v1249, 4294901760
    %3403 = vmatpush1.msra.mxu0 %v3402
    %v3404 = vand.u32 %v1253, 4294901760
    %3405 = vmatprep.subr.mxu0 %v3404
    %v3406 = vand.u32 %v1252, 4294901760
    %3407 = vmatpush1.msra.mxu0 %v3406
    %v3408 = vand.u32 %v1256, 4294901760
    %3409 = vmatprep.subr.mxu0 %v3408
    %v3410 = vand.u32 %v1255, 4294901760
    %3411 = vmatpush1.msra.mxu0 %v3410
    %v3412 = vand.u32 %v1259, 4294901760
    %3413 = vmatprep.subr.mxu0 %v3412
    %v3414 = vand.u32 %v1258, 4294901760
    %3415 = vmatpush1.msra.mxu0 %v3414
    %v3416 = vand.u32 %v1262, 4294901760
    %3417 = vmatprep.subr.mxu0 %v3416
    %v3418 = vand.u32 %v1261, 4294901760
    %3419 = vmatpush1.msra.mxu0 %v3418
    %v3420 = vand.u32 %v1265, 4294901760
    %3421 = vmatprep.subr.mxu0 %v3420
    %v3422 = vand.u32 %v1264, 4294901760
    %3423 = vmatpush1.msra.mxu0 %v3422
    %v3424 = vand.u32 %v1268, 4294901760
    %3425 = vmatprep.subr.mxu0 %v3424
    %v3426 = vand.u32 %v1267, 4294901760
    %3427 = vmatpush1.msra.mxu0 %v3426
    %v3428 = vand.u32 %v1271, 4294901760
    %3429 = vmatprep.subr.mxu0 %v3428
    %v3430 = vand.u32 %v1270, 4294901760
    %3431 = vmatpush1.msra.mxu0 %v3430
    %v3432 = vand.u32 %v1274, 4294901760
    %3433 = vmatprep.subr.mxu0 %v3432
    %v3434 = vand.u32 %v1273, 4294901760
    %3435 = vmatpush1.msra.mxu0 %v3434
    %v3436 = vand.u32 %v1277, 4294901760
    %3437 = vmatprep.subr.mxu0 %v3436
    %v3438 = vand.u32 %v1276, 4294901760
    %3439 = vmatpush1.msra.mxu0 %v3438
    %v3440 = vand.u32 %v1280, 4294901760
    %3441 = vmatprep.subr.mxu0 %v3440
    %v3442 = vand.u32 %v1279, 4294901760
    %3443 = vmatpush1.msra.mxu0 %v3442
    %v3444 = vand.u32 %v1283, 4294901760
    %3445 = vmatprep.subr.mxu0 %v3444
    %v3446 = vand.u32 %v1282, 4294901760
    %3447 = vmatpush1.msra.mxu0 %v3446
    %v3448 = vand.u32 %v1286, 4294901760
    %3449 = vmatprep.subr.mxu0 %v3448
    %v3450 = vand.u32 %v1285, 4294901760
    %3451 = vmatpush1.msra.mxu0 %v3450
    %v3452 = vand.u32 %v1289, 4294901760
    %3453 = vmatprep.subr.mxu0 %v3452
    %v3454 = vand.u32 %v1288, 4294901760
    %3455 = vmatpush1.msra.mxu0 %v3454
    %v3456 = vand.u32 %v1292, 4294901760
    %3457 = vmatprep.subr.mxu0 %v3456
    %v3458 = vand.u32 %v1291, 4294901760
    %3459 = vmatpush1.msra.mxu0 %v3458
    %v3460 = vand.u32 %v1295, 4294901760
    %3461 = vmatprep.subr.mxu0 %v3460
    %v3462 = vand.u32 %v1294, 4294901760
    %3463 = vmatpush1.msra.mxu0 %v3462
    %v3464 = vand.u32 %v1298, 4294901760
    %3465 = vmatprep.subr.mxu0 %v3464
    %v3466 = vand.u32 %v1297, 4294901760
    %3467 = vmatpush1.msra.mxu0 %v3466
    %v3468 = vand.u32 %v1301, 4294901760
    %3469 = vmatprep.subr.mxu0 %v3468
    %v3470 = vand.u32 %v1300, 4294901760
    %3471 = vmatpush1.msra.mxu0 %v3470
    %v3472 = vand.u32 %v1304, 4294901760
    %3473 = vmatprep.subr.mxu0 %v3472
    %v3474 = vand.u32 %v1303, 4294901760
    %3475 = vmatpush1.msra.mxu0 %v3474
    %v3476 = vand.u32 %v1113, 4294901760
    %v3477 = vsub.f32 %v1113, %v3476
    %v3478 = vand.u32 %v3477, 4294901760
    %3479 = vmatprep.mubr.f32.mxu0 %v3478
    %v3480 = vand.u32 %v1112, 4294901760
    %v3481 = vsub.f32 %v1112, %v3480
    %v3482 = vand.u32 %v3481, 4294901760
    %3483 = vmatmul.mubr.f32.gmra.mrb[0].mxu0 %v3482
    %v3484 = vpop.f32.mrb[0].mxu0
    %v3485 = vadd.f32 %v3344, %v3484
    %v3486 = vpop.f32.mrb[0].mxu0
    %v3487 = vadd.f32 %v3346, %v3486
    %3488 = vdwg.mxu0
    %v3489 = vand.u32 %v1211, 4294901760
    %v3490 = vsub.f32 %v1211, %v3489
    %v3491 = vand.u32 %v3490, 4294901760
    %3492 = vmatprep.subr.mxu0 %v3491
    %v3493 = vand.u32 %v1210, 4294901760
    %v3494 = vsub.f32 %v1210, %v3493
    %v3495 = vand.u32 %v3494, 4294901760
    %3496 = vmatpush1.msra.mxu0 %v3495
    %v3497 = vand.u32 %v1214, 4294901760
    %v3498 = vsub.f32 %v1214, %v3497
    %v3499 = vand.u32 %v3498, 4294901760
    %3500 = vmatprep.subr.mxu0 %v3499
    %v3501 = vand.u32 %v1213, 4294901760
    %v3502 = vsub.f32 %v1213, %v3501
    %v3503 = vand.u32 %v3502, 4294901760
    %3504 = vmatpush1.msra.mxu0 %v3503
    %v3505 = vand.u32 %v1217, 4294901760
    %v3506 = vsub.f32 %v1217, %v3505
    %v3507 = vand.u32 %v3506, 4294901760
    %3508 = vmatprep.subr.mxu0 %v3507
    %v3509 = vand.u32 %v1216, 4294901760
    %v3510 = vsub.f32 %v1216, %v3509
    %v3511 = vand.u32 %v3510, 4294901760
    %3512 = vmatpush1.msra.mxu0 %v3511
    %v3513 = vand.u32 %v1220, 4294901760
    %v3514 = vsub.f32 %v1220, %v3513
    %v3515 = vand.u32 %v3514, 4294901760
    %3516 = vmatprep.subr.mxu0 %v3515
    %v3517 = vand.u32 %v1219, 4294901760
    %v3518 = vsub.f32 %v1219, %v3517
    %v3519 = vand.u32 %v3518, 4294901760
    %3520 = vmatpush1.msra.mxu0 %v3519
    %v3521 = vand.u32 %v1223, 4294901760
    %v3522 = vsub.f32 %v1223, %v3521
    %v3523 = vand.u32 %v3522, 4294901760
    %3524 = vmatprep.subr.mxu0 %v3523
    %v3525 = vand.u32 %v1222, 4294901760
    %v3526 = vsub.f32 %v1222, %v3525
    %v3527 = vand.u32 %v3526, 4294901760
    %3528 = vmatpush1.msra.mxu0 %v3527
    %v3529 = vand.u32 %v1226, 4294901760
    %v3530 = vsub.f32 %v1226, %v3529
    %v3531 = vand.u32 %v3530, 4294901760
    %3532 = vmatprep.subr.mxu0 %v3531
    %v3533 = vand.u32 %v1225, 4294901760
    %v3534 = vsub.f32 %v1225, %v3533
    %v3535 = vand.u32 %v3534, 4294901760
    %3536 = vmatpush1.msra.mxu0 %v3535
    %v3537 = vand.u32 %v1229, 4294901760
    %v3538 = vsub.f32 %v1229, %v3537
    %v3539 = vand.u32 %v3538, 4294901760
    %3540 = vmatprep.subr.mxu0 %v3539
    %v3541 = vand.u32 %v1228, 4294901760
    %v3542 = vsub.f32 %v1228, %v3541
    %v3543 = vand.u32 %v3542, 4294901760
    %3544 = vmatpush1.msra.mxu0 %v3543
    %v3545 = vand.u32 %v1232, 4294901760
    %v3546 = vsub.f32 %v1232, %v3545
    %v3547 = vand.u32 %v3546, 4294901760
    %3548 = vmatprep.subr.mxu0 %v3547
    %v3549 = vand.u32 %v1231, 4294901760
    %v3550 = vsub.f32 %v1231, %v3549
    %v3551 = vand.u32 %v3550, 4294901760
    %3552 = vmatpush1.msra.mxu0 %v3551
    %v3553 = vand.u32 %v1235, 4294901760
    %v3554 = vsub.f32 %v1235, %v3553
    %v3555 = vand.u32 %v3554, 4294901760
    %3556 = vmatprep.subr.mxu0 %v3555
    %v3557 = vand.u32 %v1234, 4294901760
    %v3558 = vsub.f32 %v1234, %v3557
    %v3559 = vand.u32 %v3558, 4294901760
    %3560 = vmatpush1.msra.mxu0 %v3559
    %v3561 = vand.u32 %v1238, 4294901760
    %v3562 = vsub.f32 %v1238, %v3561
    %v3563 = vand.u32 %v3562, 4294901760
    %3564 = vmatprep.subr.mxu0 %v3563
    %v3565 = vand.u32 %v1237, 4294901760
    %v3566 = vsub.f32 %v1237, %v3565
    %v3567 = vand.u32 %v3566, 4294901760
    %3568 = vmatpush1.msra.mxu0 %v3567
    %v3569 = vand.u32 %v1241, 4294901760
    %v3570 = vsub.f32 %v1241, %v3569
    %v3571 = vand.u32 %v3570, 4294901760
    %3572 = vmatprep.subr.mxu0 %v3571
    %v3573 = vand.u32 %v1240, 4294901760
    %v3574 = vsub.f32 %v1240, %v3573
    %v3575 = vand.u32 %v3574, 4294901760
    %3576 = vmatpush1.msra.mxu0 %v3575
    %v3577 = vand.u32 %v1244, 4294901760
    %v3578 = vsub.f32 %v1244, %v3577
    %v3579 = vand.u32 %v3578, 4294901760
    %3580 = vmatprep.subr.mxu0 %v3579
    %v3581 = vand.u32 %v1243, 4294901760
    %v3582 = vsub.f32 %v1243, %v3581
    %v3583 = vand.u32 %v3582, 4294901760
    %3584 = vmatpush1.msra.mxu0 %v3583
    %v3585 = vand.u32 %v1247, 4294901760
    %v3586 = vsub.f32 %v1247, %v3585
    %v3587 = vand.u32 %v3586, 4294901760
    %3588 = vmatprep.subr.mxu0 %v3587
    %v3589 = vand.u32 %v1246, 4294901760
    %v3590 = vsub.f32 %v1246, %v3589
    %v3591 = vand.u32 %v3590, 4294901760
    %3592 = vmatpush1.msra.mxu0 %v3591
    %v3593 = vand.u32 %v1250, 4294901760
    %v3594 = vsub.f32 %v1250, %v3593
    %v3595 = vand.u32 %v3594, 4294901760
    %3596 = vmatprep.subr.mxu0 %v3595
    %v3597 = vand.u32 %v1249, 4294901760
    %v3598 = vsub.f32 %v1249, %v3597
    %v3599 = vand.u32 %v3598, 4294901760
    %3600 = vmatpush1.msra.mxu0 %v3599
    %v3601 = vand.u32 %v1253, 4294901760
    %v3602 = vsub.f32 %v1253, %v3601
    %v3603 = vand.u32 %v3602, 4294901760
    %3604 = vmatprep.subr.mxu0 %v3603
    %v3605 = vand.u32 %v1252, 4294901760
    %v3606 = vsub.f32 %v1252, %v3605
    %v3607 = vand.u32 %v3606, 4294901760
    %3608 = vmatpush1.msra.mxu0 %v3607
    %v3609 = vand.u32 %v1256, 4294901760
    %v3610 = vsub.f32 %v1256, %v3609
    %v3611 = vand.u32 %v3610, 4294901760
    %3612 = vmatprep.subr.mxu0 %v3611
    %v3613 = vand.u32 %v1255, 4294901760
    %v3614 = vsub.f32 %v1255, %v3613
    %v3615 = vand.u32 %v3614, 4294901760
    %3616 = vmatpush1.msra.mxu0 %v3615
    %v3617 = vand.u32 %v1259, 4294901760
    %v3618 = vsub.f32 %v1259, %v3617
    %v3619 = vand.u32 %v3618, 4294901760
    %3620 = vmatprep.subr.mxu0 %v3619
    %v3621 = vand.u32 %v1258, 4294901760
    %v3622 = vsub.f32 %v1258, %v3621
    %v3623 = vand.u32 %v3622, 4294901760
    %3624 = vmatpush1.msra.mxu0 %v3623
    %v3625 = vand.u32 %v1262, 4294901760
    %v3626 = vsub.f32 %v1262, %v3625
    %v3627 = vand.u32 %v3626, 4294901760
    %3628 = vmatprep.subr.mxu0 %v3627
    %v3629 = vand.u32 %v1261, 4294901760
    %v3630 = vsub.f32 %v1261, %v3629
    %v3631 = vand.u32 %v3630, 4294901760
    %3632 = vmatpush1.msra.mxu0 %v3631
    %v3633 = vand.u32 %v1265, 4294901760
    %v3634 = vsub.f32 %v1265, %v3633
    %v3635 = vand.u32 %v3634, 4294901760
    %3636 = vmatprep.subr.mxu0 %v3635
    %v3637 = vand.u32 %v1264, 4294901760
    %v3638 = vsub.f32 %v1264, %v3637
    %v3639 = vand.u32 %v3638, 4294901760
    %3640 = vmatpush1.msra.mxu0 %v3639
    %v3641 = vand.u32 %v1268, 4294901760
    %v3642 = vsub.f32 %v1268, %v3641
    %v3643 = vand.u32 %v3642, 4294901760
    %3644 = vmatprep.subr.mxu0 %v3643
    %v3645 = vand.u32 %v1267, 4294901760
    %v3646 = vsub.f32 %v1267, %v3645
    %v3647 = vand.u32 %v3646, 4294901760
    %3648 = vmatpush1.msra.mxu0 %v3647
    %v3649 = vand.u32 %v1271, 4294901760
    %v3650 = vsub.f32 %v1271, %v3649
    %v3651 = vand.u32 %v3650, 4294901760
    %3652 = vmatprep.subr.mxu0 %v3651
    %v3653 = vand.u32 %v1270, 4294901760
    %v3654 = vsub.f32 %v1270, %v3653
    %v3655 = vand.u32 %v3654, 4294901760
    %3656 = vmatpush1.msra.mxu0 %v3655
    %v3657 = vand.u32 %v1274, 4294901760
    %v3658 = vsub.f32 %v1274, %v3657
    %v3659 = vand.u32 %v3658, 4294901760
    %3660 = vmatprep.subr.mxu0 %v3659
    %v3661 = vand.u32 %v1273, 4294901760
    %v3662 = vsub.f32 %v1273, %v3661
    %v3663 = vand.u32 %v3662, 4294901760
    %3664 = vmatpush1.msra.mxu0 %v3663
    %v3665 = vand.u32 %v1277, 4294901760
    %v3666 = vsub.f32 %v1277, %v3665
    %v3667 = vand.u32 %v3666, 4294901760
    %3668 = vmatprep.subr.mxu0 %v3667
    %v3669 = vand.u32 %v1276, 4294901760
    %v3670 = vsub.f32 %v1276, %v3669
    %v3671 = vand.u32 %v3670, 4294901760
    %3672 = vmatpush1.msra.mxu0 %v3671
    %v3673 = vand.u32 %v1280, 4294901760
    %v3674 = vsub.f32 %v1280, %v3673
    %v3675 = vand.u32 %v3674, 4294901760
    %3676 = vmatprep.subr.mxu0 %v3675
    %v3677 = vand.u32 %v1279, 4294901760
    %v3678 = vsub.f32 %v1279, %v3677
    %v3679 = vand.u32 %v3678, 4294901760
    %3680 = vmatpush1.msra.mxu0 %v3679
    %v3681 = vand.u32 %v1283, 4294901760
    %v3682 = vsub.f32 %v1283, %v3681
    %v3683 = vand.u32 %v3682, 4294901760
    %3684 = vmatprep.subr.mxu0 %v3683
    %v3685 = vand.u32 %v1282, 4294901760
    %v3686 = vsub.f32 %v1282, %v3685
    %v3687 = vand.u32 %v3686, 4294901760
    %3688 = vmatpush1.msra.mxu0 %v3687
    %v3689 = vand.u32 %v1286, 4294901760
    %v3690 = vsub.f32 %v1286, %v3689
    %v3691 = vand.u32 %v3690, 4294901760
    %3692 = vmatprep.subr.mxu0 %v3691
    %v3693 = vand.u32 %v1285, 4294901760
    %v3694 = vsub.f32 %v1285, %v3693
    %v3695 = vand.u32 %v3694, 4294901760
    %3696 = vmatpush1.msra.mxu0 %v3695
    %v3697 = vand.u32 %v1289, 4294901760
    %v3698 = vsub.f32 %v1289, %v3697
    %v3699 = vand.u32 %v3698, 4294901760
    %3700 = vmatprep.subr.mxu0 %v3699
    %v3701 = vand.u32 %v1288, 4294901760
    %v3702 = vsub.f32 %v1288, %v3701
    %v3703 = vand.u32 %v3702, 4294901760
    %3704 = vmatpush1.msra.mxu0 %v3703
    %v3705 = vand.u32 %v1292, 4294901760
    %v3706 = vsub.f32 %v1292, %v3705
    %v3707 = vand.u32 %v3706, 4294901760
    %3708 = vmatprep.subr.mxu0 %v3707
    %v3709 = vand.u32 %v1291, 4294901760
    %v3710 = vsub.f32 %v1291, %v3709
    %v3711 = vand.u32 %v3710, 4294901760
    %3712 = vmatpush1.msra.mxu0 %v3711
    %v3713 = vand.u32 %v1295, 4294901760
    %v3714 = vsub.f32 %v1295, %v3713
    %v3715 = vand.u32 %v3714, 4294901760
    %3716 = vmatprep.subr.mxu0 %v3715
    %v3717 = vand.u32 %v1294, 4294901760
    %v3718 = vsub.f32 %v1294, %v3717
    %v3719 = vand.u32 %v3718, 4294901760
    %3720 = vmatpush1.msra.mxu0 %v3719
    %v3721 = vand.u32 %v1298, 4294901760
    %v3722 = vsub.f32 %v1298, %v3721
    %v3723 = vand.u32 %v3722, 4294901760
    %3724 = vmatprep.subr.mxu0 %v3723
    %v3725 = vand.u32 %v1297, 4294901760
    %v3726 = vsub.f32 %v1297, %v3725
    %v3727 = vand.u32 %v3726, 4294901760
    %3728 = vmatpush1.msra.mxu0 %v3727
    %v3729 = vand.u32 %v1301, 4294901760
    %v3730 = vsub.f32 %v1301, %v3729
    %v3731 = vand.u32 %v3730, 4294901760
    %3732 = vmatprep.subr.mxu0 %v3731
    %v3733 = vand.u32 %v1300, 4294901760
    %v3734 = vsub.f32 %v1300, %v3733
    %v3735 = vand.u32 %v3734, 4294901760
    %3736 = vmatpush1.msra.mxu0 %v3735
    %v3737 = vand.u32 %v1304, 4294901760
    %v3738 = vsub.f32 %v1304, %v3737
    %v3739 = vand.u32 %v3738, 4294901760
    %3740 = vmatprep.subr.mxu0 %v3739
    %v3741 = vand.u32 %v1303, 4294901760
    %v3742 = vsub.f32 %v1303, %v3741
    %v3743 = vand.u32 %v3742, 4294901760
    %3744 = vmatpush1.msra.mxu0 %v3743
    %v3745 = vand.u32 %v1113, 4294901760
    %3746 = vmatprep.mubr.f32.mxu0 %v3745
    %v3747 = vand.u32 %v1112, 4294901760
    %3748 = vmatmul.mubr.f32.gmra.mrb[0].mxu0 %v3747
    %v3749 = vpop.f32.mrb[0].mxu0
    %v3750 = vadd.f32 %v3485, %v3749
    %v3751 = vpop.f32.mrb[0].mxu0
    %v3752 = vadd.f32 %v3487, %v3751
    %3753 = vdwg.mxu0
    %v3754 = vand.u32 %v1211, 4294901760
    %3755 = vmatprep.subr.mxu0 %v3754
    %v3756 = vand.u32 %v1210, 4294901760
    %3757 = vmatpush1.msra.mxu0 %v3756
    %v3758 = vand.u32 %v1214, 4294901760
    %3759 = vmatprep.subr.mxu0 %v3758
    %v3760 = vand.u32 %v1213, 4294901760
    %3761 = vmatpush1.msra.mxu0 %v3760
    %v3762 = vand.u32 %v1217, 4294901760
    %3763 = vmatprep.subr.mxu0 %v3762
    %v3764 = vand.u32 %v1216, 4294901760
    %3765 = vmatpush1.msra.mxu0 %v3764
    %v3766 = vand.u32 %v1220, 4294901760
    %3767 = vmatprep.subr.mxu0 %v3766
    %v3768 = vand.u32 %v1219, 4294901760
    %3769 = vmatpush1.msra.mxu0 %v3768
    %v3770 = vand.u32 %v1223, 4294901760
    %3771 = vmatprep.subr.mxu0 %v3770
    %v3772 = vand.u32 %v1222, 4294901760
    %3773 = vmatpush1.msra.mxu0 %v3772
    %v3774 = vand.u32 %v1226, 4294901760
    %3775 = vmatprep.subr.mxu0 %v3774
    %v3776 = vand.u32 %v1225, 4294901760
    %3777 = vmatpush1.msra.mxu0 %v3776
    %v3778 = vand.u32 %v1229, 4294901760
    %3779 = vmatprep.subr.mxu0 %v3778
    %v3780 = vand.u32 %v1228, 4294901760
    %3781 = vmatpush1.msra.mxu0 %v3780
    %v3782 = vand.u32 %v1232, 4294901760
    %3783 = vmatprep.subr.mxu0 %v3782
    %v3784 = vand.u32 %v1231, 4294901760
    %3785 = vmatpush1.msra.mxu0 %v3784
    %v3786 = vand.u32 %v1235, 4294901760
    %3787 = vmatprep.subr.mxu0 %v3786
    %v3788 = vand.u32 %v1234, 4294901760
    %3789 = vmatpush1.msra.mxu0 %v3788
    %v3790 = vand.u32 %v1238, 4294901760
    %3791 = vmatprep.subr.mxu0 %v3790
    %v3792 = vand.u32 %v1237, 4294901760
    %3793 = vmatpush1.msra.mxu0 %v3792
    %v3794 = vand.u32 %v1241, 4294901760
    %3795 = vmatprep.subr.mxu0 %v3794
    %v3796 = vand.u32 %v1240, 4294901760
    %3797 = vmatpush1.msra.mxu0 %v3796
    %v3798 = vand.u32 %v1244, 4294901760
    %3799 = vmatprep.subr.mxu0 %v3798
    %v3800 = vand.u32 %v1243, 4294901760
    %3801 = vmatpush1.msra.mxu0 %v3800
    %v3802 = vand.u32 %v1247, 4294901760
    %3803 = vmatprep.subr.mxu0 %v3802
    %v3804 = vand.u32 %v1246, 4294901760
    %3805 = vmatpush1.msra.mxu0 %v3804
    %v3806 = vand.u32 %v1250, 4294901760
    %3807 = vmatprep.subr.mxu0 %v3806
    %v3808 = vand.u32 %v1249, 4294901760
    %3809 = vmatpush1.msra.mxu0 %v3808
    %v3810 = vand.u32 %v1253, 4294901760
    %3811 = vmatprep.subr.mxu0 %v3810
    %v3812 = vand.u32 %v1252, 4294901760
    %3813 = vmatpush1.msra.mxu0 %v3812
    %v3814 = vand.u32 %v1256, 4294901760
    %3815 = vmatprep.subr.mxu0 %v3814
    %v3816 = vand.u32 %v1255, 4294901760
    %3817 = vmatpush1.msra.mxu0 %v3816
    %v3818 = vand.u32 %v1259, 4294901760
    %3819 = vmatprep.subr.mxu0 %v3818
    %v3820 = vand.u32 %v1258, 4294901760
    %3821 = vmatpush1.msra.mxu0 %v3820
    %v3822 = vand.u32 %v1262, 4294901760
    %3823 = vmatprep.subr.mxu0 %v3822
    %v3824 = vand.u32 %v1261, 4294901760
    %3825 = vmatpush1.msra.mxu0 %v3824
    %v3826 = vand.u32 %v1265, 4294901760
    %3827 = vmatprep.subr.mxu0 %v3826
    %v3828 = vand.u32 %v1264, 4294901760
    %3829 = vmatpush1.msra.mxu0 %v3828
    %v3830 = vand.u32 %v1268, 4294901760
    %3831 = vmatprep.subr.mxu0 %v3830
    %v3832 = vand.u32 %v1267, 4294901760
    %3833 = vmatpush1.msra.mxu0 %v3832
    %v3834 = vand.u32 %v1271, 4294901760
    %3835 = vmatprep.subr.mxu0 %v3834
    %v3836 = vand.u32 %v1270, 4294901760
    %3837 = vmatpush1.msra.mxu0 %v3836
    %v3838 = vand.u32 %v1274, 4294901760
    %3839 = vmatprep.subr.mxu0 %v3838
    %v3840 = vand.u32 %v1273, 4294901760
    %3841 = vmatpush1.msra.mxu0 %v3840
    %v3842 = vand.u32 %v1277, 4294901760
    %3843 = vmatprep.subr.mxu0 %v3842
    %v3844 = vand.u32 %v1276, 4294901760
    %3845 = vmatpush1.msra.mxu0 %v3844
    %v3846 = vand.u32 %v1280, 4294901760
    %3847 = vmatprep.subr.mxu0 %v3846
    %v3848 = vand.u32 %v1279, 4294901760
    %3849 = vmatpush1.msra.mxu0 %v3848
    %v3850 = vand.u32 %v1283, 4294901760
    %3851 = vmatprep.subr.mxu0 %v3850
    %v3852 = vand.u32 %v1282, 4294901760
    %3853 = vmatpush1.msra.mxu0 %v3852
    %v3854 = vand.u32 %v1286, 4294901760
    %3855 = vmatprep.subr.mxu0 %v3854
    %v3856 = vand.u32 %v1285, 4294901760
    %3857 = vmatpush1.msra.mxu0 %v3856
    %v3858 = vand.u32 %v1289, 4294901760
    %3859 = vmatprep.subr.mxu0 %v3858
    %v3860 = vand.u32 %v1288, 4294901760
    %3861 = vmatpush1.msra.mxu0 %v3860
    %v3862 = vand.u32 %v1292, 4294901760
    %3863 = vmatprep.subr.mxu0 %v3862
    %v3864 = vand.u32 %v1291, 4294901760
    %3865 = vmatpush1.msra.mxu0 %v3864
    %v3866 = vand.u32 %v1295, 4294901760
    %3867 = vmatprep.subr.mxu0 %v3866
    %v3868 = vand.u32 %v1294, 4294901760
    %3869 = vmatpush1.msra.mxu0 %v3868
    %v3870 = vand.u32 %v1298, 4294901760
    %3871 = vmatprep.subr.mxu0 %v3870
    %v3872 = vand.u32 %v1297, 4294901760
    %3873 = vmatpush1.msra.mxu0 %v3872
    %v3874 = vand.u32 %v1301, 4294901760
    %3875 = vmatprep.subr.mxu0 %v3874
    %v3876 = vand.u32 %v1300, 4294901760
    %3877 = vmatpush1.msra.mxu0 %v3876
    %v3878 = vand.u32 %v1304, 4294901760
    %3879 = vmatprep.subr.mxu0 %v3878
    %v3880 = vand.u32 %v1303, 4294901760
    %3881 = vmatpush1.msra.mxu0 %v3880
    %v3882 = vand.u32 %v1113, 4294901760
    %3883 = vmatprep.mubr.f32.mxu0 %v3882
    %v3884 = vand.u32 %v1112, 4294901760
    %3885 = vmatmul.mubr.f32.gmra.mrb[0].mxu0 %v3884
    %v3886 = vpop.f32.mrb[0].mxu0
    %v3887 = vadd.f32 %v3750, %v3886
    %v3888 = vpop.f32.mrb[0].mxu0
    %v3889 = vadd.f32 %v3752, %v3888
    %3890 = vdwg.mxu0
    %3891 = vmatprep.subr.mxu0 0.0
    %v3892 = vand.u32 %v1116, 4294901760
    %3893 = vmatpush1.msra.mxu0 %v3892
    %3894 = vmatprep.subr.mxu0 0.0
    %v3895 = vand.u32 %v1119, 4294901760
    %3896 = vmatpush1.msra.mxu0 %v3895
    %3897 = vmatprep.subr.mxu0 0.0
    %v3898 = vand.u32 %v1122, 4294901760
    %3899 = vmatpush1.msra.mxu0 %v3898
    %3900 = vmatprep.subr.mxu0 0.0
    %v3901 = vand.u32 %v1125, 4294901760
    %3902 = vmatpush1.msra.mxu0 %v3901
    %3903 = vmatprep.subr.mxu0 0.0
    %v3904 = vand.u32 %v1128, 4294901760
    %3905 = vmatpush1.msra.mxu0 %v3904
    %3906 = vmatprep.subr.mxu0 0.0
    %v3907 = vand.u32 %v1131, 4294901760
    %3908 = vmatpush1.msra.mxu0 %v3907
    %3909 = vmatprep.subr.mxu0 0.0
    %v3910 = vand.u32 %v1134, 4294901760
    %3911 = vmatpush1.msra.mxu0 %v3910
    %3912 = vmatprep.subr.mxu0 0.0
    %v3913 = vand.u32 %v1137, 4294901760
    %3914 = vmatpush1.msra.mxu0 %v3913
    %3915 = vmatprep.subr.mxu0 0.0
    %v3916 = vand.u32 %v1140, 4294901760
    %3917 = vmatpush1.msra.mxu0 %v3916
    %3918 = vmatprep.subr.mxu0 0.0
    %v3919 = vand.u32 %v1143, 4294901760
    %3920 = vmatpush1.msra.mxu0 %v3919
    %3921 = vmatprep.subr.mxu0 0.0
    %v3922 = vand.u32 %v1146, 4294901760
    %3923 = vmatpush1.msra.mxu0 %v3922
    %3924 = vmatprep.subr.mxu0 0.0
    %v3925 = vand.u32 %v1149, 4294901760
    %3926 = vmatpush1.msra.mxu0 %v3925
    %3927 = vmatprep.subr.mxu0 0.0
    %v3928 = vand.u32 %v1152, 4294901760
    %3929 = vmatpush1.msra.mxu0 %v3928
    %3930 = vmatprep.subr.mxu0 0.0
    %v3931 = vand.u32 %v1155, 4294901760
    %3932 = vmatpush1.msra.mxu0 %v3931
    %3933 = vmatprep.subr.mxu0 0.0
    %v3934 = vand.u32 %v1158, 4294901760
    %3935 = vmatpush1.msra.mxu0 %v3934
    %3936 = vmatprep.subr.mxu0 0.0
    %v3937 = vand.u32 %v1161, 4294901760
    %3938 = vmatpush1.msra.mxu0 %v3937
    %3939 = vmatprep.subr.mxu0 0.0
    %v3940 = vand.u32 %v1164, 4294901760
    %3941 = vmatpush1.msra.mxu0 %v3940
    %3942 = vmatprep.subr.mxu0 0.0
    %v3943 = vand.u32 %v1167, 4294901760
    %3944 = vmatpush1.msra.mxu0 %v3943
    %3945 = vmatprep.subr.mxu0 0.0
    %v3946 = vand.u32 %v1170, 4294901760
    %3947 = vmatpush1.msra.mxu0 %v3946
    %3948 = vmatprep.subr.mxu0 0.0
    %v3949 = vand.u32 %v1173, 4294901760
    %3950 = vmatpush1.msra.mxu0 %v3949
    %3951 = vmatprep.subr.mxu0 0.0
    %v3952 = vand.u32 %v1176, 4294901760
    %3953 = vmatpush1.msra.mxu0 %v3952
    %3954 = vmatprep.subr.mxu0 0.0
    %v3955 = vand.u32 %v1179, 4294901760
    %3956 = vmatpush1.msra.mxu0 %v3955
    %3957 = vmatprep.subr.mxu0 0.0
    %v3958 = vand.u32 %v1182, 4294901760
    %3959 = vmatpush1.msra.mxu0 %v3958
    %3960 = vmatprep.subr.mxu0 0.0
    %v3961 = vand.u32 %v1185, 4294901760
    %3962 = vmatpush1.msra.mxu0 %v3961
    %3963 = vmatprep.subr.mxu0 0.0
    %v3964 = vand.u32 %v1188, 4294901760
    %3965 = vmatpush1.msra.mxu0 %v3964
    %3966 = vmatprep.subr.mxu0 0.0
    %v3967 = vand.u32 %v1191, 4294901760
    %3968 = vmatpush1.msra.mxu0 %v3967
    %3969 = vmatprep.subr.mxu0 0.0
    %v3970 = vand.u32 %v1194, 4294901760
    %3971 = vmatpush1.msra.mxu0 %v3970
    %3972 = vmatprep.subr.mxu0 0.0
    %v3973 = vand.u32 %v1197, 4294901760
    %3974 = vmatpush1.msra.mxu0 %v3973
    %3975 = vmatprep.subr.mxu0 0.0
    %v3976 = vand.u32 %v1200, 4294901760
    %3977 = vmatpush1.msra.mxu0 %v3976
    %3978 = vmatprep.subr.mxu0 0.0
    %v3979 = vand.u32 %v1203, 4294901760
    %3980 = vmatpush1.msra.mxu0 %v3979
    %3981 = vmatprep.subr.mxu0 0.0
    %v3982 = vand.u32 %v1206, 4294901760
    %3983 = vmatpush1.msra.mxu0 %v3982
    %3984 = vmatprep.subr.mxu0 0.0
    %v3985 = vand.u32 %v1209, 4294901760
    %3986 = vmatpush1.msra.mxu0 %v3985
    %v3987 = vand.u32 %v1111, 4294901760
    %v3988 = vsub.f32 %v1111, %v3987
    %v3989 = vand.u32 %v3988, 4294901760
    %v3990 = vsub.f32 %v3988, %v3989
    %v3991 = vand.u32 %v3990, 4294901760
    %3992 = vmatprep.mubr.f32.mxu0 %v3991
    %v3993 = vand.u32 %v1110, 4294901760
    %v3994 = vsub.f32 %v1110, %v3993
    %v3995 = vand.u32 %v3994, 4294901760
    %v3996 = vsub.f32 %v3994, %v3995
    %v3997 = vand.u32 %v3996, 4294901760
    %3998 = vmatmul.mubr.f32.gmra.mrb[0].mxu0 %v3997
    %v3999 = vpop.f32.mrb[0].mxu0
    %v4000 = vadd.f32 %v1319, %v3999
    %v4001 = vpop.f32.mrb[0].mxu0
    %4002 = vdwg.mxu0
    %4003 = vmatprep.subr.mxu0 0.0
    %v4004 = vand.u32 %v1116, 4294901760
    %v4005 = vsub.f32 %v1116, %v4004
    %v4006 = vand.u32 %v4005, 4294901760
    %v4007 = vsub.f32 %v4005, %v4006
    %v4008 = vand.u32 %v4007, 4294901760
    %4009 = vmatpush1.msra.mxu0 %v4008
    %4010 = vmatprep.subr.mxu0 0.0
    %v4011 = vand.u32 %v1119, 4294901760
    %v4012 = vsub.f32 %v1119, %v4011
    %v4013 = vand.u32 %v4012, 4294901760
    %v4014 = vsub.f32 %v4012, %v4013
    %v4015 = vand.u32 %v4014, 4294901760
    %4016 = vmatpush1.msra.mxu0 %v4015
    %4017 = vmatprep.subr.mxu0 0.0
    %v4018 = vand.u32 %v1122, 4294901760
    %v4019 = vsub.f32 %v1122, %v4018
    %v4020 = vand.u32 %v4019, 4294901760
    %v4021 = vsub.f32 %v4019, %v4020
    %v4022 = vand.u32 %v4021, 4294901760
    %4023 = vmatpush1.msra.mxu0 %v4022
    %4024 = vmatprep.subr.mxu0 0.0
    %v4025 = vand.u32 %v1125, 4294901760
    %v4026 = vsub.f32 %v1125, %v4025
    %v4027 = vand.u32 %v4026, 4294901760
    %v4028 = vsub.f32 %v4026, %v4027
    %v4029 = vand.u32 %v4028, 4294901760
    %4030 = vmatpush1.msra.mxu0 %v4029
    %4031 = vmatprep.subr.mxu0 0.0
    %v4032 = vand.u32 %v1128, 4294901760
    %v4033 = vsub.f32 %v1128, %v4032
    %v4034 = vand.u32 %v4033, 4294901760
    %v4035 = vsub.f32 %v4033, %v4034
    %v4036 = vand.u32 %v4035, 4294901760
    %4037 = vmatpush1.msra.mxu0 %v4036
    %4038 = vmatprep.subr.mxu0 0.0
    %v4039 = vand.u32 %v1131, 4294901760
    %v4040 = vsub.f32 %v1131, %v4039
    %v4041 = vand.u32 %v4040, 4294901760
    %v4042 = vsub.f32 %v4040, %v4041
    %v4043 = vand.u32 %v4042, 4294901760
    %4044 = vmatpush1.msra.mxu0 %v4043
    %4045 = vmatprep.subr.mxu0 0.0
    %v4046 = vand.u32 %v1134, 4294901760
    %v4047 = vsub.f32 %v1134, %v4046
    %v4048 = vand.u32 %v4047, 4294901760
    %v4049 = vsub.f32 %v4047, %v4048
    %v4050 = vand.u32 %v4049, 4294901760
    %4051 = vmatpush1.msra.mxu0 %v4050
    %4052 = vmatprep.subr.mxu0 0.0
    %v4053 = vand.u32 %v1137, 4294901760
    %v4054 = vsub.f32 %v1137, %v4053
    %v4055 = vand.u32 %v4054, 4294901760
    %v4056 = vsub.f32 %v4054, %v4055
    %v4057 = vand.u32 %v4056, 4294901760
    %4058 = vmatpush1.msra.mxu0 %v4057
    %4059 = vmatprep.subr.mxu0 0.0
    %v4060 = vand.u32 %v1140, 4294901760
    %v4061 = vsub.f32 %v1140, %v4060
    %v4062 = vand.u32 %v4061, 4294901760
    %v4063 = vsub.f32 %v4061, %v4062
    %v4064 = vand.u32 %v4063, 4294901760
    %4065 = vmatpush1.msra.mxu0 %v4064
    %4066 = vmatprep.subr.mxu0 0.0
    %v4067 = vand.u32 %v1143, 4294901760
    %v4068 = vsub.f32 %v1143, %v4067
    %v4069 = vand.u32 %v4068, 4294901760
    %v4070 = vsub.f32 %v4068, %v4069
    %v4071 = vand.u32 %v4070, 4294901760
    %4072 = vmatpush1.msra.mxu0 %v4071
    %4073 = vmatprep.subr.mxu0 0.0
    %v4074 = vand.u32 %v1146, 4294901760
    %v4075 = vsub.f32 %v1146, %v4074
    %v4076 = vand.u32 %v4075, 4294901760
    %v4077 = vsub.f32 %v4075, %v4076
    %v4078 = vand.u32 %v4077, 4294901760
    %4079 = vmatpush1.msra.mxu0 %v4078
    %4080 = vmatprep.subr.mxu0 0.0
    %v4081 = vand.u32 %v1149, 4294901760
    %v4082 = vsub.f32 %v1149, %v4081
    %v4083 = vand.u32 %v4082, 4294901760
    %v4084 = vsub.f32 %v4082, %v4083
    %v4085 = vand.u32 %v4084, 4294901760
    %4086 = vmatpush1.msra.mxu0 %v4085
    %4087 = vmatprep.subr.mxu0 0.0
    %v4088 = vand.u32 %v1152, 4294901760
    %v4089 = vsub.f32 %v1152, %v4088
    %v4090 = vand.u32 %v4089, 4294901760
    %v4091 = vsub.f32 %v4089, %v4090
    %v4092 = vand.u32 %v4091, 4294901760
    %4093 = vmatpush1.msra.mxu0 %v4092
    %4094 = vmatprep.subr.mxu0 0.0
    %v4095 = vand.u32 %v1155, 4294901760
    %v4096 = vsub.f32 %v1155, %v4095
    %v4097 = vand.u32 %v4096, 4294901760
    %v4098 = vsub.f32 %v4096, %v4097
    %v4099 = vand.u32 %v4098, 4294901760
    %4100 = vmatpush1.msra.mxu0 %v4099
    %4101 = vmatprep.subr.mxu0 0.0
    %v4102 = vand.u32 %v1158, 4294901760
    %v4103 = vsub.f32 %v1158, %v4102
    %v4104 = vand.u32 %v4103, 4294901760
    %v4105 = vsub.f32 %v4103, %v4104
    %v4106 = vand.u32 %v4105, 4294901760
    %4107 = vmatpush1.msra.mxu0 %v4106
    %4108 = vmatprep.subr.mxu0 0.0
    %v4109 = vand.u32 %v1161, 4294901760
    %v4110 = vsub.f32 %v1161, %v4109
    %v4111 = vand.u32 %v4110, 4294901760
    %v4112 = vsub.f32 %v4110, %v4111
    %v4113 = vand.u32 %v4112, 4294901760
    %4114 = vmatpush1.msra.mxu0 %v4113
    %4115 = vmatprep.subr.mxu0 0.0
    %v4116 = vand.u32 %v1164, 4294901760
    %v4117 = vsub.f32 %v1164, %v4116
    %v4118 = vand.u32 %v4117, 4294901760
    %v4119 = vsub.f32 %v4117, %v4118
    %v4120 = vand.u32 %v4119, 4294901760
    %4121 = vmatpush1.msra.mxu0 %v4120
    %4122 = vmatprep.subr.mxu0 0.0
    %v4123 = vand.u32 %v1167, 4294901760
    %v4124 = vsub.f32 %v1167, %v4123
    %v4125 = vand.u32 %v4124, 4294901760
    %v4126 = vsub.f32 %v4124, %v4125
    %v4127 = vand.u32 %v4126, 4294901760
    %4128 = vmatpush1.msra.mxu0 %v4127
    %4129 = vmatprep.subr.mxu0 0.0
    %v4130 = vand.u32 %v1170, 4294901760
    %v4131 = vsub.f32 %v1170, %v4130
    %v4132 = vand.u32 %v4131, 4294901760
    %v4133 = vsub.f32 %v4131, %v4132
    %v4134 = vand.u32 %v4133, 4294901760
    %4135 = vmatpush1.msra.mxu0 %v4134
    %4136 = vmatprep.subr.mxu0 0.0
    %v4137 = vand.u32 %v1173, 4294901760
    %v4138 = vsub.f32 %v1173, %v4137
    %v4139 = vand.u32 %v4138, 4294901760
    %v4140 = vsub.f32 %v4138, %v4139
    %v4141 = vand.u32 %v4140, 4294901760
    %4142 = vmatpush1.msra.mxu0 %v4141
    %4143 = vmatprep.subr.mxu0 0.0
    %v4144 = vand.u32 %v1176, 4294901760
    %v4145 = vsub.f32 %v1176, %v4144
    %v4146 = vand.u32 %v4145, 4294901760
    %v4147 = vsub.f32 %v4145, %v4146
    %v4148 = vand.u32 %v4147, 4294901760
    %4149 = vmatpush1.msra.mxu0 %v4148
    %4150 = vmatprep.subr.mxu0 0.0
    %v4151 = vand.u32 %v1179, 4294901760
    %v4152 = vsub.f32 %v1179, %v4151
    %v4153 = vand.u32 %v4152, 4294901760
    %v4154 = vsub.f32 %v4152, %v4153
    %v4155 = vand.u32 %v4154, 4294901760
    %4156 = vmatpush1.msra.mxu0 %v4155
    %4157 = vmatprep.subr.mxu0 0.0
    %v4158 = vand.u32 %v1182, 4294901760
    %v4159 = vsub.f32 %v1182, %v4158
    %v4160 = vand.u32 %v4159, 4294901760
    %v4161 = vsub.f32 %v4159, %v4160
    %v4162 = vand.u32 %v4161, 4294901760
    %4163 = vmatpush1.msra.mxu0 %v4162
    %4164 = vmatprep.subr.mxu0 0.0
    %v4165 = vand.u32 %v1185, 4294901760
    %v4166 = vsub.f32 %v1185, %v4165
    %v4167 = vand.u32 %v4166, 4294901760
    %v4168 = vsub.f32 %v4166, %v4167
    %v4169 = vand.u32 %v4168, 4294901760
    %4170 = vmatpush1.msra.mxu0 %v4169
    %4171 = vmatprep.subr.mxu0 0.0
    %v4172 = vand.u32 %v1188, 4294901760
    %v4173 = vsub.f32 %v1188, %v4172
    %v4174 = vand.u32 %v4173, 4294901760
    %v4175 = vsub.f32 %v4173, %v4174
    %v4176 = vand.u32 %v4175, 4294901760
    %4177 = vmatpush1.msra.mxu0 %v4176
    %4178 = vmatprep.subr.mxu0 0.0
    %v4179 = vand.u32 %v1191, 4294901760
    %v4180 = vsub.f32 %v1191, %v4179
    %v4181 = vand.u32 %v4180, 4294901760
    %v4182 = vsub.f32 %v4180, %v4181
    %v4183 = vand.u32 %v4182, 4294901760
    %4184 = vmatpush1.msra.mxu0 %v4183
    %4185 = vmatprep.subr.mxu0 0.0
    %v4186 = vand.u32 %v1194, 4294901760
    %v4187 = vsub.f32 %v1194, %v4186
    %v4188 = vand.u32 %v4187, 4294901760
    %v4189 = vsub.f32 %v4187, %v4188
    %v4190 = vand.u32 %v4189, 4294901760
    %4191 = vmatpush1.msra.mxu0 %v4190
    %4192 = vmatprep.subr.mxu0 0.0
    %v4193 = vand.u32 %v1197, 4294901760
    %v4194 = vsub.f32 %v1197, %v4193
    %v4195 = vand.u32 %v4194, 4294901760
    %v4196 = vsub.f32 %v4194, %v4195
    %v4197 = vand.u32 %v4196, 4294901760
    %4198 = vmatpush1.msra.mxu0 %v4197
    %4199 = vmatprep.subr.mxu0 0.0
    %v4200 = vand.u32 %v1200, 4294901760
    %v4201 = vsub.f32 %v1200, %v4200
    %v4202 = vand.u32 %v4201, 4294901760
    %v4203 = vsub.f32 %v4201, %v4202
    %v4204 = vand.u32 %v4203, 4294901760
    %4205 = vmatpush1.msra.mxu0 %v4204
    %4206 = vmatprep.subr.mxu0 0.0
    %v4207 = vand.u32 %v1203, 4294901760
    %v4208 = vsub.f32 %v1203, %v4207
    %v4209 = vand.u32 %v4208, 4294901760
    %v4210 = vsub.f32 %v4208, %v4209
    %v4211 = vand.u32 %v4210, 4294901760
    %4212 = vmatpush1.msra.mxu0 %v4211
    %4213 = vmatprep.subr.mxu0 0.0
    %v4214 = vand.u32 %v1206, 4294901760
    %v4215 = vsub.f32 %v1206, %v4214
    %v4216 = vand.u32 %v4215, 4294901760
    %v4217 = vsub.f32 %v4215, %v4216
    %v4218 = vand.u32 %v4217, 4294901760
    %4219 = vmatpush1.msra.mxu0 %v4218
    %4220 = vmatprep.subr.mxu0 0.0
    %v4221 = vand.u32 %v1209, 4294901760
    %v4222 = vsub.f32 %v1209, %v4221
    %v4223 = vand.u32 %v4222, 4294901760
    %v4224 = vsub.f32 %v4222, %v4223
    %v4225 = vand.u32 %v4224, 4294901760
    %4226 = vmatpush1.msra.mxu0 %v4225
    %v4227 = vand.u32 %v1111, 4294901760
    %4228 = vmatprep.mubr.f32.mxu0 %v4227
    %v4229 = vand.u32 %v1110, 4294901760
    %4230 = vmatmul.mubr.f32.gmra.mrb[0].mxu0 %v4229
    %v4231 = vpop.f32.mrb[0].mxu0
    %v4232 = vadd.f32 %v4000, %v4231
    %v4233 = vpop.f32.mrb[0].mxu0
    %4234 = vdwg.mxu0
    %4235 = vmatprep.subr.mxu0 0.0
    %v4236 = vand.u32 %v1116, 4294901760
    %v4237 = vsub.f32 %v1116, %v4236
    %4238 = vmatpush1.msra.mxu0 %v4237
    %4239 = vmatprep.subr.mxu0 0.0
    %v4240 = vand.u32 %v1119, 4294901760
    %v4241 = vsub.f32 %v1119, %v4240
    %4242 = vmatpush1.msra.mxu0 %v4241
    %4243 = vmatprep.subr.mxu0 0.0
    %v4244 = vand.u32 %v1122, 4294901760
    %v4245 = vsub.f32 %v1122, %v4244
    %4246 = vmatpush1.msra.mxu0 %v4245
    %4247 = vmatprep.subr.mxu0 0.0
    %v4248 = vand.u32 %v1125, 4294901760
    %v4249 = vsub.f32 %v1125, %v4248
    %4250 = vmatpush1.msra.mxu0 %v4249
    %4251 = vmatprep.subr.mxu0 0.0
    %v4252 = vand.u32 %v1128, 4294901760
    %v4253 = vsub.f32 %v1128, %v4252
    %4254 = vmatpush1.msra.mxu0 %v4253
    %4255 = vmatprep.subr.mxu0 0.0
    %v4256 = vand.u32 %v1131, 4294901760
    %v4257 = vsub.f32 %v1131, %v4256
    %4258 = vmatpush1.msra.mxu0 %v4257
    %4259 = vmatprep.subr.mxu0 0.0
    %v4260 = vand.u32 %v1134, 4294901760
    %v4261 = vsub.f32 %v1134, %v4260
    %4262 = vmatpush1.msra.mxu0 %v4261
    %4263 = vmatprep.subr.mxu0 0.0
    %v4264 = vand.u32 %v1137, 4294901760
    %v4265 = vsub.f32 %v1137, %v4264
    %4266 = vmatpush1.msra.mxu0 %v4265
    %4267 = vmatprep.subr.mxu0 0.0
    %v4268 = vand.u32 %v1140, 4294901760
    %v4269 = vsub.f32 %v1140, %v4268
    %4270 = vmatpush1.msra.mxu0 %v4269
    %4271 = vmatprep.subr.mxu0 0.0
    %v4272 = vand.u32 %v1143, 4294901760
    %v4273 = vsub.f32 %v1143, %v4272
    %4274 = vmatpush1.msra.mxu0 %v4273
    %4275 = vmatprep.subr.mxu0 0.0
    %v4276 = vand.u32 %v1146, 4294901760
    %v4277 = vsub.f32 %v1146, %v4276
    %4278 = vmatpush1.msra.mxu0 %v4277
    %4279 = vmatprep.subr.mxu0 0.0
    %v4280 = vand.u32 %v1149, 4294901760
    %v4281 = vsub.f32 %v1149, %v4280
    %4282 = vmatpush1.msra.mxu0 %v4281
    %4283 = vmatprep.subr.mxu0 0.0
    %v4284 = vand.u32 %v1152, 4294901760
    %v4285 = vsub.f32 %v1152, %v4284
    %4286 = vmatpush1.msra.mxu0 %v4285
    %4287 = vmatprep.subr.mxu0 0.0
    %v4288 = vand.u32 %v1155, 4294901760
    %v4289 = vsub.f32 %v1155, %v4288
    %4290 = vmatpush1.msra.mxu0 %v4289
    %4291 = vmatprep.subr.mxu0 0.0
    %v4292 = vand.u32 %v1158, 4294901760
    %v4293 = vsub.f32 %v1158, %v4292
    %4294 = vmatpush1.msra.mxu0 %v4293
    %4295 = vmatprep.subr.mxu0 0.0
    %v4296 = vand.u32 %v1161, 4294901760
    %v4297 = vsub.f32 %v1161, %v4296
    %4298 = vmatpush1.msra.mxu0 %v4297
    %4299 = vmatprep.subr.mxu0 0.0
    %v4300 = vand.u32 %v1164, 4294901760
    %v4301 = vsub.f32 %v1164, %v4300
    %4302 = vmatpush1.msra.mxu0 %v4301
    %4303 = vmatprep.subr.mxu0 0.0
    %v4304 = vand.u32 %v1167, 4294901760
    %v4305 = vsub.f32 %v1167, %v4304
    %4306 = vmatpush1.msra.mxu0 %v4305
    %4307 = vmatprep.subr.mxu0 0.0
    %v4308 = vand.u32 %v1170, 4294901760
    %v4309 = vsub.f32 %v1170, %v4308
    %4310 = vmatpush1.msra.mxu0 %v4309
    %4311 = vmatprep.subr.mxu0 0.0
    %v4312 = vand.u32 %v1173, 4294901760
    %v4313 = vsub.f32 %v1173, %v4312
    %4314 = vmatpush1.msra.mxu0 %v4313
    %4315 = vmatprep.subr.mxu0 0.0
    %v4316 = vand.u32 %v1176, 4294901760
    %v4317 = vsub.f32 %v1176, %v4316
    %4318 = vmatpush1.msra.mxu0 %v4317
    %4319 = vmatprep.subr.mxu0 0.0
    %v4320 = vand.u32 %v1179, 4294901760
    %v4321 = vsub.f32 %v1179, %v4320
    %4322 = vmatpush1.msra.mxu0 %v4321
    %4323 = vmatprep.subr.mxu0 0.0
    %v4324 = vand.u32 %v1182, 4294901760
    %v4325 = vsub.f32 %v1182, %v4324
    %4326 = vmatpush1.msra.mxu0 %v4325
    %4327 = vmatprep.subr.mxu0 0.0
    %v4328 = vand.u32 %v1185, 4294901760
    %v4329 = vsub.f32 %v1185, %v4328
    %4330 = vmatpush1.msra.mxu0 %v4329
    %4331 = vmatprep.subr.mxu0 0.0
    %v4332 = vand.u32 %v1188, 4294901760
    %v4333 = vsub.f32 %v1188, %v4332
    %4334 = vmatpush1.msra.mxu0 %v4333
    %4335 = vmatprep.subr.mxu0 0.0
    %v4336 = vand.u32 %v1191, 4294901760
    %v4337 = vsub.f32 %v1191, %v4336
    %4338 = vmatpush1.msra.mxu0 %v4337
    %4339 = vmatprep.subr.mxu0 0.0
    %v4340 = vand.u32 %v1194, 4294901760
    %v4341 = vsub.f32 %v1194, %v4340
    %4342 = vmatpush1.msra.mxu0 %v4341
    %4343 = vmatprep.subr.mxu0 0.0
    %v4344 = vand.u32 %v1197, 4294901760
    %v4345 = vsub.f32 %v1197, %v4344
    %4346 = vmatpush1.msra.mxu0 %v4345
    %4347 = vmatprep.subr.mxu0 0.0
    %v4348 = vand.u32 %v1200, 4294901760
    %v4349 = vsub.f32 %v1200, %v4348
    %4350 = vmatpush1.msra.mxu0 %v4349
    %4351 = vmatprep.subr.mxu0 0.0
    %v4352 = vand.u32 %v1203, 4294901760
    %v4353 = vsub.f32 %v1203, %v4352
    %4354 = vmatpush1.msra.mxu0 %v4353
    %4355 = vmatprep.subr.mxu0 0.0
    %v4356 = vand.u32 %v1206, 4294901760
    %v4357 = vsub.f32 %v1206, %v4356
    %4358 = vmatpush1.msra.mxu0 %v4357
    %4359 = vmatprep.subr.mxu0 0.0
    %v4360 = vand.u32 %v1209, 4294901760
    %v4361 = vsub.f32 %v1209, %v4360
    %4362 = vmatpush1.msra.mxu0 %v4361
    %v4363 = vand.u32 %v1111, 4294901760
    %v4364 = vsub.f32 %v1111, %v4363
    %4365 = vmatprep.mubr.f32.mxu0 %v4364
    %v4366 = vand.u32 %v1110, 4294901760
    %v4367 = vsub.f32 %v1110, %v4366
    %4368 = vmatmul.mubr.f32.gmra.mrb[0].mxu0 %v4367
    %v4369 = vpop.f32.mrb[0].mxu0
    %v4370 = vadd.f32 %v4232, %v4369
    %v4371 = vpop.f32.mrb[0].mxu0
    %4372 = vdwg.mxu0
    %4373 = vmatprep.subr.mxu0 0.0
    %v4374 = vand.u32 %v1116, 4294901760
    %4375 = vmatpush1.msra.mxu0 %v4374
    %4376 = vmatprep.subr.mxu0 0.0
    %v4377 = vand.u32 %v1119, 4294901760
    %4378 = vmatpush1.msra.mxu0 %v4377
    %4379 = vmatprep.subr.mxu0 0.0
    %v4380 = vand.u32 %v1122, 4294901760
    %4381 = vmatpush1.msra.mxu0 %v4380
    %4382 = vmatprep.subr.mxu0 0.0
    %v4383 = vand.u32 %v1125, 4294901760
    %4384 = vmatpush1.msra.mxu0 %v4383
    %4385 = vmatprep.subr.mxu0 0.0
    %v4386 = vand.u32 %v1128, 4294901760
    %4387 = vmatpush1.msra.mxu0 %v4386
    %4388 = vmatprep.subr.mxu0 0.0
    %v4389 = vand.u32 %v1131, 4294901760
    %4390 = vmatpush1.msra.mxu0 %v4389
    %4391 = vmatprep.subr.mxu0 0.0
    %v4392 = vand.u32 %v1134, 4294901760
    %4393 = vmatpush1.msra.mxu0 %v4392
    %4394 = vmatprep.subr.mxu0 0.0
    %v4395 = vand.u32 %v1137, 4294901760
    %4396 = vmatpush1.msra.mxu0 %v4395
    %4397 = vmatprep.subr.mxu0 0.0
    %v4398 = vand.u32 %v1140, 4294901760
    %4399 = vmatpush1.msra.mxu0 %v4398
    %4400 = vmatprep.subr.mxu0 0.0
    %v4401 = vand.u32 %v1143, 4294901760
    %4402 = vmatpush1.msra.mxu0 %v4401
    %4403 = vmatprep.subr.mxu0 0.0
    %v4404 = vand.u32 %v1146, 4294901760
    %4405 = vmatpush1.msra.mxu0 %v4404
    %4406 = vmatprep.subr.mxu0 0.0
    %v4407 = vand.u32 %v1149, 4294901760
    %4408 = vmatpush1.msra.mxu0 %v4407
    %4409 = vmatprep.subr.mxu0 0.0
    %v4410 = vand.u32 %v1152, 4294901760
    %4411 = vmatpush1.msra.mxu0 %v4410
    %4412 = vmatprep.subr.mxu0 0.0
    %v4413 = vand.u32 %v1155, 4294901760
    %4414 = vmatpush1.msra.mxu0 %v4413
    %4415 = vmatprep.subr.mxu0 0.0
    %v4416 = vand.u32 %v1158, 4294901760
    %4417 = vmatpush1.msra.mxu0 %v4416
    %4418 = vmatprep.subr.mxu0 0.0
    %v4419 = vand.u32 %v1161, 4294901760
    %4420 = vmatpush1.msra.mxu0 %v4419
    %4421 = vmatprep.subr.mxu0 0.0
    %v4422 = vand.u32 %v1164, 4294901760
    %4423 = vmatpush1.msra.mxu0 %v4422
    %4424 = vmatprep.subr.mxu0 0.0
    %v4425 = vand.u32 %v1167, 4294901760
    %4426 = vmatpush1.msra.mxu0 %v4425
    %4427 = vmatprep.subr.mxu0 0.0
    %v4428 = vand.u32 %v1170, 4294901760
    %4429 = vmatpush1.msra.mxu0 %v4428
    %4430 = vmatprep.subr.mxu0 0.0
    %v4431 = vand.u32 %v1173, 4294901760
    %4432 = vmatpush1.msra.mxu0 %v4431
    %4433 = vmatprep.subr.mxu0 0.0
    %v4434 = vand.u32 %v1176, 4294901760
    %4435 = vmatpush1.msra.mxu0 %v4434
    %4436 = vmatprep.subr.mxu0 0.0
    %v4437 = vand.u32 %v1179, 4294901760
    %4438 = vmatpush1.msra.mxu0 %v4437
    %4439 = vmatprep.subr.mxu0 0.0
    %v4440 = vand.u32 %v1182, 4294901760
    %4441 = vmatpush1.msra.mxu0 %v4440
    %4442 = vmatprep.subr.mxu0 0.0
    %v4443 = vand.u32 %v1185, 4294901760
    %4444 = vmatpush1.msra.mxu0 %v4443
    %4445 = vmatprep.subr.mxu0 0.0
    %v4446 = vand.u32 %v1188, 4294901760
    %4447 = vmatpush1.msra.mxu0 %v4446
    %4448 = vmatprep.subr.mxu0 0.0
    %v4449 = vand.u32 %v1191, 4294901760
    %4450 = vmatpush1.msra.mxu0 %v4449
    %4451 = vmatprep.subr.mxu0 0.0
    %v4452 = vand.u32 %v1194, 4294901760
    %4453 = vmatpush1.msra.mxu0 %v4452
    %4454 = vmatprep.subr.mxu0 0.0
    %v4455 = vand.u32 %v1197, 4294901760
    %4456 = vmatpush1.msra.mxu0 %v4455
    %4457 = vmatprep.subr.mxu0 0.0
    %v4458 = vand.u32 %v1200, 4294901760
    %4459 = vmatpush1.msra.mxu0 %v4458
    %4460 = vmatprep.subr.mxu0 0.0
    %v4461 = vand.u32 %v1203, 4294901760
    %4462 = vmatpush1.msra.mxu0 %v4461
    %4463 = vmatprep.subr.mxu0 0.0
    %v4464 = vand.u32 %v1206, 4294901760
    %4465 = vmatpush1.msra.mxu0 %v4464
    %4466 = vmatprep.subr.mxu0 0.0
    %v4467 = vand.u32 %v1209, 4294901760
    %4468 = vmatpush1.msra.mxu0 %v4467
    %v4469 = vand.u32 %v1111, 4294901760
    %v4470 = vsub.f32 %v1111, %v4469
    %v4471 = vand.u32 %v4470, 4294901760
    %4472 = vmatprep.mubr.f32.mxu0 %v4471
    %v4473 = vand.u32 %v1110, 4294901760
    %v4474 = vsub.f32 %v1110, %v4473
    %v4475 = vand.u32 %v4474, 4294901760
    %4476 = vmatmul.mubr.f32.gmra.mrb[0].mxu0 %v4475
    %v4477 = vpop.f32.mrb[0].mxu0
    %v4478 = vadd.f32 %v4370, %v4477
    %v4479 = vpop.f32.mrb[0].mxu0
    %4480 = vdwg.mxu0
    %4481 = vmatprep.subr.mxu0 0.0
    %v4482 = vand.u32 %v1116, 4294901760
    %v4483 = vsub.f32 %v1116, %v4482
    %v4484 = vand.u32 %v4483, 4294901760
    %4485 = vmatpush1.msra.mxu0 %v4484
    %4486 = vmatprep.subr.mxu0 0.0
    %v4487 = vand.u32 %v1119, 4294901760
    %v4488 = vsub.f32 %v1119, %v4487
    %v4489 = vand.u32 %v4488, 4294901760
    %4490 = vmatpush1.msra.mxu0 %v4489
    %4491 = vmatprep.subr.mxu0 0.0
    %v4492 = vand.u32 %v1122, 4294901760
    %v4493 = vsub.f32 %v1122, %v4492
    %v4494 = vand.u32 %v4493, 4294901760
    %4495 = vmatpush1.msra.mxu0 %v4494
    %4496 = vmatprep.subr.mxu0 0.0
    %v4497 = vand.u32 %v1125, 4294901760
    %v4498 = vsub.f32 %v1125, %v4497
    %v4499 = vand.u32 %v4498, 4294901760
    %4500 = vmatpush1.msra.mxu0 %v4499
    %4501 = vmatprep.subr.mxu0 0.0
    %v4502 = vand.u32 %v1128, 4294901760
    %v4503 = vsub.f32 %v1128, %v4502
    %v4504 = vand.u32 %v4503, 4294901760
    %4505 = vmatpush1.msra.mxu0 %v4504
    %4506 = vmatprep.subr.mxu0 0.0
    %v4507 = vand.u32 %v1131, 4294901760
    %v4508 = vsub.f32 %v1131, %v4507
    %v4509 = vand.u32 %v4508, 4294901760
    %4510 = vmatpush1.msra.mxu0 %v4509
    %4511 = vmatprep.subr.mxu0 0.0
    %v4512 = vand.u32 %v1134, 4294901760
    %v4513 = vsub.f32 %v1134, %v4512
    %v4514 = vand.u32 %v4513, 4294901760
    %4515 = vmatpush1.msra.mxu0 %v4514
    %4516 = vmatprep.subr.mxu0 0.0
    %v4517 = vand.u32 %v1137, 4294901760
    %v4518 = vsub.f32 %v1137, %v4517
    %v4519 = vand.u32 %v4518, 4294901760
    %4520 = vmatpush1.msra.mxu0 %v4519
    %4521 = vmatprep.subr.mxu0 0.0
    %v4522 = vand.u32 %v1140, 4294901760
    %v4523 = vsub.f32 %v1140, %v4522
    %v4524 = vand.u32 %v4523, 4294901760
    %4525 = vmatpush1.msra.mxu0 %v4524
    %4526 = vmatprep.subr.mxu0 0.0
    %v4527 = vand.u32 %v1143, 4294901760
    %v4528 = vsub.f32 %v1143, %v4527
    %v4529 = vand.u32 %v4528, 4294901760
    %4530 = vmatpush1.msra.mxu0 %v4529
    %4531 = vmatprep.subr.mxu0 0.0
    %v4532 = vand.u32 %v1146, 4294901760
    %v4533 = vsub.f32 %v1146, %v4532
    %v4534 = vand.u32 %v4533, 4294901760
    %4535 = vmatpush1.msra.mxu0 %v4534
    %4536 = vmatprep.subr.mxu0 0.0
    %v4537 = vand.u32 %v1149, 4294901760
    %v4538 = vsub.f32 %v1149, %v4537
    %v4539 = vand.u32 %v4538, 4294901760
    %4540 = vmatpush1.msra.mxu0 %v4539
    %4541 = vmatprep.subr.mxu0 0.0
    %v4542 = vand.u32 %v1152, 4294901760
    %v4543 = vsub.f32 %v1152, %v4542
    %v4544 = vand.u32 %v4543, 4294901760
    %4545 = vmatpush1.msra.mxu0 %v4544
    %4546 = vmatprep.subr.mxu0 0.0
    %v4547 = vand.u32 %v1155, 4294901760
    %v4548 = vsub.f32 %v1155, %v4547
    %v4549 = vand.u32 %v4548, 4294901760
    %4550 = vmatpush1.msra.mxu0 %v4549
    %4551 = vmatprep.subr.mxu0 0.0
    %v4552 = vand.u32 %v1158, 4294901760
    %v4553 = vsub.f32 %v1158, %v4552
    %v4554 = vand.u32 %v4553, 4294901760
    %4555 = vmatpush1.msra.mxu0 %v4554
    %4556 = vmatprep.subr.mxu0 0.0
    %v4557 = vand.u32 %v1161, 4294901760
    %v4558 = vsub.f32 %v1161, %v4557
    %v4559 = vand.u32 %v4558, 4294901760
    %4560 = vmatpush1.msra.mxu0 %v4559
    %4561 = vmatprep.subr.mxu0 0.0
    %v4562 = vand.u32 %v1164, 4294901760
    %v4563 = vsub.f32 %v1164, %v4562
    %v4564 = vand.u32 %v4563, 4294901760
    %4565 = vmatpush1.msra.mxu0 %v4564
    %4566 = vmatprep.subr.mxu0 0.0
    %v4567 = vand.u32 %v1167, 4294901760
    %v4568 = vsub.f32 %v1167, %v4567
    %v4569 = vand.u32 %v4568, 4294901760
    %4570 = vmatpush1.msra.mxu0 %v4569
    %4571 = vmatprep.subr.mxu0 0.0
    %v4572 = vand.u32 %v1170, 4294901760
    %v4573 = vsub.f32 %v1170, %v4572
    %v4574 = vand.u32 %v4573, 4294901760
    %4575 = vmatpush1.msra.mxu0 %v4574
    %4576 = vmatprep.subr.mxu0 0.0
    %v4577 = vand.u32 %v1173, 4294901760
    %v4578 = vsub.f32 %v1173, %v4577
    %v4579 = vand.u32 %v4578, 4294901760
    %4580 = vmatpush1.msra.mxu0 %v4579
    %4581 = vmatprep.subr.mxu0 0.0
    %v4582 = vand.u32 %v1176, 4294901760
    %v4583 = vsub.f32 %v1176, %v4582
    %v4584 = vand.u32 %v4583, 4294901760
    %4585 = vmatpush1.msra.mxu0 %v4584
    %4586 = vmatprep.subr.mxu0 0.0
    %v4587 = vand.u32 %v1179, 4294901760
    %v4588 = vsub.f32 %v1179, %v4587
    %v4589 = vand.u32 %v4588, 4294901760
    %4590 = vmatpush1.msra.mxu0 %v4589
    %4591 = vmatprep.subr.mxu0 0.0
    %v4592 = vand.u32 %v1182, 4294901760
    %v4593 = vsub.f32 %v1182, %v4592
    %v4594 = vand.u32 %v4593, 4294901760
    %4595 = vmatpush1.msra.mxu0 %v4594
    %4596 = vmatprep.subr.mxu0 0.0
    %v4597 = vand.u32 %v1185, 4294901760
    %v4598 = vsub.f32 %v1185, %v4597
    %v4599 = vand.u32 %v4598, 4294901760
    %4600 = vmatpush1.msra.mxu0 %v4599
    %4601 = vmatprep.subr.mxu0 0.0
    %v4602 = vand.u32 %v1188, 4294901760
    %v4603 = vsub.f32 %v1188, %v4602
    %v4604 = vand.u32 %v4603, 4294901760
    %4605 = vmatpush1.msra.mxu0 %v4604
    %4606 = vmatprep.subr.mxu0 0.0
    %v4607 = vand.u32 %v1191, 4294901760
    %v4608 = vsub.f32 %v1191, %v4607
    %v4609 = vand.u32 %v4608, 4294901760
    %4610 = vmatpush1.msra.mxu0 %v4609
    %4611 = vmatprep.subr.mxu0 0.0
    %v4612 = vand.u32 %v1194, 4294901760
    %v4613 = vsub.f32 %v1194, %v4612
    %v4614 = vand.u32 %v4613, 4294901760
    %4615 = vmatpush1.msra.mxu0 %v4614
    %4616 = vmatprep.subr.mxu0 0.0
    %v4617 = vand.u32 %v1197, 4294901760
    %v4618 = vsub.f32 %v1197, %v4617
    %v4619 = vand.u32 %v4618, 4294901760
    %4620 = vmatpush1.msra.mxu0 %v4619
    %4621 = vmatprep.subr.mxu0 0.0
    %v4622 = vand.u32 %v1200, 4294901760
    %v4623 = vsub.f32 %v1200, %v4622
    %v4624 = vand.u32 %v4623, 4294901760
    %4625 = vmatpush1.msra.mxu0 %v4624
    %4626 = vmatprep.subr.mxu0 0.0
    %v4627 = vand.u32 %v1203, 4294901760
    %v4628 = vsub.f32 %v1203, %v4627
    %v4629 = vand.u32 %v4628, 4294901760
    %4630 = vmatpush1.msra.mxu0 %v4629
    %4631 = vmatprep.subr.mxu0 0.0
    %v4632 = vand.u32 %v1206, 4294901760
    %v4633 = vsub.f32 %v1206, %v4632
    %v4634 = vand.u32 %v4633, 4294901760
    %4635 = vmatpush1.msra.mxu0 %v4634
    %4636 = vmatprep.subr.mxu0 0.0
    %v4637 = vand.u32 %v1209, 4294901760
    %v4638 = vsub.f32 %v1209, %v4637
    %v4639 = vand.u32 %v4638, 4294901760
    %4640 = vmatpush1.msra.mxu0 %v4639
    %v4641 = vand.u32 %v1111, 4294901760
    %4642 = vmatprep.mubr.f32.mxu0 %v4641
    %v4643 = vand.u32 %v1110, 4294901760
    %4644 = vmatmul.mubr.f32.gmra.mrb[0].mxu0 %v4643
    %v4645 = vpop.f32.mrb[0].mxu0
    %v4646 = vadd.f32 %v4478, %v4645
    %v4647 = vpop.f32.mrb[0].mxu0
    %4648 = vdwg.mxu0
    %4649 = vmatprep.subr.mxu0 0.0
    %v4650 = vand.u32 %v1116, 4294901760
    %4651 = vmatpush1.msra.mxu0 %v4650
    %4652 = vmatprep.subr.mxu0 0.0
    %v4653 = vand.u32 %v1119, 4294901760
    %4654 = vmatpush1.msra.mxu0 %v4653
    %4655 = vmatprep.subr.mxu0 0.0
    %v4656 = vand.u32 %v1122, 4294901760
    %4657 = vmatpush1.msra.mxu0 %v4656
    %4658 = vmatprep.subr.mxu0 0.0
    %v4659 = vand.u32 %v1125, 4294901760
    %4660 = vmatpush1.msra.mxu0 %v4659
    %4661 = vmatprep.subr.mxu0 0.0
    %v4662 = vand.u32 %v1128, 4294901760
    %4663 = vmatpush1.msra.mxu0 %v4662
    %4664 = vmatprep.subr.mxu0 0.0
    %v4665 = vand.u32 %v1131, 4294901760
    %4666 = vmatpush1.msra.mxu0 %v4665
    %4667 = vmatprep.subr.mxu0 0.0
    %v4668 = vand.u32 %v1134, 4294901760
    %4669 = vmatpush1.msra.mxu0 %v4668
    %4670 = vmatprep.subr.mxu0 0.0
    %v4671 = vand.u32 %v1137, 4294901760
    %4672 = vmatpush1.msra.mxu0 %v4671
    %4673 = vmatprep.subr.mxu0 0.0
    %v4674 = vand.u32 %v1140, 4294901760
    %4675 = vmatpush1.msra.mxu0 %v4674
    %4676 = vmatprep.subr.mxu0 0.0
    %v4677 = vand.u32 %v1143, 4294901760
    %4678 = vmatpush1.msra.mxu0 %v4677
    %4679 = vmatprep.subr.mxu0 0.0
    %v4680 = vand.u32 %v1146, 4294901760
    %4681 = vmatpush1.msra.mxu0 %v4680
    %4682 = vmatprep.subr.mxu0 0.0
    %v4683 = vand.u32 %v1149, 4294901760
    %4684 = vmatpush1.msra.mxu0 %v4683
    %4685 = vmatprep.subr.mxu0 0.0
    %v4686 = vand.u32 %v1152, 4294901760
    %4687 = vmatpush1.msra.mxu0 %v4686
    %4688 = vmatprep.subr.mxu0 0.0
    %v4689 = vand.u32 %v1155, 4294901760
    %4690 = vmatpush1.msra.mxu0 %v4689
    %4691 = vmatprep.subr.mxu0 0.0
    %v4692 = vand.u32 %v1158, 4294901760
    %4693 = vmatpush1.msra.mxu0 %v4692
    %4694 = vmatprep.subr.mxu0 0.0
    %v4695 = vand.u32 %v1161, 4294901760
    %4696 = vmatpush1.msra.mxu0 %v4695
    %4697 = vmatprep.subr.mxu0 0.0
    %v4698 = vand.u32 %v1164, 4294901760
    %4699 = vmatpush1.msra.mxu0 %v4698
    %4700 = vmatprep.subr.mxu0 0.0
    %v4701 = vand.u32 %v1167, 4294901760
    %4702 = vmatpush1.msra.mxu0 %v4701
    %4703 = vmatprep.subr.mxu0 0.0
    %v4704 = vand.u32 %v1170, 4294901760
    %4705 = vmatpush1.msra.mxu0 %v4704
    %4706 = vmatprep.subr.mxu0 0.0
    %v4707 = vand.u32 %v1173, 4294901760
    %4708 = vmatpush1.msra.mxu0 %v4707
    %4709 = vmatprep.subr.mxu0 0.0
    %v4710 = vand.u32 %v1176, 4294901760
    %4711 = vmatpush1.msra.mxu0 %v4710
    %4712 = vmatprep.subr.mxu0 0.0
    %v4713 = vand.u32 %v1179, 4294901760
    %4714 = vmatpush1.msra.mxu0 %v4713
    %4715 = vmatprep.subr.mxu0 0.0
    %v4716 = vand.u32 %v1182, 4294901760
    %4717 = vmatpush1.msra.mxu0 %v4716
    %4718 = vmatprep.subr.mxu0 0.0
    %v4719 = vand.u32 %v1185, 4294901760
    %4720 = vmatpush1.msra.mxu0 %v4719
    %4721 = vmatprep.subr.mxu0 0.0
    %v4722 = vand.u32 %v1188, 4294901760
    %4723 = vmatpush1.msra.mxu0 %v4722
    %4724 = vmatprep.subr.mxu0 0.0
    %v4725 = vand.u32 %v1191, 4294901760
    %4726 = vmatpush1.msra.mxu0 %v4725
    %4727 = vmatprep.subr.mxu0 0.0
    %v4728 = vand.u32 %v1194, 4294901760
    %4729 = vmatpush1.msra.mxu0 %v4728
    %4730 = vmatprep.subr.mxu0 0.0
    %v4731 = vand.u32 %v1197, 4294901760
    %4732 = vmatpush1.msra.mxu0 %v4731
    %4733 = vmatprep.subr.mxu0 0.0
    %v4734 = vand.u32 %v1200, 4294901760
    %4735 = vmatpush1.msra.mxu0 %v4734
    %4736 = vmatprep.subr.mxu0 0.0
    %v4737 = vand.u32 %v1203, 4294901760
    %4738 = vmatpush1.msra.mxu0 %v4737
    %4739 = vmatprep.subr.mxu0 0.0
    %v4740 = vand.u32 %v1206, 4294901760
    %4741 = vmatpush1.msra.mxu0 %v4740
    %4742 = vmatprep.subr.mxu0 0.0
    %v4743 = vand.u32 %v1209, 4294901760
    %4744 = vmatpush1.msra.mxu0 %v4743
    %v4745 = vand.u32 %v1111, 4294901760
    %4746 = vmatprep.mubr.f32.mxu0 %v4745
    %v4747 = vand.u32 %v1110, 4294901760
    %4748 = vmatmul.mubr.f32.gmra.mrb[0].mxu0 %v4747
    %v4749 = vpop.f32.mrb[0].mxu0
    %v4750 = vadd.f32 %v4646, %v4749
    %v4751 = vpop.f32.mrb[0].mxu0
    %4752 = vdwg.mxu0
    %4753 = vmatprep.subr.mxu0 0.0
    %v4754 = vand.u32 %v1212, 4294901760
    %4755 = vmatpush1.msra.mxu0 %v4754
    %4756 = vmatprep.subr.mxu0 0.0
    %v4757 = vand.u32 %v1215, 4294901760
    %4758 = vmatpush1.msra.mxu0 %v4757
    %4759 = vmatprep.subr.mxu0 0.0
    %v4760 = vand.u32 %v1218, 4294901760
    %4761 = vmatpush1.msra.mxu0 %v4760
    %4762 = vmatprep.subr.mxu0 0.0
    %v4763 = vand.u32 %v1221, 4294901760
    %4764 = vmatpush1.msra.mxu0 %v4763
    %4765 = vmatprep.subr.mxu0 0.0
    %v4766 = vand.u32 %v1224, 4294901760
    %4767 = vmatpush1.msra.mxu0 %v4766
    %4768 = vmatprep.subr.mxu0 0.0
    %v4769 = vand.u32 %v1227, 4294901760
    %4770 = vmatpush1.msra.mxu0 %v4769
    %4771 = vmatprep.subr.mxu0 0.0
    %v4772 = vand.u32 %v1230, 4294901760
    %4773 = vmatpush1.msra.mxu0 %v4772
    %4774 = vmatprep.subr.mxu0 0.0
    %v4775 = vand.u32 %v1233, 4294901760
    %4776 = vmatpush1.msra.mxu0 %v4775
    %4777 = vmatprep.subr.mxu0 0.0
    %v4778 = vand.u32 %v1236, 4294901760
    %4779 = vmatpush1.msra.mxu0 %v4778
    %4780 = vmatprep.subr.mxu0 0.0
    %v4781 = vand.u32 %v1239, 4294901760
    %4782 = vmatpush1.msra.mxu0 %v4781
    %4783 = vmatprep.subr.mxu0 0.0
    %v4784 = vand.u32 %v1242, 4294901760
    %4785 = vmatpush1.msra.mxu0 %v4784
    %4786 = vmatprep.subr.mxu0 0.0
    %v4787 = vand.u32 %v1245, 4294901760
    %4788 = vmatpush1.msra.mxu0 %v4787
    %4789 = vmatprep.subr.mxu0 0.0
    %v4790 = vand.u32 %v1248, 4294901760
    %4791 = vmatpush1.msra.mxu0 %v4790
    %4792 = vmatprep.subr.mxu0 0.0
    %v4793 = vand.u32 %v1251, 4294901760
    %4794 = vmatpush1.msra.mxu0 %v4793
    %4795 = vmatprep.subr.mxu0 0.0
    %v4796 = vand.u32 %v1254, 4294901760
    %4797 = vmatpush1.msra.mxu0 %v4796
    %4798 = vmatprep.subr.mxu0 0.0
    %v4799 = vand.u32 %v1257, 4294901760
    %4800 = vmatpush1.msra.mxu0 %v4799
    %4801 = vmatprep.subr.mxu0 0.0
    %v4802 = vand.u32 %v1260, 4294901760
    %4803 = vmatpush1.msra.mxu0 %v4802
    %4804 = vmatprep.subr.mxu0 0.0
    %v4805 = vand.u32 %v1263, 4294901760
    %4806 = vmatpush1.msra.mxu0 %v4805
    %4807 = vmatprep.subr.mxu0 0.0
    %v4808 = vand.u32 %v1266, 4294901760
    %4809 = vmatpush1.msra.mxu0 %v4808
    %4810 = vmatprep.subr.mxu0 0.0
    %v4811 = vand.u32 %v1269, 4294901760
    %4812 = vmatpush1.msra.mxu0 %v4811
    %4813 = vmatprep.subr.mxu0 0.0
    %v4814 = vand.u32 %v1272, 4294901760
    %4815 = vmatpush1.msra.mxu0 %v4814
    %4816 = vmatprep.subr.mxu0 0.0
    %v4817 = vand.u32 %v1275, 4294901760
    %4818 = vmatpush1.msra.mxu0 %v4817
    %4819 = vmatprep.subr.mxu0 0.0
    %v4820 = vand.u32 %v1278, 4294901760
    %4821 = vmatpush1.msra.mxu0 %v4820
    %4822 = vmatprep.subr.mxu0 0.0
    %v4823 = vand.u32 %v1281, 4294901760
    %4824 = vmatpush1.msra.mxu0 %v4823
    %4825 = vmatprep.subr.mxu0 0.0
    %v4826 = vand.u32 %v1284, 4294901760
    %4827 = vmatpush1.msra.mxu0 %v4826
    %4828 = vmatprep.subr.mxu0 0.0
    %v4829 = vand.u32 %v1287, 4294901760
    %4830 = vmatpush1.msra.mxu0 %v4829
    %4831 = vmatprep.subr.mxu0 0.0
    %v4832 = vand.u32 %v1290, 4294901760
    %4833 = vmatpush1.msra.mxu0 %v4832
    %4834 = vmatprep.subr.mxu0 0.0
    %v4835 = vand.u32 %v1293, 4294901760
    %4836 = vmatpush1.msra.mxu0 %v4835
    %4837 = vmatprep.subr.mxu0 0.0
    %v4838 = vand.u32 %v1296, 4294901760
    %4839 = vmatpush1.msra.mxu0 %v4838
    %4840 = vmatprep.subr.mxu0 0.0
    %v4841 = vand.u32 %v1299, 4294901760
    %4842 = vmatpush1.msra.mxu0 %v4841
    %4843 = vmatprep.subr.mxu0 0.0
    %v4844 = vand.u32 %v1302, 4294901760
    %4845 = vmatpush1.msra.mxu0 %v4844
    %4846 = vmatprep.subr.mxu0 0.0
    %v4847 = vand.u32 %v1305, 4294901760
    %4848 = vmatpush1.msra.mxu0 %v4847
    %v4849 = vand.u32 %v1113, 4294901760
    %v4850 = vsub.f32 %v1113, %v4849
    %v4851 = vand.u32 %v4850, 4294901760
    %v4852 = vsub.f32 %v4850, %v4851
    %v4853 = vand.u32 %v4852, 4294901760
    %4854 = vmatprep.mubr.f32.mxu0 %v4853
    %v4855 = vand.u32 %v1112, 4294901760
    %v4856 = vsub.f32 %v1112, %v4855
    %v4857 = vand.u32 %v4856, 4294901760
    %v4858 = vsub.f32 %v4856, %v4857
    %v4859 = vand.u32 %v4858, 4294901760
    %4860 = vmatmul.mubr.f32.gmra.mrb[0].mxu0 %v4859
    %v4861 = vpop.f32.mrb[0].mxu0
    %v4862 = vadd.f32 %v4750, %v4861
    %v4863 = vpop.f32.mrb[0].mxu0
    %4864 = vdwg.mxu0
    %4865 = vmatprep.subr.mxu0 0.0
    %v4866 = vand.u32 %v1212, 4294901760
    %v4867 = vsub.f32 %v1212, %v4866
    %v4868 = vand.u32 %v4867, 4294901760
    %v4869 = vsub.f32 %v4867, %v4868
    %v4870 = vand.u32 %v4869, 4294901760
    %4871 = vmatpush1.msra.mxu0 %v4870
    %4872 = vmatprep.subr.mxu0 0.0
    %v4873 = vand.u32 %v1215, 4294901760
    %v4874 = vsub.f32 %v1215, %v4873
    %v4875 = vand.u32 %v4874, 4294901760
    %v4876 = vsub.f32 %v4874, %v4875
    %v4877 = vand.u32 %v4876, 4294901760
    %4878 = vmatpush1.msra.mxu0 %v4877
    %4879 = vmatprep.subr.mxu0 0.0
    %v4880 = vand.u32 %v1218, 4294901760
    %v4881 = vsub.f32 %v1218, %v4880
    %v4882 = vand.u32 %v4881, 4294901760
    %v4883 = vsub.f32 %v4881, %v4882
    %v4884 = vand.u32 %v4883, 4294901760
    %4885 = vmatpush1.msra.mxu0 %v4884
    %4886 = vmatprep.subr.mxu0 0.0
    %v4887 = vand.u32 %v1221, 4294901760
    %v4888 = vsub.f32 %v1221, %v4887
    %v4889 = vand.u32 %v4888, 4294901760
    %v4890 = vsub.f32 %v4888, %v4889
    %v4891 = vand.u32 %v4890, 4294901760
    %4892 = vmatpush1.msra.mxu0 %v4891
    %4893 = vmatprep.subr.mxu0 0.0
    %v4894 = vand.u32 %v1224, 4294901760
    %v4895 = vsub.f32 %v1224, %v4894
    %v4896 = vand.u32 %v4895, 4294901760
    %v4897 = vsub.f32 %v4895, %v4896
    %v4898 = vand.u32 %v4897, 4294901760
    %4899 = vmatpush1.msra.mxu0 %v4898
    %4900 = vmatprep.subr.mxu0 0.0
    %v4901 = vand.u32 %v1227, 4294901760
    %v4902 = vsub.f32 %v1227, %v4901
    %v4903 = vand.u32 %v4902, 4294901760
    %v4904 = vsub.f32 %v4902, %v4903
    %v4905 = vand.u32 %v4904, 4294901760
    %4906 = vmatpush1.msra.mxu0 %v4905
    %4907 = vmatprep.subr.mxu0 0.0
    %v4908 = vand.u32 %v1230, 4294901760
    %v4909 = vsub.f32 %v1230, %v4908
    %v4910 = vand.u32 %v4909, 4294901760
    %v4911 = vsub.f32 %v4909, %v4910
    %v4912 = vand.u32 %v4911, 4294901760
    %4913 = vmatpush1.msra.mxu0 %v4912
    %4914 = vmatprep.subr.mxu0 0.0
    %v4915 = vand.u32 %v1233, 4294901760
    %v4916 = vsub.f32 %v1233, %v4915
    %v4917 = vand.u32 %v4916, 4294901760
    %v4918 = vsub.f32 %v4916, %v4917
    %v4919 = vand.u32 %v4918, 4294901760
    %4920 = vmatpush1.msra.mxu0 %v4919
    %4921 = vmatprep.subr.mxu0 0.0
    %v4922 = vand.u32 %v1236, 4294901760
    %v4923 = vsub.f32 %v1236, %v4922
    %v4924 = vand.u32 %v4923, 4294901760
    %v4925 = vsub.f32 %v4923, %v4924
    %v4926 = vand.u32 %v4925, 4294901760
    %4927 = vmatpush1.msra.mxu0 %v4926
    %4928 = vmatprep.subr.mxu0 0.0
    %v4929 = vand.u32 %v1239, 4294901760
    %v4930 = vsub.f32 %v1239, %v4929
    %v4931 = vand.u32 %v4930, 4294901760
    %v4932 = vsub.f32 %v4930, %v4931
    %v4933 = vand.u32 %v4932, 4294901760
    %4934 = vmatpush1.msra.mxu0 %v4933
    %4935 = vmatprep.subr.mxu0 0.0
    %v4936 = vand.u32 %v1242, 4294901760
    %v4937 = vsub.f32 %v1242, %v4936
    %v4938 = vand.u32 %v4937, 4294901760
    %v4939 = vsub.f32 %v4937, %v4938
    %v4940 = vand.u32 %v4939, 4294901760
    %4941 = vmatpush1.msra.mxu0 %v4940
    %4942 = vmatprep.subr.mxu0 0.0
    %v4943 = vand.u32 %v1245, 4294901760
    %v4944 = vsub.f32 %v1245, %v4943
    %v4945 = vand.u32 %v4944, 4294901760
    %v4946 = vsub.f32 %v4944, %v4945
    %v4947 = vand.u32 %v4946, 4294901760
    %4948 = vmatpush1.msra.mxu0 %v4947
    %4949 = vmatprep.subr.mxu0 0.0
    %v4950 = vand.u32 %v1248, 4294901760
    %v4951 = vsub.f32 %v1248, %v4950
    %v4952 = vand.u32 %v4951, 4294901760
    %v4953 = vsub.f32 %v4951, %v4952
    %v4954 = vand.u32 %v4953, 4294901760
    %4955 = vmatpush1.msra.mxu0 %v4954
    %4956 = vmatprep.subr.mxu0 0.0
    %v4957 = vand.u32 %v1251, 4294901760
    %v4958 = vsub.f32 %v1251, %v4957
    %v4959 = vand.u32 %v4958, 4294901760
    %v4960 = vsub.f32 %v4958, %v4959
    %v4961 = vand.u32 %v4960, 4294901760
    %4962 = vmatpush1.msra.mxu0 %v4961
    %4963 = vmatprep.subr.mxu0 0.0
    %v4964 = vand.u32 %v1254, 4294901760
    %v4965 = vsub.f32 %v1254, %v4964
    %v4966 = vand.u32 %v4965, 4294901760
    %v4967 = vsub.f32 %v4965, %v4966
    %v4968 = vand.u32 %v4967, 4294901760
    %4969 = vmatpush1.msra.mxu0 %v4968
    %4970 = vmatprep.subr.mxu0 0.0
    %v4971 = vand.u32 %v1257, 4294901760
    %v4972 = vsub.f32 %v1257, %v4971
    %v4973 = vand.u32 %v4972, 4294901760
    %v4974 = vsub.f32 %v4972, %v4973
    %v4975 = vand.u32 %v4974, 4294901760
    %4976 = vmatpush1.msra.mxu0 %v4975
    %4977 = vmatprep.subr.mxu0 0.0
    %v4978 = vand.u32 %v1260, 4294901760
    %v4979 = vsub.f32 %v1260, %v4978
    %v4980 = vand.u32 %v4979, 4294901760
    %v4981 = vsub.f32 %v4979, %v4980
    %v4982 = vand.u32 %v4981, 4294901760
    %4983 = vmatpush1.msra.mxu0 %v4982
    %4984 = vmatprep.subr.mxu0 0.0
    %v4985 = vand.u32 %v1263, 4294901760
    %v4986 = vsub.f32 %v1263, %v4985
    %v4987 = vand.u32 %v4986, 4294901760
    %v4988 = vsub.f32 %v4986, %v4987
    %v4989 = vand.u32 %v4988, 4294901760
    %4990 = vmatpush1.msra.mxu0 %v4989
    %4991 = vmatprep.subr.mxu0 0.0
    %v4992 = vand.u32 %v1266, 4294901760
    %v4993 = vsub.f32 %v1266, %v4992
    %v4994 = vand.u32 %v4993, 4294901760
    %v4995 = vsub.f32 %v4993, %v4994
    %v4996 = vand.u32 %v4995, 4294901760
    %4997 = vmatpush1.msra.mxu0 %v4996
    %4998 = vmatprep.subr.mxu0 0.0
    %v4999 = vand.u32 %v1269, 4294901760
    %v5000 = vsub.f32 %v1269, %v4999
    %v5001 = vand.u32 %v5000, 4294901760
    %v5002 = vsub.f32 %v5000, %v5001
    %v5003 = vand.u32 %v5002, 4294901760
    %5004 = vmatpush1.msra.mxu0 %v5003
    %5005 = vmatprep.subr.mxu0 0.0
    %v5006 = vand.u32 %v1272, 4294901760
    %v5007 = vsub.f32 %v1272, %v5006
    %v5008 = vand.u32 %v5007, 4294901760
    %v5009 = vsub.f32 %v5007, %v5008
    %v5010 = vand.u32 %v5009, 4294901760
    %5011 = vmatpush1.msra.mxu0 %v5010
    %5012 = vmatprep.subr.mxu0 0.0
    %v5013 = vand.u32 %v1275, 4294901760
    %v5014 = vsub.f32 %v1275, %v5013
    %v5015 = vand.u32 %v5014, 4294901760
    %v5016 = vsub.f32 %v5014, %v5015
    %v5017 = vand.u32 %v5016, 4294901760
    %5018 = vmatpush1.msra.mxu0 %v5017
    %5019 = vmatprep.subr.mxu0 0.0
    %v5020 = vand.u32 %v1278, 4294901760
    %v5021 = vsub.f32 %v1278, %v5020
    %v5022 = vand.u32 %v5021, 4294901760
    %v5023 = vsub.f32 %v5021, %v5022
    %v5024 = vand.u32 %v5023, 4294901760
    %5025 = vmatpush1.msra.mxu0 %v5024
    %5026 = vmatprep.subr.mxu0 0.0
    %v5027 = vand.u32 %v1281, 4294901760
    %v5028 = vsub.f32 %v1281, %v5027
    %v5029 = vand.u32 %v5028, 4294901760
    %v5030 = vsub.f32 %v5028, %v5029
    %v5031 = vand.u32 %v5030, 4294901760
    %5032 = vmatpush1.msra.mxu0 %v5031
    %5033 = vmatprep.subr.mxu0 0.0
    %v5034 = vand.u32 %v1284, 4294901760
    %v5035 = vsub.f32 %v1284, %v5034
    %v5036 = vand.u32 %v5035, 4294901760
    %v5037 = vsub.f32 %v5035, %v5036
    %v5038 = vand.u32 %v5037, 4294901760
    %5039 = vmatpush1.msra.mxu0 %v5038
    %5040 = vmatprep.subr.mxu0 0.0
    %v5041 = vand.u32 %v1287, 4294901760
    %v5042 = vsub.f32 %v1287, %v5041
    %v5043 = vand.u32 %v5042, 4294901760
    %v5044 = vsub.f32 %v5042, %v5043
    %v5045 = vand.u32 %v5044, 4294901760
    %5046 = vmatpush1.msra.mxu0 %v5045
    %5047 = vmatprep.subr.mxu0 0.0
    %v5048 = vand.u32 %v1290, 4294901760
    %v5049 = vsub.f32 %v1290, %v5048
    %v5050 = vand.u32 %v5049, 4294901760
    %v5051 = vsub.f32 %v5049, %v5050
    %v5052 = vand.u32 %v5051, 4294901760
    %5053 = vmatpush1.msra.mxu0 %v5052
    %5054 = vmatprep.subr.mxu0 0.0
    %v5055 = vand.u32 %v1293, 4294901760
    %v5056 = vsub.f32 %v1293, %v5055
    %v5057 = vand.u32 %v5056, 4294901760
    %v5058 = vsub.f32 %v5056, %v5057
    %v5059 = vand.u32 %v5058, 4294901760
    %5060 = vmatpush1.msra.mxu0 %v5059
    %5061 = vmatprep.subr.mxu0 0.0
    %v5062 = vand.u32 %v1296, 4294901760
    %v5063 = vsub.f32 %v1296, %v5062
    %v5064 = vand.u32 %v5063, 4294901760
    %v5065 = vsub.f32 %v5063, %v5064
    %v5066 = vand.u32 %v5065, 4294901760
    %5067 = vmatpush1.msra.mxu0 %v5066
    %5068 = vmatprep.subr.mxu0 0.0
    %v5069 = vand.u32 %v1299, 4294901760
    %v5070 = vsub.f32 %v1299, %v5069
    %v5071 = vand.u32 %v5070, 4294901760
    %v5072 = vsub.f32 %v5070, %v5071
    %v5073 = vand.u32 %v5072, 4294901760
    %5074 = vmatpush1.msra.mxu0 %v5073
    %5075 = vmatprep.subr.mxu0 0.0
    %v5076 = vand.u32 %v1302, 4294901760
    %v5077 = vsub.f32 %v1302, %v5076
    %v5078 = vand.u32 %v5077, 4294901760
    %v5079 = vsub.f32 %v5077, %v5078
    %v5080 = vand.u32 %v5079, 4294901760
    %5081 = vmatpush1.msra.mxu0 %v5080
    %5082 = vmatprep.subr.mxu0 0.0
    %v5083 = vand.u32 %v1305, 4294901760
    %v5084 = vsub.f32 %v1305, %v5083
    %v5085 = vand.u32 %v5084, 4294901760
    %v5086 = vsub.f32 %v5084, %v5085
    %v5087 = vand.u32 %v5086, 4294901760
    %5088 = vmatpush1.msra.mxu0 %v5087
    %v5089 = vand.u32 %v1113, 4294901760
    %5090 = vmatprep.mubr.f32.mxu0 %v5089
    %v5091 = vand.u32 %v1112, 4294901760
    %5092 = vmatmul.mubr.f32.gmra.mrb[0].mxu0 %v5091
    %v5093 = vpop.f32.mrb[0].mxu0
    %v5094 = vadd.f32 %v4862, %v5093
    %v5095 = vpop.f32.mrb[0].mxu0
    %5096 = vdwg.mxu0
    %5097 = vmatprep.subr.mxu0 0.0
    %v5098 = vand.u32 %v1212, 4294901760
    %v5099 = vsub.f32 %v1212, %v5098
    %5100 = vmatpush1.msra.mxu0 %v5099
    %5101 = vmatprep.subr.mxu0 0.0
    %v5102 = vand.u32 %v1215, 4294901760
    %v5103 = vsub.f32 %v1215, %v5102
    %5104 = vmatpush1.msra.mxu0 %v5103
    %5105 = vmatprep.subr.mxu0 0.0
    %v5106 = vand.u32 %v1218, 4294901760
    %v5107 = vsub.f32 %v1218, %v5106
    %5108 = vmatpush1.msra.mxu0 %v5107
    %5109 = vmatprep.subr.mxu0 0.0
    %v5110 = vand.u32 %v1221, 4294901760
    %v5111 = vsub.f32 %v1221, %v5110
    %5112 = vmatpush1.msra.mxu0 %v5111
    %5113 = vmatprep.subr.mxu0 0.0
    %v5114 = vand.u32 %v1224, 4294901760
    %v5115 = vsub.f32 %v1224, %v5114
    %5116 = vmatpush1.msra.mxu0 %v5115
    %5117 = vmatprep.subr.mxu0 0.0
    %v5118 = vand.u32 %v1227, 4294901760
    %v5119 = vsub.f32 %v1227, %v5118
    %5120 = vmatpush1.msra.mxu0 %v5119
    %5121 = vmatprep.subr.mxu0 0.0
    %v5122 = vand.u32 %v1230, 4294901760
    %v5123 = vsub.f32 %v1230, %v5122
    %5124 = vmatpush1.msra.mxu0 %v5123
    %5125 = vmatprep.subr.mxu0 0.0
    %v5126 = vand.u32 %v1233, 4294901760
    %v5127 = vsub.f32 %v1233, %v5126
    %5128 = vmatpush1.msra.mxu0 %v5127
    %5129 = vmatprep.subr.mxu0 0.0
    %v5130 = vand.u32 %v1236, 4294901760
    %v5131 = vsub.f32 %v1236, %v5130
    %5132 = vmatpush1.msra.mxu0 %v5131
    %5133 = vmatprep.subr.mxu0 0.0
    %v5134 = vand.u32 %v1239, 4294901760
    %v5135 = vsub.f32 %v1239, %v5134
    %5136 = vmatpush1.msra.mxu0 %v5135
    %5137 = vmatprep.subr.mxu0 0.0
    %v5138 = vand.u32 %v1242, 4294901760
    %v5139 = vsub.f32 %v1242, %v5138
    %5140 = vmatpush1.msra.mxu0 %v5139
    %5141 = vmatprep.subr.mxu0 0.0
    %v5142 = vand.u32 %v1245, 4294901760
    %v5143 = vsub.f32 %v1245, %v5142
    %5144 = vmatpush1.msra.mxu0 %v5143
    %5145 = vmatprep.subr.mxu0 0.0
    %v5146 = vand.u32 %v1248, 4294901760
    %v5147 = vsub.f32 %v1248, %v5146
    %5148 = vmatpush1.msra.mxu0 %v5147
    %5149 = vmatprep.subr.mxu0 0.0
    %v5150 = vand.u32 %v1251, 4294901760
    %v5151 = vsub.f32 %v1251, %v5150
    %5152 = vmatpush1.msra.mxu0 %v5151
    %5153 = vmatprep.subr.mxu0 0.0
    %v5154 = vand.u32 %v1254, 4294901760
    %v5155 = vsub.f32 %v1254, %v5154
    %5156 = vmatpush1.msra.mxu0 %v5155
    %5157 = vmatprep.subr.mxu0 0.0
    %v5158 = vand.u32 %v1257, 4294901760
    %v5159 = vsub.f32 %v1257, %v5158
    %5160 = vmatpush1.msra.mxu0 %v5159
    %5161 = vmatprep.subr.mxu0 0.0
    %v5162 = vand.u32 %v1260, 4294901760
    %v5163 = vsub.f32 %v1260, %v5162
    %5164 = vmatpush1.msra.mxu0 %v5163
    %5165 = vmatprep.subr.mxu0 0.0
    %v5166 = vand.u32 %v1263, 4294901760
    %v5167 = vsub.f32 %v1263, %v5166
    %5168 = vmatpush1.msra.mxu0 %v5167
    %5169 = vmatprep.subr.mxu0 0.0
    %v5170 = vand.u32 %v1266, 4294901760
    %v5171 = vsub.f32 %v1266, %v5170
    %5172 = vmatpush1.msra.mxu0 %v5171
    %5173 = vmatprep.subr.mxu0 0.0
    %v5174 = vand.u32 %v1269, 4294901760
    %v5175 = vsub.f32 %v1269, %v5174
    %5176 = vmatpush1.msra.mxu0 %v5175
    %5177 = vmatprep.subr.mxu0 0.0
    %v5178 = vand.u32 %v1272, 4294901760
    %v5179 = vsub.f32 %v1272, %v5178
    %5180 = vmatpush1.msra.mxu0 %v5179
    %5181 = vmatprep.subr.mxu0 0.0
    %v5182 = vand.u32 %v1275, 4294901760
    %v5183 = vsub.f32 %v1275, %v5182
    %5184 = vmatpush1.msra.mxu0 %v5183
    %5185 = vmatprep.subr.mxu0 0.0
    %v5186 = vand.u32 %v1278, 4294901760
    %v5187 = vsub.f32 %v1278, %v5186
    %5188 = vmatpush1.msra.mxu0 %v5187
    %5189 = vmatprep.subr.mxu0 0.0
    %v5190 = vand.u32 %v1281, 4294901760
    %v5191 = vsub.f32 %v1281, %v5190
    %5192 = vmatpush1.msra.mxu0 %v5191
    %5193 = vmatprep.subr.mxu0 0.0
    %v5194 = vand.u32 %v1284, 4294901760
    %v5195 = vsub.f32 %v1284, %v5194
    %5196 = vmatpush1.msra.mxu0 %v5195
    %5197 = vmatprep.subr.mxu0 0.0
    %v5198 = vand.u32 %v1287, 4294901760
    %v5199 = vsub.f32 %v1287, %v5198
    %5200 = vmatpush1.msra.mxu0 %v5199
    %5201 = vmatprep.subr.mxu0 0.0
    %v5202 = vand.u32 %v1290, 4294901760
    %v5203 = vsub.f32 %v1290, %v5202
    %5204 = vmatpush1.msra.mxu0 %v5203
    %5205 = vmatprep.subr.mxu0 0.0
    %v5206 = vand.u32 %v1293, 4294901760
    %v5207 = vsub.f32 %v1293, %v5206
    %5208 = vmatpush1.msra.mxu0 %v5207
    %5209 = vmatprep.subr.mxu0 0.0
    %v5210 = vand.u32 %v1296, 4294901760
    %v5211 = vsub.f32 %v1296, %v5210
    %5212 = vmatpush1.msra.mxu0 %v5211
    %5213 = vmatprep.subr.mxu0 0.0
    %v5214 = vand.u32 %v1299, 4294901760
    %v5215 = vsub.f32 %v1299, %v5214
    %5216 = vmatpush1.msra.mxu0 %v5215
    %5217 = vmatprep.subr.mxu0 0.0
    %v5218 = vand.u32 %v1302, 4294901760
    %v5219 = vsub.f32 %v1302, %v5218
    %5220 = vmatpush1.msra.mxu0 %v5219
    %5221 = vmatprep.subr.mxu0 0.0
    %v5222 = vand.u32 %v1305, 4294901760
    %v5223 = vsub.f32 %v1305, %v5222
    %5224 = vmatpush1.msra.mxu0 %v5223
    %v5225 = vand.u32 %v1113, 4294901760
    %v5226 = vsub.f32 %v1113, %v5225
    %5227 = vmatprep.mubr.f32.mxu0 %v5226
    %v5228 = vand.u32 %v1112, 4294901760
    %v5229 = vsub.f32 %v1112, %v5228
    %5230 = vmatmul.mubr.f32.gmra.mrb[0].mxu0 %v5229
    %v5231 = vpop.f32.mrb[0].mxu0
    %v5232 = vadd.f32 %v5094, %v5231
    %v5233 = vpop.f32.mrb[0].mxu0
    %5234 = vdwg.mxu0
    %5235 = vmatprep.subr.mxu0 0.0
    %v5236 = vand.u32 %v1212, 4294901760
    %5237 = vmatpush1.msra.mxu0 %v5236
    %5238 = vmatprep.subr.mxu0 0.0
    %v5239 = vand.u32 %v1215, 4294901760
    %5240 = vmatpush1.msra.mxu0 %v5239
    %5241 = vmatprep.subr.mxu0 0.0
    %v5242 = vand.u32 %v1218, 4294901760
    %5243 = vmatpush1.msra.mxu0 %v5242
    %5244 = vmatprep.subr.mxu0 0.0
    %v5245 = vand.u32 %v1221, 4294901760
    %5246 = vmatpush1.msra.mxu0 %v5245
    %5247 = vmatprep.subr.mxu0 0.0
    %v5248 = vand.u32 %v1224, 4294901760
    %5249 = vmatpush1.msra.mxu0 %v5248
    %5250 = vmatprep.subr.mxu0 0.0
    %v5251 = vand.u32 %v1227, 4294901760
    %5252 = vmatpush1.msra.mxu0 %v5251
    %5253 = vmatprep.subr.mxu0 0.0
    %v5254 = vand.u32 %v1230, 4294901760
    %5255 = vmatpush1.msra.mxu0 %v5254
    %5256 = vmatprep.subr.mxu0 0.0
    %v5257 = vand.u32 %v1233, 4294901760
    %5258 = vmatpush1.msra.mxu0 %v5257
    %5259 = vmatprep.subr.mxu0 0.0
    %v5260 = vand.u32 %v1236, 4294901760
    %5261 = vmatpush1.msra.mxu0 %v5260
    %5262 = vmatprep.subr.mxu0 0.0
    %v5263 = vand.u32 %v1239, 4294901760
    %5264 = vmatpush1.msra.mxu0 %v5263
    %5265 = vmatprep.subr.mxu0 0.0
    %v5266 = vand.u32 %v1242, 4294901760
    %5267 = vmatpush1.msra.mxu0 %v5266
    %5268 = vmatprep.subr.mxu0 0.0
    %v5269 = vand.u32 %v1245, 4294901760
    %5270 = vmatpush1.msra.mxu0 %v5269
    %5271 = vmatprep.subr.mxu0 0.0
    %v5272 = vand.u32 %v1248, 4294901760
    %5273 = vmatpush1.msra.mxu0 %v5272
    %5274 = vmatprep.subr.mxu0 0.0
    %v5275 = vand.u32 %v1251, 4294901760
    %5276 = vmatpush1.msra.mxu0 %v5275
    %5277 = vmatprep.subr.mxu0 0.0
    %v5278 = vand.u32 %v1254, 4294901760
    %5279 = vmatpush1.msra.mxu0 %v5278
    %5280 = vmatprep.subr.mxu0 0.0
    %v5281 = vand.u32 %v1257, 4294901760
    %5282 = vmatpush1.msra.mxu0 %v5281
    %5283 = vmatprep.subr.mxu0 0.0
    %v5284 = vand.u32 %v1260, 4294901760
    %5285 = vmatpush1.msra.mxu0 %v5284
    %5286 = vmatprep.subr.mxu0 0.0
    %v5287 = vand.u32 %v1263, 4294901760
    %5288 = vmatpush1.msra.mxu0 %v5287
    %5289 = vmatprep.subr.mxu0 0.0
    %v5290 = vand.u32 %v1266, 4294901760
    %5291 = vmatpush1.msra.mxu0 %v5290
    %5292 = vmatprep.subr.mxu0 0.0
    %v5293 = vand.u32 %v1269, 4294901760
    %5294 = vmatpush1.msra.mxu0 %v5293
    %5295 = vmatprep.subr.mxu0 0.0
    %v5296 = vand.u32 %v1272, 4294901760
    %5297 = vmatpush1.msra.mxu0 %v5296
    %5298 = vmatprep.subr.mxu0 0.0
    %v5299 = vand.u32 %v1275, 4294901760
    %5300 = vmatpush1.msra.mxu0 %v5299
    %5301 = vmatprep.subr.mxu0 0.0
    %v5302 = vand.u32 %v1278, 4294901760
    %5303 = vmatpush1.msra.mxu0 %v5302
    %5304 = vmatprep.subr.mxu0 0.0
    %v5305 = vand.u32 %v1281, 4294901760
    %5306 = vmatpush1.msra.mxu0 %v5305
    %5307 = vmatprep.subr.mxu0 0.0
    %v5308 = vand.u32 %v1284, 4294901760
    %5309 = vmatpush1.msra.mxu0 %v5308
    %5310 = vmatprep.subr.mxu0 0.0
    %v5311 = vand.u32 %v1287, 4294901760
    %5312 = vmatpush1.msra.mxu0 %v5311
    %5313 = vmatprep.subr.mxu0 0.0
    %v5314 = vand.u32 %v1290, 4294901760
    %5315 = vmatpush1.msra.mxu0 %v5314
    %5316 = vmatprep.subr.mxu0 0.0
    %v5317 = vand.u32 %v1293, 4294901760
    %5318 = vmatpush1.msra.mxu0 %v5317
    %5319 = vmatprep.subr.mxu0 0.0
    %v5320 = vand.u32 %v1296, 4294901760
    %5321 = vmatpush1.msra.mxu0 %v5320
    %5322 = vmatprep.subr.mxu0 0.0
    %v5323 = vand.u32 %v1299, 4294901760
    %5324 = vmatpush1.msra.mxu0 %v5323
    %5325 = vmatprep.subr.mxu0 0.0
    %v5326 = vand.u32 %v1302, 4294901760
    %5327 = vmatpush1.msra.mxu0 %v5326
    %5328 = vmatprep.subr.mxu0 0.0
    %v5329 = vand.u32 %v1305, 4294901760
    %5330 = vmatpush1.msra.mxu0 %v5329
    %v5331 = vand.u32 %v1113, 4294901760
    %v5332 = vsub.f32 %v1113, %v5331
    %v5333 = vand.u32 %v5332, 4294901760
    %5334 = vmatprep.mubr.f32.mxu0 %v5333
    %v5335 = vand.u32 %v1112, 4294901760
    %v5336 = vsub.f32 %v1112, %v5335
    %v5337 = vand.u32 %v5336, 4294901760
    %5338 = vmatmul.mubr.f32.gmra.mrb[0].mxu0 %v5337
    %v5339 = vpop.f32.mrb[0].mxu0
    %v5340 = vadd.f32 %v5232, %v5339
    %v5341 = vpop.f32.mrb[0].mxu0
    %5342 = vdwg.mxu0
    %5343 = vmatprep.subr.mxu0 0.0
    %v5344 = vand.u32 %v1212, 4294901760
    %v5345 = vsub.f32 %v1212, %v5344
    %v5346 = vand.u32 %v5345, 4294901760
    %5347 = vmatpush1.msra.mxu0 %v5346
    %5348 = vmatprep.subr.mxu0 0.0
    %v5349 = vand.u32 %v1215, 4294901760
    %v5350 = vsub.f32 %v1215, %v5349
    %v5351 = vand.u32 %v5350, 4294901760
    %5352 = vmatpush1.msra.mxu0 %v5351
    %5353 = vmatprep.subr.mxu0 0.0
    %v5354 = vand.u32 %v1218, 4294901760
    %v5355 = vsub.f32 %v1218, %v5354
    %v5356 = vand.u32 %v5355, 4294901760
    %5357 = vmatpush1.msra.mxu0 %v5356
    %5358 = vmatprep.subr.mxu0 0.0
    %v5359 = vand.u32 %v1221, 4294901760
    %v5360 = vsub.f32 %v1221, %v5359
    %v5361 = vand.u32 %v5360, 4294901760
    %5362 = vmatpush1.msra.mxu0 %v5361
    %5363 = vmatprep.subr.mxu0 0.0
    %v5364 = vand.u32 %v1224, 4294901760
    %v5365 = vsub.f32 %v1224, %v5364
    %v5366 = vand.u32 %v5365, 4294901760
    %5367 = vmatpush1.msra.mxu0 %v5366
    %5368 = vmatprep.subr.mxu0 0.0
    %v5369 = vand.u32 %v1227, 4294901760
    %v5370 = vsub.f32 %v1227, %v5369
    %v5371 = vand.u32 %v5370, 4294901760
    %5372 = vmatpush1.msra.mxu0 %v5371
    %5373 = vmatprep.subr.mxu0 0.0
    %v5374 = vand.u32 %v1230, 4294901760
    %v5375 = vsub.f32 %v1230, %v5374
    %v5376 = vand.u32 %v5375, 4294901760
    %5377 = vmatpush1.msra.mxu0 %v5376
    %5378 = vmatprep.subr.mxu0 0.0
    %v5379 = vand.u32 %v1233, 4294901760
    %v5380 = vsub.f32 %v1233, %v5379
    %v5381 = vand.u32 %v5380, 4294901760
    %5382 = vmatpush1.msra.mxu0 %v5381
    %5383 = vmatprep.subr.mxu0 0.0
    %v5384 = vand.u32 %v1236, 4294901760
    %v5385 = vsub.f32 %v1236, %v5384
    %v5386 = vand.u32 %v5385, 4294901760
    %5387 = vmatpush1.msra.mxu0 %v5386
    %5388 = vmatprep.subr.mxu0 0.0
    %v5389 = vand.u32 %v1239, 4294901760
    %v5390 = vsub.f32 %v1239, %v5389
    %v5391 = vand.u32 %v5390, 4294901760
    %5392 = vmatpush1.msra.mxu0 %v5391
    %5393 = vmatprep.subr.mxu0 0.0
    %v5394 = vand.u32 %v1242, 4294901760
    %v5395 = vsub.f32 %v1242, %v5394
    %v5396 = vand.u32 %v5395, 4294901760
    %5397 = vmatpush1.msra.mxu0 %v5396
    %5398 = vmatprep.subr.mxu0 0.0
    %v5399 = vand.u32 %v1245, 4294901760
    %v5400 = vsub.f32 %v1245, %v5399
    %v5401 = vand.u32 %v5400, 4294901760
    %5402 = vmatpush1.msra.mxu0 %v5401
    %5403 = vmatprep.subr.mxu0 0.0
    %v5404 = vand.u32 %v1248, 4294901760
    %v5405 = vsub.f32 %v1248, %v5404
    %v5406 = vand.u32 %v5405, 4294901760
    %5407 = vmatpush1.msra.mxu0 %v5406
    %5408 = vmatprep.subr.mxu0 0.0
    %v5409 = vand.u32 %v1251, 4294901760
    %v5410 = vsub.f32 %v1251, %v5409
    %v5411 = vand.u32 %v5410, 4294901760
    %5412 = vmatpush1.msra.mxu0 %v5411
    %5413 = vmatprep.subr.mxu0 0.0
    %v5414 = vand.u32 %v1254, 4294901760
    %v5415 = vsub.f32 %v1254, %v5414
    %v5416 = vand.u32 %v5415, 4294901760
    %5417 = vmatpush1.msra.mxu0 %v5416
    %5418 = vmatprep.subr.mxu0 0.0
    %v5419 = vand.u32 %v1257, 4294901760
    %v5420 = vsub.f32 %v1257, %v5419
    %v5421 = vand.u32 %v5420, 4294901760
    %5422 = vmatpush1.msra.mxu0 %v5421
    %5423 = vmatprep.subr.mxu0 0.0
    %v5424 = vand.u32 %v1260, 4294901760
    %v5425 = vsub.f32 %v1260, %v5424
    %v5426 = vand.u32 %v5425, 4294901760
    %5427 = vmatpush1.msra.mxu0 %v5426
    %5428 = vmatprep.subr.mxu0 0.0
    %v5429 = vand.u32 %v1263, 4294901760
    %v5430 = vsub.f32 %v1263, %v5429
    %v5431 = vand.u32 %v5430, 4294901760
    %5432 = vmatpush1.msra.mxu0 %v5431
    %5433 = vmatprep.subr.mxu0 0.0
    %v5434 = vand.u32 %v1266, 4294901760
    %v5435 = vsub.f32 %v1266, %v5434
    %v5436 = vand.u32 %v5435, 4294901760
    %5437 = vmatpush1.msra.mxu0 %v5436
    %5438 = vmatprep.subr.mxu0 0.0
    %v5439 = vand.u32 %v1269, 4294901760
    %v5440 = vsub.f32 %v1269, %v5439
    %v5441 = vand.u32 %v5440, 4294901760
    %5442 = vmatpush1.msra.mxu0 %v5441
    %5443 = vmatprep.subr.mxu0 0.0
    %v5444 = vand.u32 %v1272, 4294901760
    %v5445 = vsub.f32 %v1272, %v5444
    %v5446 = vand.u32 %v5445, 4294901760
    %5447 = vmatpush1.msra.mxu0 %v5446
    %5448 = vmatprep.subr.mxu0 0.0
    %v5449 = vand.u32 %v1275, 4294901760
    %v5450 = vsub.f32 %v1275, %v5449
    %v5451 = vand.u32 %v5450, 4294901760
    %5452 = vmatpush1.msra.mxu0 %v5451
    %5453 = vmatprep.subr.mxu0 0.0
    %v5454 = vand.u32 %v1278, 4294901760
    %v5455 = vsub.f32 %v1278, %v5454
    %v5456 = vand.u32 %v5455, 4294901760
    %5457 = vmatpush1.msra.mxu0 %v5456
    %5458 = vmatprep.subr.mxu0 0.0
    %v5459 = vand.u32 %v1281, 4294901760
    %v5460 = vsub.f32 %v1281, %v5459
    %v5461 = vand.u32 %v5460, 4294901760
    %5462 = vmatpush1.msra.mxu0 %v5461
    %5463 = vmatprep.subr.mxu0 0.0
    %v5464 = vand.u32 %v1284, 4294901760
    %v5465 = vsub.f32 %v1284, %v5464
    %v5466 = vand.u32 %v5465, 4294901760
    %5467 = vmatpush1.msra.mxu0 %v5466
    %5468 = vmatprep.subr.mxu0 0.0
    %v5469 = vand.u32 %v1287, 4294901760
    %v5470 = vsub.f32 %v1287, %v5469
    %v5471 = vand.u32 %v5470, 4294901760
    %5472 = vmatpush1.msra.mxu0 %v5471
    %5473 = vmatprep.subr.mxu0 0.0
    %v5474 = vand.u32 %v1290, 4294901760
    %v5475 = vsub.f32 %v1290, %v5474
    %v5476 = vand.u32 %v5475, 4294901760
    %5477 = vmatpush1.msra.mxu0 %v5476
    %5478 = vmatprep.subr.mxu0 0.0
    %v5479 = vand.u32 %v1293, 4294901760
    %v5480 = vsub.f32 %v1293, %v5479
    %v5481 = vand.u32 %v5480, 4294901760
    %5482 = vmatpush1.msra.mxu0 %v5481
    %5483 = vmatprep.subr.mxu0 0.0
    %v5484 = vand.u32 %v1296, 4294901760
    %v5485 = vsub.f32 %v1296, %v5484
    %v5486 = vand.u32 %v5485, 4294901760
    %5487 = vmatpush1.msra.mxu0 %v5486
    %5488 = vmatprep.subr.mxu0 0.0
    %v5489 = vand.u32 %v1299, 4294901760
    %v5490 = vsub.f32 %v1299, %v5489
    %v5491 = vand.u32 %v5490, 4294901760
    %5492 = vmatpush1.msra.mxu0 %v5491
    %5493 = vmatprep.subr.mxu0 0.0
    %v5494 = vand.u32 %v1302, 4294901760
    %v5495 = vsub.f32 %v1302, %v5494
    %v5496 = vand.u32 %v5495, 4294901760
    %5497 = vmatpush1.msra.mxu0 %v5496
    %5498 = vmatprep.subr.mxu0 0.0
    %v5499 = vand.u32 %v1305, 4294901760
    %v5500 = vsub.f32 %v1305, %v5499
    %v5501 = vand.u32 %v5500, 4294901760
    %5502 = vmatpush1.msra.mxu0 %v5501
    %v5503 = vand.u32 %v1113, 4294901760
    %5504 = vmatprep.mubr.f32.mxu0 %v5503
    %v5505 = vand.u32 %v1112, 4294901760
    %5506 = vmatmul.mubr.f32.gmra.mrb[0].mxu0 %v5505
    %v5507 = vpop.f32.mrb[0].mxu0
    %v5508 = vadd.f32 %v5340, %v5507
    %v5509 = vpop.f32.mrb[0].mxu0
    %5510 = vdwg.mxu0
    %5511 = vmatprep.subr.mxu0 0.0
    %v5512 = vand.u32 %v1212, 4294901760
    %5513 = vmatpush1.msra.mxu0 %v5512
    %5514 = vmatprep.subr.mxu0 0.0
    %v5515 = vand.u32 %v1215, 4294901760
    %5516 = vmatpush1.msra.mxu0 %v5515
    %5517 = vmatprep.subr.mxu0 0.0
    %v5518 = vand.u32 %v1218, 4294901760
    %5519 = vmatpush1.msra.mxu0 %v5518
    %5520 = vmatprep.subr.mxu0 0.0
    %v5521 = vand.u32 %v1221, 4294901760
    %5522 = vmatpush1.msra.mxu0 %v5521
    %5523 = vmatprep.subr.mxu0 0.0
    %v5524 = vand.u32 %v1224, 4294901760
    %5525 = vmatpush1.msra.mxu0 %v5524
    %5526 = vmatprep.subr.mxu0 0.0
    %v5527 = vand.u32 %v1227, 4294901760
    %5528 = vmatpush1.msra.mxu0 %v5527
    %5529 = vmatprep.subr.mxu0 0.0
    %v5530 = vand.u32 %v1230, 4294901760
    %5531 = vmatpush1.msra.mxu0 %v5530
    %5532 = vmatprep.subr.mxu0 0.0
    %v5533 = vand.u32 %v1233, 4294901760
    %5534 = vmatpush1.msra.mxu0 %v5533
    %5535 = vmatprep.subr.mxu0 0.0
    %v5536 = vand.u32 %v1236, 4294901760
    %5537 = vmatpush1.msra.mxu0 %v5536
    %5538 = vmatprep.subr.mxu0 0.0
    %v5539 = vand.u32 %v1239, 4294901760
    %5540 = vmatpush1.msra.mxu0 %v5539
    %5541 = vmatprep.subr.mxu0 0.0
    %v5542 = vand.u32 %v1242, 4294901760
    %5543 = vmatpush1.msra.mxu0 %v5542
    %5544 = vmatprep.subr.mxu0 0.0
    %v5545 = vand.u32 %v1245, 4294901760
    %5546 = vmatpush1.msra.mxu0 %v5545
    %5547 = vmatprep.subr.mxu0 0.0
    %v5548 = vand.u32 %v1248, 4294901760
    %5549 = vmatpush1.msra.mxu0 %v5548
    %5550 = vmatprep.subr.mxu0 0.0
    %v5551 = vand.u32 %v1251, 4294901760
    %5552 = vmatpush1.msra.mxu0 %v5551
    %5553 = vmatprep.subr.mxu0 0.0
    %v5554 = vand.u32 %v1254, 4294901760
    %5555 = vmatpush1.msra.mxu0 %v5554
    %5556 = vmatprep.subr.mxu0 0.0
    %v5557 = vand.u32 %v1257, 4294901760
    %5558 = vmatpush1.msra.mxu0 %v5557
    %5559 = vmatprep.subr.mxu0 0.0
    %v5560 = vand.u32 %v1260, 4294901760
    %5561 = vmatpush1.msra.mxu0 %v5560
    %5562 = vmatprep.subr.mxu0 0.0
    %v5563 = vand.u32 %v1263, 4294901760
    %5564 = vmatpush1.msra.mxu0 %v5563
    %5565 = vmatprep.subr.mxu0 0.0
    %v5566 = vand.u32 %v1266, 4294901760
    %5567 = vmatpush1.msra.mxu0 %v5566
    %5568 = vmatprep.subr.mxu0 0.0
    %v5569 = vand.u32 %v1269, 4294901760
    %5570 = vmatpush1.msra.mxu0 %v5569
    %5571 = vmatprep.subr.mxu0 0.0
    %v5572 = vand.u32 %v1272, 4294901760
    %5573 = vmatpush1.msra.mxu0 %v5572
    %5574 = vmatprep.subr.mxu0 0.0
    %v5575 = vand.u32 %v1275, 4294901760
    %5576 = vmatpush1.msra.mxu0 %v5575
    %5577 = vmatprep.subr.mxu0 0.0
    %v5578 = vand.u32 %v1278, 4294901760
    %5579 = vmatpush1.msra.mxu0 %v5578
    %5580 = vmatprep.subr.mxu0 0.0
    %v5581 = vand.u32 %v1281, 4294901760
    %5582 = vmatpush1.msra.mxu0 %v5581
    %5583 = vmatprep.subr.mxu0 0.0
    %v5584 = vand.u32 %v1284, 4294901760
    %5585 = vmatpush1.msra.mxu0 %v5584
    %5586 = vmatprep.subr.mxu0 0.0
    %v5587 = vand.u32 %v1287, 4294901760
    %5588 = vmatpush1.msra.mxu0 %v5587
    %5589 = vmatprep.subr.mxu0 0.0
    %v5590 = vand.u32 %v1290, 4294901760
    %5591 = vmatpush1.msra.mxu0 %v5590
    %5592 = vmatprep.subr.mxu0 0.0
    %v5593 = vand.u32 %v1293, 4294901760
    %5594 = vmatpush1.msra.mxu0 %v5593
    %5595 = vmatprep.subr.mxu0 0.0
    %v5596 = vand.u32 %v1296, 4294901760
    %5597 = vmatpush1.msra.mxu0 %v5596
    %5598 = vmatprep.subr.mxu0 0.0
    %v5599 = vand.u32 %v1299, 4294901760
    %5600 = vmatpush1.msra.mxu0 %v5599
    %5601 = vmatprep.subr.mxu0 0.0
    %v5602 = vand.u32 %v1302, 4294901760
    %5603 = vmatpush1.msra.mxu0 %v5602
    %5604 = vmatprep.subr.mxu0 0.0
    %v5605 = vand.u32 %v1305, 4294901760
    %5606 = vmatpush1.msra.mxu0 %v5605
    %v5607 = vand.u32 %v1113, 4294901760
    %5608 = vmatprep.mubr.f32.mxu0 %v5607
    %v5609 = vand.u32 %v1112, 4294901760
    %5610 = vmatmul.mubr.f32.gmra.mrb[0].mxu0 %v5609
    %v5611 = vpop.f32.mrb[0].mxu0
    %v5612 = vadd.f32 %v5508, %v5611
    %v5613 = vpop.f32.mrb[0].mxu0
    %5614 = vdwg.mxu0
    %v5615 = vmax.f32 %v3887, 0.0
    %v5616 = vmax.f32 %v3889, 0.0
    %v5617 = vmax.f32 %v5612, 0.0
    %v5618 = vld [vmem:[#allocation8] sm:$0xff]
    %v5619 = vld [vmem:[#allocation8 + $0x8] sm:$0xff]
    %v5620 = vld [vmem:[#allocation8 + $0x10] sm:$0xff]
    %v5621 = vld [vmem:[#allocation8 + $0x18] sm:$0xff]
    %v5622 = vld [vmem:[#allocation8 + $0x20] sm:$0xff]
    %v5623 = vld [vmem:[#allocation8 + $0x28] sm:$0xff]
    %v5624 = vld [vmem:[#allocation8 + $0x30] sm:$0xff]
    %v5625 = vld [vmem:[#allocation8 + $0x38] sm:$0xff]
    %v5626 = vld [vmem:[#allocation8 + $0x40] sm:$0xff]
    %v5627 = vld [vmem:[#allocation8 + $0x48] sm:$0xff]
    %v5628 = vld [vmem:[#allocation8 + $0x50] sm:$0xff]
    %v5629 = vld [vmem:[#allocation8 + $0x58] sm:$0xff]
    %v5630 = vld [vmem:[#allocation8 + $0x60] sm:$0xff]
    %v5631 = vld [vmem:[#allocation8 + $0x68] sm:$0xff]
    %v5632 = vld [vmem:[#allocation8 + $0x70] sm:$0xff]
    %v5633 = vld [vmem:[#allocation8 + $0x78] sm:$0xff]
    %v5634 = vld [vmem:[#allocation8 + $0x80] sm:$0xff]
    %v5635 = vld [vmem:[#allocation8 + $0x88] sm:$0xff]
    %v5636 = vld [vmem:[#allocation8 + $0x90] sm:$0xff]
    %v5637 = vld [vmem:[#allocation8 + $0x98] sm:$0xff]
    %v5638 = vld [vmem:[#allocation8 + $0xa0] sm:$0xff]
    %v5639 = vld [vmem:[#allocation8 + $0xa8] sm:$0xff]
    %v5640 = vld [vmem:[#allocation8 + $0xb0] sm:$0xff]
    %v5641 = vld [vmem:[#allocation8 + $0xb8] sm:$0xff]
    %v5642 = vld [vmem:[#allocation8 + $0xc0] sm:$0xff]
    %v5643 = vld [vmem:[#allocation8 + $0xc8] sm:$0xff]
    %v5644 = vld [vmem:[#allocation8 + $0xd0] sm:$0xff]
    %v5645 = vld [vmem:[#allocation8 + $0xd8] sm:$0xff]
    %v5646 = vld [vmem:[#allocation8 + $0xe0] sm:$0xff]
    %v5647 = vld [vmem:[#allocation8 + $0xe8] sm:$0xff]
    %v5648 = vld [vmem:[#allocation8 + $0xf0] sm:$0xff]
    %v5649 = vld [vmem:[#allocation8 + $0xf8] sm:$0xff]
    %v5650 = vld [vmem:[#allocation8 + $0x100] sm:$0xff]
    %v5651 = vld [vmem:[#allocation8 + $0x108] sm:$0xff]
    %v5652 = vld [vmem:[#allocation8 + $0x110] sm:$0xff]
    %v5653 = vld [vmem:[#allocation8 + $0x118] sm:$0xff]
    %v5654 = vld [vmem:[#allocation8 + $0x120] sm:$0xff]
    %v5655 = vld [vmem:[#allocation8 + $0x128] sm:$0xff]
    %v5656 = vld [vmem:[#allocation8 + $0x130] sm:$0xff]
    %v5657 = vld [vmem:[#allocation8 + $0x138] sm:$0xff]
    %v5658 = vld [vmem:[#allocation8 + $0x140] sm:$0xff]
    %v5659 = vld [vmem:[#allocation8 + $0x148] sm:$0xff]
    %v5660 = vld [vmem:[#allocation8 + $0x150] sm:$0xff]
    %v5661 = vld [vmem:[#allocation8 + $0x158] sm:$0xff]
    %v5662 = vld [vmem:[#allocation8 + $0x160] sm:$0xff]
    %v5663 = vld [vmem:[#allocation8 + $0x168] sm:$0xff]
    %v5664 = vld [vmem:[#allocation8 + $0x170] sm:$0xff]
    %v5665 = vld [vmem:[#allocation8 + $0x178] sm:$0xff]
    %v5666 = vld [vmem:[%s6] sm:$0x1]
    %v5668 = vlaneseq
    %v5669 = vshrl.u32 %v5668, 7
    %v5670 = vsub.s32 0, %v5669
    %v5671 = vrot.slane %v5666, %v5670
    %5673 = vmatprep.subr.mxu0 0.0
    %v5674 = vand.u32 %v5618, 4294901760
    %5675 = vmatpush1.msra.mxu0 %v5674
    %5676 = vmatprep.subr.mxu0 0.0
    %v5677 = vand.u32 %v5619, 4294901760
    %5678 = vmatpush1.msra.mxu0 %v5677
    %5679 = vmatprep.subr.mxu0 0.0
    %v5680 = vand.u32 %v5620, 4294901760
    %5681 = vmatpush1.msra.mxu0 %v5680
    %5682 = vmatprep.subr.mxu0 0.0
    %v5683 = vand.u32 %v5621, 4294901760
    %5684 = vmatpush1.msra.mxu0 %v5683
    %5685 = vmatprep.subr.mxu0 0.0
    %v5686 = vand.u32 %v5622, 4294901760
    %5687 = vmatpush1.msra.mxu0 %v5686
    %5688 = vmatprep.subr.mxu0 0.0
    %v5689 = vand.u32 %v5623, 4294901760
    %5690 = vmatpush1.msra.mxu0 %v5689
    %5691 = vmatprep.subr.mxu0 0.0
    %v5692 = vand.u32 %v5624, 4294901760
    %5693 = vmatpush1.msra.mxu0 %v5692
    %5694 = vmatprep.subr.mxu0 0.0
    %v5695 = vand.u32 %v5625, 4294901760
    %5696 = vmatpush1.msra.mxu0 %v5695
    %5697 = vmatprep.subr.mxu0 0.0
    %v5698 = vand.u32 %v5626, 4294901760
    %5699 = vmatpush1.msra.mxu0 %v5698
    %5700 = vmatprep.subr.mxu0 0.0
    %v5701 = vand.u32 %v5627, 4294901760
    %5702 = vmatpush1.msra.mxu0 %v5701
    %5703 = vmatprep.subr.mxu0 0.0
    %v5704 = vand.u32 %v5628, 4294901760
    %5705 = vmatpush1.msra.mxu0 %v5704
    %5706 = vmatprep.subr.mxu0 0.0
    %v5707 = vand.u32 %v5629, 4294901760
    %5708 = vmatpush1.msra.mxu0 %v5707
    %5709 = vmatprep.subr.mxu0 0.0
    %v5710 = vand.u32 %v5630, 4294901760
    %5711 = vmatpush1.msra.mxu0 %v5710
    %5712 = vmatprep.subr.mxu0 0.0
    %v5713 = vand.u32 %v5631, 4294901760
    %5714 = vmatpush1.msra.mxu0 %v5713
    %5715 = vmatprep.subr.mxu0 0.0
    %v5716 = vand.u32 %v5632, 4294901760
    %5717 = vmatpush1.msra.mxu0 %v5716
    %5718 = vmatprep.subr.mxu0 0.0
    %v5719 = vand.u32 %v5633, 4294901760
    %5720 = vmatpush1.msra.mxu0 %v5719
    %5721 = vmatprep.subr.mxu0 0.0
    %v5722 = vand.u32 %v5634, 4294901760
    %5723 = vmatpush1.msra.mxu0 %v5722
    %5724 = vmatprep.subr.mxu0 0.0
    %v5725 = vand.u32 %v5635, 4294901760
    %5726 = vmatpush1.msra.mxu0 %v5725
    %5727 = vmatprep.subr.mxu0 0.0
    %v5728 = vand.u32 %v5636, 4294901760
    %5729 = vmatpush1.msra.mxu0 %v5728
    %5730 = vmatprep.subr.mxu0 0.0
    %v5731 = vand.u32 %v5637, 4294901760
    %5732 = vmatpush1.msra.mxu0 %v5731
    %5733 = vmatprep.subr.mxu0 0.0
    %v5734 = vand.u32 %v5638, 4294901760
    %5735 = vmatpush1.msra.mxu0 %v5734
    %5736 = vmatprep.subr.mxu0 0.0
    %v5737 = vand.u32 %v5639, 4294901760
    %5738 = vmatpush1.msra.mxu0 %v5737
    %5739 = vmatprep.subr.mxu0 0.0
    %v5740 = vand.u32 %v5640, 4294901760
    %5741 = vmatpush1.msra.mxu0 %v5740
    %5742 = vmatprep.subr.mxu0 0.0
    %v5743 = vand.u32 %v5641, 4294901760
    %5744 = vmatpush1.msra.mxu0 %v5743
    %5745 = vmatprep.subr.mxu0 0.0
    %v5746 = vand.u32 %v5642, 4294901760
    %5747 = vmatpush1.msra.mxu0 %v5746
    %5748 = vmatprep.subr.mxu0 0.0
    %v5749 = vand.u32 %v5643, 4294901760
    %5750 = vmatpush1.msra.mxu0 %v5749
    %5751 = vmatprep.subr.mxu0 0.0
    %v5752 = vand.u32 %v5644, 4294901760
    %5753 = vmatpush1.msra.mxu0 %v5752
    %5754 = vmatprep.subr.mxu0 0.0
    %v5755 = vand.u32 %v5645, 4294901760
    %5756 = vmatpush1.msra.mxu0 %v5755
    %5757 = vmatprep.subr.mxu0 0.0
    %v5758 = vand.u32 %v5646, 4294901760
    %5759 = vmatpush1.msra.mxu0 %v5758
    %5760 = vmatprep.subr.mxu0 0.0
    %v5761 = vand.u32 %v5647, 4294901760
    %5762 = vmatpush1.msra.mxu0 %v5761
    %5763 = vmatprep.subr.mxu0 0.0
    %v5764 = vand.u32 %v5648, 4294901760
    %5765 = vmatpush1.msra.mxu0 %v5764
    %5766 = vmatprep.subr.mxu0 0.0
    %v5767 = vand.u32 %v5649, 4294901760
    %5768 = vmatpush1.msra.mxu0 %v5767
    %v5769 = vand.u32 %v5616, 4294901760
    %v5770 = vsub.f32 %v5616, %v5769
    %v5771 = vand.u32 %v5770, 4294901760
    %v5772 = vsub.f32 %v5770, %v5771
    %v5773 = vand.u32 %v5772, 4294901760
    %5774 = vmatprep.mubr.f32.mxu0 %v5773
    %v5775 = vand.u32 %v5615, 4294901760
    %v5776 = vsub.f32 %v5615, %v5775
    %v5777 = vand.u32 %v5776, 4294901760
    %v5778 = vsub.f32 %v5776, %v5777
    %v5779 = vand.u32 %v5778, 4294901760
    %5780 = vmatmul.mubr.f32.gmra.mrb[0].mxu0 %v5779
    %v5781 = vpop.f32.mrb[0].mxu0
    %v5782 = vadd.f32 %v5671, %v5781
    %v5783 = vpop.f32.mrb[0].mxu0
    %5784 = vdwg.mxu0
    %5785 = vmatprep.subr.mxu0 0.0
    %v5786 = vand.u32 %v5618, 4294901760
    %v5787 = vsub.f32 %v5618, %v5786
    %v5788 = vand.u32 %v5787, 4294901760
    %v5789 = vsub.f32 %v5787, %v5788
    %v5790 = vand.u32 %v5789, 4294901760
    %5791 = vmatpush1.msra.mxu0 %v5790
    %5792 = vmatprep.subr.mxu0 0.0
    %v5793 = vand.u32 %v5619, 4294901760
    %v5794 = vsub.f32 %v5619, %v5793
    %v5795 = vand.u32 %v5794, 4294901760
    %v5796 = vsub.f32 %v5794, %v5795
    %v5797 = vand.u32 %v5796, 4294901760
    %5798 = vmatpush1.msra.mxu0 %v5797
    %5799 = vmatprep.subr.mxu0 0.0
    %v5800 = vand.u32 %v5620, 4294901760
    %v5801 = vsub.f32 %v5620, %v5800
    %v5802 = vand.u32 %v5801, 4294901760
    %v5803 = vsub.f32 %v5801, %v5802
    %v5804 = vand.u32 %v5803, 4294901760
    %5805 = vmatpush1.msra.mxu0 %v5804
    %5806 = vmatprep.subr.mxu0 0.0
    %v5807 = vand.u32 %v5621, 4294901760
    %v5808 = vsub.f32 %v5621, %v5807
    %v5809 = vand.u32 %v5808, 4294901760
    %v5810 = vsub.f32 %v5808, %v5809
    %v5811 = vand.u32 %v5810, 4294901760
    %5812 = vmatpush1.msra.mxu0 %v5811
    %5813 = vmatprep.subr.mxu0 0.0
    %v5814 = vand.u32 %v5622, 4294901760
    %v5815 = vsub.f32 %v5622, %v5814
    %v5816 = vand.u32 %v5815, 4294901760
    %v5817 = vsub.f32 %v5815, %v5816
    %v5818 = vand.u32 %v5817, 4294901760
    %5819 = vmatpush1.msra.mxu0 %v5818
    %5820 = vmatprep.subr.mxu0 0.0
    %v5821 = vand.u32 %v5623, 4294901760
    %v5822 = vsub.f32 %v5623, %v5821
    %v5823 = vand.u32 %v5822, 4294901760
    %v5824 = vsub.f32 %v5822, %v5823
    %v5825 = vand.u32 %v5824, 4294901760
    %5826 = vmatpush1.msra.mxu0 %v5825
    %5827 = vmatprep.subr.mxu0 0.0
    %v5828 = vand.u32 %v5624, 4294901760
    %v5829 = vsub.f32 %v5624, %v5828
    %v5830 = vand.u32 %v5829, 4294901760
    %v5831 = vsub.f32 %v5829, %v5830
    %v5832 = vand.u32 %v5831, 4294901760
    %5833 = vmatpush1.msra.mxu0 %v5832
    %5834 = vmatprep.subr.mxu0 0.0
    %v5835 = vand.u32 %v5625, 4294901760
    %v5836 = vsub.f32 %v5625, %v5835
    %v5837 = vand.u32 %v5836, 4294901760
    %v5838 = vsub.f32 %v5836, %v5837
    %v5839 = vand.u32 %v5838, 4294901760
    %5840 = vmatpush1.msra.mxu0 %v5839
    %5841 = vmatprep.subr.mxu0 0.0
    %v5842 = vand.u32 %v5626, 4294901760
    %v5843 = vsub.f32 %v5626, %v5842
    %v5844 = vand.u32 %v5843, 4294901760
    %v5845 = vsub.f32 %v5843, %v5844
    %v5846 = vand.u32 %v5845, 4294901760
    %5847 = vmatpush1.msra.mxu0 %v5846
    %5848 = vmatprep.subr.mxu0 0.0
    %v5849 = vand.u32 %v5627, 4294901760
    %v5850 = vsub.f32 %v5627, %v5849
    %v5851 = vand.u32 %v5850, 4294901760
    %v5852 = vsub.f32 %v5850, %v5851
    %v5853 = vand.u32 %v5852, 4294901760
    %5854 = vmatpush1.msra.mxu0 %v5853
    %5855 = vmatprep.subr.mxu0 0.0
    %v5856 = vand.u32 %v5628, 4294901760
    %v5857 = vsub.f32 %v5628, %v5856
    %v5858 = vand.u32 %v5857, 4294901760
    %v5859 = vsub.f32 %v5857, %v5858
    %v5860 = vand.u32 %v5859, 4294901760
    %5861 = vmatpush1.msra.mxu0 %v5860
    %5862 = vmatprep.subr.mxu0 0.0
    %v5863 = vand.u32 %v5629, 4294901760
    %v5864 = vsub.f32 %v5629, %v5863
    %v5865 = vand.u32 %v5864, 4294901760
    %v5866 = vsub.f32 %v5864, %v5865
    %v5867 = vand.u32 %v5866, 4294901760
    %5868 = vmatpush1.msra.mxu0 %v5867
    %5869 = vmatprep.subr.mxu0 0.0
    %v5870 = vand.u32 %v5630, 4294901760
    %v5871 = vsub.f32 %v5630, %v5870
    %v5872 = vand.u32 %v5871, 4294901760
    %v5873 = vsub.f32 %v5871, %v5872
    %v5874 = vand.u32 %v5873, 4294901760
    %5875 = vmatpush1.msra.mxu0 %v5874
    %5876 = vmatprep.subr.mxu0 0.0
    %v5877 = vand.u32 %v5631, 4294901760
    %v5878 = vsub.f32 %v5631, %v5877
    %v5879 = vand.u32 %v5878, 4294901760
    %v5880 = vsub.f32 %v5878, %v5879
    %v5881 = vand.u32 %v5880, 4294901760
    %5882 = vmatpush1.msra.mxu0 %v5881
    %5883 = vmatprep.subr.mxu0 0.0
    %v5884 = vand.u32 %v5632, 4294901760
    %v5885 = vsub.f32 %v5632, %v5884
    %v5886 = vand.u32 %v5885, 4294901760
    %v5887 = vsub.f32 %v5885, %v5886
    %v5888 = vand.u32 %v5887, 4294901760
    %5889 = vmatpush1.msra.mxu0 %v5888
    %5890 = vmatprep.subr.mxu0 0.0
    %v5891 = vand.u32 %v5633, 4294901760
    %v5892 = vsub.f32 %v5633, %v5891
    %v5893 = vand.u32 %v5892, 4294901760
    %v5894 = vsub.f32 %v5892, %v5893
    %v5895 = vand.u32 %v5894, 4294901760
    %5896 = vmatpush1.msra.mxu0 %v5895
    %5897 = vmatprep.subr.mxu0 0.0
    %v5898 = vand.u32 %v5634, 4294901760
    %v5899 = vsub.f32 %v5634, %v5898
    %v5900 = vand.u32 %v5899, 4294901760
    %v5901 = vsub.f32 %v5899, %v5900
    %v5902 = vand.u32 %v5901, 4294901760
    %5903 = vmatpush1.msra.mxu0 %v5902
    %5904 = vmatprep.subr.mxu0 0.0
    %v5905 = vand.u32 %v5635, 4294901760
    %v5906 = vsub.f32 %v5635, %v5905
    %v5907 = vand.u32 %v5906, 4294901760
    %v5908 = vsub.f32 %v5906, %v5907
    %v5909 = vand.u32 %v5908, 4294901760
    %5910 = vmatpush1.msra.mxu0 %v5909
    %5911 = vmatprep.subr.mxu0 0.0
    %v5912 = vand.u32 %v5636, 4294901760
    %v5913 = vsub.f32 %v5636, %v5912
    %v5914 = vand.u32 %v5913, 4294901760
    %v5915 = vsub.f32 %v5913, %v5914
    %v5916 = vand.u32 %v5915, 4294901760
    %5917 = vmatpush1.msra.mxu0 %v5916
    %5918 = vmatprep.subr.mxu0 0.0
    %v5919 = vand.u32 %v5637, 4294901760
    %v5920 = vsub.f32 %v5637, %v5919
    %v5921 = vand.u32 %v5920, 4294901760
    %v5922 = vsub.f32 %v5920, %v5921
    %v5923 = vand.u32 %v5922, 4294901760
    %5924 = vmatpush1.msra.mxu0 %v5923
    %5925 = vmatprep.subr.mxu0 0.0
    %v5926 = vand.u32 %v5638, 4294901760
    %v5927 = vsub.f32 %v5638, %v5926
    %v5928 = vand.u32 %v5927, 4294901760
    %v5929 = vsub.f32 %v5927, %v5928
    %v5930 = vand.u32 %v5929, 4294901760
    %5931 = vmatpush1.msra.mxu0 %v5930
    %5932 = vmatprep.subr.mxu0 0.0
    %v5933 = vand.u32 %v5639, 4294901760
    %v5934 = vsub.f32 %v5639, %v5933
    %v5935 = vand.u32 %v5934, 4294901760
    %v5936 = vsub.f32 %v5934, %v5935
    %v5937 = vand.u32 %v5936, 4294901760
    %5938 = vmatpush1.msra.mxu0 %v5937
    %5939 = vmatprep.subr.mxu0 0.0
    %v5940 = vand.u32 %v5640, 4294901760
    %v5941 = vsub.f32 %v5640, %v5940
    %v5942 = vand.u32 %v5941, 4294901760
    %v5943 = vsub.f32 %v5941, %v5942
    %v5944 = vand.u32 %v5943, 4294901760
    %5945 = vmatpush1.msra.mxu0 %v5944
    %5946 = vmatprep.subr.mxu0 0.0
    %v5947 = vand.u32 %v5641, 4294901760
    %v5948 = vsub.f32 %v5641, %v5947
    %v5949 = vand.u32 %v5948, 4294901760
    %v5950 = vsub.f32 %v5948, %v5949
    %v5951 = vand.u32 %v5950, 4294901760
    %5952 = vmatpush1.msra.mxu0 %v5951
    %5953 = vmatprep.subr.mxu0 0.0
    %v5954 = vand.u32 %v5642, 4294901760
    %v5955 = vsub.f32 %v5642, %v5954
    %v5956 = vand.u32 %v5955, 4294901760
    %v5957 = vsub.f32 %v5955, %v5956
    %v5958 = vand.u32 %v5957, 4294901760
    %5959 = vmatpush1.msra.mxu0 %v5958
    %5960 = vmatprep.subr.mxu0 0.0
    %v5961 = vand.u32 %v5643, 4294901760
    %v5962 = vsub.f32 %v5643, %v5961
    %v5963 = vand.u32 %v5962, 4294901760
    %v5964 = vsub.f32 %v5962, %v5963
    %v5965 = vand.u32 %v5964, 4294901760
    %5966 = vmatpush1.msra.mxu0 %v5965
    %5967 = vmatprep.subr.mxu0 0.0
    %v5968 = vand.u32 %v5644, 4294901760
    %v5969 = vsub.f32 %v5644, %v5968
    %v5970 = vand.u32 %v5969, 4294901760
    %v5971 = vsub.f32 %v5969, %v5970
    %v5972 = vand.u32 %v5971, 4294901760
    %5973 = vmatpush1.msra.mxu0 %v5972
    %5974 = vmatprep.subr.mxu0 0.0
    %v5975 = vand.u32 %v5645, 4294901760
    %v5976 = vsub.f32 %v5645, %v5975
    %v5977 = vand.u32 %v5976, 4294901760
    %v5978 = vsub.f32 %v5976, %v5977
    %v5979 = vand.u32 %v5978, 4294901760
    %5980 = vmatpush1.msra.mxu0 %v5979
    %5981 = vmatprep.subr.mxu0 0.0
    %v5982 = vand.u32 %v5646, 4294901760
    %v5983 = vsub.f32 %v5646, %v5982
    %v5984 = vand.u32 %v5983, 4294901760
    %v5985 = vsub.f32 %v5983, %v5984
    %v5986 = vand.u32 %v5985, 4294901760
    %5987 = vmatpush1.msra.mxu0 %v5986
    %5988 = vmatprep.subr.mxu0 0.0
    %v5989 = vand.u32 %v5647, 4294901760
    %v5990 = vsub.f32 %v5647, %v5989
    %v5991 = vand.u32 %v5990, 4294901760
    %v5992 = vsub.f32 %v5990, %v5991
    %v5993 = vand.u32 %v5992, 4294901760
    %5994 = vmatpush1.msra.mxu0 %v5993
    %5995 = vmatprep.subr.mxu0 0.0
    %v5996 = vand.u32 %v5648, 4294901760
    %v5997 = vsub.f32 %v5648, %v5996
    %v5998 = vand.u32 %v5997, 4294901760
    %v5999 = vsub.f32 %v5997, %v5998
    %v6000 = vand.u32 %v5999, 4294901760
    %6001 = vmatpush1.msra.mxu0 %v6000
    %6002 = vmatprep.subr.mxu0 0.0
    %v6003 = vand.u32 %v5649, 4294901760
    %v6004 = vsub.f32 %v5649, %v6003
    %v6005 = vand.u32 %v6004, 4294901760
    %v6006 = vsub.f32 %v6004, %v6005
    %v6007 = vand.u32 %v6006, 4294901760
    %6008 = vmatpush1.msra.mxu0 %v6007
    %v6009 = vand.u32 %v5616, 4294901760
    %6010 = vmatprep.mubr.f32.mxu0 %v6009
    %v6011 = vand.u32 %v5615, 4294901760
    %6012 = vmatmul.mubr.f32.gmra.mrb[0].mxu0 %v6011
    %v6013 = vpop.f32.mrb[0].mxu0
    %v6014 = vadd.f32 %v5782, %v6013
    %v6015 = vpop.f32.mrb[0].mxu0
    %6016 = vdwg.mxu0
    %6017 = vmatprep.subr.mxu0 0.0
    %v6018 = vand.u32 %v5618, 4294901760
    %v6019 = vsub.f32 %v5618, %v6018
    %6020 = vmatpush1.msra.mxu0 %v6019
    %6021 = vmatprep.subr.mxu0 0.0
    %v6022 = vand.u32 %v5619, 4294901760
    %v6023 = vsub.f32 %v5619, %v6022
    %6024 = vmatpush1.msra.mxu0 %v6023
    %6025 = vmatprep.subr.mxu0 0.0
    %v6026 = vand.u32 %v5620, 4294901760
    %v6027 = vsub.f32 %v5620, %v6026
    %6028 = vmatpush1.msra.mxu0 %v6027
    %6029 = vmatprep.subr.mxu0 0.0
    %v6030 = vand.u32 %v5621, 4294901760
    %v6031 = vsub.f32 %v5621, %v6030
    %6032 = vmatpush1.msra.mxu0 %v6031
    %6033 = vmatprep.subr.mxu0 0.0
    %v6034 = vand.u32 %v5622, 4294901760
    %v6035 = vsub.f32 %v5622, %v6034
    %6036 = vmatpush1.msra.mxu0 %v6035
    %6037 = vmatprep.subr.mxu0 0.0
    %v6038 = vand.u32 %v5623, 4294901760
    %v6039 = vsub.f32 %v5623, %v6038
    %6040 = vmatpush1.msra.mxu0 %v6039
    %6041 = vmatprep.subr.mxu0 0.0
    %v6042 = vand.u32 %v5624, 4294901760
    %v6043 = vsub.f32 %v5624, %v6042
    %6044 = vmatpush1.msra.mxu0 %v6043
    %6045 = vmatprep.subr.mxu0 0.0
    %v6046 = vand.u32 %v5625, 4294901760
    %v6047 = vsub.f32 %v5625, %v6046
    %6048 = vmatpush1.msra.mxu0 %v6047
    %6049 = vmatprep.subr.mxu0 0.0
    %v6050 = vand.u32 %v5626, 4294901760
    %v6051 = vsub.f32 %v5626, %v6050
    %6052 = vmatpush1.msra.mxu0 %v6051
    %6053 = vmatprep.subr.mxu0 0.0
    %v6054 = vand.u32 %v5627, 4294901760
    %v6055 = vsub.f32 %v5627, %v6054
    %6056 = vmatpush1.msra.mxu0 %v6055
    %6057 = vmatprep.subr.mxu0 0.0
    %v6058 = vand.u32 %v5628, 4294901760
    %v6059 = vsub.f32 %v5628, %v6058
    %6060 = vmatpush1.msra.mxu0 %v6059
    %6061 = vmatprep.subr.mxu0 0.0
    %v6062 = vand.u32 %v5629, 4294901760
    %v6063 = vsub.f32 %v5629, %v6062
    %6064 = vmatpush1.msra.mxu0 %v6063
    %6065 = vmatprep.subr.mxu0 0.0
    %v6066 = vand.u32 %v5630, 4294901760
    %v6067 = vsub.f32 %v5630, %v6066
    %6068 = vmatpush1.msra.mxu0 %v6067
    %6069 = vmatprep.subr.mxu0 0.0
    %v6070 = vand.u32 %v5631, 4294901760
    %v6071 = vsub.f32 %v5631, %v6070
    %6072 = vmatpush1.msra.mxu0 %v6071
    %6073 = vmatprep.subr.mxu0 0.0
    %v6074 = vand.u32 %v5632, 4294901760
    %v6075 = vsub.f32 %v5632, %v6074
    %6076 = vmatpush1.msra.mxu0 %v6075
    %6077 = vmatprep.subr.mxu0 0.0
    %v6078 = vand.u32 %v5633, 4294901760
    %v6079 = vsub.f32 %v5633, %v6078
    %6080 = vmatpush1.msra.mxu0 %v6079
    %6081 = vmatprep.subr.mxu0 0.0
    %v6082 = vand.u32 %v5634, 4294901760
    %v6083 = vsub.f32 %v5634, %v6082
    %6084 = vmatpush1.msra.mxu0 %v6083
    %6085 = vmatprep.subr.mxu0 0.0
    %v6086 = vand.u32 %v5635, 4294901760
    %v6087 = vsub.f32 %v5635, %v6086
    %6088 = vmatpush1.msra.mxu0 %v6087
    %6089 = vmatprep.subr.mxu0 0.0
    %v6090 = vand.u32 %v5636, 4294901760
    %v6091 = vsub.f32 %v5636, %v6090
    %6092 = vmatpush1.msra.mxu0 %v6091
    %6093 = vmatprep.subr.mxu0 0.0
    %v6094 = vand.u32 %v5637, 4294901760
    %v6095 = vsub.f32 %v5637, %v6094
    %6096 = vmatpush1.msra.mxu0 %v6095
    %6097 = vmatprep.subr.mxu0 0.0
    %v6098 = vand.u32 %v5638, 4294901760
    %v6099 = vsub.f32 %v5638, %v6098
    %6100 = vmatpush1.msra.mxu0 %v6099
    %6101 = vmatprep.subr.mxu0 0.0
    %v6102 = vand.u32 %v5639, 4294901760
    %v6103 = vsub.f32 %v5639, %v6102
    %6104 = vmatpush1.msra.mxu0 %v6103
    %6105 = vmatprep.subr.mxu0 0.0
    %v6106 = vand.u32 %v5640, 4294901760
    %v6107 = vsub.f32 %v5640, %v6106
    %6108 = vmatpush1.msra.mxu0 %v6107
    %6109 = vmatprep.subr.mxu0 0.0
    %v6110 = vand.u32 %v5641, 4294901760
    %v6111 = vsub.f32 %v5641, %v6110
    %6112 = vmatpush1.msra.mxu0 %v6111
    %6113 = vmatprep.subr.mxu0 0.0
    %v6114 = vand.u32 %v5642, 4294901760
    %v6115 = vsub.f32 %v5642, %v6114
    %6116 = vmatpush1.msra.mxu0 %v6115
    %6117 = vmatprep.subr.mxu0 0.0
    %v6118 = vand.u32 %v5643, 4294901760
    %v6119 = vsub.f32 %v5643, %v6118
    %6120 = vmatpush1.msra.mxu0 %v6119
    %6121 = vmatprep.subr.mxu0 0.0
    %v6122 = vand.u32 %v5644, 4294901760
    %v6123 = vsub.f32 %v5644, %v6122
    %6124 = vmatpush1.msra.mxu0 %v6123
    %6125 = vmatprep.subr.mxu0 0.0
    %v6126 = vand.u32 %v5645, 4294901760
    %v6127 = vsub.f32 %v5645, %v6126
    %6128 = vmatpush1.msra.mxu0 %v6127
    %6129 = vmatprep.subr.mxu0 0.0
    %v6130 = vand.u32 %v5646, 4294901760
    %v6131 = vsub.f32 %v5646, %v6130
    %6132 = vmatpush1.msra.mxu0 %v6131
    %6133 = vmatprep.subr.mxu0 0.0
    %v6134 = vand.u32 %v5647, 4294901760
    %v6135 = vsub.f32 %v5647, %v6134
    %6136 = vmatpush1.msra.mxu0 %v6135
    %6137 = vmatprep.subr.mxu0 0.0
    %v6138 = vand.u32 %v5648, 4294901760
    %v6139 = vsub.f32 %v5648, %v6138
    %6140 = vmatpush1.msra.mxu0 %v6139
    %6141 = vmatprep.subr.mxu0 0.0
    %v6142 = vand.u32 %v5649, 4294901760
    %v6143 = vsub.f32 %v5649, %v6142
    %6144 = vmatpush1.msra.mxu0 %v6143
    %v6145 = vand.u32 %v5616, 4294901760
    %v6146 = vsub.f32 %v5616, %v6145
    %6147 = vmatprep.mubr.f32.mxu0 %v6146
    %v6148 = vand.u32 %v5615, 4294901760
    %v6149 = vsub.f32 %v5615, %v6148
    %6150 = vmatmul.mubr.f32.gmra.mrb[0].mxu0 %v6149
    %v6151 = vpop.f32.mrb[0].mxu0
    %v6152 = vadd.f32 %v6014, %v6151
    %v6153 = vpop.f32.mrb[0].mxu0
    %6154 = vdwg.mxu0
    %6155 = vmatprep.subr.mxu0 0.0
    %v6156 = vand.u32 %v5618, 4294901760
    %6157 = vmatpush1.msra.mxu0 %v6156
    %6158 = vmatprep.subr.mxu0 0.0
    %v6159 = vand.u32 %v5619, 4294901760
    %6160 = vmatpush1.msra.mxu0 %v6159
    %6161 = vmatprep.subr.mxu0 0.0
    %v6162 = vand.u32 %v5620, 4294901760
    %6163 = vmatpush1.msra.mxu0 %v6162
    %6164 = vmatprep.subr.mxu0 0.0
    %v6165 = vand.u32 %v5621, 4294901760
    %6166 = vmatpush1.msra.mxu0 %v6165
    %6167 = vmatprep.subr.mxu0 0.0
    %v6168 = vand.u32 %v5622, 4294901760
    %6169 = vmatpush1.msra.mxu0 %v6168
    %6170 = vmatprep.subr.mxu0 0.0
    %v6171 = vand.u32 %v5623, 4294901760
    %6172 = vmatpush1.msra.mxu0 %v6171
    %6173 = vmatprep.subr.mxu0 0.0
    %v6174 = vand.u32 %v5624, 4294901760
    %6175 = vmatpush1.msra.mxu0 %v6174
    %6176 = vmatprep.subr.mxu0 0.0
    %v6177 = vand.u32 %v5625, 4294901760
    %6178 = vmatpush1.msra.mxu0 %v6177
    %6179 = vmatprep.subr.mxu0 0.0
    %v6180 = vand.u32 %v5626, 4294901760
    %6181 = vmatpush1.msra.mxu0 %v6180
    %6182 = vmatprep.subr.mxu0 0.0
    %v6183 = vand.u32 %v5627, 4294901760
    %6184 = vmatpush1.msra.mxu0 %v6183
    %6185 = vmatprep.subr.mxu0 0.0
    %v6186 = vand.u32 %v5628, 4294901760
    %6187 = vmatpush1.msra.mxu0 %v6186
    %6188 = vmatprep.subr.mxu0 0.0
    %v6189 = vand.u32 %v5629, 4294901760
    %6190 = vmatpush1.msra.mxu0 %v6189
    %6191 = vmatprep.subr.mxu0 0.0
    %v6192 = vand.u32 %v5630, 4294901760
    %6193 = vmatpush1.msra.mxu0 %v6192
    %6194 = vmatprep.subr.mxu0 0.0
    %v6195 = vand.u32 %v5631, 4294901760
    %6196 = vmatpush1.msra.mxu0 %v6195
    %6197 = vmatprep.subr.mxu0 0.0
    %v6198 = vand.u32 %v5632, 4294901760
    %6199 = vmatpush1.msra.mxu0 %v6198
    %6200 = vmatprep.subr.mxu0 0.0
    %v6201 = vand.u32 %v5633, 4294901760
    %6202 = vmatpush1.msra.mxu0 %v6201
    %6203 = vmatprep.subr.mxu0 0.0
    %v6204 = vand.u32 %v5634, 4294901760
    %6205 = vmatpush1.msra.mxu0 %v6204
    %6206 = vmatprep.subr.mxu0 0.0
    %v6207 = vand.u32 %v5635, 4294901760
    %6208 = vmatpush1.msra.mxu0 %v6207
    %6209 = vmatprep.subr.mxu0 0.0
    %v6210 = vand.u32 %v5636, 4294901760
    %6211 = vmatpush1.msra.mxu0 %v6210
    %6212 = vmatprep.subr.mxu0 0.0
    %v6213 = vand.u32 %v5637, 4294901760
    %6214 = vmatpush1.msra.mxu0 %v6213
    %6215 = vmatprep.subr.mxu0 0.0
    %v6216 = vand.u32 %v5638, 4294901760
    %6217 = vmatpush1.msra.mxu0 %v6216
    %6218 = vmatprep.subr.mxu0 0.0
    %v6219 = vand.u32 %v5639, 4294901760
    %6220 = vmatpush1.msra.mxu0 %v6219
    %6221 = vmatprep.subr.mxu0 0.0
    %v6222 = vand.u32 %v5640, 4294901760
    %6223 = vmatpush1.msra.mxu0 %v6222
    %6224 = vmatprep.subr.mxu0 0.0
    %v6225 = vand.u32 %v5641, 4294901760
    %6226 = vmatpush1.msra.mxu0 %v6225
    %6227 = vmatprep.subr.mxu0 0.0
    %v6228 = vand.u32 %v5642, 4294901760
    %6229 = vmatpush1.msra.mxu0 %v6228
    %6230 = vmatprep.subr.mxu0 0.0
    %v6231 = vand.u32 %v5643, 4294901760
    %6232 = vmatpush1.msra.mxu0 %v6231
    %6233 = vmatprep.subr.mxu0 0.0
    %v6234 = vand.u32 %v5644, 4294901760
    %6235 = vmatpush1.msra.mxu0 %v6234
    %6236 = vmatprep.subr.mxu0 0.0
    %v6237 = vand.u32 %v5645, 4294901760
    %6238 = vmatpush1.msra.mxu0 %v6237
    %6239 = vmatprep.subr.mxu0 0.0
    %v6240 = vand.u32 %v5646, 4294901760
    %6241 = vmatpush1.msra.mxu0 %v6240
    %6242 = vmatprep.subr.mxu0 0.0
    %v6243 = vand.u32 %v5647, 4294901760
    %6244 = vmatpush1.msra.mxu0 %v6243
    %6245 = vmatprep.subr.mxu0 0.0
    %v6246 = vand.u32 %v5648, 4294901760
    %6247 = vmatpush1.msra.mxu0 %v6246
    %6248 = vmatprep.subr.mxu0 0.0
    %v6249 = vand.u32 %v5649, 4294901760
    %6250 = vmatpush1.msra.mxu0 %v6249
    %v6251 = vand.u32 %v5616, 4294901760
    %v6252 = vsub.f32 %v5616, %v6251
    %v6253 = vand.u32 %v6252, 4294901760
    %6254 = vmatprep.mubr.f32.mxu0 %v6253
    %v6255 = vand.u32 %v5615, 4294901760
    %v6256 = vsub.f32 %v5615, %v6255
    %v6257 = vand.u32 %v6256, 4294901760
    %6258 = vmatmul.mubr.f32.gmra.mrb[0].mxu0 %v6257
    %v6259 = vpop.f32.mrb[0].mxu0
    %v6260 = vadd.f32 %v6152, %v6259
    %v6261 = vpop.f32.mrb[0].mxu0
    %6262 = vdwg.mxu0
    %6263 = vmatprep.subr.mxu0 0.0
    %v6264 = vand.u32 %v5618, 4294901760
    %v6265 = vsub.f32 %v5618, %v6264
    %v6266 = vand.u32 %v6265, 4294901760
    %6267 = vmatpush1.msra.mxu0 %v6266
    %6268 = vmatprep.subr.mxu0 0.0
    %v6269 = vand.u32 %v5619, 4294901760
    %v6270 = vsub.f32 %v5619, %v6269
    %v6271 = vand.u32 %v6270, 4294901760
    %6272 = vmatpush1.msra.mxu0 %v6271
    %6273 = vmatprep.subr.mxu0 0.0
    %v6274 = vand.u32 %v5620, 4294901760
    %v6275 = vsub.f32 %v5620, %v6274
    %v6276 = vand.u32 %v6275, 4294901760
    %6277 = vmatpush1.msra.mxu0 %v6276
    %6278 = vmatprep.subr.mxu0 0.0
    %v6279 = vand.u32 %v5621, 4294901760
    %v6280 = vsub.f32 %v5621, %v6279
    %v6281 = vand.u32 %v6280, 4294901760
    %6282 = vmatpush1.msra.mxu0 %v6281
    %6283 = vmatprep.subr.mxu0 0.0
    %v6284 = vand.u32 %v5622, 4294901760
    %v6285 = vsub.f32 %v5622, %v6284
    %v6286 = vand.u32 %v6285, 4294901760
    %6287 = vmatpush1.msra.mxu0 %v6286
    %6288 = vmatprep.subr.mxu0 0.0
    %v6289 = vand.u32 %v5623, 4294901760
    %v6290 = vsub.f32 %v5623, %v6289
    %v6291 = vand.u32 %v6290, 4294901760
    %6292 = vmatpush1.msra.mxu0 %v6291
    %6293 = vmatprep.subr.mxu0 0.0
    %v6294 = vand.u32 %v5624, 4294901760
    %v6295 = vsub.f32 %v5624, %v6294
    %v6296 = vand.u32 %v6295, 4294901760
    %6297 = vmatpush1.msra.mxu0 %v6296
    %6298 = vmatprep.subr.mxu0 0.0
    %v6299 = vand.u32 %v5625, 4294901760
    %v6300 = vsub.f32 %v5625, %v6299
    %v6301 = vand.u32 %v6300, 4294901760
    %6302 = vmatpush1.msra.mxu0 %v6301
    %6303 = vmatprep.subr.mxu0 0.0
    %v6304 = vand.u32 %v5626, 4294901760
    %v6305 = vsub.f32 %v5626, %v6304
    %v6306 = vand.u32 %v6305, 4294901760
    %6307 = vmatpush1.msra.mxu0 %v6306
    %6308 = vmatprep.subr.mxu0 0.0
    %v6309 = vand.u32 %v5627, 4294901760
    %v6310 = vsub.f32 %v5627, %v6309
    %v6311 = vand.u32 %v6310, 4294901760
    %6312 = vmatpush1.msra.mxu0 %v6311
    %6313 = vmatprep.subr.mxu0 0.0
    %v6314 = vand.u32 %v5628, 4294901760
    %v6315 = vsub.f32 %v5628, %v6314
    %v6316 = vand.u32 %v6315, 4294901760
    %6317 = vmatpush1.msra.mxu0 %v6316
    %6318 = vmatprep.subr.mxu0 0.0
    %v6319 = vand.u32 %v5629, 4294901760
    %v6320 = vsub.f32 %v5629, %v6319
    %v6321 = vand.u32 %v6320, 4294901760
    %6322 = vmatpush1.msra.mxu0 %v6321
    %6323 = vmatprep.subr.mxu0 0.0
    %v6324 = vand.u32 %v5630, 4294901760
    %v6325 = vsub.f32 %v5630, %v6324
    %v6326 = vand.u32 %v6325, 4294901760
    %6327 = vmatpush1.msra.mxu0 %v6326
    %6328 = vmatprep.subr.mxu0 0.0
    %v6329 = vand.u32 %v5631, 4294901760
    %v6330 = vsub.f32 %v5631, %v6329
    %v6331 = vand.u32 %v6330, 4294901760
    %6332 = vmatpush1.msra.mxu0 %v6331
    %6333 = vmatprep.subr.mxu0 0.0
    %v6334 = vand.u32 %v5632, 4294901760
    %v6335 = vsub.f32 %v5632, %v6334
    %v6336 = vand.u32 %v6335, 4294901760
    %6337 = vmatpush1.msra.mxu0 %v6336
    %6338 = vmatprep.subr.mxu0 0.0
    %v6339 = vand.u32 %v5633, 4294901760
    %v6340 = vsub.f32 %v5633, %v6339
    %v6341 = vand.u32 %v6340, 4294901760
    %6342 = vmatpush1.msra.mxu0 %v6341
    %6343 = vmatprep.subr.mxu0 0.0
    %v6344 = vand.u32 %v5634, 4294901760
    %v6345 = vsub.f32 %v5634, %v6344
    %v6346 = vand.u32 %v6345, 4294901760
    %6347 = vmatpush1.msra.mxu0 %v6346
    %6348 = vmatprep.subr.mxu0 0.0
    %v6349 = vand.u32 %v5635, 4294901760
    %v6350 = vsub.f32 %v5635, %v6349
    %v6351 = vand.u32 %v6350, 4294901760
    %6352 = vmatpush1.msra.mxu0 %v6351
    %6353 = vmatprep.subr.mxu0 0.0
    %v6354 = vand.u32 %v5636, 4294901760
    %v6355 = vsub.f32 %v5636, %v6354
    %v6356 = vand.u32 %v6355, 4294901760
    %6357 = vmatpush1.msra.mxu0 %v6356
    %6358 = vmatprep.subr.mxu0 0.0
    %v6359 = vand.u32 %v5637, 4294901760
    %v6360 = vsub.f32 %v5637, %v6359
    %v6361 = vand.u32 %v6360, 4294901760
    %6362 = vmatpush1.msra.mxu0 %v6361
    %6363 = vmatprep.subr.mxu0 0.0
    %v6364 = vand.u32 %v5638, 4294901760
    %v6365 = vsub.f32 %v5638, %v6364
    %v6366 = vand.u32 %v6365, 4294901760
    %6367 = vmatpush1.msra.mxu0 %v6366
    %6368 = vmatprep.subr.mxu0 0.0
    %v6369 = vand.u32 %v5639, 4294901760
    %v6370 = vsub.f32 %v5639, %v6369
    %v6371 = vand.u32 %v6370, 4294901760
    %6372 = vmatpush1.msra.mxu0 %v6371
    %6373 = vmatprep.subr.mxu0 0.0
    %v6374 = vand.u32 %v5640, 4294901760
    %v6375 = vsub.f32 %v5640, %v6374
    %v6376 = vand.u32 %v6375, 4294901760
    %6377 = vmatpush1.msra.mxu0 %v6376
    %6378 = vmatprep.subr.mxu0 0.0
    %v6379 = vand.u32 %v5641, 4294901760
    %v6380 = vsub.f32 %v5641, %v6379
    %v6381 = vand.u32 %v6380, 4294901760
    %6382 = vmatpush1.msra.mxu0 %v6381
    %6383 = vmatprep.subr.mxu0 0.0
    %v6384 = vand.u32 %v5642, 4294901760
    %v6385 = vsub.f32 %v5642, %v6384
    %v6386 = vand.u32 %v6385, 4294901760
    %6387 = vmatpush1.msra.mxu0 %v6386
    %6388 = vmatprep.subr.mxu0 0.0
    %v6389 = vand.u32 %v5643, 4294901760
    %v6390 = vsub.f32 %v5643, %v6389
    %v6391 = vand.u32 %v6390, 4294901760
    %6392 = vmatpush1.msra.mxu0 %v6391
    %6393 = vmatprep.subr.mxu0 0.0
    %v6394 = vand.u32 %v5644, 4294901760
    %v6395 = vsub.f32 %v5644, %v6394
    %v6396 = vand.u32 %v6395, 4294901760
    %6397 = vmatpush1.msra.mxu0 %v6396
    %6398 = vmatprep.subr.mxu0 0.0
    %v6399 = vand.u32 %v5645, 4294901760
    %v6400 = vsub.f32 %v5645, %v6399
    %v6401 = vand.u32 %v6400, 4294901760
    %6402 = vmatpush1.msra.mxu0 %v6401
    %6403 = vmatprep.subr.mxu0 0.0
    %v6404 = vand.u32 %v5646, 4294901760
    %v6405 = vsub.f32 %v5646, %v6404
    %v6406 = vand.u32 %v6405, 4294901760
    %6407 = vmatpush1.msra.mxu0 %v6406
    %6408 = vmatprep.subr.mxu0 0.0
    %v6409 = vand.u32 %v5647, 4294901760
    %v6410 = vsub.f32 %v5647, %v6409
    %v6411 = vand.u32 %v6410, 4294901760
    %6412 = vmatpush1.msra.mxu0 %v6411
    %6413 = vmatprep.subr.mxu0 0.0
    %v6414 = vand.u32 %v5648, 4294901760
    %v6415 = vsub.f32 %v5648, %v6414
    %v6416 = vand.u32 %v6415, 4294901760
    %6417 = vmatpush1.msra.mxu0 %v6416
    %6418 = vmatprep.subr.mxu0 0.0
    %v6419 = vand.u32 %v5649, 4294901760
    %v6420 = vsub.f32 %v5649, %v6419
    %v6421 = vand.u32 %v6420, 4294901760
    %6422 = vmatpush1.msra.mxu0 %v6421
    %v6423 = vand.u32 %v5616, 4294901760
    %6424 = vmatprep.mubr.f32.mxu0 %v6423
    %v6425 = vand.u32 %v5615, 4294901760
    %6426 = vmatmul.mubr.f32.gmra.mrb[0].mxu0 %v6425
    %v6427 = vpop.f32.mrb[0].mxu0
    %v6428 = vadd.f32 %v6260, %v6427
    %v6429 = vpop.f32.mrb[0].mxu0
    %6430 = vdwg.mxu0
    %6431 = vmatprep.subr.mxu0 0.0
    %v6432 = vand.u32 %v5618, 4294901760
    %6433 = vmatpush1.msra.mxu0 %v6432
    %6434 = vmatprep.subr.mxu0 0.0
    %v6435 = vand.u32 %v5619, 4294901760
    %6436 = vmatpush1.msra.mxu0 %v6435
    %6437 = vmatprep.subr.mxu0 0.0
    %v6438 = vand.u32 %v5620, 4294901760
    %6439 = vmatpush1.msra.mxu0 %v6438
    %6440 = vmatprep.subr.mxu0 0.0
    %v6441 = vand.u32 %v5621, 4294901760
    %6442 = vmatpush1.msra.mxu0 %v6441
    %6443 = vmatprep.subr.mxu0 0.0
    %v6444 = vand.u32 %v5622, 4294901760
    %6445 = vmatpush1.msra.mxu0 %v6444
    %6446 = vmatprep.subr.mxu0 0.0
    %v6447 = vand.u32 %v5623, 4294901760
    %6448 = vmatpush1.msra.mxu0 %v6447
    %6449 = vmatprep.subr.mxu0 0.0
    %v6450 = vand.u32 %v5624, 4294901760
    %6451 = vmatpush1.msra.mxu0 %v6450
    %6452 = vmatprep.subr.mxu0 0.0
    %v6453 = vand.u32 %v5625, 4294901760
    %6454 = vmatpush1.msra.mxu0 %v6453
    %6455 = vmatprep.subr.mxu0 0.0
    %v6456 = vand.u32 %v5626, 4294901760
    %6457 = vmatpush1.msra.mxu0 %v6456
    %6458 = vmatprep.subr.mxu0 0.0
    %v6459 = vand.u32 %v5627, 4294901760
    %6460 = vmatpush1.msra.mxu0 %v6459
    %6461 = vmatprep.subr.mxu0 0.0
    %v6462 = vand.u32 %v5628, 4294901760
    %6463 = vmatpush1.msra.mxu0 %v6462
    %6464 = vmatprep.subr.mxu0 0.0
    %v6465 = vand.u32 %v5629, 4294901760
    %6466 = vmatpush1.msra.mxu0 %v6465
    %6467 = vmatprep.subr.mxu0 0.0
    %v6468 = vand.u32 %v5630, 4294901760
    %6469 = vmatpush1.msra.mxu0 %v6468
    %6470 = vmatprep.subr.mxu0 0.0
    %v6471 = vand.u32 %v5631, 4294901760
    %6472 = vmatpush1.msra.mxu0 %v6471
    %6473 = vmatprep.subr.mxu0 0.0
    %v6474 = vand.u32 %v5632, 4294901760
    %6475 = vmatpush1.msra.mxu0 %v6474
    %6476 = vmatprep.subr.mxu0 0.0
    %v6477 = vand.u32 %v5633, 4294901760
    %6478 = vmatpush1.msra.mxu0 %v6477
    %6479 = vmatprep.subr.mxu0 0.0
    %v6480 = vand.u32 %v5634, 4294901760
    %6481 = vmatpush1.msra.mxu0 %v6480
    %6482 = vmatprep.subr.mxu0 0.0
    %v6483 = vand.u32 %v5635, 4294901760
    %6484 = vmatpush1.msra.mxu0 %v6483
    %6485 = vmatprep.subr.mxu0 0.0
    %v6486 = vand.u32 %v5636, 4294901760
    %6487 = vmatpush1.msra.mxu0 %v6486
    %6488 = vmatprep.subr.mxu0 0.0
    %v6489 = vand.u32 %v5637, 4294901760
    %6490 = vmatpush1.msra.mxu0 %v6489
    %6491 = vmatprep.subr.mxu0 0.0
    %v6492 = vand.u32 %v5638, 4294901760
    %6493 = vmatpush1.msra.mxu0 %v6492
    %6494 = vmatprep.subr.mxu0 0.0
    %v6495 = vand.u32 %v5639, 4294901760
    %6496 = vmatpush1.msra.mxu0 %v6495
    %6497 = vmatprep.subr.mxu0 0.0
    %v6498 = vand.u32 %v5640, 4294901760
    %6499 = vmatpush1.msra.mxu0 %v6498
    %6500 = vmatprep.subr.mxu0 0.0
    %v6501 = vand.u32 %v5641, 4294901760
    %6502 = vmatpush1.msra.mxu0 %v6501
    %6503 = vmatprep.subr.mxu0 0.0
    %v6504 = vand.u32 %v5642, 4294901760
    %6505 = vmatpush1.msra.mxu0 %v6504
    %6506 = vmatprep.subr.mxu0 0.0
    %v6507 = vand.u32 %v5643, 4294901760
    %6508 = vmatpush1.msra.mxu0 %v6507
    %6509 = vmatprep.subr.mxu0 0.0
    %v6510 = vand.u32 %v5644, 4294901760
    %6511 = vmatpush1.msra.mxu0 %v6510
    %6512 = vmatprep.subr.mxu0 0.0
    %v6513 = vand.u32 %v5645, 4294901760
    %6514 = vmatpush1.msra.mxu0 %v6513
    %6515 = vmatprep.subr.mxu0 0.0
    %v6516 = vand.u32 %v5646, 4294901760
    %6517 = vmatpush1.msra.mxu0 %v6516
    %6518 = vmatprep.subr.mxu0 0.0
    %v6519 = vand.u32 %v5647, 4294901760
    %6520 = vmatpush1.msra.mxu0 %v6519
    %6521 = vmatprep.subr.mxu0 0.0
    %v6522 = vand.u32 %v5648, 4294901760
    %6523 = vmatpush1.msra.mxu0 %v6522
    %6524 = vmatprep.subr.mxu0 0.0
    %v6525 = vand.u32 %v5649, 4294901760
    %6526 = vmatpush1.msra.mxu0 %v6525
    %v6527 = vand.u32 %v5616, 4294901760
    %6528 = vmatprep.mubr.f32.mxu0 %v6527
    %v6529 = vand.u32 %v5615, 4294901760
    %6530 = vmatmul.mubr.f32.gmra.mrb[0].mxu0 %v6529
    %v6531 = vpop.f32.mrb[0].mxu0
    %v6532 = vadd.f32 %v6428, %v6531
    %v6533 = vpop.f32.mrb[0].mxu0
    %6534 = vdwg.mxu0
    %6535 = vmatprep.subr.mxu0 0.0
    %v6536 = vand.u32 %v5650, 4294901760
    %6537 = vmatpush1.msra.mxu0 %v6536
    %6538 = vmatprep.subr.mxu0 0.0
    %v6539 = vand.u32 %v5651, 4294901760
    %6540 = vmatpush1.msra.mxu0 %v6539
    %6541 = vmatprep.subr.mxu0 0.0
    %v6542 = vand.u32 %v5652, 4294901760
    %6543 = vmatpush1.msra.mxu0 %v6542
    %6544 = vmatprep.subr.mxu0 0.0
    %v6545 = vand.u32 %v5653, 4294901760
    %6546 = vmatpush1.msra.mxu0 %v6545
    %6547 = vmatprep.subr.mxu0 0.0
    %v6548 = vand.u32 %v5654, 4294901760
    %6549 = vmatpush1.msra.mxu0 %v6548
    %6550 = vmatprep.subr.mxu0 0.0
    %v6551 = vand.u32 %v5655, 4294901760
    %6552 = vmatpush1.msra.mxu0 %v6551
    %6553 = vmatprep.subr.mxu0 0.0
    %v6554 = vand.u32 %v5656, 4294901760
    %6555 = vmatpush1.msra.mxu0 %v6554
    %6556 = vmatprep.subr.mxu0 0.0
    %v6557 = vand.u32 %v5657, 4294901760
    %6558 = vmatpush1.msra.mxu0 %v6557
    %6559 = vmatprep.subr.mxu0 0.0
    %v6560 = vand.u32 %v5658, 4294901760
    %6561 = vmatpush1.msra.mxu0 %v6560
    %6562 = vmatprep.subr.mxu0 0.0
    %v6563 = vand.u32 %v5659, 4294901760
    %6564 = vmatpush1.msra.mxu0 %v6563
    %6565 = vmatprep.subr.mxu0 0.0
    %v6566 = vand.u32 %v5660, 4294901760
    %6567 = vmatpush1.msra.mxu0 %v6566
    %6568 = vmatprep.subr.mxu0 0.0
    %v6569 = vand.u32 %v5661, 4294901760
    %6570 = vmatpush1.msra.mxu0 %v6569
    %6571 = vmatprep.subr.mxu0 0.0
    %v6572 = vand.u32 %v5662, 4294901760
    %6573 = vmatpush1.msra.mxu0 %v6572
    %6574 = vmatprep.subr.mxu0 0.0
    %v6575 = vand.u32 %v5663, 4294901760
    %6576 = vmatpush1.msra.mxu0 %v6575
    %6577 = vmatprep.subr.mxu0 0.0
    %v6578 = vand.u32 %v5664, 4294901760
    %6579 = vmatpush1.msra.mxu0 %v6578
    %6580 = vmatprep.subr.mxu0 0.0
    %v6581 = vand.u32 %v5665, 4294901760
    %6582 = vmatpush1.msra.mxu0 %v6581
    %6583 = vmatprep.subr.mxu0 0.0
    %6584 = vmatpush1.msra.mxu0 0.0
    %6585 = vmatprep.subr.mxu0 0.0
    %6586 = vmatpush1.msra.mxu0 0.0
    %6587 = vmatprep.subr.mxu0 0.0
    %6588 = vmatpush1.msra.mxu0 0.0
    %6589 = vmatprep.subr.mxu0 0.0
    %6590 = vmatpush1.msra.mxu0 0.0
    %6591 = vmatprep.subr.mxu0 0.0
    %6592 = vmatpush1.msra.mxu0 0.0
    %6593 = vmatprep.subr.mxu0 0.0
    %6594 = vmatpush1.msra.mxu0 0.0
    %6595 = vmatprep.subr.mxu0 0.0
    %6596 = vmatpush1.msra.mxu0 0.0
    %6597 = vmatprep.subr.mxu0 0.0
    %6598 = vmatpush1.msra.mxu0 0.0
    %6599 = vmatprep.subr.mxu0 0.0
    %6600 = vmatpush1.msra.mxu0 0.0
    %6601 = vmatprep.subr.mxu0 0.0
    %6602 = vmatpush1.msra.mxu0 0.0
    %6603 = vmatprep.subr.mxu0 0.0
    %6604 = vmatpush1.msra.mxu0 0.0
    %6605 = vmatprep.subr.mxu0 0.0
    %6606 = vmatpush1.msra.mxu0 0.0
    %6607 = vmatprep.subr.mxu0 0.0
    %6608 = vmatpush1.msra.mxu0 0.0
    %6609 = vmatprep.subr.mxu0 0.0
    %6610 = vmatpush1.msra.mxu0 0.0
    %6611 = vmatprep.subr.mxu0 0.0
    %6612 = vmatpush1.msra.mxu0 0.0
    %6613 = vmatprep.subr.mxu0 0.0
    %6614 = vmatpush1.msra.mxu0 0.0
    %6615 = vmatprep.mubr.f32.mxu0 0.0
    %v6616 = vand.u32 %v5617, 4294901760
    %v6617 = vsub.f32 %v5617, %v6616
    %v6618 = vand.u32 %v6617, 4294901760
    %v6619 = vsub.f32 %v6617, %v6618
    %v6620 = vand.u32 %v6619, 4294901760
    %6621 = vmatmul.mubr.f32.gmra.mrb[0].mxu0 %v6620
    %v6622 = vpop.f32.mrb[0].mxu0
    %v6623 = vadd.f32 %v6532, %v6622
    %v6624 = vpop.f32.mrb[0].mxu0
    %6625 = vdwg.mxu0
    %6626 = vmatprep.subr.mxu0 0.0
    %v6627 = vand.u32 %v5650, 4294901760
    %v6628 = vsub.f32 %v5650, %v6627
    %v6629 = vand.u32 %v6628, 4294901760
    %v6630 = vsub.f32 %v6628, %v6629
    %v6631 = vand.u32 %v6630, 4294901760
    %6632 = vmatpush1.msra.mxu0 %v6631
    %6633 = vmatprep.subr.mxu0 0.0
    %v6634 = vand.u32 %v5651, 4294901760
    %v6635 = vsub.f32 %v5651, %v6634
    %v6636 = vand.u32 %v6635, 4294901760
    %v6637 = vsub.f32 %v6635, %v6636
    %v6638 = vand.u32 %v6637, 4294901760
    %6639 = vmatpush1.msra.mxu0 %v6638
    %6640 = vmatprep.subr.mxu0 0.0
    %v6641 = vand.u32 %v5652, 4294901760
    %v6642 = vsub.f32 %v5652, %v6641
    %v6643 = vand.u32 %v6642, 4294901760
    %v6644 = vsub.f32 %v6642, %v6643
    %v6645 = vand.u32 %v6644, 4294901760
    %6646 = vmatpush1.msra.mxu0 %v6645
    %6647 = vmatprep.subr.mxu0 0.0
    %v6648 = vand.u32 %v5653, 4294901760
    %v6649 = vsub.f32 %v5653, %v6648
    %v6650 = vand.u32 %v6649, 4294901760
    %v6651 = vsub.f32 %v6649, %v6650
    %v6652 = vand.u32 %v6651, 4294901760
    %6653 = vmatpush1.msra.mxu0 %v6652
    %6654 = vmatprep.subr.mxu0 0.0
    %v6655 = vand.u32 %v5654, 4294901760
    %v6656 = vsub.f32 %v5654, %v6655
    %v6657 = vand.u32 %v6656, 4294901760
    %v6658 = vsub.f32 %v6656, %v6657
    %v6659 = vand.u32 %v6658, 4294901760
    %6660 = vmatpush1.msra.mxu0 %v6659
    %6661 = vmatprep.subr.mxu0 0.0
    %v6662 = vand.u32 %v5655, 4294901760
    %v6663 = vsub.f32 %v5655, %v6662
    %v6664 = vand.u32 %v6663, 4294901760
    %v6665 = vsub.f32 %v6663, %v6664
    %v6666 = vand.u32 %v6665, 4294901760
    %6667 = vmatpush1.msra.mxu0 %v6666
    %6668 = vmatprep.subr.mxu0 0.0
    %v6669 = vand.u32 %v5656, 4294901760
    %v6670 = vsub.f32 %v5656, %v6669
    %v6671 = vand.u32 %v6670, 4294901760
    %v6672 = vsub.f32 %v6670, %v6671
    %v6673 = vand.u32 %v6672, 4294901760
    %6674 = vmatpush1.msra.mxu0 %v6673
    %6675 = vmatprep.subr.mxu0 0.0
    %v6676 = vand.u32 %v5657, 4294901760
    %v6677 = vsub.f32 %v5657, %v6676
    %v6678 = vand.u32 %v6677, 4294901760
    %v6679 = vsub.f32 %v6677, %v6678
    %v6680 = vand.u32 %v6679, 4294901760
    %6681 = vmatpush1.msra.mxu0 %v6680
    %6682 = vmatprep.subr.mxu0 0.0
    %v6683 = vand.u32 %v5658, 4294901760
    %v6684 = vsub.f32 %v5658, %v6683
    %v6685 = vand.u32 %v6684, 4294901760
    %v6686 = vsub.f32 %v6684, %v6685
    %v6687 = vand.u32 %v6686, 4294901760
    %6688 = vmatpush1.msra.mxu0 %v6687
    %6689 = vmatprep.subr.mxu0 0.0
    %v6690 = vand.u32 %v5659, 4294901760
    %v6691 = vsub.f32 %v5659, %v6690
    %v6692 = vand.u32 %v6691, 4294901760
    %v6693 = vsub.f32 %v6691, %v6692
    %v6694 = vand.u32 %v6693, 4294901760
    %6695 = vmatpush1.msra.mxu0 %v6694
    %6696 = vmatprep.subr.mxu0 0.0
    %v6697 = vand.u32 %v5660, 4294901760
    %v6698 = vsub.f32 %v5660, %v6697
    %v6699 = vand.u32 %v6698, 4294901760
    %v6700 = vsub.f32 %v6698, %v6699
    %v6701 = vand.u32 %v6700, 4294901760
    %6702 = vmatpush1.msra.mxu0 %v6701
    %6703 = vmatprep.subr.mxu0 0.0
    %v6704 = vand.u32 %v5661, 4294901760
    %v6705 = vsub.f32 %v5661, %v6704
    %v6706 = vand.u32 %v6705, 4294901760
    %v6707 = vsub.f32 %v6705, %v6706
    %v6708 = vand.u32 %v6707, 4294901760
    %6709 = vmatpush1.msra.mxu0 %v6708
    %6710 = vmatprep.subr.mxu0 0.0
    %v6711 = vand.u32 %v5662, 4294901760
    %v6712 = vsub.f32 %v5662, %v6711
    %v6713 = vand.u32 %v6712, 4294901760
    %v6714 = vsub.f32 %v6712, %v6713
    %v6715 = vand.u32 %v6714, 4294901760
    %6716 = vmatpush1.msra.mxu0 %v6715
    %6717 = vmatprep.subr.mxu0 0.0
    %v6718 = vand.u32 %v5663, 4294901760
    %v6719 = vsub.f32 %v5663, %v6718
    %v6720 = vand.u32 %v6719, 4294901760
    %v6721 = vsub.f32 %v6719, %v6720
    %v6722 = vand.u32 %v6721, 4294901760
    %6723 = vmatpush1.msra.mxu0 %v6722
    %6724 = vmatprep.subr.mxu0 0.0
    %v6725 = vand.u32 %v5664, 4294901760
    %v6726 = vsub.f32 %v5664, %v6725
    %v6727 = vand.u32 %v6726, 4294901760
    %v6728 = vsub.f32 %v6726, %v6727
    %v6729 = vand.u32 %v6728, 4294901760
    %6730 = vmatpush1.msra.mxu0 %v6729
    %6731 = vmatprep.subr.mxu0 0.0
    %v6732 = vand.u32 %v5665, 4294901760
    %v6733 = vsub.f32 %v5665, %v6732
    %v6734 = vand.u32 %v6733, 4294901760
    %v6735 = vsub.f32 %v6733, %v6734
    %v6736 = vand.u32 %v6735, 4294901760
    %6737 = vmatpush1.msra.mxu0 %v6736
    %6738 = vmatprep.subr.mxu0 0.0
    %6739 = vmatpush1.msra.mxu0 0.0
    %6740 = vmatprep.subr.mxu0 0.0
    %6741 = vmatpush1.msra.mxu0 0.0
    %6742 = vmatprep.subr.mxu0 0.0
    %6743 = vmatpush1.msra.mxu0 0.0
    %6744 = vmatprep.subr.mxu0 0.0
    %6745 = vmatpush1.msra.mxu0 0.0
    %6746 = vmatprep.subr.mxu0 0.0
    %6747 = vmatpush1.msra.mxu0 0.0
    %6748 = vmatprep.subr.mxu0 0.0
    %6749 = vmatpush1.msra.mxu0 0.0
    %6750 = vmatprep.subr.mxu0 0.0
    %6751 = vmatpush1.msra.mxu0 0.0
    %6752 = vmatprep.subr.mxu0 0.0
    %6753 = vmatpush1.msra.mxu0 0.0
    %6754 = vmatprep.subr.mxu0 0.0
    %6755 = vmatpush1.msra.mxu0 0.0
    %6756 = vmatprep.subr.mxu0 0.0
    %6757 = vmatpush1.msra.mxu0 0.0
    %6758 = vmatprep.subr.mxu0 0.0
    %6759 = vmatpush1.msra.mxu0 0.0
    %6760 = vmatprep.subr.mxu0 0.0
    %6761 = vmatpush1.msra.mxu0 0.0
    %6762 = vmatprep.subr.mxu0 0.0
    %6763 = vmatpush1.msra.mxu0 0.0
    %6764 = vmatprep.subr.mxu0 0.0
    %6765 = vmatpush1.msra.mxu0 0.0
    %6766 = vmatprep.subr.mxu0 0.0
    %6767 = vmatpush1.msra.mxu0 0.0
    %6768 = vmatprep.subr.mxu0 0.0
    %6769 = vmatpush1.msra.mxu0 0.0
    %6770 = vmatprep.mubr.f32.mxu0 0.0
    %v6771 = vand.u32 %v5617, 4294901760
    %6772 = vmatmul.mubr.f32.gmra.mrb[0].mxu0 %v6771
    %v6773 = vpop.f32.mrb[0].mxu0
    %v6774 = vadd.f32 %v6623, %v6773
    %v6775 = vpop.f32.mrb[0].mxu0
    %6776 = vdwg.mxu0
    %6777 = vmatprep.subr.mxu0 0.0
    %v6778 = vand.u32 %v5650, 4294901760
    %v6779 = vsub.f32 %v5650, %v6778
    %6780 = vmatpush1.msra.mxu0 %v6779
    %6781 = vmatprep.subr.mxu0 0.0
    %v6782 = vand.u32 %v5651, 4294901760
    %v6783 = vsub.f32 %v5651, %v6782
    %6784 = vmatpush1.msra.mxu0 %v6783
    %6785 = vmatprep.subr.mxu0 0.0
    %v6786 = vand.u32 %v5652, 4294901760
    %v6787 = vsub.f32 %v5652, %v6786
    %6788 = vmatpush1.msra.mxu0 %v6787
    %6789 = vmatprep.subr.mxu0 0.0
    %v6790 = vand.u32 %v5653, 4294901760
    %v6791 = vsub.f32 %v5653, %v6790
    %6792 = vmatpush1.msra.mxu0 %v6791
    %6793 = vmatprep.subr.mxu0 0.0
    %v6794 = vand.u32 %v5654, 4294901760
    %v6795 = vsub.f32 %v5654, %v6794
    %6796 = vmatpush1.msra.mxu0 %v6795
    %6797 = vmatprep.subr.mxu0 0.0
    %v6798 = vand.u32 %v5655, 4294901760
    %v6799 = vsub.f32 %v5655, %v6798
    %6800 = vmatpush1.msra.mxu0 %v6799
    %6801 = vmatprep.subr.mxu0 0.0
    %v6802 = vand.u32 %v5656, 4294901760
    %v6803 = vsub.f32 %v5656, %v6802
    %6804 = vmatpush1.msra.mxu0 %v6803
    %6805 = vmatprep.subr.mxu0 0.0
    %v6806 = vand.u32 %v5657, 4294901760
    %v6807 = vsub.f32 %v5657, %v6806
    %6808 = vmatpush1.msra.mxu0 %v6807
    %6809 = vmatprep.subr.mxu0 0.0
    %v6810 = vand.u32 %v5658, 4294901760
    %v6811 = vsub.f32 %v5658, %v6810
    %6812 = vmatpush1.msra.mxu0 %v6811
    %6813 = vmatprep.subr.mxu0 0.0
    %v6814 = vand.u32 %v5659, 4294901760
    %v6815 = vsub.f32 %v5659, %v6814
    %6816 = vmatpush1.msra.mxu0 %v6815
    %6817 = vmatprep.subr.mxu0 0.0
    %v6818 = vand.u32 %v5660, 4294901760
    %v6819 = vsub.f32 %v5660, %v6818
    %6820 = vmatpush1.msra.mxu0 %v6819
    %6821 = vmatprep.subr.mxu0 0.0
    %v6822 = vand.u32 %v5661, 4294901760
    %v6823 = vsub.f32 %v5661, %v6822
    %6824 = vmatpush1.msra.mxu0 %v6823
    %6825 = vmatprep.subr.mxu0 0.0
    %v6826 = vand.u32 %v5662, 4294901760
    %v6827 = vsub.f32 %v5662, %v6826
    %6828 = vmatpush1.msra.mxu0 %v6827
    %6829 = vmatprep.subr.mxu0 0.0
    %v6830 = vand.u32 %v5663, 4294901760
    %v6831 = vsub.f32 %v5663, %v6830
    %6832 = vmatpush1.msra.mxu0 %v6831
    %6833 = vmatprep.subr.mxu0 0.0
    %v6834 = vand.u32 %v5664, 4294901760
    %v6835 = vsub.f32 %v5664, %v6834
    %6836 = vmatpush1.msra.mxu0 %v6835
    %6837 = vmatprep.subr.mxu0 0.0
    %v6838 = vand.u32 %v5665, 4294901760
    %v6839 = vsub.f32 %v5665, %v6838
    %6840 = vmatpush1.msra.mxu0 %v6839
    %6841 = vmatprep.subr.mxu0 0.0
    %6842 = vmatpush1.msra.mxu0 0.0
    %6843 = vmatprep.subr.mxu0 0.0
    %6844 = vmatpush1.msra.mxu0 0.0
    %6845 = vmatprep.subr.mxu0 0.0
    %6846 = vmatpush1.msra.mxu0 0.0
    %6847 = vmatprep.subr.mxu0 0.0
    %6848 = vmatpush1.msra.mxu0 0.0
    %6849 = vmatprep.subr.mxu0 0.0
    %6850 = vmatpush1.msra.mxu0 0.0
    %6851 = vmatprep.subr.mxu0 0.0
    %6852 = vmatpush1.msra.mxu0 0.0
    %6853 = vmatprep.subr.mxu0 0.0
    %6854 = vmatpush1.msra.mxu0 0.0
    %6855 = vmatprep.subr.mxu0 0.0
    %6856 = vmatpush1.msra.mxu0 0.0
    %6857 = vmatprep.subr.mxu0 0.0
    %6858 = vmatpush1.msra.mxu0 0.0
    %6859 = vmatprep.subr.mxu0 0.0
    %6860 = vmatpush1.msra.mxu0 0.0
    %6861 = vmatprep.subr.mxu0 0.0
    %6862 = vmatpush1.msra.mxu0 0.0
    %6863 = vmatprep.subr.mxu0 0.0
    %6864 = vmatpush1.msra.mxu0 0.0
    %6865 = vmatprep.subr.mxu0 0.0
    %6866 = vmatpush1.msra.mxu0 0.0
    %6867 = vmatprep.subr.mxu0 0.0
    %6868 = vmatpush1.msra.mxu0 0.0
    %6869 = vmatprep.subr.mxu0 0.0
    %6870 = vmatpush1.msra.mxu0 0.0
    %6871 = vmatprep.subr.mxu0 0.0
    %6872 = vmatpush1.msra.mxu0 0.0
    %6873 = vmatprep.mubr.f32.mxu0 0.0
    %v6874 = vand.u32 %v5617, 4294901760
    %v6875 = vsub.f32 %v5617, %v6874
    %6876 = vmatmul.mubr.f32.gmra.mrb[0].mxu0 %v6875
    %v6877 = vpop.f32.mrb[0].mxu0
    %v6878 = vadd.f32 %v6774, %v6877
    %v6879 = vpop.f32.mrb[0].mxu0
    %6880 = vdwg.mxu0
    %6881 = vmatprep.subr.mxu0 0.0
    %v6882 = vand.u32 %v5650, 4294901760
    %6883 = vmatpush1.msra.mxu0 %v6882
    %6884 = vmatprep.subr.mxu0 0.0
    %v6885 = vand.u32 %v5651, 4294901760
    %6886 = vmatpush1.msra.mxu0 %v6885
    %6887 = vmatprep.subr.mxu0 0.0
    %v6888 = vand.u32 %v5652, 4294901760
    %6889 = vmatpush1.msra.mxu0 %v6888
    %6890 = vmatprep.subr.mxu0 0.0
    %v6891 = vand.u32 %v5653, 4294901760
    %6892 = vmatpush1.msra.mxu0 %v6891
    %6893 = vmatprep.subr.mxu0 0.0
    %v6894 = vand.u32 %v5654, 4294901760
    %6895 = vmatpush1.msra.mxu0 %v6894
    %6896 = vmatprep.subr.mxu0 0.0
    %v6897 = vand.u32 %v5655, 4294901760
    %6898 = vmatpush1.msra.mxu0 %v6897
    %6899 = vmatprep.subr.mxu0 0.0
    %v6900 = vand.u32 %v5656, 4294901760
    %6901 = vmatpush1.msra.mxu0 %v6900
    %6902 = vmatprep.subr.mxu0 0.0
    %v6903 = vand.u32 %v5657, 4294901760
    %6904 = vmatpush1.msra.mxu0 %v6903
    %6905 = vmatprep.subr.mxu0 0.0
    %v6906 = vand.u32 %v5658, 4294901760
    %6907 = vmatpush1.msra.mxu0 %v6906
    %6908 = vmatprep.subr.mxu0 0.0
    %v6909 = vand.u32 %v5659, 4294901760
    %6910 = vmatpush1.msra.mxu0 %v6909
    %6911 = vmatprep.subr.mxu0 0.0
    %v6912 = vand.u32 %v5660, 4294901760
    %6913 = vmatpush1.msra.mxu0 %v6912
    %6914 = vmatprep.subr.mxu0 0.0
    %v6915 = vand.u32 %v5661, 4294901760
    %6916 = vmatpush1.msra.mxu0 %v6915
    %6917 = vmatprep.subr.mxu0 0.0
    %v6918 = vand.u32 %v5662, 4294901760
    %6919 = vmatpush1.msra.mxu0 %v6918
    %6920 = vmatprep.subr.mxu0 0.0
    %v6921 = vand.u32 %v5663, 4294901760
    %6922 = vmatpush1.msra.mxu0 %v6921
    %6923 = vmatprep.subr.mxu0 0.0
    %v6924 = vand.u32 %v5664, 4294901760
    %6925 = vmatpush1.msra.mxu0 %v6924
    %6926 = vmatprep.subr.mxu0 0.0
    %v6927 = vand.u32 %v5665, 4294901760
    %6928 = vmatpush1.msra.mxu0 %v6927
    %6929 = vmatprep.subr.mxu0 0.0
    %6930 = vmatpush1.msra.mxu0 0.0
    %6931 = vmatprep.subr.mxu0 0.0
    %6932 = vmatpush1.msra.mxu0 0.0
    %6933 = vmatprep.subr.mxu0 0.0
    %6934 = vmatpush1.msra.mxu0 0.0
    %6935 = vmatprep.subr.mxu0 0.0
    %6936 = vmatpush1.msra.mxu0 0.0
    %6937 = vmatprep.subr.mxu0 0.0
    %6938 = vmatpush1.msra.mxu0 0.0
    %6939 = vmatprep.subr.mxu0 0.0
    %6940 = vmatpush1.msra.mxu0 0.0
    %6941 = vmatprep.subr.mxu0 0.0
    %6942 = vmatpush1.msra.mxu0 0.0
    %6943 = vmatprep.subr.mxu0 0.0
    %6944 = vmatpush1.msra.mxu0 0.0
    %6945 = vmatprep.subr.mxu0 0.0
    %6946 = vmatpush1.msra.mxu0 0.0
    %6947 = vmatprep.subr.mxu0 0.0
    %6948 = vmatpush1.msra.mxu0 0.0
    %6949 = vmatprep.subr.mxu0 0.0
    %6950 = vmatpush1.msra.mxu0 0.0
    %6951 = vmatprep.subr.mxu0 0.0
    %6952 = vmatpush1.msra.mxu0 0.0
    %6953 = vmatprep.subr.mxu0 0.0
    %6954 = vmatpush1.msra.mxu0 0.0
    %6955 = vmatprep.subr.mxu0 0.0
    %6956 = vmatpush1.msra.mxu0 0.0
    %6957 = vmatprep.subr.mxu0 0.0
    %6958 = vmatpush1.msra.mxu0 0.0
    %6959 = vmatprep.subr.mxu0 0.0
    %6960 = vmatpush1.msra.mxu0 0.0
    %6961 = vmatprep.mubr.f32.mxu0 0.0
    %v6962 = vand.u32 %v5617, 4294901760
    %v6963 = vsub.f32 %v5617, %v6962
    %v6964 = vand.u32 %v6963, 4294901760
    %6965 = vmatmul.mubr.f32.gmra.mrb[0].mxu0 %v6964
    %v6966 = vpop.f32.mrb[0].mxu0
    %v6967 = vadd.f32 %v6878, %v6966
    %v6968 = vpop.f32.mrb[0].mxu0
    %6969 = vdwg.mxu0
    %6970 = vmatprep.subr.mxu0 0.0
    %v6971 = vand.u32 %v5650, 4294901760
    %v6972 = vsub.f32 %v5650, %v6971
    %v6973 = vand.u32 %v6972, 4294901760
    %6974 = vmatpush1.msra.mxu0 %v6973
    %6975 = vmatprep.subr.mxu0 0.0
    %v6976 = vand.u32 %v5651, 4294901760
    %v6977 = vsub.f32 %v5651, %v6976
    %v6978 = vand.u32 %v6977, 4294901760
    %6979 = vmatpush1.msra.mxu0 %v6978
    %6980 = vmatprep.subr.mxu0 0.0
    %v6981 = vand.u32 %v5652, 4294901760
    %v6982 = vsub.f32 %v5652, %v6981
    %v6983 = vand.u32 %v6982, 4294901760
    %6984 = vmatpush1.msra.mxu0 %v6983
    %6985 = vmatprep.subr.mxu0 0.0
    %v6986 = vand.u32 %v5653, 4294901760
    %v6987 = vsub.f32 %v5653, %v6986
    %v6988 = vand.u32 %v6987, 4294901760
    %6989 = vmatpush1.msra.mxu0 %v6988
    %6990 = vmatprep.subr.mxu0 0.0
    %v6991 = vand.u32 %v5654, 4294901760
    %v6992 = vsub.f32 %v5654, %v6991
    %v6993 = vand.u32 %v6992, 4294901760
    %6994 = vmatpush1.msra.mxu0 %v6993
    %6995 = vmatprep.subr.mxu0 0.0
    %v6996 = vand.u32 %v5655, 4294901760
    %v6997 = vsub.f32 %v5655, %v6996
    %v6998 = vand.u32 %v6997, 4294901760
    %6999 = vmatpush1.msra.mxu0 %v6998
    %7000 = vmatprep.subr.mxu0 0.0
    %v7001 = vand.u32 %v5656, 4294901760
    %v7002 = vsub.f32 %v5656, %v7001
    %v7003 = vand.u32 %v7002, 4294901760
    %7004 = vmatpush1.msra.mxu0 %v7003
    %7005 = vmatprep.subr.mxu0 0.0
    %v7006 = vand.u32 %v5657, 4294901760
    %v7007 = vsub.f32 %v5657, %v7006
    %v7008 = vand.u32 %v7007, 4294901760
    %7009 = vmatpush1.msra.mxu0 %v7008
    %7010 = vmatprep.subr.mxu0 0.0
    %v7011 = vand.u32 %v5658, 4294901760
    %v7012 = vsub.f32 %v5658, %v7011
    %v7013 = vand.u32 %v7012, 4294901760
    %7014 = vmatpush1.msra.mxu0 %v7013
    %7015 = vmatprep.subr.mxu0 0.0
    %v7016 = vand.u32 %v5659, 4294901760
    %v7017 = vsub.f32 %v5659, %v7016
    %v7018 = vand.u32 %v7017, 4294901760
    %7019 = vmatpush1.msra.mxu0 %v7018
    %7020 = vmatprep.subr.mxu0 0.0
    %v7021 = vand.u32 %v5660, 4294901760
    %v7022 = vsub.f32 %v5660, %v7021
    %v7023 = vand.u32 %v7022, 4294901760
    %7024 = vmatpush1.msra.mxu0 %v7023
    %7025 = vmatprep.subr.mxu0 0.0
    %v7026 = vand.u32 %v5661, 4294901760
    %v7027 = vsub.f32 %v5661, %v7026
    %v7028 = vand.u32 %v7027, 4294901760
    %7029 = vmatpush1.msra.mxu0 %v7028
    %7030 = vmatprep.subr.mxu0 0.0
    %v7031 = vand.u32 %v5662, 4294901760
    %v7032 = vsub.f32 %v5662, %v7031
    %v7033 = vand.u32 %v7032, 4294901760
    %7034 = vmatpush1.msra.mxu0 %v7033
    %7035 = vmatprep.subr.mxu0 0.0
    %v7036 = vand.u32 %v5663, 4294901760
    %v7037 = vsub.f32 %v5663, %v7036
    %v7038 = vand.u32 %v7037, 4294901760
    %7039 = vmatpush1.msra.mxu0 %v7038
    %7040 = vmatprep.subr.mxu0 0.0
    %v7041 = vand.u32 %v5664, 4294901760
    %v7042 = vsub.f32 %v5664, %v7041
    %v7043 = vand.u32 %v7042, 4294901760
    %7044 = vmatpush1.msra.mxu0 %v7043
    %7045 = vmatprep.subr.mxu0 0.0
    %v7046 = vand.u32 %v5665, 4294901760
    %v7047 = vsub.f32 %v5665, %v7046
    %v7048 = vand.u32 %v7047, 4294901760
    %7049 = vmatpush1.msra.mxu0 %v7048
    %7050 = vmatprep.subr.mxu0 0.0
    %7051 = vmatpush1.msra.mxu0 0.0
    %7052 = vmatprep.subr.mxu0 0.0
    %7053 = vmatpush1.msra.mxu0 0.0
    %7054 = vmatprep.subr.mxu0 0.0
    %7055 = vmatpush1.msra.mxu0 0.0
    %7056 = vmatprep.subr.mxu0 0.0
    %7057 = vmatpush1.msra.mxu0 0.0
    %7058 = vmatprep.subr.mxu0 0.0
    %7059 = vmatpush1.msra.mxu0 0.0
    %7060 = vmatprep.subr.mxu0 0.0
    %7061 = vmatpush1.msra.mxu0 0.0
    %7062 = vmatprep.subr.mxu0 0.0
    %7063 = vmatpush1.msra.mxu0 0.0
    %7064 = vmatprep.subr.mxu0 0.0
    %7065 = vmatpush1.msra.mxu0 0.0
    %7066 = vmatprep.subr.mxu0 0.0
    %7067 = vmatpush1.msra.mxu0 0.0
    %7068 = vmatprep.subr.mxu0 0.0
    %7069 = vmatpush1.msra.mxu0 0.0
    %7070 = vmatprep.subr.mxu0 0.0
    %7071 = vmatpush1.msra.mxu0 0.0
    %7072 = vmatprep.subr.mxu0 0.0
    %7073 = vmatpush1.msra.mxu0 0.0
    %7074 = vmatprep.subr.mxu0 0.0
    %7075 = vmatpush1.msra.mxu0 0.0
    %7076 = vmatprep.subr.mxu0 0.0
    %7077 = vmatpush1.msra.mxu0 0.0
    %7078 = vmatprep.subr.mxu0 0.0
    %7079 = vmatpush1.msra.mxu0 0.0
    %7080 = vmatprep.subr.mxu0 0.0
    %7081 = vmatpush1.msra.mxu0 0.0
    %7082 = vmatprep.mubr.f32.mxu0 0.0
    %v7083 = vand.u32 %v5617, 4294901760
    %7084 = vmatmul.mubr.f32.gmra.mrb[0].mxu0 %v7083
    %v7085 = vpop.f32.mrb[0].mxu0
    %v7086 = vadd.f32 %v6967, %v7085
    %v7087 = vpop.f32.mrb[0].mxu0
    %7088 = vdwg.mxu0
    %7089 = vmatprep.subr.mxu0 0.0
    %v7090 = vand.u32 %v5650, 4294901760
    %7091 = vmatpush1.msra.mxu0 %v7090
    %7092 = vmatprep.subr.mxu0 0.0
    %v7093 = vand.u32 %v5651, 4294901760
    %7094 = vmatpush1.msra.mxu0 %v7093
    %7095 = vmatprep.subr.mxu0 0.0
    %v7096 = vand.u32 %v5652, 4294901760
    %7097 = vmatpush1.msra.mxu0 %v7096
    %7098 = vmatprep.subr.mxu0 0.0
    %v7099 = vand.u32 %v5653, 4294901760
    %7100 = vmatpush1.msra.mxu0 %v7099
    %7101 = vmatprep.subr.mxu0 0.0
    %v7102 = vand.u32 %v5654, 4294901760
    %7103 = vmatpush1.msra.mxu0 %v7102
    %7104 = vmatprep.subr.mxu0 0.0
    %v7105 = vand.u32 %v5655, 4294901760
    %7106 = vmatpush1.msra.mxu0 %v7105
    %7107 = vmatprep.subr.mxu0 0.0
    %v7108 = vand.u32 %v5656, 4294901760
    %7109 = vmatpush1.msra.mxu0 %v7108
    %7110 = vmatprep.subr.mxu0 0.0
    %v7111 = vand.u32 %v5657, 4294901760
    %7112 = vmatpush1.msra.mxu0 %v7111
    %7113 = vmatprep.subr.mxu0 0.0
    %v7114 = vand.u32 %v5658, 4294901760
    %7115 = vmatpush1.msra.mxu0 %v7114
    %7116 = vmatprep.subr.mxu0 0.0
    %v7117 = vand.u32 %v5659, 4294901760
    %7118 = vmatpush1.msra.mxu0 %v7117
    %7119 = vmatprep.subr.mxu0 0.0
    %v7120 = vand.u32 %v5660, 4294901760
    %7121 = vmatpush1.msra.mxu0 %v7120
    %7122 = vmatprep.subr.mxu0 0.0
    %v7123 = vand.u32 %v5661, 4294901760
    %7124 = vmatpush1.msra.mxu0 %v7123
    %7125 = vmatprep.subr.mxu0 0.0
    %v7126 = vand.u32 %v5662, 4294901760
    %7127 = vmatpush1.msra.mxu0 %v7126
    %7128 = vmatprep.subr.mxu0 0.0
    %v7129 = vand.u32 %v5663, 4294901760
    %7130 = vmatpush1.msra.mxu0 %v7129
    %7131 = vmatprep.subr.mxu0 0.0
    %v7132 = vand.u32 %v5664, 4294901760
    %7133 = vmatpush1.msra.mxu0 %v7132
    %7134 = vmatprep.subr.mxu0 0.0
    %v7135 = vand.u32 %v5665, 4294901760
    %7136 = vmatpush1.msra.mxu0 %v7135
    %7137 = vmatprep.subr.mxu0 0.0
    %7138 = vmatpush1.msra.mxu0 0.0
    %7139 = vmatprep.subr.mxu0 0.0
    %7140 = vmatpush1.msra.mxu0 0.0
    %7141 = vmatprep.subr.mxu0 0.0
    %7142 = vmatpush1.msra.mxu0 0.0
    %7143 = vmatprep.subr.mxu0 0.0
    %7144 = vmatpush1.msra.mxu0 0.0
    %7145 = vmatprep.subr.mxu0 0.0
    %7146 = vmatpush1.msra.mxu0 0.0
    %7147 = vmatprep.subr.mxu0 0.0
    %7148 = vmatpush1.msra.mxu0 0.0
    %7149 = vmatprep.subr.mxu0 0.0
    %7150 = vmatpush1.msra.mxu0 0.0
    %7151 = vmatprep.subr.mxu0 0.0
    %7152 = vmatpush1.msra.mxu0 0.0
    %7153 = vmatprep.subr.mxu0 0.0
    %7154 = vmatpush1.msra.mxu0 0.0
    %7155 = vmatprep.subr.mxu0 0.0
    %7156 = vmatpush1.msra.mxu0 0.0
    %7157 = vmatprep.subr.mxu0 0.0
    %7158 = vmatpush1.msra.mxu0 0.0
    %7159 = vmatprep.subr.mxu0 0.0
    %7160 = vmatpush1.msra.mxu0 0.0
    %7161 = vmatprep.subr.mxu0 0.0
    %7162 = vmatpush1.msra.mxu0 0.0
    %7163 = vmatprep.subr.mxu0 0.0
    %7164 = vmatpush1.msra.mxu0 0.0
    %7165 = vmatprep.subr.mxu0 0.0
    %7166 = vmatpush1.msra.mxu0 0.0
    %7167 = vmatprep.subr.mxu0 0.0
    %7168 = vmatpush1.msra.mxu0 0.0
    %7169 = vmatprep.mubr.f32.mxu0 0.0
    %v7170 = vand.u32 %v5617, 4294901760
    %7171 = vmatmul.mubr.f32.gmra.mrb[0].mxu0 %v7170
    %v7172 = vpop.f32.mrb[0].mxu0
    %v7173 = vadd.f32 %v7086, %v7172
    %v7174 = vpop.f32.mrb[0].mxu0
    %7175 = vdwg.mxu0
    %7176 = vst [vmem:[#allocation10] sm:$0xff] %v7173
    // Predicated region
    $region46: #{tpu_custom_call.1} parent=1 // pred_check
      _
    $region47: #{tpu_custom_call.1} parent=1 // pred_check_branch
      %7178 = sbr.rel (0) target = $region49
    $region48: #{tpu_custom_call.1} parent=1 // pred_region
      %s7180 = ssub.s32 128, 128
      %7181 = vsyncadd [#allocation4], %s7180
      %s7183 = sshll.u32 [#allocation10], 4
      %s7184 = int_to_ptr.vmem [resolvable:$true] %s7183
      %7186 = dma.vmem_to_hbm [thread:$0]  %s7184, 128, %s7, [#allocation4]
    $region49: #{tpu_custom_call.1} parent=1 // pred_fallthru
      _
    // Predicated region
    $region50: #{tpu_custom_call.1} parent=1 // pred_check
      _
    $region51: #{tpu_custom_call.1} parent=1 // pred_check_branch
      %7188 = sbr.rel (0) target = $region53
    $region52: #{tpu_custom_call.1} parent=1 // pred_region
      %7189 = dma.done [#allocation4], 128
    $region53: #{tpu_custom_call.1} parent=1 // pred_fallthru
      _
    %7190 = vsyncpa [#allocation3], 1
    %7191 = vsyncpa [#allocation6], 1
    %7192 = vsyncpa [#allocation9], 1
    %7193 = vsyncpa [#allocation4], 1

</llo_original>
